<compile_context>
chip_gen: v6e
topology: v6e:2x2x1
jax: 0.10.0
libtpu: 0.0.40
codegen_flags: <defaults>
</compile_context>

<pallas_src>
import math

import jax
import jax.numpy as jnp
from jax import lax
from jax.experimental import pallas as pl
from jax.experimental.pallas import tpu as pltpu

# ---- small, deterministic hyper-parameters ---------------------------------
N_NODES = 64      # num_nodes
ANCHORS = 16      # anchor_nodes
IN_DIM = 16
OUT_DIM = 16
HEADS = 4
K = 5
TAU = 0.25

R_BLOCKS = HEADS            # lane blocks of W: (heads*out_dim)//out_dim == heads
S = N_NODES // HEADS        # node rows feeding one head after the torch reshape
assert N_NODES % HEADS == 0, "block decomposition of the reshape needs N % heads == 0"


# -----------------------------------------------------------------------------
# Fused kernel: projection + anchor attention + eval-mode gumbel softmax + GNN
# -----------------------------------------------------------------------------
def _fused_kernel(x_ref, wT_ref, er_ref, wb_ref, wc_ref, perm_ref,
                  wrelT_ref, wrootT_ref, bias_ref, out_ref):
    f32 = jnp.float32
    x = x_ref[...]                                        # [N, Fin]
    wb = wb_ref[...]                                      # [1, D]
    wc = wc_ref[...]                                      # [1, D]

    # -- phase 1: anchor projections + global sums of squares ----------------
    #    q3[h, HEADS*s + r, :] == x[h*S + s, :] @ W[r*D:(r+1)*D, :].T
    ss_q = jnp.zeros((), f32)
    ss_aq = jnp.zeros((), f32)
    anchor_q = []
    for h in range(HEADS):
        xh = x[h * S:(h + 1) * S, :]                      # [S, Fin]
        aq_h = jnp.zeros((ANCHORS, OUT_DIM), f32)
        for r in range(R_BLOCKS):
            t = jnp.dot(xh, wT_ref[r], preferred_element_type=f32)           # [S, D]
            ss_q = ss_q + jnp.sum(t * t)
            aq_h = aq_h + jnp.dot(er_ref[r], t, preferred_element_type=f32)  # [A, D]
        anchor_q.append(aq_h)
        ss_aq = ss_aq + jnp.sum(aq_h * aq_h)

    # global (Frobenius) norms folded into scales; EUP rsqrt instead of
    # dividing the full q / anchor_q tensors.  (The reference's additive 1e-10
    # eps on the norm is negligible for nonzero inputs.)
    inv_nq = lax.rsqrt(ss_q + 1e-20)
    inv_naq = lax.rsqrt(ss_aq + 1e-20)
    scale = inv_nq * inv_naq

    # -- phase 2: streamed per-(head, block) logits / gumbel softmax ---------
    # One [S, A] tile is live at a time; attention accumulates into R_BLOCKS
    # [S, A] blocks (row r*S + s of the blocked matrix is node m = HEADS*s + r).
    acc = [jnp.zeros((S, ANCHORS), f32) for _ in range(R_BLOCKS)]
    for h in range(HEADS):
        xh = x[h * S:(h + 1) * S, :]
        aq_t = anchor_q[h].T                              # [D, A]
        for r in range(R_BLOCKS):
            # recompute t (tiny matmul) instead of keeping 16 tiles live,
            # which keeps the vreg live set small (no spill traffic).
            t = jnp.dot(xh, wT_ref[r], preferred_element_type=f32)           # [S, D]
            logit = jnp.dot(t, aq_t, preferred_element_type=f32) * scale     # [S, A]
            b = jax.nn.sigmoid(jnp.sum(t * wb, axis=-1, keepdims=True) * inv_nq)
            c = jax.nn.sigmoid(jnp.sum(t * wc, axis=-1, keepdims=True) * inv_nq)
            g = jnp.exp((logit + b) ** 2 * (-10.0 / c))                       # [S, A]
            # eval-mode gumbel softmax == softmax(g / tau, axis=-1)
            z = g * (1.0 / TAU)
            z = z - jnp.max(z, axis=-1, keepdims=True)
            e = jnp.exp(z)
            p = e * (1.0 / jnp.sum(e, axis=-1, keepdims=True))
            acc[r] = acc[r] + p

    # sum over the K identical gumbel copies == K * softmax; mean over heads.
    att_blk = jnp.concatenate(acc, axis=0) * (float(K) / float(HEADS))        # [N, A]
    # restore node-major row order with a precomputed permutation matmul.
    att = jnp.dot(perm_ref[...], att_blk, preferred_element_type=f32)         # [N, A]

    # -- DenseAnchorDiffGraphConv --------------------------------------------
    # TODO(synk): DenseAnchorDiffGraphConv not provided; using
    #             out = lin_rel(att @ (att^T @ x)) + bias + lin_root(x).
    anchor_agg = jnp.dot(att.T, x, preferred_element_type=f32)                # [A, Fin]
    agg = jnp.dot(att, anchor_agg, preferred_element_type=f32)                # [N, Fin]
    out = (jnp.dot(agg, wrelT_ref[...], preferred_element_type=f32)
           + bias_ref[...]
           + jnp.dot(x, wrootT_ref[...], preferred_element_type=f32))
    # NOTE: the [64, 16] output is a 16-lane (masked) store -- shape dictated
    # by the module; fuse downstream consumers for a lane-dense slab if needed.
    out_ref[...] = out


# -----------------------------------------------------------------------------
# Wrapper (single fused pallas_call; whole problem fits in VMEM, no grid)
# -----------------------------------------------------------------------------
def gumbel_anchor_diff_gcn_conv(x, kparams):
    # NOTE: for batched graphs, add a leading grid axis over the batch with
    # dimension_semantics=("parallel",) so v7x uses both TensorCores and the
    # MXU sees larger contractions; the module forward is single-graph.
    def vmem():
        return pl.BlockSpec(memory_space=pltpu.MemorySpace.VMEM)

    return pl.pallas_call(
        _fused_kernel,
        out_shape=jax.ShapeDtypeStruct((N_NODES, OUT_DIM), jnp.float32),
        in_specs=[vmem() for _ in range(9)],
        out_specs=vmem(),
    )(x, kparams['wT_stack'], kparams['er_stack'], kparams['w_b'],
      kparams['w_c'], kparams['perm'], kparams['w_relT'],
      kparams['w_rootT'], kparams['bias'])


# -----------------------------------------------------------------------------
# Deterministic parameter init (glorot-uniform, torch Linear weight layout)
# -----------------------------------------------------------------------------
def _glorot(key, shape):
    fan_out, fan_in = shape[0], shape[1]
    lim = math.sqrt(6.0 / (fan_in + fan_out))
    return jax.random.uniform(key, shape, jnp.float32, -lim, lim)


def init_params(key):
    ks = jax.random.split(key, 7)
    return {
        'w_lin':  _glorot(ks[0], (HEADS * OUT_DIM, IN_DIM)),   # lin.weight
        'w_b':    _glorot(ks[1], (1, OUT_DIM)),                # lin_b.weight
        'w_c':    _glorot(ks[2], (1, OUT_DIM)),                # lin_c.weight
        'E':      _glorot(ks[3], (ANCHORS, N_NODES)),          # anchor assignment
        'w_rel':  _glorot(ks[4], (OUT_DIM, IN_DIM)),           # gnn.lin_rel.weight
        'w_root': _glorot(ks[5], (OUT_DIM, IN_DIM)),           # gnn.lin_root.weight
        'bias':   0.01 * jax.random.normal(ks[6], (1, OUT_DIM), jnp.float32),
    }


def prepare_kernel_params(params):
    """One-time re-layout of the weights for the fused kernel (outside the hot
    path: no per-call transposes / reshapes)."""
    W = params['w_lin']                                                     # [H*D, Fin]
    wT_stack = jnp.stack(
        [W[r * OUT_DIM:(r + 1) * OUT_DIM, :].T for r in range(R_BLOCKS)], 0)  # [R, Fin, D]
    er_stack = jnp.stack(
        [params['E'][:, r::HEADS] for r in range(R_BLOCKS)], 0)             # [R, A, S]
    # Permutation that maps blocked row r*S + s back to node row m = HEADS*s + r.
    m = jnp.arange(N_NODES)
    src = (m % HEADS) * S + (m // HEADS)
    perm = jnp.zeros((N_NODES, N_NODES), jnp.float32).at[m, src].set(1.0)
    return {
        'wT_stack': wT_stack,
        'er_stack': er_stack,
        'w_b': params['w_b'],            # [1, D]
        'w_c': params['w_c'],            # [1, D]
        'perm': perm,                    # [N, N]
        'w_relT': params['w_rel'].T,     # [Fin, D]
        'w_rootT': params['w_root'].T,   # [Fin, D]
        'bias': params['bias'],          # [1, D]
    }


# -----------------------------------------------------------------------------
# Pure-JAX reference (faithful translation of the torch forward, eval mode)
# -----------------------------------------------------------------------------
def reference(x, params):
    with jax.default_matmul_precision("highest"):
        q = x @ params['w_lin'].T                              # [N, H*D]
        q = q.reshape(HEADS, -1, OUT_DIM)                      # [H, N, D] (row-major)
        anchor_q = jnp.matmul(params['E'], q)                  # [H, A, D]
        q = q / (jnp.linalg.norm(q) + 1e-10)
        anchor_q = anchor_q / (jnp.linalg.norm(anchor_q) + 1e-10)
        logits = jnp.matmul(q, jnp.swapaxes(anchor_q, -1, -2))  # [H, N, A]
        b = jax.nn.sigmoid(q @ params['w_b'].T)                # [H, N, 1]
        c = jax.nn.sigmoid(q @ params['w_c'].T)                # [H, N, 1]
        logits = jnp.exp((logits + b) ** 2 / (-0.1 * c))
        p = jax.nn.softmax(logits / TAU, axis=-1)              # eval-mode gumbel
        attention = K * jnp.mean(p, axis=0)                    # [N, A]
        # DenseAnchorDiffGraphConv (same TODO semantics as the kernel)
        anchor_agg = attention.T @ x                           # [A, Fin]
        agg = attention @ anchor_agg                           # [N, Fin]
        return agg @ params['w_rel'].T + params['bias'] + x @ params['w_root'].T


if __name__ == "__main__":
    key = jax.random.PRNGKey(0)
    k_x, k_p = jax.random.split(key)
    x = jax.random.normal(k_x, (N_NODES, IN_DIM), jnp.float32)
    params = init_params(k_p)
    kparams = prepare_kernel_params(params)

    out = jax.block_until_ready(gumbel_anchor_diff_gcn_conv(x, kparams))

    ref = reference(x, params)
    err = float(jnp.max(jnp.abs(out - ref)))
    tol = 1e-3 * (1.0 + float(jnp.max(jnp.abs(ref))))
    if not (err <= tol):
        raise AssertionError(f"Pallas output mismatch: max abs err {err} > tol {tol}")

    print("KERNEL_OK")
</pallas_src>

<mosaic_0001>
module attributes {stable_mosaic.version = 11 : i64} {
  func.func @_fused_kernel(%arg0: memref<64x16xf32, #tpu.memory_space<vmem>>, %arg1: memref<4x16x16xf32, #tpu.memory_space<vmem>>, %arg2: memref<4x16x16xf32, #tpu.memory_space<vmem>>, %arg3: memref<1x16xf32, #tpu.memory_space<vmem>>, %arg4: memref<1x16xf32, #tpu.memory_space<vmem>>, %arg5: memref<64x64xf32, #tpu.memory_space<vmem>>, %arg6: memref<16x16xf32, #tpu.memory_space<vmem>>, %arg7: memref<16x16xf32, #tpu.memory_space<vmem>>, %arg8: memref<1x16xf32, #tpu.memory_space<vmem>>, %arg9: memref<64x16xf32, #tpu.memory_space<vmem>>) attributes {dimension_semantics = [], scalar_prefetch = 0 : i64, scratch_operands = 0 : i64, tpu.core_type = #tpu.core_type<tc>} {
    %c0 = arith.constant 0 : index
    %c0_0 = arith.constant 0 : index
    %0 = vector.load %arg0[%c0, %c0_0] : memref<64x16xf32, #tpu.memory_space<vmem>>, vector<64x16xf32>
    %c0_1 = arith.constant 0 : index
    %c0_2 = arith.constant 0 : index
    %1 = vector.load %arg3[%c0_1, %c0_2] : memref<1x16xf32, #tpu.memory_space<vmem>>, vector<1x16xf32>
    %c0_3 = arith.constant 0 : index
    %c0_4 = arith.constant 0 : index
    %2 = vector.load %arg4[%c0_3, %c0_4] : memref<1x16xf32, #tpu.memory_space<vmem>>, vector<1x16xf32>
    %3 = vector.extract_strided_slice %0 {offsets = [0, 0], sizes = [16, 16], strides = [1, 1]} : vector<64x16xf32> to vector<16x16xf32>
    %cst = arith.constant 0.000000e+00 : f32
    %4 = vector.broadcast %cst : f32 to vector<16x16xf32>
    %c0_5 = arith.constant 0 : index
    %c0_6 = arith.constant 0 : index
    %c0_7 = arith.constant 0 : index
    %5 = vector.load %arg1[%c0_5, %c0_6, %c0_7] : memref<4x16x16xf32, #tpu.memory_space<vmem>>, vector<1x16x16xf32>
    %6 = vector.shape_cast %5 : vector<1x16x16xf32> to vector<16x16xf32>
    %cst_8 = arith.constant dense<0.000000e+00> : vector<16x16xf32>
    %7 = tpu.matmul %3, %6, %cst_8 {dimension_numbers = #tpu.dot_dimension_numbers<[1], [0], [0], [1], [0, 0, 1, 1], [], []>} : vector<16x16xf32>, vector<16x16xf32>, vector<16x16xf32> -> vector<16x16xf32>
    %8 = arith.mulf %7, %7 : vector<16x16xf32>
    %9 = vector.shape_cast %8 : vector<16x16xf32> to vector<1x16x16xf32>
    %cst_9 = arith.constant dense<0.000000e+00> : vector<1xf32>
    %10 = vector.multi_reduction <add>, %9, %cst_9 [1, 2] : vector<1x16x16xf32> to vector<1xf32>
    %11 = vector.shape_cast %10 : vector<1xf32> to vector<1x1x1xf32>
    %12 = vector.extract %11[0, 0, 0] : f32 from vector<1x1x1xf32>
    %cst_10 = arith.constant 0.000000e+00 : f32
    %13 = arith.addf %cst_10, %12 : f32
    %c0_11 = arith.constant 0 : index
    %c0_12 = arith.constant 0 : index
    %c0_13 = arith.constant 0 : index
    %14 = vector.load %arg2[%c0_11, %c0_12, %c0_13] : memref<4x16x16xf32, #tpu.memory_space<vmem>>, vector<1x16x16xf32>
    %15 = vector.shape_cast %14 : vector<1x16x16xf32> to vector<16x16xf32>
    %cst_14 = arith.constant dense<0.000000e+00> : vector<16x16xf32>
    %16 = tpu.matmul %15, %7, %cst_14 {dimension_numbers = #tpu.dot_dimension_numbers<[1], [0], [0], [1], [0, 0, 1, 1], [], []>} : vector<16x16xf32>, vector<16x16xf32>, vector<16x16xf32> -> vector<16x16xf32>
    %17 = arith.addf %4, %16 : vector<16x16xf32>
    %c1 = arith.constant 1 : index
    %c0_15 = arith.constant 0 : index
    %c0_16 = arith.constant 0 : index
    %18 = vector.load %arg1[%c1, %c0_15, %c0_16] : memref<4x16x16xf32, #tpu.memory_space<vmem>>, vector<1x16x16xf32>
    %19 = vector.shape_cast %18 : vector<1x16x16xf32> to vector<16x16xf32>
    %cst_17 = arith.constant dense<0.000000e+00> : vector<16x16xf32>
    %20 = tpu.matmul %3, %19, %cst_17 {dimension_numbers = #tpu.dot_dimension_numbers<[1], [0], [0], [1], [0, 0, 1, 1], [], []>} : vector<16x16xf32>, vector<16x16xf32>, vector<16x16xf32> -> vector<16x16xf32>
    %21 = arith.mulf %20, %20 : vector<16x16xf32>
    %22 = vector.shape_cast %21 : vector<16x16xf32> to vector<1x16x16xf32>
    %cst_18 = arith.constant dense<0.000000e+00> : vector<1xf32>
    %23 = vector.multi_reduction <add>, %22, %cst_18 [1, 2] : vector<1x16x16xf32> to vector<1xf32>
    %24 = vector.shape_cast %23 : vector<1xf32> to vector<1x1x1xf32>
    %25 = vector.extract %24[0, 0, 0] : f32 from vector<1x1x1xf32>
    %26 = arith.addf %13, %25 : f32
    %c1_19 = arith.constant 1 : index
    %c0_20 = arith.constant 0 : index
    %c0_21 = arith.constant 0 : index
    %27 = vector.load %arg2[%c1_19, %c0_20, %c0_21] : memref<4x16x16xf32, #tpu.memory_space<vmem>>, vector<1x16x16xf32>
    %28 = vector.shape_cast %27 : vector<1x16x16xf32> to vector<16x16xf32>
    %cst_22 = arith.constant dense<0.000000e+00> : vector<16x16xf32>
    %29 = tpu.matmul %28, %20, %cst_22 {dimension_numbers = #tpu.dot_dimension_numbers<[1], [0], [0], [1], [0, 0, 1, 1], [], []>} : vector<16x16xf32>, vector<16x16xf32>, vector<16x16xf32> -> vector<16x16xf32>
    %30 = arith.addf %17, %29 : vector<16x16xf32>
    %c2 = arith.constant 2 : index
    %c0_23 = arith.constant 0 : index
    %c0_24 = arith.constant 0 : index
    %31 = vector.load %arg1[%c2, %c0_23, %c0_24] : memref<4x16x16xf32, #tpu.memory_space<vmem>>, vector<1x16x16xf32>
    %32 = vector.shape_cast %31 : vector<1x16x16xf32> to vector<16x16xf32>
    %cst_25 = arith.constant dense<0.000000e+00> : vector<16x16xf32>
    %33 = tpu.matmul %3, %32, %cst_25 {dimension_numbers = #tpu.dot_dimension_numbers<[1], [0], [0], [1], [0, 0, 1, 1], [], []>} : vector<16x16xf32>, vector<16x16xf32>, vector<16x16xf32> -> vector<16x16xf32>
    %34 = arith.mulf %33, %33 : vector<16x16xf32>
    %35 = vector.shape_cast %34 : vector<16x16xf32> to vector<1x16x16xf32>
    %cst_26 = arith.constant dense<0.000000e+00> : vector<1xf32>
    %36 = vector.multi_reduction <add>, %35, %cst_26 [1, 2] : vector<1x16x16xf32> to vector<1xf32>
    %37 = vector.shape_cast %36 : vector<1xf32> to vector<1x1x1xf32>
    %38 = vector.extract %37[0, 0, 0] : f32 from vector<1x1x1xf32>
    %39 = arith.addf %26, %38 : f32
    %c2_27 = arith.constant 2 : index
    %c0_28 = arith.constant 0 : index
    %c0_29 = arith.constant 0 : index
    %40 = vector.load %arg2[%c2_27, %c0_28, %c0_29] : memref<4x16x16xf32, #tpu.memory_space<vmem>>, vector<1x16x16xf32>
    %41 = vector.shape_cast %40 : vector<1x16x16xf32> to vector<16x16xf32>
    %cst_30 = arith.constant dense<0.000000e+00> : vector<16x16xf32>
    %42 = tpu.matmul %41, %33, %cst_30 {dimension_numbers = #tpu.dot_dimension_numbers<[1], [0], [0], [1], [0, 0, 1, 1], [], []>} : vector<16x16xf32>, vector<16x16xf32>, vector<16x16xf32> -> vector<16x16xf32>
    %43 = arith.addf %30, %42 : vector<16x16xf32>
    %c3 = arith.constant 3 : index
    %c0_31 = arith.constant 0 : index
    %c0_32 = arith.constant 0 : index
    %44 = vector.load %arg1[%c3, %c0_31, %c0_32] : memref<4x16x16xf32, #tpu.memory_space<vmem>>, vector<1x16x16xf32>
    %45 = vector.shape_cast %44 : vector<1x16x16xf32> to vector<16x16xf32>
    %cst_33 = arith.constant dense<0.000000e+00> : vector<16x16xf32>
    %46 = tpu.matmul %3, %45, %cst_33 {dimension_numbers = #tpu.dot_dimension_numbers<[1], [0], [0], [1], [0, 0, 1, 1], [], []>} : vector<16x16xf32>, vector<16x16xf32>, vector<16x16xf32> -> vector<16x16xf32>
    %47 = arith.mulf %46, %46 : vector<16x16xf32>
    %48 = vector.shape_cast %47 : vector<16x16xf32> to vector<1x16x16xf32>
    %cst_34 = arith.constant dense<0.000000e+00> : vector<1xf32>
    %49 = vector.multi_reduction <add>, %48, %cst_34 [1, 2] : vector<1x16x16xf32> to vector<1xf32>
    %50 = vector.shape_cast %49 : vector<1xf32> to vector<1x1x1xf32>
    %51 = vector.extract %50[0, 0, 0] : f32 from vector<1x1x1xf32>
    %52 = arith.addf %39, %51 : f32
    %c3_35 = arith.constant 3 : index
    %c0_36 = arith.constant 0 : index
    %c0_37 = arith.constant 0 : index
    %53 = vector.load %arg2[%c3_35, %c0_36, %c0_37] : memref<4x16x16xf32, #tpu.memory_space<vmem>>, vector<1x16x16xf32>
    %54 = vector.shape_cast %53 : vector<1x16x16xf32> to vector<16x16xf32>
    %cst_38 = arith.constant dense<0.000000e+00> : vector<16x16xf32>
    %55 = tpu.matmul %54, %46, %cst_38 {dimension_numbers = #tpu.dot_dimension_numbers<[1], [0], [0], [1], [0, 0, 1, 1], [], []>} : vector<16x16xf32>, vector<16x16xf32>, vector<16x16xf32> -> vector<16x16xf32>
    %56 = arith.addf %43, %55 : vector<16x16xf32>
    %57 = arith.mulf %56, %56 : vector<16x16xf32>
    %58 = vector.shape_cast %57 : vector<16x16xf32> to vector<1x16x16xf32>
    %cst_39 = arith.constant dense<0.000000e+00> : vector<1xf32>
    %59 = vector.multi_reduction <add>, %58, %cst_39 [1, 2] : vector<1x16x16xf32> to vector<1xf32>
    %60 = vector.shape_cast %59 : vector<1xf32> to vector<1x1x1xf32>
    %61 = vector.extract %60[0, 0, 0] : f32 from vector<1x1x1xf32>
    %cst_40 = arith.constant 0.000000e+00 : f32
    %62 = arith.addf %cst_40, %61 : f32
    %63 = vector.extract_strided_slice %0 {offsets = [16, 0], sizes = [16, 16], strides = [1, 1]} : vector<64x16xf32> to vector<16x16xf32>
    %cst_41 = arith.constant 0.000000e+00 : f32
    %64 = vector.broadcast %cst_41 : f32 to vector<16x16xf32>
    %c0_42 = arith.constant 0 : index
    %c0_43 = arith.constant 0 : index
    %c0_44 = arith.constant 0 : index
    %65 = vector.load %arg1[%c0_42, %c0_43, %c0_44] : memref<4x16x16xf32, #tpu.memory_space<vmem>>, vector<1x16x16xf32>
    %66 = vector.shape_cast %65 : vector<1x16x16xf32> to vector<16x16xf32>
    %cst_45 = arith.constant dense<0.000000e+00> : vector<16x16xf32>
    %67 = tpu.matmul %63, %66, %cst_45 {dimension_numbers = #tpu.dot_dimension_numbers<[1], [0], [0], [1], [0, 0, 1, 1], [], []>} : vector<16x16xf32>, vector<16x16xf32>, vector<16x16xf32> -> vector<16x16xf32>
    %68 = arith.mulf %67, %67 : vector<16x16xf32>
    %69 = vector.shape_cast %68 : vector<16x16xf32> to vector<1x16x16xf32>
    %cst_46 = arith.constant dense<0.000000e+00> : vector<1xf32>
    %70 = vector.multi_reduction <add>, %69, %cst_46 [1, 2] : vector<1x16x16xf32> to vector<1xf32>
    %71 = vector.shape_cast %70 : vector<1xf32> to vector<1x1x1xf32>
    %72 = vector.extract %71[0, 0, 0] : f32 from vector<1x1x1xf32>
    %73 = arith.addf %52, %72 : f32
    %c0_47 = arith.constant 0 : index
    %c0_48 = arith.constant 0 : index
    %c0_49 = arith.constant 0 : index
    %74 = vector.load %arg2[%c0_47, %c0_48, %c0_49] : memref<4x16x16xf32, #tpu.memory_space<vmem>>, vector<1x16x16xf32>
    %75 = vector.shape_cast %74 : vector<1x16x16xf32> to vector<16x16xf32>
    %cst_50 = arith.constant dense<0.000000e+00> : vector<16x16xf32>
    %76 = tpu.matmul %75, %67, %cst_50 {dimension_numbers = #tpu.dot_dimension_numbers<[1], [0], [0], [1], [0, 0, 1, 1], [], []>} : vector<16x16xf32>, vector<16x16xf32>, vector<16x16xf32> -> vector<16x16xf32>
    %77 = arith.addf %64, %76 : vector<16x16xf32>
    %c1_51 = arith.constant 1 : index
    %c0_52 = arith.constant 0 : index
    %c0_53 = arith.constant 0 : index
    %78 = vector.load %arg1[%c1_51, %c0_52, %c0_53] : memref<4x16x16xf32, #tpu.memory_space<vmem>>, vector<1x16x16xf32>
    %79 = vector.shape_cast %78 : vector<1x16x16xf32> to vector<16x16xf32>
    %cst_54 = arith.constant dense<0.000000e+00> : vector<16x16xf32>
    %80 = tpu.matmul %63, %79, %cst_54 {dimension_numbers = #tpu.dot_dimension_numbers<[1], [0], [0], [1], [0, 0, 1, 1], [], []>} : vector<16x16xf32>, vector<16x16xf32>, vector<16x16xf32> -> vector<16x16xf32>
    %81 = arith.mulf %80, %80 : vector<16x16xf32>
    %82 = vector.shape_cast %81 : vector<16x16xf32> to vector<1x16x16xf32>
    %cst_55 = arith.constant dense<0.000000e+00> : vector<1xf32>
    %83 = vector.multi_reduction <add>, %82, %cst_55 [1, 2] : vector<1x16x16xf32> to vector<1xf32>
    %84 = vector.shape_cast %83 : vector<1xf32> to vector<1x1x1xf32>
    %85 = vector.extract %84[0, 0, 0] : f32 from vector<1x1x1xf32>
    %86 = arith.addf %73, %85 : f32
    %c1_56 = arith.constant 1 : index
    %c0_57 = arith.constant 0 : index
    %c0_58 = arith.constant 0 : index
    %87 = vector.load %arg2[%c1_56, %c0_57, %c0_58] : memref<4x16x16xf32, #tpu.memory_space<vmem>>, vector<1x16x16xf32>
    %88 = vector.shape_cast %87 : vector<1x16x16xf32> to vector<16x16xf32>
    %cst_59 = arith.constant dense<0.000000e+00> : vector<16x16xf32>
    %89 = tpu.matmul %88, %80, %cst_59 {dimension_numbers = #tpu.dot_dimension_numbers<[1], [0], [0], [1], [0, 0, 1, 1], [], []>} : vector<16x16xf32>, vector<16x16xf32>, vector<16x16xf32> -> vector<16x16xf32>
    %90 = arith.addf %77, %89 : vector<16x16xf32>
    %c2_60 = arith.constant 2 : index
    %c0_61 = arith.constant 0 : index
    %c0_62 = arith.constant 0 : index
    %91 = vector.load %arg1[%c2_60, %c0_61, %c0_62] : memref<4x16x16xf32, #tpu.memory_space<vmem>>, vector<1x16x16xf32>
    %92 = vector.shape_cast %91 : vector<1x16x16xf32> to vector<16x16xf32>
    %cst_63 = arith.constant dense<0.000000e+00> : vector<16x16xf32>
    %93 = tpu.matmul %63, %92, %cst_63 {dimension_numbers = #tpu.dot_dimension_numbers<[1], [0], [0], [1], [0, 0, 1, 1], [], []>} : vector<16x16xf32>, vector<16x16xf32>, vector<16x16xf32> -> vector<16x16xf32>
    %94 = arith.mulf %93, %93 : vector<16x16xf32>
    %95 = vector.shape_cast %94 : vector<16x16xf32> to vector<1x16x16xf32>
    %cst_64 = arith.constant dense<0.000000e+00> : vector<1xf32>
    %96 = vector.multi_reduction <add>, %95, %cst_64 [1, 2] : vector<1x16x16xf32> to vector<1xf32>
    %97 = vector.shape_cast %96 : vector<1xf32> to vector<1x1x1xf32>
    %98 = vector.extract %97[0, 0, 0] : f32 from vector<1x1x1xf32>
    %99 = arith.addf %86, %98 : f32
    %c2_65 = arith.constant 2 : index
    %c0_66 = arith.constant 0 : index
    %c0_67 = arith.constant 0 : index
    %100 = vector.load %arg2[%c2_65, %c0_66, %c0_67] : memref<4x16x16xf32, #tpu.memory_space<vmem>>, vector<1x16x16xf32>
    %101 = vector.shape_cast %100 : vector<1x16x16xf32> to vector<16x16xf32>
    %cst_68 = arith.constant dense<0.000000e+00> : vector<16x16xf32>
    %102 = tpu.matmul %101, %93, %cst_68 {dimension_numbers = #tpu.dot_dimension_numbers<[1], [0], [0], [1], [0, 0, 1, 1], [], []>} : vector<16x16xf32>, vector<16x16xf32>, vector<16x16xf32> -> vector<16x16xf32>
    %103 = arith.addf %90, %102 : vector<16x16xf32>
    %c3_69 = arith.constant 3 : index
    %c0_70 = arith.constant 0 : index
    %c0_71 = arith.constant 0 : index
    %104 = vector.load %arg1[%c3_69, %c0_70, %c0_71] : memref<4x16x16xf32, #tpu.memory_space<vmem>>, vector<1x16x16xf32>
    %105 = vector.shape_cast %104 : vector<1x16x16xf32> to vector<16x16xf32>
    %cst_72 = arith.constant dense<0.000000e+00> : vector<16x16xf32>
    %106 = tpu.matmul %63, %105, %cst_72 {dimension_numbers = #tpu.dot_dimension_numbers<[1], [0], [0], [1], [0, 0, 1, 1], [], []>} : vector<16x16xf32>, vector<16x16xf32>, vector<16x16xf32> -> vector<16x16xf32>
    %107 = arith.mulf %106, %106 : vector<16x16xf32>
    %108 = vector.shape_cast %107 : vector<16x16xf32> to vector<1x16x16xf32>
    %cst_73 = arith.constant dense<0.000000e+00> : vector<1xf32>
    %109 = vector.multi_reduction <add>, %108, %cst_73 [1, 2] : vector<1x16x16xf32> to vector<1xf32>
    %110 = vector.shape_cast %109 : vector<1xf32> to vector<1x1x1xf32>
    %111 = vector.extract %110[0, 0, 0] : f32 from vector<1x1x1xf32>
    %112 = arith.addf %99, %111 : f32
    %c3_74 = arith.constant 3 : index
    %c0_75 = arith.constant 0 : index
    %c0_76 = arith.constant 0 : index
    %113 = vector.load %arg2[%c3_74, %c0_75, %c0_76] : memref<4x16x16xf32, #tpu.memory_space<vmem>>, vector<1x16x16xf32>
    %114 = vector.shape_cast %113 : vector<1x16x16xf32> to vector<16x16xf32>
    %cst_77 = arith.constant dense<0.000000e+00> : vector<16x16xf32>
    %115 = tpu.matmul %114, %106, %cst_77 {dimension_numbers = #tpu.dot_dimension_numbers<[1], [0], [0], [1], [0, 0, 1, 1], [], []>} : vector<16x16xf32>, vector<16x16xf32>, vector<16x16xf32> -> vector<16x16xf32>
    %116 = arith.addf %103, %115 : vector<16x16xf32>
    %117 = arith.mulf %116, %116 : vector<16x16xf32>
    %118 = vector.shape_cast %117 : vector<16x16xf32> to vector<1x16x16xf32>
    %cst_78 = arith.constant dense<0.000000e+00> : vector<1xf32>
    %119 = vector.multi_reduction <add>, %118, %cst_78 [1, 2] : vector<1x16x16xf32> to vector<1xf32>
    %120 = vector.shape_cast %119 : vector<1xf32> to vector<1x1x1xf32>
    %121 = vector.extract %120[0, 0, 0] : f32 from vector<1x1x1xf32>
    %122 = arith.addf %62, %121 : f32
    %123 = vector.extract_strided_slice %0 {offsets = [32, 0], sizes = [16, 16], strides = [1, 1]} : vector<64x16xf32> to vector<16x16xf32>
    %cst_79 = arith.constant 0.000000e+00 : f32
    %124 = vector.broadcast %cst_79 : f32 to vector<16x16xf32>
    %c0_80 = arith.constant 0 : index
    %c0_81 = arith.constant 0 : index
    %c0_82 = arith.constant 0 : index
    %125 = vector.load %arg1[%c0_80, %c0_81, %c0_82] : memref<4x16x16xf32, #tpu.memory_space<vmem>>, vector<1x16x16xf32>
    %126 = vector.shape_cast %125 : vector<1x16x16xf32> to vector<16x16xf32>
    %cst_83 = arith.constant dense<0.000000e+00> : vector<16x16xf32>
    %127 = tpu.matmul %123, %126, %cst_83 {dimension_numbers = #tpu.dot_dimension_numbers<[1], [0], [0], [1], [0, 0, 1, 1], [], []>} : vector<16x16xf32>, vector<16x16xf32>, vector<16x16xf32> -> vector<16x16xf32>
    %128 = arith.mulf %127, %127 : vector<16x16xf32>
    %129 = vector.shape_cast %128 : vector<16x16xf32> to vector<1x16x16xf32>
    %cst_84 = arith.constant dense<0.000000e+00> : vector<1xf32>
    %130 = vector.multi_reduction <add>, %129, %cst_84 [1, 2] : vector<1x16x16xf32> to vector<1xf32>
    %131 = vector.shape_cast %130 : vector<1xf32> to vector<1x1x1xf32>
    %132 = vector.extract %131[0, 0, 0] : f32 from vector<1x1x1xf32>
    %133 = arith.addf %112, %132 : f32
    %c0_85 = arith.constant 0 : index
    %c0_86 = arith.constant 0 : index
    %c0_87 = arith.constant 0 : index
    %134 = vector.load %arg2[%c0_85, %c0_86, %c0_87] : memref<4x16x16xf32, #tpu.memory_space<vmem>>, vector<1x16x16xf32>
    %135 = vector.shape_cast %134 : vector<1x16x16xf32> to vector<16x16xf32>
    %cst_88 = arith.constant dense<0.000000e+00> : vector<16x16xf32>
    %136 = tpu.matmul %135, %127, %cst_88 {dimension_numbers = #tpu.dot_dimension_numbers<[1], [0], [0], [1], [0, 0, 1, 1], [], []>} : vector<16x16xf32>, vector<16x16xf32>, vector<16x16xf32> -> vector<16x16xf32>
    %137 = arith.addf %124, %136 : vector<16x16xf32>
    %c1_89 = arith.constant 1 : index
    %c0_90 = arith.constant 0 : index
    %c0_91 = arith.constant 0 : index
    %138 = vector.load %arg1[%c1_89, %c0_90, %c0_91] : memref<4x16x16xf32, #tpu.memory_space<vmem>>, vector<1x16x16xf32>
    %139 = vector.shape_cast %138 : vector<1x16x16xf32> to vector<16x16xf32>
    %cst_92 = arith.constant dense<0.000000e+00> : vector<16x16xf32>
    %140 = tpu.matmul %123, %139, %cst_92 {dimension_numbers = #tpu.dot_dimension_numbers<[1], [0], [0], [1], [0, 0, 1, 1], [], []>} : vector<16x16xf32>, vector<16x16xf32>, vector<16x16xf32> -> vector<16x16xf32>
    %141 = arith.mulf %140, %140 : vector<16x16xf32>
    %142 = vector.shape_cast %141 : vector<16x16xf32> to vector<1x16x16xf32>
    %cst_93 = arith.constant dense<0.000000e+00> : vector<1xf32>
    %143 = vector.multi_reduction <add>, %142, %cst_93 [1, 2] : vector<1x16x16xf32> to vector<1xf32>
    %144 = vector.shape_cast %143 : vector<1xf32> to vector<1x1x1xf32>
    %145 = vector.extract %144[0, 0, 0] : f32 from vector<1x1x1xf32>
    %146 = arith.addf %133, %145 : f32
    %c1_94 = arith.constant 1 : index
    %c0_95 = arith.constant 0 : index
    %c0_96 = arith.constant 0 : index
    %147 = vector.load %arg2[%c1_94, %c0_95, %c0_96] : memref<4x16x16xf32, #tpu.memory_space<vmem>>, vector<1x16x16xf32>
    %148 = vector.shape_cast %147 : vector<1x16x16xf32> to vector<16x16xf32>
    %cst_97 = arith.constant dense<0.000000e+00> : vector<16x16xf32>
    %149 = tpu.matmul %148, %140, %cst_97 {dimension_numbers = #tpu.dot_dimension_numbers<[1], [0], [0], [1], [0, 0, 1, 1], [], []>} : vector<16x16xf32>, vector<16x16xf32>, vector<16x16xf32> -> vector<16x16xf32>
    %150 = arith.addf %137, %149 : vector<16x16xf32>
    %c2_98 = arith.constant 2 : index
    %c0_99 = arith.constant 0 : index
    %c0_100 = arith.constant 0 : index
    %151 = vector.load %arg1[%c2_98, %c0_99, %c0_100] : memref<4x16x16xf32, #tpu.memory_space<vmem>>, vector<1x16x16xf32>
    %152 = vector.shape_cast %151 : vector<1x16x16xf32> to vector<16x16xf32>
    %cst_101 = arith.constant dense<0.000000e+00> : vector<16x16xf32>
    %153 = tpu.matmul %123, %152, %cst_101 {dimension_numbers = #tpu.dot_dimension_numbers<[1], [0], [0], [1], [0, 0, 1, 1], [], []>} : vector<16x16xf32>, vector<16x16xf32>, vector<16x16xf32> -> vector<16x16xf32>
    %154 = arith.mulf %153, %153 : vector<16x16xf32>
    %155 = vector.shape_cast %154 : vector<16x16xf32> to vector<1x16x16xf32>
    %cst_102 = arith.constant dense<0.000000e+00> : vector<1xf32>
    %156 = vector.multi_reduction <add>, %155, %cst_102 [1, 2] : vector<1x16x16xf32> to vector<1xf32>
    %157 = vector.shape_cast %156 : vector<1xf32> to vector<1x1x1xf32>
    %158 = vector.extract %157[0, 0, 0] : f32 from vector<1x1x1xf32>
    %159 = arith.addf %146, %158 : f32
    %c2_103 = arith.constant 2 : index
    %c0_104 = arith.constant 0 : index
    %c0_105 = arith.constant 0 : index
    %160 = vector.load %arg2[%c2_103, %c0_104, %c0_105] : memref<4x16x16xf32, #tpu.memory_space<vmem>>, vector<1x16x16xf32>
    %161 = vector.shape_cast %160 : vector<1x16x16xf32> to vector<16x16xf32>
    %cst_106 = arith.constant dense<0.000000e+00> : vector<16x16xf32>
    %162 = tpu.matmul %161, %153, %cst_106 {dimension_numbers = #tpu.dot_dimension_numbers<[1], [0], [0], [1], [0, 0, 1, 1], [], []>} : vector<16x16xf32>, vector<16x16xf32>, vector<16x16xf32> -> vector<16x16xf32>
    %163 = arith.addf %150, %162 : vector<16x16xf32>
    %c3_107 = arith.constant 3 : index
    %c0_108 = arith.constant 0 : index
    %c0_109 = arith.constant 0 : index
    %164 = vector.load %arg1[%c3_107, %c0_108, %c0_109] : memref<4x16x16xf32, #tpu.memory_space<vmem>>, vector<1x16x16xf32>
    %165 = vector.shape_cast %164 : vector<1x16x16xf32> to vector<16x16xf32>
    %cst_110 = arith.constant dense<0.000000e+00> : vector<16x16xf32>
    %166 = tpu.matmul %123, %165, %cst_110 {dimension_numbers = #tpu.dot_dimension_numbers<[1], [0], [0], [1], [0, 0, 1, 1], [], []>} : vector<16x16xf32>, vector<16x16xf32>, vector<16x16xf32> -> vector<16x16xf32>
    %167 = arith.mulf %166, %166 : vector<16x16xf32>
    %168 = vector.shape_cast %167 : vector<16x16xf32> to vector<1x16x16xf32>
    %cst_111 = arith.constant dense<0.000000e+00> : vector<1xf32>
    %169 = vector.multi_reduction <add>, %168, %cst_111 [1, 2] : vector<1x16x16xf32> to vector<1xf32>
    %170 = vector.shape_cast %169 : vector<1xf32> to vector<1x1x1xf32>
    %171 = vector.extract %170[0, 0, 0] : f32 from vector<1x1x1xf32>
    %172 = arith.addf %159, %171 : f32
    %c3_112 = arith.constant 3 : index
    %c0_113 = arith.constant 0 : index
    %c0_114 = arith.constant 0 : index
    %173 = vector.load %arg2[%c3_112, %c0_113, %c0_114] : memref<4x16x16xf32, #tpu.memory_space<vmem>>, vector<1x16x16xf32>
    %174 = vector.shape_cast %173 : vector<1x16x16xf32> to vector<16x16xf32>
    %cst_115 = arith.constant dense<0.000000e+00> : vector<16x16xf32>
    %175 = tpu.matmul %174, %166, %cst_115 {dimension_numbers = #tpu.dot_dimension_numbers<[1], [0], [0], [1], [0, 0, 1, 1], [], []>} : vector<16x16xf32>, vector<16x16xf32>, vector<16x16xf32> -> vector<16x16xf32>
    %176 = arith.addf %163, %175 : vector<16x16xf32>
    %177 = arith.mulf %176, %176 : vector<16x16xf32>
    %178 = vector.shape_cast %177 : vector<16x16xf32> to vector<1x16x16xf32>
    %cst_116 = arith.constant dense<0.000000e+00> : vector<1xf32>
    %179 = vector.multi_reduction <add>, %178, %cst_116 [1, 2] : vector<1x16x16xf32> to vector<1xf32>
    %180 = vector.shape_cast %179 : vector<1xf32> to vector<1x1x1xf32>
    %181 = vector.extract %180[0, 0, 0] : f32 from vector<1x1x1xf32>
    %182 = arith.addf %122, %181 : f32
    %183 = vector.extract_strided_slice %0 {offsets = [48, 0], sizes = [16, 16], strides = [1, 1]} : vector<64x16xf32> to vector<16x16xf32>
    %cst_117 = arith.constant 0.000000e+00 : f32
    %184 = vector.broadcast %cst_117 : f32 to vector<16x16xf32>
    %c0_118 = arith.constant 0 : index
    %c0_119 = arith.constant 0 : index
    %c0_120 = arith.constant 0 : index
    %185 = vector.load %arg1[%c0_118, %c0_119, %c0_120] : memref<4x16x16xf32, #tpu.memory_space<vmem>>, vector<1x16x16xf32>
    %186 = vector.shape_cast %185 : vector<1x16x16xf32> to vector<16x16xf32>
    %cst_121 = arith.constant dense<0.000000e+00> : vector<16x16xf32>
    %187 = tpu.matmul %183, %186, %cst_121 {dimension_numbers = #tpu.dot_dimension_numbers<[1], [0], [0], [1], [0, 0, 1, 1], [], []>} : vector<16x16xf32>, vector<16x16xf32>, vector<16x16xf32> -> vector<16x16xf32>
    %188 = arith.mulf %187, %187 : vector<16x16xf32>
    %189 = vector.shape_cast %188 : vector<16x16xf32> to vector<1x16x16xf32>
    %cst_122 = arith.constant dense<0.000000e+00> : vector<1xf32>
    %190 = vector.multi_reduction <add>, %189, %cst_122 [1, 2] : vector<1x16x16xf32> to vector<1xf32>
    %191 = vector.shape_cast %190 : vector<1xf32> to vector<1x1x1xf32>
    %192 = vector.extract %191[0, 0, 0] : f32 from vector<1x1x1xf32>
    %193 = arith.addf %172, %192 : f32
    %c0_123 = arith.constant 0 : index
    %c0_124 = arith.constant 0 : index
    %c0_125 = arith.constant 0 : index
    %194 = vector.load %arg2[%c0_123, %c0_124, %c0_125] : memref<4x16x16xf32, #tpu.memory_space<vmem>>, vector<1x16x16xf32>
    %195 = vector.shape_cast %194 : vector<1x16x16xf32> to vector<16x16xf32>
    %cst_126 = arith.constant dense<0.000000e+00> : vector<16x16xf32>
    %196 = tpu.matmul %195, %187, %cst_126 {dimension_numbers = #tpu.dot_dimension_numbers<[1], [0], [0], [1], [0, 0, 1, 1], [], []>} : vector<16x16xf32>, vector<16x16xf32>, vector<16x16xf32> -> vector<16x16xf32>
    %197 = arith.addf %184, %196 : vector<16x16xf32>
    %c1_127 = arith.constant 1 : index
    %c0_128 = arith.constant 0 : index
    %c0_129 = arith.constant 0 : index
    %198 = vector.load %arg1[%c1_127, %c0_128, %c0_129] : memref<4x16x16xf32, #tpu.memory_space<vmem>>, vector<1x16x16xf32>
    %199 = vector.shape_cast %198 : vector<1x16x16xf32> to vector<16x16xf32>
    %cst_130 = arith.constant dense<0.000000e+00> : vector<16x16xf32>
    %200 = tpu.matmul %183, %199, %cst_130 {dimension_numbers = #tpu.dot_dimension_numbers<[1], [0], [0], [1], [0, 0, 1, 1], [], []>} : vector<16x16xf32>, vector<16x16xf32>, vector<16x16xf32> -> vector<16x16xf32>
    %201 = arith.mulf %200, %200 : vector<16x16xf32>
    %202 = vector.shape_cast %201 : vector<16x16xf32> to vector<1x16x16xf32>
    %cst_131 = arith.constant dense<0.000000e+00> : vector<1xf32>
    %203 = vector.multi_reduction <add>, %202, %cst_131 [1, 2] : vector<1x16x16xf32> to vector<1xf32>
    %204 = vector.shape_cast %203 : vector<1xf32> to vector<1x1x1xf32>
    %205 = vector.extract %204[0, 0, 0] : f32 from vector<1x1x1xf32>
    %206 = arith.addf %193, %205 : f32
    %c1_132 = arith.constant 1 : index
    %c0_133 = arith.constant 0 : index
    %c0_134 = arith.constant 0 : index
    %207 = vector.load %arg2[%c1_132, %c0_133, %c0_134] : memref<4x16x16xf32, #tpu.memory_space<vmem>>, vector<1x16x16xf32>
    %208 = vector.shape_cast %207 : vector<1x16x16xf32> to vector<16x16xf32>
    %cst_135 = arith.constant dense<0.000000e+00> : vector<16x16xf32>
    %209 = tpu.matmul %208, %200, %cst_135 {dimension_numbers = #tpu.dot_dimension_numbers<[1], [0], [0], [1], [0, 0, 1, 1], [], []>} : vector<16x16xf32>, vector<16x16xf32>, vector<16x16xf32> -> vector<16x16xf32>
    %210 = arith.addf %197, %209 : vector<16x16xf32>
    %c2_136 = arith.constant 2 : index
    %c0_137 = arith.constant 0 : index
    %c0_138 = arith.constant 0 : index
    %211 = vector.load %arg1[%c2_136, %c0_137, %c0_138] : memref<4x16x16xf32, #tpu.memory_space<vmem>>, vector<1x16x16xf32>
    %212 = vector.shape_cast %211 : vector<1x16x16xf32> to vector<16x16xf32>
    %cst_139 = arith.constant dense<0.000000e+00> : vector<16x16xf32>
    %213 = tpu.matmul %183, %212, %cst_139 {dimension_numbers = #tpu.dot_dimension_numbers<[1], [0], [0], [1], [0, 0, 1, 1], [], []>} : vector<16x16xf32>, vector<16x16xf32>, vector<16x16xf32> -> vector<16x16xf32>
    %214 = arith.mulf %213, %213 : vector<16x16xf32>
    %215 = vector.shape_cast %214 : vector<16x16xf32> to vector<1x16x16xf32>
    %cst_140 = arith.constant dense<0.000000e+00> : vector<1xf32>
    %216 = vector.multi_reduction <add>, %215, %cst_140 [1, 2] : vector<1x16x16xf32> to vector<1xf32>
    %217 = vector.shape_cast %216 : vector<1xf32> to vector<1x1x1xf32>
    %218 = vector.extract %217[0, 0, 0] : f32 from vector<1x1x1xf32>
    %219 = arith.addf %206, %218 : f32
    %c2_141 = arith.constant 2 : index
    %c0_142 = arith.constant 0 : index
    %c0_143 = arith.constant 0 : index
    %220 = vector.load %arg2[%c2_141, %c0_142, %c0_143] : memref<4x16x16xf32, #tpu.memory_space<vmem>>, vector<1x16x16xf32>
    %221 = vector.shape_cast %220 : vector<1x16x16xf32> to vector<16x16xf32>
    %cst_144 = arith.constant dense<0.000000e+00> : vector<16x16xf32>
    %222 = tpu.matmul %221, %213, %cst_144 {dimension_numbers = #tpu.dot_dimension_numbers<[1], [0], [0], [1], [0, 0, 1, 1], [], []>} : vector<16x16xf32>, vector<16x16xf32>, vector<16x16xf32> -> vector<16x16xf32>
    %223 = arith.addf %210, %222 : vector<16x16xf32>
    %c3_145 = arith.constant 3 : index
    %c0_146 = arith.constant 0 : index
    %c0_147 = arith.constant 0 : index
    %224 = vector.load %arg1[%c3_145, %c0_146, %c0_147] : memref<4x16x16xf32, #tpu.memory_space<vmem>>, vector<1x16x16xf32>
    %225 = vector.shape_cast %224 : vector<1x16x16xf32> to vector<16x16xf32>
    %cst_148 = arith.constant dense<0.000000e+00> : vector<16x16xf32>
    %226 = tpu.matmul %183, %225, %cst_148 {dimension_numbers = #tpu.dot_dimension_numbers<[1], [0], [0], [1], [0, 0, 1, 1], [], []>} : vector<16x16xf32>, vector<16x16xf32>, vector<16x16xf32> -> vector<16x16xf32>
    %227 = arith.mulf %226, %226 : vector<16x16xf32>
    %228 = vector.shape_cast %227 : vector<16x16xf32> to vector<1x16x16xf32>
    %cst_149 = arith.constant dense<0.000000e+00> : vector<1xf32>
    %229 = vector.multi_reduction <add>, %228, %cst_149 [1, 2] : vector<1x16x16xf32> to vector<1xf32>
    %230 = vector.shape_cast %229 : vector<1xf32> to vector<1x1x1xf32>
    %231 = vector.extract %230[0, 0, 0] : f32 from vector<1x1x1xf32>
    %232 = arith.addf %219, %231 : f32
    %c3_150 = arith.constant 3 : index
    %c0_151 = arith.constant 0 : index
    %c0_152 = arith.constant 0 : index
    %233 = vector.load %arg2[%c3_150, %c0_151, %c0_152] : memref<4x16x16xf32, #tpu.memory_space<vmem>>, vector<1x16x16xf32>
    %234 = vector.shape_cast %233 : vector<1x16x16xf32> to vector<16x16xf32>
    %cst_153 = arith.constant dense<0.000000e+00> : vector<16x16xf32>
    %235 = tpu.matmul %234, %226, %cst_153 {dimension_numbers = #tpu.dot_dimension_numbers<[1], [0], [0], [1], [0, 0, 1, 1], [], []>} : vector<16x16xf32>, vector<16x16xf32>, vector<16x16xf32> -> vector<16x16xf32>
    %236 = arith.addf %223, %235 : vector<16x16xf32>
    %237 = arith.mulf %236, %236 : vector<16x16xf32>
    %238 = vector.shape_cast %237 : vector<16x16xf32> to vector<1x16x16xf32>
    %cst_154 = arith.constant dense<0.000000e+00> : vector<1xf32>
    %239 = vector.multi_reduction <add>, %238, %cst_154 [1, 2] : vector<1x16x16xf32> to vector<1xf32>
    %240 = vector.shape_cast %239 : vector<1xf32> to vector<1x1x1xf32>
    %241 = vector.extract %240[0, 0, 0] : f32 from vector<1x1x1xf32>
    %242 = arith.addf %182, %241 : f32
    %cst_155 = arith.constant 9.99999968E-21 : f32
    %243 = arith.addf %232, %cst_155 : f32
    %244 = math.rsqrt %243 : f32
    %cst_156 = arith.constant 9.99999968E-21 : f32
    %245 = arith.addf %242, %cst_156 : f32
    %246 = math.rsqrt %245 : f32
    %247 = arith.mulf %244, %246 : f32
    %cst_157 = arith.constant 0.000000e+00 : f32
    %248 = vector.broadcast %cst_157 : f32 to vector<16x16xf32>
    %cst_158 = arith.constant 0.000000e+00 : f32
    %249 = vector.broadcast %cst_158 : f32 to vector<16x16xf32>
    %cst_159 = arith.constant 0.000000e+00 : f32
    %250 = vector.broadcast %cst_159 : f32 to vector<16x16xf32>
    %cst_160 = arith.constant 0.000000e+00 : f32
    %251 = vector.broadcast %cst_160 : f32 to vector<16x16xf32>
    %252 = vector.extract_strided_slice %0 {offsets = [0, 0], sizes = [16, 16], strides = [1, 1]} : vector<64x16xf32> to vector<16x16xf32>
    %253 = tpu.transpose %56, [1, 0] : vector<16x16xf32> -> vector<16x16xf32>
    %c0_161 = arith.constant 0 : index
    %c0_162 = arith.constant 0 : index
    %c0_163 = arith.constant 0 : index
    %254 = vector.load %arg1[%c0_161, %c0_162, %c0_163] : memref<4x16x16xf32, #tpu.memory_space<vmem>>, vector<1x16x16xf32>
    %255 = vector.shape_cast %254 : vector<1x16x16xf32> to vector<16x16xf32>
    %cst_164 = arith.constant dense<0.000000e+00> : vector<16x16xf32>
    %256 = tpu.matmul %252, %255, %cst_164 {dimension_numbers = #tpu.dot_dimension_numbers<[1], [0], [0], [1], [0, 0, 1, 1], [], []>} : vector<16x16xf32>, vector<16x16xf32>, vector<16x16xf32> -> vector<16x16xf32>
    %cst_165 = arith.constant dense<0.000000e+00> : vector<16x16xf32>
    %257 = tpu.matmul %256, %253, %cst_165 {dimension_numbers = #tpu.dot_dimension_numbers<[1], [0], [0], [1], [0, 0, 1, 1], [], []>} : vector<16x16xf32>, vector<16x16xf32>, vector<16x16xf32> -> vector<16x16xf32>
    %258 = vector.broadcast %247 : f32 to vector<16x16xf32>
    %259 = arith.mulf %257, %258 : vector<16x16xf32>
    %260 = vector.broadcast %1 : vector<1x16xf32> to vector<16x16xf32>
    %261 = arith.mulf %256, %260 : vector<16x16xf32>
    %cst_166 = arith.constant dense<0.000000e+00> : vector<16xf32>
    %262 = vector.multi_reduction <add>, %261, %cst_166 [1] : vector<16x16xf32> to vector<16xf32>
    %263 = vector.shape_cast %262 : vector<16xf32> to vector<16x1xf32>
    %264 = vector.broadcast %244 : f32 to vector<16x1xf32>
    %265 = arith.mulf %263, %264 : vector<16x1xf32>
    %266 = arith.negf %265 : vector<16x1xf32>
    %267 = math.exp %266 : vector<16x1xf32>
    %cst_167 = arith.constant 1.000000e+00 : f32
    %268 = vector.broadcast %cst_167 : f32 to vector<16x1xf32>
    %269 = arith.addf %268, %267 : vector<16x1xf32>
    %270 = arith.divf %268, %269 : vector<16x1xf32>
    %271 = vector.broadcast %2 : vector<1x16xf32> to vector<16x16xf32>
    %272 = arith.mulf %256, %271 : vector<16x16xf32>
    %cst_168 = arith.constant dense<0.000000e+00> : vector<16xf32>
    %273 = vector.multi_reduction <add>, %272, %cst_168 [1] : vector<16x16xf32> to vector<16xf32>
    %274 = vector.shape_cast %273 : vector<16xf32> to vector<16x1xf32>
    %275 = vector.broadcast %244 : f32 to vector<16x1xf32>
    %276 = arith.mulf %274, %275 : vector<16x1xf32>
    %277 = arith.negf %276 : vector<16x1xf32>
    %278 = math.exp %277 : vector<16x1xf32>
    %cst_169 = arith.constant 1.000000e+00 : f32
    %279 = vector.broadcast %cst_169 : f32 to vector<16x1xf32>
    %280 = arith.addf %279, %278 : vector<16x1xf32>
    %281 = arith.divf %279, %280 : vector<16x1xf32>
    %282 = vector.broadcast %270 : vector<16x1xf32> to vector<16x16xf32>
    %283 = arith.addf %259, %282 : vector<16x16xf32>
    %284 = arith.mulf %283, %283 : vector<16x16xf32>
    %cst_170 = arith.constant -1.000000e+01 : f32
    %285 = vector.broadcast %cst_170 : f32 to vector<16x1xf32>
    %286 = arith.divf %285, %281 : vector<16x1xf32>
    %287 = vector.broadcast %286 : vector<16x1xf32> to vector<16x16xf32>
    %288 = arith.mulf %284, %287 : vector<16x16xf32>
    %289 = math.exp %288 : vector<16x16xf32>
    %cst_171 = arith.constant 4.000000e+00 : f32
    %290 = vector.broadcast %cst_171 : f32 to vector<16x16xf32>
    %291 = arith.mulf %289, %290 : vector<16x16xf32>
    %cst_172 = arith.constant dense<0xFF800000> : vector<16xf32>
    %292 = vector.multi_reduction <maximumf>, %291, %cst_172 [1] : vector<16x16xf32> to vector<16xf32>
    %293 = vector.shape_cast %292 : vector<16xf32> to vector<16x1xf32>
    %294 = vector.broadcast %293 : vector<16x1xf32> to vector<16x16xf32>
    %295 = arith.subf %291, %294 : vector<16x16xf32>
    %296 = math.exp %295 : vector<16x16xf32>
    %cst_173 = arith.constant dense<0.000000e+00> : vector<16xf32>
    %297 = vector.multi_reduction <add>, %296, %cst_173 [1] : vector<16x16xf32> to vector<16xf32>
    %298 = vector.shape_cast %297 : vector<16xf32> to vector<16x1xf32>
    %cst_174 = arith.constant 1.000000e+00 : f32
    %299 = vector.broadcast %cst_174 : f32 to vector<16x1xf32>
    %300 = arith.divf %299, %298 : vector<16x1xf32>
    %301 = vector.broadcast %300 : vector<16x1xf32> to vector<16x16xf32>
    %302 = arith.mulf %296, %301 : vector<16x16xf32>
    %303 = arith.addf %248, %302 : vector<16x16xf32>
    %c1_175 = arith.constant 1 : index
    %c0_176 = arith.constant 0 : index
    %c0_177 = arith.constant 0 : index
    %304 = vector.load %arg1[%c1_175, %c0_176, %c0_177] : memref<4x16x16xf32, #tpu.memory_space<vmem>>, vector<1x16x16xf32>
    %305 = vector.shape_cast %304 : vector<1x16x16xf32> to vector<16x16xf32>
    %cst_178 = arith.constant dense<0.000000e+00> : vector<16x16xf32>
    %306 = tpu.matmul %252, %305, %cst_178 {dimension_numbers = #tpu.dot_dimension_numbers<[1], [0], [0], [1], [0, 0, 1, 1], [], []>} : vector<16x16xf32>, vector<16x16xf32>, vector<16x16xf32> -> vector<16x16xf32>
    %cst_179 = arith.constant dense<0.000000e+00> : vector<16x16xf32>
    %307 = tpu.matmul %306, %253, %cst_179 {dimension_numbers = #tpu.dot_dimension_numbers<[1], [0], [0], [1], [0, 0, 1, 1], [], []>} : vector<16x16xf32>, vector<16x16xf32>, vector<16x16xf32> -> vector<16x16xf32>
    %308 = vector.broadcast %247 : f32 to vector<16x16xf32>
    %309 = arith.mulf %307, %308 : vector<16x16xf32>
    %310 = vector.broadcast %1 : vector<1x16xf32> to vector<16x16xf32>
    %311 = arith.mulf %306, %310 : vector<16x16xf32>
    %cst_180 = arith.constant dense<0.000000e+00> : vector<16xf32>
    %312 = vector.multi_reduction <add>, %311, %cst_180 [1] : vector<16x16xf32> to vector<16xf32>
    %313 = vector.shape_cast %312 : vector<16xf32> to vector<16x1xf32>
    %314 = vector.broadcast %244 : f32 to vector<16x1xf32>
    %315 = arith.mulf %313, %314 : vector<16x1xf32>
    %316 = arith.negf %315 : vector<16x1xf32>
    %317 = math.exp %316 : vector<16x1xf32>
    %cst_181 = arith.constant 1.000000e+00 : f32
    %318 = vector.broadcast %cst_181 : f32 to vector<16x1xf32>
    %319 = arith.addf %318, %317 : vector<16x1xf32>
    %320 = arith.divf %318, %319 : vector<16x1xf32>
    %321 = vector.broadcast %2 : vector<1x16xf32> to vector<16x16xf32>
    %322 = arith.mulf %306, %321 : vector<16x16xf32>
    %cst_182 = arith.constant dense<0.000000e+00> : vector<16xf32>
    %323 = vector.multi_reduction <add>, %322, %cst_182 [1] : vector<16x16xf32> to vector<16xf32>
    %324 = vector.shape_cast %323 : vector<16xf32> to vector<16x1xf32>
    %325 = vector.broadcast %244 : f32 to vector<16x1xf32>
    %326 = arith.mulf %324, %325 : vector<16x1xf32>
    %327 = arith.negf %326 : vector<16x1xf32>
    %328 = math.exp %327 : vector<16x1xf32>
    %cst_183 = arith.constant 1.000000e+00 : f32
    %329 = vector.broadcast %cst_183 : f32 to vector<16x1xf32>
    %330 = arith.addf %329, %328 : vector<16x1xf32>
    %331 = arith.divf %329, %330 : vector<16x1xf32>
    %332 = vector.broadcast %320 : vector<16x1xf32> to vector<16x16xf32>
    %333 = arith.addf %309, %332 : vector<16x16xf32>
    %334 = arith.mulf %333, %333 : vector<16x16xf32>
    %cst_184 = arith.constant -1.000000e+01 : f32
    %335 = vector.broadcast %cst_184 : f32 to vector<16x1xf32>
    %336 = arith.divf %335, %331 : vector<16x1xf32>
    %337 = vector.broadcast %336 : vector<16x1xf32> to vector<16x16xf32>
    %338 = arith.mulf %334, %337 : vector<16x16xf32>
    %339 = math.exp %338 : vector<16x16xf32>
    %cst_185 = arith.constant 4.000000e+00 : f32
    %340 = vector.broadcast %cst_185 : f32 to vector<16x16xf32>
    %341 = arith.mulf %339, %340 : vector<16x16xf32>
    %cst_186 = arith.constant dense<0xFF800000> : vector<16xf32>
    %342 = vector.multi_reduction <maximumf>, %341, %cst_186 [1] : vector<16x16xf32> to vector<16xf32>
    %343 = vector.shape_cast %342 : vector<16xf32> to vector<16x1xf32>
    %344 = vector.broadcast %343 : vector<16x1xf32> to vector<16x16xf32>
    %345 = arith.subf %341, %344 : vector<16x16xf32>
    %346 = math.exp %345 : vector<16x16xf32>
    %cst_187 = arith.constant dense<0.000000e+00> : vector<16xf32>
    %347 = vector.multi_reduction <add>, %346, %cst_187 [1] : vector<16x16xf32> to vector<16xf32>
    %348 = vector.shape_cast %347 : vector<16xf32> to vector<16x1xf32>
    %cst_188 = arith.constant 1.000000e+00 : f32
    %349 = vector.broadcast %cst_188 : f32 to vector<16x1xf32>
    %350 = arith.divf %349, %348 : vector<16x1xf32>
    %351 = vector.broadcast %350 : vector<16x1xf32> to vector<16x16xf32>
    %352 = arith.mulf %346, %351 : vector<16x16xf32>
    %353 = arith.addf %249, %352 : vector<16x16xf32>
    %c2_189 = arith.constant 2 : index
    %c0_190 = arith.constant 0 : index
    %c0_191 = arith.constant 0 : index
    %354 = vector.load %arg1[%c2_189, %c0_190, %c0_191] : memref<4x16x16xf32, #tpu.memory_space<vmem>>, vector<1x16x16xf32>
    %355 = vector.shape_cast %354 : vector<1x16x16xf32> to vector<16x16xf32>
    %cst_192 = arith.constant dense<0.000000e+00> : vector<16x16xf32>
    %356 = tpu.matmul %252, %355, %cst_192 {dimension_numbers = #tpu.dot_dimension_numbers<[1], [0], [0], [1], [0, 0, 1, 1], [], []>} : vector<16x16xf32>, vector<16x16xf32>, vector<16x16xf32> -> vector<16x16xf32>
    %cst_193 = arith.constant dense<0.000000e+00> : vector<16x16xf32>
    %357 = tpu.matmul %356, %253, %cst_193 {dimension_numbers = #tpu.dot_dimension_numbers<[1], [0], [0], [1], [0, 0, 1, 1], [], []>} : vector<16x16xf32>, vector<16x16xf32>, vector<16x16xf32> -> vector<16x16xf32>
    %358 = vector.broadcast %247 : f32 to vector<16x16xf32>
    %359 = arith.mulf %357, %358 : vector<16x16xf32>
    %360 = vector.broadcast %1 : vector<1x16xf32> to vector<16x16xf32>
    %361 = arith.mulf %356, %360 : vector<16x16xf32>
    %cst_194 = arith.constant dense<0.000000e+00> : vector<16xf32>
    %362 = vector.multi_reduction <add>, %361, %cst_194 [1] : vector<16x16xf32> to vector<16xf32>
    %363 = vector.shape_cast %362 : vector<16xf32> to vector<16x1xf32>
    %364 = vector.broadcast %244 : f32 to vector<16x1xf32>
    %365 = arith.mulf %363, %364 : vector<16x1xf32>
    %366 = arith.negf %365 : vector<16x1xf32>
    %367 = math.exp %366 : vector<16x1xf32>
    %cst_195 = arith.constant 1.000000e+00 : f32
    %368 = vector.broadcast %cst_195 : f32 to vector<16x1xf32>
    %369 = arith.addf %368, %367 : vector<16x1xf32>
    %370 = arith.divf %368, %369 : vector<16x1xf32>
    %371 = vector.broadcast %2 : vector<1x16xf32> to vector<16x16xf32>
    %372 = arith.mulf %356, %371 : vector<16x16xf32>
    %cst_196 = arith.constant dense<0.000000e+00> : vector<16xf32>
    %373 = vector.multi_reduction <add>, %372, %cst_196 [1] : vector<16x16xf32> to vector<16xf32>
    %374 = vector.shape_cast %373 : vector<16xf32> to vector<16x1xf32>
    %375 = vector.broadcast %244 : f32 to vector<16x1xf32>
    %376 = arith.mulf %374, %375 : vector<16x1xf32>
    %377 = arith.negf %376 : vector<16x1xf32>
    %378 = math.exp %377 : vector<16x1xf32>
    %cst_197 = arith.constant 1.000000e+00 : f32
    %379 = vector.broadcast %cst_197 : f32 to vector<16x1xf32>
    %380 = arith.addf %379, %378 : vector<16x1xf32>
    %381 = arith.divf %379, %380 : vector<16x1xf32>
    %382 = vector.broadcast %370 : vector<16x1xf32> to vector<16x16xf32>
    %383 = arith.addf %359, %382 : vector<16x16xf32>
    %384 = arith.mulf %383, %383 : vector<16x16xf32>
    %cst_198 = arith.constant -1.000000e+01 : f32
    %385 = vector.broadcast %cst_198 : f32 to vector<16x1xf32>
    %386 = arith.divf %385, %381 : vector<16x1xf32>
    %387 = vector.broadcast %386 : vector<16x1xf32> to vector<16x16xf32>
    %388 = arith.mulf %384, %387 : vector<16x16xf32>
    %389 = math.exp %388 : vector<16x16xf32>
    %cst_199 = arith.constant 4.000000e+00 : f32
    %390 = vector.broadcast %cst_199 : f32 to vector<16x16xf32>
    %391 = arith.mulf %389, %390 : vector<16x16xf32>
    %cst_200 = arith.constant dense<0xFF800000> : vector<16xf32>
    %392 = vector.multi_reduction <maximumf>, %391, %cst_200 [1] : vector<16x16xf32> to vector<16xf32>
    %393 = vector.shape_cast %392 : vector<16xf32> to vector<16x1xf32>
    %394 = vector.broadcast %393 : vector<16x1xf32> to vector<16x16xf32>
    %395 = arith.subf %391, %394 : vector<16x16xf32>
    %396 = math.exp %395 : vector<16x16xf32>
    %cst_201 = arith.constant dense<0.000000e+00> : vector<16xf32>
    %397 = vector.multi_reduction <add>, %396, %cst_201 [1] : vector<16x16xf32> to vector<16xf32>
    %398 = vector.shape_cast %397 : vector<16xf32> to vector<16x1xf32>
    %cst_202 = arith.constant 1.000000e+00 : f32
    %399 = vector.broadcast %cst_202 : f32 to vector<16x1xf32>
    %400 = arith.divf %399, %398 : vector<16x1xf32>
    %401 = vector.broadcast %400 : vector<16x1xf32> to vector<16x16xf32>
    %402 = arith.mulf %396, %401 : vector<16x16xf32>
    %403 = arith.addf %250, %402 : vector<16x16xf32>
    %c3_203 = arith.constant 3 : index
    %c0_204 = arith.constant 0 : index
    %c0_205 = arith.constant 0 : index
    %404 = vector.load %arg1[%c3_203, %c0_204, %c0_205] : memref<4x16x16xf32, #tpu.memory_space<vmem>>, vector<1x16x16xf32>
    %405 = vector.shape_cast %404 : vector<1x16x16xf32> to vector<16x16xf32>
    %cst_206 = arith.constant dense<0.000000e+00> : vector<16x16xf32>
    %406 = tpu.matmul %252, %405, %cst_206 {dimension_numbers = #tpu.dot_dimension_numbers<[1], [0], [0], [1], [0, 0, 1, 1], [], []>} : vector<16x16xf32>, vector<16x16xf32>, vector<16x16xf32> -> vector<16x16xf32>
    %cst_207 = arith.constant dense<0.000000e+00> : vector<16x16xf32>
    %407 = tpu.matmul %406, %253, %cst_207 {dimension_numbers = #tpu.dot_dimension_numbers<[1], [0], [0], [1], [0, 0, 1, 1], [], []>} : vector<16x16xf32>, vector<16x16xf32>, vector<16x16xf32> -> vector<16x16xf32>
    %408 = vector.broadcast %247 : f32 to vector<16x16xf32>
    %409 = arith.mulf %407, %408 : vector<16x16xf32>
    %410 = vector.broadcast %1 : vector<1x16xf32> to vector<16x16xf32>
    %411 = arith.mulf %406, %410 : vector<16x16xf32>
    %cst_208 = arith.constant dense<0.000000e+00> : vector<16xf32>
    %412 = vector.multi_reduction <add>, %411, %cst_208 [1] : vector<16x16xf32> to vector<16xf32>
    %413 = vector.shape_cast %412 : vector<16xf32> to vector<16x1xf32>
    %414 = vector.broadcast %244 : f32 to vector<16x1xf32>
    %415 = arith.mulf %413, %414 : vector<16x1xf32>
    %416 = arith.negf %415 : vector<16x1xf32>
    %417 = math.exp %416 : vector<16x1xf32>
    %cst_209 = arith.constant 1.000000e+00 : f32
    %418 = vector.broadcast %cst_209 : f32 to vector<16x1xf32>
    %419 = arith.addf %418, %417 : vector<16x1xf32>
    %420 = arith.divf %418, %419 : vector<16x1xf32>
    %421 = vector.broadcast %2 : vector<1x16xf32> to vector<16x16xf32>
    %422 = arith.mulf %406, %421 : vector<16x16xf32>
    %cst_210 = arith.constant dense<0.000000e+00> : vector<16xf32>
    %423 = vector.multi_reduction <add>, %422, %cst_210 [1] : vector<16x16xf32> to vector<16xf32>
    %424 = vector.shape_cast %423 : vector<16xf32> to vector<16x1xf32>
    %425 = vector.broadcast %244 : f32 to vector<16x1xf32>
    %426 = arith.mulf %424, %425 : vector<16x1xf32>
    %427 = arith.negf %426 : vector<16x1xf32>
    %428 = math.exp %427 : vector<16x1xf32>
    %cst_211 = arith.constant 1.000000e+00 : f32
    %429 = vector.broadcast %cst_211 : f32 to vector<16x1xf32>
    %430 = arith.addf %429, %428 : vector<16x1xf32>
    %431 = arith.divf %429, %430 : vector<16x1xf32>
    %432 = vector.broadcast %420 : vector<16x1xf32> to vector<16x16xf32>
    %433 = arith.addf %409, %432 : vector<16x16xf32>
    %434 = arith.mulf %433, %433 : vector<16x16xf32>
    %cst_212 = arith.constant -1.000000e+01 : f32
    %435 = vector.broadcast %cst_212 : f32 to vector<16x1xf32>
    %436 = arith.divf %435, %431 : vector<16x1xf32>
    %437 = vector.broadcast %436 : vector<16x1xf32> to vector<16x16xf32>
    %438 = arith.mulf %434, %437 : vector<16x16xf32>
    %439 = math.exp %438 : vector<16x16xf32>
    %cst_213 = arith.constant 4.000000e+00 : f32
    %440 = vector.broadcast %cst_213 : f32 to vector<16x16xf32>
    %441 = arith.mulf %439, %440 : vector<16x16xf32>
    %cst_214 = arith.constant dense<0xFF800000> : vector<16xf32>
    %442 = vector.multi_reduction <maximumf>, %441, %cst_214 [1] : vector<16x16xf32> to vector<16xf32>
    %443 = vector.shape_cast %442 : vector<16xf32> to vector<16x1xf32>
    %444 = vector.broadcast %443 : vector<16x1xf32> to vector<16x16xf32>
    %445 = arith.subf %441, %444 : vector<16x16xf32>
    %446 = math.exp %445 : vector<16x16xf32>
    %cst_215 = arith.constant dense<0.000000e+00> : vector<16xf32>
    %447 = vector.multi_reduction <add>, %446, %cst_215 [1] : vector<16x16xf32> to vector<16xf32>
    %448 = vector.shape_cast %447 : vector<16xf32> to vector<16x1xf32>
    %cst_216 = arith.constant 1.000000e+00 : f32
    %449 = vector.broadcast %cst_216 : f32 to vector<16x1xf32>
    %450 = arith.divf %449, %448 : vector<16x1xf32>
    %451 = vector.broadcast %450 : vector<16x1xf32> to vector<16x16xf32>
    %452 = arith.mulf %446, %451 : vector<16x16xf32>
    %453 = arith.addf %251, %452 : vector<16x16xf32>
    %454 = vector.extract_strided_slice %0 {offsets = [16, 0], sizes = [16, 16], strides = [1, 1]} : vector<64x16xf32> to vector<16x16xf32>
    %455 = tpu.transpose %116, [1, 0] : vector<16x16xf32> -> vector<16x16xf32>
    %c0_217 = arith.constant 0 : index
    %c0_218 = arith.constant 0 : index
    %c0_219 = arith.constant 0 : index
    %456 = vector.load %arg1[%c0_217, %c0_218, %c0_219] : memref<4x16x16xf32, #tpu.memory_space<vmem>>, vector<1x16x16xf32>
    %457 = vector.shape_cast %456 : vector<1x16x16xf32> to vector<16x16xf32>
    %cst_220 = arith.constant dense<0.000000e+00> : vector<16x16xf32>
    %458 = tpu.matmul %454, %457, %cst_220 {dimension_numbers = #tpu.dot_dimension_numbers<[1], [0], [0], [1], [0, 0, 1, 1], [], []>} : vector<16x16xf32>, vector<16x16xf32>, vector<16x16xf32> -> vector<16x16xf32>
    %cst_221 = arith.constant dense<0.000000e+00> : vector<16x16xf32>
    %459 = tpu.matmul %458, %455, %cst_221 {dimension_numbers = #tpu.dot_dimension_numbers<[1], [0], [0], [1], [0, 0, 1, 1], [], []>} : vector<16x16xf32>, vector<16x16xf32>, vector<16x16xf32> -> vector<16x16xf32>
    %460 = vector.broadcast %247 : f32 to vector<16x16xf32>
    %461 = arith.mulf %459, %460 : vector<16x16xf32>
    %462 = vector.broadcast %1 : vector<1x16xf32> to vector<16x16xf32>
    %463 = arith.mulf %458, %462 : vector<16x16xf32>
    %cst_222 = arith.constant dense<0.000000e+00> : vector<16xf32>
    %464 = vector.multi_reduction <add>, %463, %cst_222 [1] : vector<16x16xf32> to vector<16xf32>
    %465 = vector.shape_cast %464 : vector<16xf32> to vector<16x1xf32>
    %466 = vector.broadcast %244 : f32 to vector<16x1xf32>
    %467 = arith.mulf %465, %466 : vector<16x1xf32>
    %468 = arith.negf %467 : vector<16x1xf32>
    %469 = math.exp %468 : vector<16x1xf32>
    %cst_223 = arith.constant 1.000000e+00 : f32
    %470 = vector.broadcast %cst_223 : f32 to vector<16x1xf32>
    %471 = arith.addf %470, %469 : vector<16x1xf32>
    %472 = arith.divf %470, %471 : vector<16x1xf32>
    %473 = vector.broadcast %2 : vector<1x16xf32> to vector<16x16xf32>
    %474 = arith.mulf %458, %473 : vector<16x16xf32>
    %cst_224 = arith.constant dense<0.000000e+00> : vector<16xf32>
    %475 = vector.multi_reduction <add>, %474, %cst_224 [1] : vector<16x16xf32> to vector<16xf32>
    %476 = vector.shape_cast %475 : vector<16xf32> to vector<16x1xf32>
    %477 = vector.broadcast %244 : f32 to vector<16x1xf32>
    %478 = arith.mulf %476, %477 : vector<16x1xf32>
    %479 = arith.negf %478 : vector<16x1xf32>
    %480 = math.exp %479 : vector<16x1xf32>
    %cst_225 = arith.constant 1.000000e+00 : f32
    %481 = vector.broadcast %cst_225 : f32 to vector<16x1xf32>
    %482 = arith.addf %481, %480 : vector<16x1xf32>
    %483 = arith.divf %481, %482 : vector<16x1xf32>
    %484 = vector.broadcast %472 : vector<16x1xf32> to vector<16x16xf32>
    %485 = arith.addf %461, %484 : vector<16x16xf32>
    %486 = arith.mulf %485, %485 : vector<16x16xf32>
    %cst_226 = arith.constant -1.000000e+01 : f32
    %487 = vector.broadcast %cst_226 : f32 to vector<16x1xf32>
    %488 = arith.divf %487, %483 : vector<16x1xf32>
    %489 = vector.broadcast %488 : vector<16x1xf32> to vector<16x16xf32>
    %490 = arith.mulf %486, %489 : vector<16x16xf32>
    %491 = math.exp %490 : vector<16x16xf32>
    %cst_227 = arith.constant 4.000000e+00 : f32
    %492 = vector.broadcast %cst_227 : f32 to vector<16x16xf32>
    %493 = arith.mulf %491, %492 : vector<16x16xf32>
    %cst_228 = arith.constant dense<0xFF800000> : vector<16xf32>
    %494 = vector.multi_reduction <maximumf>, %493, %cst_228 [1] : vector<16x16xf32> to vector<16xf32>
    %495 = vector.shape_cast %494 : vector<16xf32> to vector<16x1xf32>
    %496 = vector.broadcast %495 : vector<16x1xf32> to vector<16x16xf32>
    %497 = arith.subf %493, %496 : vector<16x16xf32>
    %498 = math.exp %497 : vector<16x16xf32>
    %cst_229 = arith.constant dense<0.000000e+00> : vector<16xf32>
    %499 = vector.multi_reduction <add>, %498, %cst_229 [1] : vector<16x16xf32> to vector<16xf32>
    %500 = vector.shape_cast %499 : vector<16xf32> to vector<16x1xf32>
    %cst_230 = arith.constant 1.000000e+00 : f32
    %501 = vector.broadcast %cst_230 : f32 to vector<16x1xf32>
    %502 = arith.divf %501, %500 : vector<16x1xf32>
    %503 = vector.broadcast %502 : vector<16x1xf32> to vector<16x16xf32>
    %504 = arith.mulf %498, %503 : vector<16x16xf32>
    %505 = arith.addf %303, %504 : vector<16x16xf32>
    %c1_231 = arith.constant 1 : index
    %c0_232 = arith.constant 0 : index
    %c0_233 = arith.constant 0 : index
    %506 = vector.load %arg1[%c1_231, %c0_232, %c0_233] : memref<4x16x16xf32, #tpu.memory_space<vmem>>, vector<1x16x16xf32>
    %507 = vector.shape_cast %506 : vector<1x16x16xf32> to vector<16x16xf32>
    %cst_234 = arith.constant dense<0.000000e+00> : vector<16x16xf32>
    %508 = tpu.matmul %454, %507, %cst_234 {dimension_numbers = #tpu.dot_dimension_numbers<[1], [0], [0], [1], [0, 0, 1, 1], [], []>} : vector<16x16xf32>, vector<16x16xf32>, vector<16x16xf32> -> vector<16x16xf32>
    %cst_235 = arith.constant dense<0.000000e+00> : vector<16x16xf32>
    %509 = tpu.matmul %508, %455, %cst_235 {dimension_numbers = #tpu.dot_dimension_numbers<[1], [0], [0], [1], [0, 0, 1, 1], [], []>} : vector<16x16xf32>, vector<16x16xf32>, vector<16x16xf32> -> vector<16x16xf32>
    %510 = vector.broadcast %247 : f32 to vector<16x16xf32>
    %511 = arith.mulf %509, %510 : vector<16x16xf32>
    %512 = vector.broadcast %1 : vector<1x16xf32> to vector<16x16xf32>
    %513 = arith.mulf %508, %512 : vector<16x16xf32>
    %cst_236 = arith.constant dense<0.000000e+00> : vector<16xf32>
    %514 = vector.multi_reduction <add>, %513, %cst_236 [1] : vector<16x16xf32> to vector<16xf32>
    %515 = vector.shape_cast %514 : vector<16xf32> to vector<16x1xf32>
    %516 = vector.broadcast %244 : f32 to vector<16x1xf32>
    %517 = arith.mulf %515, %516 : vector<16x1xf32>
    %518 = arith.negf %517 : vector<16x1xf32>
    %519 = math.exp %518 : vector<16x1xf32>
    %cst_237 = arith.constant 1.000000e+00 : f32
    %520 = vector.broadcast %cst_237 : f32 to vector<16x1xf32>
    %521 = arith.addf %520, %519 : vector<16x1xf32>
    %522 = arith.divf %520, %521 : vector<16x1xf32>
    %523 = vector.broadcast %2 : vector<1x16xf32> to vector<16x16xf32>
    %524 = arith.mulf %508, %523 : vector<16x16xf32>
    %cst_238 = arith.constant dense<0.000000e+00> : vector<16xf32>
    %525 = vector.multi_reduction <add>, %524, %cst_238 [1] : vector<16x16xf32> to vector<16xf32>
    %526 = vector.shape_cast %525 : vector<16xf32> to vector<16x1xf32>
    %527 = vector.broadcast %244 : f32 to vector<16x1xf32>
    %528 = arith.mulf %526, %527 : vector<16x1xf32>
    %529 = arith.negf %528 : vector<16x1xf32>
    %530 = math.exp %529 : vector<16x1xf32>
    %cst_239 = arith.constant 1.000000e+00 : f32
    %531 = vector.broadcast %cst_239 : f32 to vector<16x1xf32>
    %532 = arith.addf %531, %530 : vector<16x1xf32>
    %533 = arith.divf %531, %532 : vector<16x1xf32>
    %534 = vector.broadcast %522 : vector<16x1xf32> to vector<16x16xf32>
    %535 = arith.addf %511, %534 : vector<16x16xf32>
    %536 = arith.mulf %535, %535 : vector<16x16xf32>
    %cst_240 = arith.constant -1.000000e+01 : f32
    %537 = vector.broadcast %cst_240 : f32 to vector<16x1xf32>
    %538 = arith.divf %537, %533 : vector<16x1xf32>
    %539 = vector.broadcast %538 : vector<16x1xf32> to vector<16x16xf32>
    %540 = arith.mulf %536, %539 : vector<16x16xf32>
    %541 = math.exp %540 : vector<16x16xf32>
    %cst_241 = arith.constant 4.000000e+00 : f32
    %542 = vector.broadcast %cst_241 : f32 to vector<16x16xf32>
    %543 = arith.mulf %541, %542 : vector<16x16xf32>
    %cst_242 = arith.constant dense<0xFF800000> : vector<16xf32>
    %544 = vector.multi_reduction <maximumf>, %543, %cst_242 [1] : vector<16x16xf32> to vector<16xf32>
    %545 = vector.shape_cast %544 : vector<16xf32> to vector<16x1xf32>
    %546 = vector.broadcast %545 : vector<16x1xf32> to vector<16x16xf32>
    %547 = arith.subf %543, %546 : vector<16x16xf32>
    %548 = math.exp %547 : vector<16x16xf32>
    %cst_243 = arith.constant dense<0.000000e+00> : vector<16xf32>
    %549 = vector.multi_reduction <add>, %548, %cst_243 [1] : vector<16x16xf32> to vector<16xf32>
    %550 = vector.shape_cast %549 : vector<16xf32> to vector<16x1xf32>
    %cst_244 = arith.constant 1.000000e+00 : f32
    %551 = vector.broadcast %cst_244 : f32 to vector<16x1xf32>
    %552 = arith.divf %551, %550 : vector<16x1xf32>
    %553 = vector.broadcast %552 : vector<16x1xf32> to vector<16x16xf32>
    %554 = arith.mulf %548, %553 : vector<16x16xf32>
    %555 = arith.addf %353, %554 : vector<16x16xf32>
    %c2_245 = arith.constant 2 : index
    %c0_246 = arith.constant 0 : index
    %c0_247 = arith.constant 0 : index
    %556 = vector.load %arg1[%c2_245, %c0_246, %c0_247] : memref<4x16x16xf32, #tpu.memory_space<vmem>>, vector<1x16x16xf32>
    %557 = vector.shape_cast %556 : vector<1x16x16xf32> to vector<16x16xf32>
    %cst_248 = arith.constant dense<0.000000e+00> : vector<16x16xf32>
    %558 = tpu.matmul %454, %557, %cst_248 {dimension_numbers = #tpu.dot_dimension_numbers<[1], [0], [0], [1], [0, 0, 1, 1], [], []>} : vector<16x16xf32>, vector<16x16xf32>, vector<16x16xf32> -> vector<16x16xf32>
    %cst_249 = arith.constant dense<0.000000e+00> : vector<16x16xf32>
    %559 = tpu.matmul %558, %455, %cst_249 {dimension_numbers = #tpu.dot_dimension_numbers<[1], [0], [0], [1], [0, 0, 1, 1], [], []>} : vector<16x16xf32>, vector<16x16xf32>, vector<16x16xf32> -> vector<16x16xf32>
    %560 = vector.broadcast %247 : f32 to vector<16x16xf32>
    %561 = arith.mulf %559, %560 : vector<16x16xf32>
    %562 = vector.broadcast %1 : vector<1x16xf32> to vector<16x16xf32>
    %563 = arith.mulf %558, %562 : vector<16x16xf32>
    %cst_250 = arith.constant dense<0.000000e+00> : vector<16xf32>
    %564 = vector.multi_reduction <add>, %563, %cst_250 [1] : vector<16x16xf32> to vector<16xf32>
    %565 = vector.shape_cast %564 : vector<16xf32> to vector<16x1xf32>
    %566 = vector.broadcast %244 : f32 to vector<16x1xf32>
    %567 = arith.mulf %565, %566 : vector<16x1xf32>
    %568 = arith.negf %567 : vector<16x1xf32>
    %569 = math.exp %568 : vector<16x1xf32>
    %cst_251 = arith.constant 1.000000e+00 : f32
    %570 = vector.broadcast %cst_251 : f32 to vector<16x1xf32>
    %571 = arith.addf %570, %569 : vector<16x1xf32>
    %572 = arith.divf %570, %571 : vector<16x1xf32>
    %573 = vector.broadcast %2 : vector<1x16xf32> to vector<16x16xf32>
    %574 = arith.mulf %558, %573 : vector<16x16xf32>
    %cst_252 = arith.constant dense<0.000000e+00> : vector<16xf32>
    %575 = vector.multi_reduction <add>, %574, %cst_252 [1] : vector<16x16xf32> to vector<16xf32>
    %576 = vector.shape_cast %575 : vector<16xf32> to vector<16x1xf32>
    %577 = vector.broadcast %244 : f32 to vector<16x1xf32>
    %578 = arith.mulf %576, %577 : vector<16x1xf32>
    %579 = arith.negf %578 : vector<16x1xf32>
    %580 = math.exp %579 : vector<16x1xf32>
    %cst_253 = arith.constant 1.000000e+00 : f32
    %581 = vector.broadcast %cst_253 : f32 to vector<16x1xf32>
    %582 = arith.addf %581, %580 : vector<16x1xf32>
    %583 = arith.divf %581, %582 : vector<16x1xf32>
    %584 = vector.broadcast %572 : vector<16x1xf32> to vector<16x16xf32>
    %585 = arith.addf %561, %584 : vector<16x16xf32>
    %586 = arith.mulf %585, %585 : vector<16x16xf32>
    %cst_254 = arith.constant -1.000000e+01 : f32
    %587 = vector.broadcast %cst_254 : f32 to vector<16x1xf32>
    %588 = arith.divf %587, %583 : vector<16x1xf32>
    %589 = vector.broadcast %588 : vector<16x1xf32> to vector<16x16xf32>
    %590 = arith.mulf %586, %589 : vector<16x16xf32>
    %591 = math.exp %590 : vector<16x16xf32>
    %cst_255 = arith.constant 4.000000e+00 : f32
    %592 = vector.broadcast %cst_255 : f32 to vector<16x16xf32>
    %593 = arith.mulf %591, %592 : vector<16x16xf32>
    %cst_256 = arith.constant dense<0xFF800000> : vector<16xf32>
    %594 = vector.multi_reduction <maximumf>, %593, %cst_256 [1] : vector<16x16xf32> to vector<16xf32>
    %595 = vector.shape_cast %594 : vector<16xf32> to vector<16x1xf32>
    %596 = vector.broadcast %595 : vector<16x1xf32> to vector<16x16xf32>
    %597 = arith.subf %593, %596 : vector<16x16xf32>
    %598 = math.exp %597 : vector<16x16xf32>
    %cst_257 = arith.constant dense<0.000000e+00> : vector<16xf32>
    %599 = vector.multi_reduction <add>, %598, %cst_257 [1] : vector<16x16xf32> to vector<16xf32>
    %600 = vector.shape_cast %599 : vector<16xf32> to vector<16x1xf32>
    %cst_258 = arith.constant 1.000000e+00 : f32
    %601 = vector.broadcast %cst_258 : f32 to vector<16x1xf32>
    %602 = arith.divf %601, %600 : vector<16x1xf32>
    %603 = vector.broadcast %602 : vector<16x1xf32> to vector<16x16xf32>
    %604 = arith.mulf %598, %603 : vector<16x16xf32>
    %605 = arith.addf %403, %604 : vector<16x16xf32>
    %c3_259 = arith.constant 3 : index
    %c0_260 = arith.constant 0 : index
    %c0_261 = arith.constant 0 : index
    %606 = vector.load %arg1[%c3_259, %c0_260, %c0_261] : memref<4x16x16xf32, #tpu.memory_space<vmem>>, vector<1x16x16xf32>
    %607 = vector.shape_cast %606 : vector<1x16x16xf32> to vector<16x16xf32>
    %cst_262 = arith.constant dense<0.000000e+00> : vector<16x16xf32>
    %608 = tpu.matmul %454, %607, %cst_262 {dimension_numbers = #tpu.dot_dimension_numbers<[1], [0], [0], [1], [0, 0, 1, 1], [], []>} : vector<16x16xf32>, vector<16x16xf32>, vector<16x16xf32> -> vector<16x16xf32>
    %cst_263 = arith.constant dense<0.000000e+00> : vector<16x16xf32>
    %609 = tpu.matmul %608, %455, %cst_263 {dimension_numbers = #tpu.dot_dimension_numbers<[1], [0], [0], [1], [0, 0, 1, 1], [], []>} : vector<16x16xf32>, vector<16x16xf32>, vector<16x16xf32> -> vector<16x16xf32>
    %610 = vector.broadcast %247 : f32 to vector<16x16xf32>
    %611 = arith.mulf %609, %610 : vector<16x16xf32>
    %612 = vector.broadcast %1 : vector<1x16xf32> to vector<16x16xf32>
    %613 = arith.mulf %608, %612 : vector<16x16xf32>
    %cst_264 = arith.constant dense<0.000000e+00> : vector<16xf32>
    %614 = vector.multi_reduction <add>, %613, %cst_264 [1] : vector<16x16xf32> to vector<16xf32>
    %615 = vector.shape_cast %614 : vector<16xf32> to vector<16x1xf32>
    %616 = vector.broadcast %244 : f32 to vector<16x1xf32>
    %617 = arith.mulf %615, %616 : vector<16x1xf32>
    %618 = arith.negf %617 : vector<16x1xf32>
    %619 = math.exp %618 : vector<16x1xf32>
    %cst_265 = arith.constant 1.000000e+00 : f32
    %620 = vector.broadcast %cst_265 : f32 to vector<16x1xf32>
    %621 = arith.addf %620, %619 : vector<16x1xf32>
    %622 = arith.divf %620, %621 : vector<16x1xf32>
    %623 = vector.broadcast %2 : vector<1x16xf32> to vector<16x16xf32>
    %624 = arith.mulf %608, %623 : vector<16x16xf32>
    %cst_266 = arith.constant dense<0.000000e+00> : vector<16xf32>
    %625 = vector.multi_reduction <add>, %624, %cst_266 [1] : vector<16x16xf32> to vector<16xf32>
    %626 = vector.shape_cast %625 : vector<16xf32> to vector<16x1xf32>
    %627 = vector.broadcast %244 : f32 to vector<16x1xf32>
    %628 = arith.mulf %626, %627 : vector<16x1xf32>
    %629 = arith.negf %628 : vector<16x1xf32>
    %630 = math.exp %629 : vector<16x1xf32>
    %cst_267 = arith.constant 1.000000e+00 : f32
    %631 = vector.broadcast %cst_267 : f32 to vector<16x1xf32>
    %632 = arith.addf %631, %630 : vector<16x1xf32>
    %633 = arith.divf %631, %632 : vector<16x1xf32>
    %634 = vector.broadcast %622 : vector<16x1xf32> to vector<16x16xf32>
    %635 = arith.addf %611, %634 : vector<16x16xf32>
    %636 = arith.mulf %635, %635 : vector<16x16xf32>
    %cst_268 = arith.constant -1.000000e+01 : f32
    %637 = vector.broadcast %cst_268 : f32 to vector<16x1xf32>
    %638 = arith.divf %637, %633 : vector<16x1xf32>
    %639 = vector.broadcast %638 : vector<16x1xf32> to vector<16x16xf32>
    %640 = arith.mulf %636, %639 : vector<16x16xf32>
    %641 = math.exp %640 : vector<16x16xf32>
    %cst_269 = arith.constant 4.000000e+00 : f32
    %642 = vector.broadcast %cst_269 : f32 to vector<16x16xf32>
    %643 = arith.mulf %641, %642 : vector<16x16xf32>
    %cst_270 = arith.constant dense<0xFF800000> : vector<16xf32>
    %644 = vector.multi_reduction <maximumf>, %643, %cst_270 [1] : vector<16x16xf32> to vector<16xf32>
    %645 = vector.shape_cast %644 : vector<16xf32> to vector<16x1xf32>
    %646 = vector.broadcast %645 : vector<16x1xf32> to vector<16x16xf32>
    %647 = arith.subf %643, %646 : vector<16x16xf32>
    %648 = math.exp %647 : vector<16x16xf32>
    %cst_271 = arith.constant dense<0.000000e+00> : vector<16xf32>
    %649 = vector.multi_reduction <add>, %648, %cst_271 [1] : vector<16x16xf32> to vector<16xf32>
    %650 = vector.shape_cast %649 : vector<16xf32> to vector<16x1xf32>
    %cst_272 = arith.constant 1.000000e+00 : f32
    %651 = vector.broadcast %cst_272 : f32 to vector<16x1xf32>
    %652 = arith.divf %651, %650 : vector<16x1xf32>
    %653 = vector.broadcast %652 : vector<16x1xf32> to vector<16x16xf32>
    %654 = arith.mulf %648, %653 : vector<16x16xf32>
    %655 = arith.addf %453, %654 : vector<16x16xf32>
    %656 = vector.extract_strided_slice %0 {offsets = [32, 0], sizes = [16, 16], strides = [1, 1]} : vector<64x16xf32> to vector<16x16xf32>
    %657 = tpu.transpose %176, [1, 0] : vector<16x16xf32> -> vector<16x16xf32>
    %c0_273 = arith.constant 0 : index
    %c0_274 = arith.constant 0 : index
    %c0_275 = arith.constant 0 : index
    %658 = vector.load %arg1[%c0_273, %c0_274, %c0_275] : memref<4x16x16xf32, #tpu.memory_space<vmem>>, vector<1x16x16xf32>
    %659 = vector.shape_cast %658 : vector<1x16x16xf32> to vector<16x16xf32>
    %cst_276 = arith.constant dense<0.000000e+00> : vector<16x16xf32>
    %660 = tpu.matmul %656, %659, %cst_276 {dimension_numbers = #tpu.dot_dimension_numbers<[1], [0], [0], [1], [0, 0, 1, 1], [], []>} : vector<16x16xf32>, vector<16x16xf32>, vector<16x16xf32> -> vector<16x16xf32>
    %cst_277 = arith.constant dense<0.000000e+00> : vector<16x16xf32>
    %661 = tpu.matmul %660, %657, %cst_277 {dimension_numbers = #tpu.dot_dimension_numbers<[1], [0], [0], [1], [0, 0, 1, 1], [], []>} : vector<16x16xf32>, vector<16x16xf32>, vector<16x16xf32> -> vector<16x16xf32>
    %662 = vector.broadcast %247 : f32 to vector<16x16xf32>
    %663 = arith.mulf %661, %662 : vector<16x16xf32>
    %664 = vector.broadcast %1 : vector<1x16xf32> to vector<16x16xf32>
    %665 = arith.mulf %660, %664 : vector<16x16xf32>
    %cst_278 = arith.constant dense<0.000000e+00> : vector<16xf32>
    %666 = vector.multi_reduction <add>, %665, %cst_278 [1] : vector<16x16xf32> to vector<16xf32>
    %667 = vector.shape_cast %666 : vector<16xf32> to vector<16x1xf32>
    %668 = vector.broadcast %244 : f32 to vector<16x1xf32>
    %669 = arith.mulf %667, %668 : vector<16x1xf32>
    %670 = arith.negf %669 : vector<16x1xf32>
    %671 = math.exp %670 : vector<16x1xf32>
    %cst_279 = arith.constant 1.000000e+00 : f32
    %672 = vector.broadcast %cst_279 : f32 to vector<16x1xf32>
    %673 = arith.addf %672, %671 : vector<16x1xf32>
    %674 = arith.divf %672, %673 : vector<16x1xf32>
    %675 = vector.broadcast %2 : vector<1x16xf32> to vector<16x16xf32>
    %676 = arith.mulf %660, %675 : vector<16x16xf32>
    %cst_280 = arith.constant dense<0.000000e+00> : vector<16xf32>
    %677 = vector.multi_reduction <add>, %676, %cst_280 [1] : vector<16x16xf32> to vector<16xf32>
    %678 = vector.shape_cast %677 : vector<16xf32> to vector<16x1xf32>
    %679 = vector.broadcast %244 : f32 to vector<16x1xf32>
    %680 = arith.mulf %678, %679 : vector<16x1xf32>
    %681 = arith.negf %680 : vector<16x1xf32>
    %682 = math.exp %681 : vector<16x1xf32>
    %cst_281 = arith.constant 1.000000e+00 : f32
    %683 = vector.broadcast %cst_281 : f32 to vector<16x1xf32>
    %684 = arith.addf %683, %682 : vector<16x1xf32>
    %685 = arith.divf %683, %684 : vector<16x1xf32>
    %686 = vector.broadcast %674 : vector<16x1xf32> to vector<16x16xf32>
    %687 = arith.addf %663, %686 : vector<16x16xf32>
    %688 = arith.mulf %687, %687 : vector<16x16xf32>
    %cst_282 = arith.constant -1.000000e+01 : f32
    %689 = vector.broadcast %cst_282 : f32 to vector<16x1xf32>
    %690 = arith.divf %689, %685 : vector<16x1xf32>
    %691 = vector.broadcast %690 : vector<16x1xf32> to vector<16x16xf32>
    %692 = arith.mulf %688, %691 : vector<16x16xf32>
    %693 = math.exp %692 : vector<16x16xf32>
    %cst_283 = arith.constant 4.000000e+00 : f32
    %694 = vector.broadcast %cst_283 : f32 to vector<16x16xf32>
    %695 = arith.mulf %693, %694 : vector<16x16xf32>
    %cst_284 = arith.constant dense<0xFF800000> : vector<16xf32>
    %696 = vector.multi_reduction <maximumf>, %695, %cst_284 [1] : vector<16x16xf32> to vector<16xf32>
    %697 = vector.shape_cast %696 : vector<16xf32> to vector<16x1xf32>
    %698 = vector.broadcast %697 : vector<16x1xf32> to vector<16x16xf32>
    %699 = arith.subf %695, %698 : vector<16x16xf32>
    %700 = math.exp %699 : vector<16x16xf32>
    %cst_285 = arith.constant dense<0.000000e+00> : vector<16xf32>
    %701 = vector.multi_reduction <add>, %700, %cst_285 [1] : vector<16x16xf32> to vector<16xf32>
    %702 = vector.shape_cast %701 : vector<16xf32> to vector<16x1xf32>
    %cst_286 = arith.constant 1.000000e+00 : f32
    %703 = vector.broadcast %cst_286 : f32 to vector<16x1xf32>
    %704 = arith.divf %703, %702 : vector<16x1xf32>
    %705 = vector.broadcast %704 : vector<16x1xf32> to vector<16x16xf32>
    %706 = arith.mulf %700, %705 : vector<16x16xf32>
    %707 = arith.addf %505, %706 : vector<16x16xf32>
    %c1_287 = arith.constant 1 : index
    %c0_288 = arith.constant 0 : index
    %c0_289 = arith.constant 0 : index
    %708 = vector.load %arg1[%c1_287, %c0_288, %c0_289] : memref<4x16x16xf32, #tpu.memory_space<vmem>>, vector<1x16x16xf32>
    %709 = vector.shape_cast %708 : vector<1x16x16xf32> to vector<16x16xf32>
    %cst_290 = arith.constant dense<0.000000e+00> : vector<16x16xf32>
    %710 = tpu.matmul %656, %709, %cst_290 {dimension_numbers = #tpu.dot_dimension_numbers<[1], [0], [0], [1], [0, 0, 1, 1], [], []>} : vector<16x16xf32>, vector<16x16xf32>, vector<16x16xf32> -> vector<16x16xf32>
    %cst_291 = arith.constant dense<0.000000e+00> : vector<16x16xf32>
    %711 = tpu.matmul %710, %657, %cst_291 {dimension_numbers = #tpu.dot_dimension_numbers<[1], [0], [0], [1], [0, 0, 1, 1], [], []>} : vector<16x16xf32>, vector<16x16xf32>, vector<16x16xf32> -> vector<16x16xf32>
    %712 = vector.broadcast %247 : f32 to vector<16x16xf32>
    %713 = arith.mulf %711, %712 : vector<16x16xf32>
    %714 = vector.broadcast %1 : vector<1x16xf32> to vector<16x16xf32>
    %715 = arith.mulf %710, %714 : vector<16x16xf32>
    %cst_292 = arith.constant dense<0.000000e+00> : vector<16xf32>
    %716 = vector.multi_reduction <add>, %715, %cst_292 [1] : vector<16x16xf32> to vector<16xf32>
    %717 = vector.shape_cast %716 : vector<16xf32> to vector<16x1xf32>
    %718 = vector.broadcast %244 : f32 to vector<16x1xf32>
    %719 = arith.mulf %717, %718 : vector<16x1xf32>
    %720 = arith.negf %719 : vector<16x1xf32>
    %721 = math.exp %720 : vector<16x1xf32>
    %cst_293 = arith.constant 1.000000e+00 : f32
    %722 = vector.broadcast %cst_293 : f32 to vector<16x1xf32>
    %723 = arith.addf %722, %721 : vector<16x1xf32>
    %724 = arith.divf %722, %723 : vector<16x1xf32>
    %725 = vector.broadcast %2 : vector<1x16xf32> to vector<16x16xf32>
    %726 = arith.mulf %710, %725 : vector<16x16xf32>
    %cst_294 = arith.constant dense<0.000000e+00> : vector<16xf32>
    %727 = vector.multi_reduction <add>, %726, %cst_294 [1] : vector<16x16xf32> to vector<16xf32>
    %728 = vector.shape_cast %727 : vector<16xf32> to vector<16x1xf32>
    %729 = vector.broadcast %244 : f32 to vector<16x1xf32>
    %730 = arith.mulf %728, %729 : vector<16x1xf32>
    %731 = arith.negf %730 : vector<16x1xf32>
    %732 = math.exp %731 : vector<16x1xf32>
    %cst_295 = arith.constant 1.000000e+00 : f32
    %733 = vector.broadcast %cst_295 : f32 to vector<16x1xf32>
    %734 = arith.addf %733, %732 : vector<16x1xf32>
    %735 = arith.divf %733, %734 : vector<16x1xf32>
    %736 = vector.broadcast %724 : vector<16x1xf32> to vector<16x16xf32>
    %737 = arith.addf %713, %736 : vector<16x16xf32>
    %738 = arith.mulf %737, %737 : vector<16x16xf32>
    %cst_296 = arith.constant -1.000000e+01 : f32
    %739 = vector.broadcast %cst_296 : f32 to vector<16x1xf32>
    %740 = arith.divf %739, %735 : vector<16x1xf32>
    %741 = vector.broadcast %740 : vector<16x1xf32> to vector<16x16xf32>
    %742 = arith.mulf %738, %741 : vector<16x16xf32>
    %743 = math.exp %742 : vector<16x16xf32>
    %cst_297 = arith.constant 4.000000e+00 : f32
    %744 = vector.broadcast %cst_297 : f32 to vector<16x16xf32>
    %745 = arith.mulf %743, %744 : vector<16x16xf32>
    %cst_298 = arith.constant dense<0xFF800000> : vector<16xf32>
    %746 = vector.multi_reduction <maximumf>, %745, %cst_298 [1] : vector<16x16xf32> to vector<16xf32>
    %747 = vector.shape_cast %746 : vector<16xf32> to vector<16x1xf32>
    %748 = vector.broadcast %747 : vector<16x1xf32> to vector<16x16xf32>
    %749 = arith.subf %745, %748 : vector<16x16xf32>
    %750 = math.exp %749 : vector<16x16xf32>
    %cst_299 = arith.constant dense<0.000000e+00> : vector<16xf32>
    %751 = vector.multi_reduction <add>, %750, %cst_299 [1] : vector<16x16xf32> to vector<16xf32>
    %752 = vector.shape_cast %751 : vector<16xf32> to vector<16x1xf32>
    %cst_300 = arith.constant 1.000000e+00 : f32
    %753 = vector.broadcast %cst_300 : f32 to vector<16x1xf32>
    %754 = arith.divf %753, %752 : vector<16x1xf32>
    %755 = vector.broadcast %754 : vector<16x1xf32> to vector<16x16xf32>
    %756 = arith.mulf %750, %755 : vector<16x16xf32>
    %757 = arith.addf %555, %756 : vector<16x16xf32>
    %c2_301 = arith.constant 2 : index
    %c0_302 = arith.constant 0 : index
    %c0_303 = arith.constant 0 : index
    %758 = vector.load %arg1[%c2_301, %c0_302, %c0_303] : memref<4x16x16xf32, #tpu.memory_space<vmem>>, vector<1x16x16xf32>
    %759 = vector.shape_cast %758 : vector<1x16x16xf32> to vector<16x16xf32>
    %cst_304 = arith.constant dense<0.000000e+00> : vector<16x16xf32>
    %760 = tpu.matmul %656, %759, %cst_304 {dimension_numbers = #tpu.dot_dimension_numbers<[1], [0], [0], [1], [0, 0, 1, 1], [], []>} : vector<16x16xf32>, vector<16x16xf32>, vector<16x16xf32> -> vector<16x16xf32>
    %cst_305 = arith.constant dense<0.000000e+00> : vector<16x16xf32>
    %761 = tpu.matmul %760, %657, %cst_305 {dimension_numbers = #tpu.dot_dimension_numbers<[1], [0], [0], [1], [0, 0, 1, 1], [], []>} : vector<16x16xf32>, vector<16x16xf32>, vector<16x16xf32> -> vector<16x16xf32>
    %762 = vector.broadcast %247 : f32 to vector<16x16xf32>
    %763 = arith.mulf %761, %762 : vector<16x16xf32>
    %764 = vector.broadcast %1 : vector<1x16xf32> to vector<16x16xf32>
    %765 = arith.mulf %760, %764 : vector<16x16xf32>
    %cst_306 = arith.constant dense<0.000000e+00> : vector<16xf32>
    %766 = vector.multi_reduction <add>, %765, %cst_306 [1] : vector<16x16xf32> to vector<16xf32>
    %767 = vector.shape_cast %766 : vector<16xf32> to vector<16x1xf32>
    %768 = vector.broadcast %244 : f32 to vector<16x1xf32>
    %769 = arith.mulf %767, %768 : vector<16x1xf32>
    %770 = arith.negf %769 : vector<16x1xf32>
    %771 = math.exp %770 : vector<16x1xf32>
    %cst_307 = arith.constant 1.000000e+00 : f32
    %772 = vector.broadcast %cst_307 : f32 to vector<16x1xf32>
    %773 = arith.addf %772, %771 : vector<16x1xf32>
    %774 = arith.divf %772, %773 : vector<16x1xf32>
    %775 = vector.broadcast %2 : vector<1x16xf32> to vector<16x16xf32>
    %776 = arith.mulf %760, %775 : vector<16x16xf32>
    %cst_308 = arith.constant dense<0.000000e+00> : vector<16xf32>
    %777 = vector.multi_reduction <add>, %776, %cst_308 [1] : vector<16x16xf32> to vector<16xf32>
    %778 = vector.shape_cast %777 : vector<16xf32> to vector<16x1xf32>
    %779 = vector.broadcast %244 : f32 to vector<16x1xf32>
    %780 = arith.mulf %778, %779 : vector<16x1xf32>
    %781 = arith.negf %780 : vector<16x1xf32>
    %782 = math.exp %781 : vector<16x1xf32>
    %cst_309 = arith.constant 1.000000e+00 : f32
    %783 = vector.broadcast %cst_309 : f32 to vector<16x1xf32>
    %784 = arith.addf %783, %782 : vector<16x1xf32>
    %785 = arith.divf %783, %784 : vector<16x1xf32>
    %786 = vector.broadcast %774 : vector<16x1xf32> to vector<16x16xf32>
    %787 = arith.addf %763, %786 : vector<16x16xf32>
    %788 = arith.mulf %787, %787 : vector<16x16xf32>
    %cst_310 = arith.constant -1.000000e+01 : f32
    %789 = vector.broadcast %cst_310 : f32 to vector<16x1xf32>
    %790 = arith.divf %789, %785 : vector<16x1xf32>
    %791 = vector.broadcast %790 : vector<16x1xf32> to vector<16x16xf32>
    %792 = arith.mulf %788, %791 : vector<16x16xf32>
    %793 = math.exp %792 : vector<16x16xf32>
    %cst_311 = arith.constant 4.000000e+00 : f32
    %794 = vector.broadcast %cst_311 : f32 to vector<16x16xf32>
    %795 = arith.mulf %793, %794 : vector<16x16xf32>
    %cst_312 = arith.constant dense<0xFF800000> : vector<16xf32>
    %796 = vector.multi_reduction <maximumf>, %795, %cst_312 [1] : vector<16x16xf32> to vector<16xf32>
    %797 = vector.shape_cast %796 : vector<16xf32> to vector<16x1xf32>
    %798 = vector.broadcast %797 : vector<16x1xf32> to vector<16x16xf32>
    %799 = arith.subf %795, %798 : vector<16x16xf32>
    %800 = math.exp %799 : vector<16x16xf32>
    %cst_313 = arith.constant dense<0.000000e+00> : vector<16xf32>
    %801 = vector.multi_reduction <add>, %800, %cst_313 [1] : vector<16x16xf32> to vector<16xf32>
    %802 = vector.shape_cast %801 : vector<16xf32> to vector<16x1xf32>
    %cst_314 = arith.constant 1.000000e+00 : f32
    %803 = vector.broadcast %cst_314 : f32 to vector<16x1xf32>
    %804 = arith.divf %803, %802 : vector<16x1xf32>
    %805 = vector.broadcast %804 : vector<16x1xf32> to vector<16x16xf32>
    %806 = arith.mulf %800, %805 : vector<16x16xf32>
    %807 = arith.addf %605, %806 : vector<16x16xf32>
    %c3_315 = arith.constant 3 : index
    %c0_316 = arith.constant 0 : index
    %c0_317 = arith.constant 0 : index
    %808 = vector.load %arg1[%c3_315, %c0_316, %c0_317] : memref<4x16x16xf32, #tpu.memory_space<vmem>>, vector<1x16x16xf32>
    %809 = vector.shape_cast %808 : vector<1x16x16xf32> to vector<16x16xf32>
    %cst_318 = arith.constant dense<0.000000e+00> : vector<16x16xf32>
    %810 = tpu.matmul %656, %809, %cst_318 {dimension_numbers = #tpu.dot_dimension_numbers<[1], [0], [0], [1], [0, 0, 1, 1], [], []>} : vector<16x16xf32>, vector<16x16xf32>, vector<16x16xf32> -> vector<16x16xf32>
    %cst_319 = arith.constant dense<0.000000e+00> : vector<16x16xf32>
    %811 = tpu.matmul %810, %657, %cst_319 {dimension_numbers = #tpu.dot_dimension_numbers<[1], [0], [0], [1], [0, 0, 1, 1], [], []>} : vector<16x16xf32>, vector<16x16xf32>, vector<16x16xf32> -> vector<16x16xf32>
    %812 = vector.broadcast %247 : f32 to vector<16x16xf32>
    %813 = arith.mulf %811, %812 : vector<16x16xf32>
    %814 = vector.broadcast %1 : vector<1x16xf32> to vector<16x16xf32>
    %815 = arith.mulf %810, %814 : vector<16x16xf32>
    %cst_320 = arith.constant dense<0.000000e+00> : vector<16xf32>
    %816 = vector.multi_reduction <add>, %815, %cst_320 [1] : vector<16x16xf32> to vector<16xf32>
    %817 = vector.shape_cast %816 : vector<16xf32> to vector<16x1xf32>
    %818 = vector.broadcast %244 : f32 to vector<16x1xf32>
    %819 = arith.mulf %817, %818 : vector<16x1xf32>
    %820 = arith.negf %819 : vector<16x1xf32>
    %821 = math.exp %820 : vector<16x1xf32>
    %cst_321 = arith.constant 1.000000e+00 : f32
    %822 = vector.broadcast %cst_321 : f32 to vector<16x1xf32>
    %823 = arith.addf %822, %821 : vector<16x1xf32>
    %824 = arith.divf %822, %823 : vector<16x1xf32>
    %825 = vector.broadcast %2 : vector<1x16xf32> to vector<16x16xf32>
    %826 = arith.mulf %810, %825 : vector<16x16xf32>
    %cst_322 = arith.constant dense<0.000000e+00> : vector<16xf32>
    %827 = vector.multi_reduction <add>, %826, %cst_322 [1] : vector<16x16xf32> to vector<16xf32>
    %828 = vector.shape_cast %827 : vector<16xf32> to vector<16x1xf32>
    %829 = vector.broadcast %244 : f32 to vector<16x1xf32>
    %830 = arith.mulf %828, %829 : vector<16x1xf32>
    %831 = arith.negf %830 : vector<16x1xf32>
    %832 = math.exp %831 : vector<16x1xf32>
    %cst_323 = arith.constant 1.000000e+00 : f32
    %833 = vector.broadcast %cst_323 : f32 to vector<16x1xf32>
    %834 = arith.addf %833, %832 : vector<16x1xf32>
    %835 = arith.divf %833, %834 : vector<16x1xf32>
    %836 = vector.broadcast %824 : vector<16x1xf32> to vector<16x16xf32>
    %837 = arith.addf %813, %836 : vector<16x16xf32>
    %838 = arith.mulf %837, %837 : vector<16x16xf32>
    %cst_324 = arith.constant -1.000000e+01 : f32
    %839 = vector.broadcast %cst_324 : f32 to vector<16x1xf32>
    %840 = arith.divf %839, %835 : vector<16x1xf32>
    %841 = vector.broadcast %840 : vector<16x1xf32> to vector<16x16xf32>
    %842 = arith.mulf %838, %841 : vector<16x16xf32>
    %843 = math.exp %842 : vector<16x16xf32>
    %cst_325 = arith.constant 4.000000e+00 : f32
    %844 = vector.broadcast %cst_325 : f32 to vector<16x16xf32>
    %845 = arith.mulf %843, %844 : vector<16x16xf32>
    %cst_326 = arith.constant dense<0xFF800000> : vector<16xf32>
    %846 = vector.multi_reduction <maximumf>, %845, %cst_326 [1] : vector<16x16xf32> to vector<16xf32>
    %847 = vector.shape_cast %846 : vector<16xf32> to vector<16x1xf32>
    %848 = vector.broadcast %847 : vector<16x1xf32> to vector<16x16xf32>
    %849 = arith.subf %845, %848 : vector<16x16xf32>
    %850 = math.exp %849 : vector<16x16xf32>
    %cst_327 = arith.constant dense<0.000000e+00> : vector<16xf32>
    %851 = vector.multi_reduction <add>, %850, %cst_327 [1] : vector<16x16xf32> to vector<16xf32>
    %852 = vector.shape_cast %851 : vector<16xf32> to vector<16x1xf32>
    %cst_328 = arith.constant 1.000000e+00 : f32
    %853 = vector.broadcast %cst_328 : f32 to vector<16x1xf32>
    %854 = arith.divf %853, %852 : vector<16x1xf32>
    %855 = vector.broadcast %854 : vector<16x1xf32> to vector<16x16xf32>
    %856 = arith.mulf %850, %855 : vector<16x16xf32>
    %857 = arith.addf %655, %856 : vector<16x16xf32>
    %858 = vector.extract_strided_slice %0 {offsets = [48, 0], sizes = [16, 16], strides = [1, 1]} : vector<64x16xf32> to vector<16x16xf32>
    %859 = tpu.transpose %236, [1, 0] : vector<16x16xf32> -> vector<16x16xf32>
    %c0_329 = arith.constant 0 : index
    %c0_330 = arith.constant 0 : index
    %c0_331 = arith.constant 0 : index
    %860 = vector.load %arg1[%c0_329, %c0_330, %c0_331] : memref<4x16x16xf32, #tpu.memory_space<vmem>>, vector<1x16x16xf32>
    %861 = vector.shape_cast %860 : vector<1x16x16xf32> to vector<16x16xf32>
    %cst_332 = arith.constant dense<0.000000e+00> : vector<16x16xf32>
    %862 = tpu.matmul %858, %861, %cst_332 {dimension_numbers = #tpu.dot_dimension_numbers<[1], [0], [0], [1], [0, 0, 1, 1], [], []>} : vector<16x16xf32>, vector<16x16xf32>, vector<16x16xf32> -> vector<16x16xf32>
    %cst_333 = arith.constant dense<0.000000e+00> : vector<16x16xf32>
    %863 = tpu.matmul %862, %859, %cst_333 {dimension_numbers = #tpu.dot_dimension_numbers<[1], [0], [0], [1], [0, 0, 1, 1], [], []>} : vector<16x16xf32>, vector<16x16xf32>, vector<16x16xf32> -> vector<16x16xf32>
    %864 = vector.broadcast %247 : f32 to vector<16x16xf32>
    %865 = arith.mulf %863, %864 : vector<16x16xf32>
    %866 = vector.broadcast %1 : vector<1x16xf32> to vector<16x16xf32>
    %867 = arith.mulf %862, %866 : vector<16x16xf32>
    %cst_334 = arith.constant dense<0.000000e+00> : vector<16xf32>
    %868 = vector.multi_reduction <add>, %867, %cst_334 [1] : vector<16x16xf32> to vector<16xf32>
    %869 = vector.shape_cast %868 : vector<16xf32> to vector<16x1xf32>
    %870 = vector.broadcast %244 : f32 to vector<16x1xf32>
    %871 = arith.mulf %869, %870 : vector<16x1xf32>
    %872 = arith.negf %871 : vector<16x1xf32>
    %873 = math.exp %872 : vector<16x1xf32>
    %cst_335 = arith.constant 1.000000e+00 : f32
    %874 = vector.broadcast %cst_335 : f32 to vector<16x1xf32>
    %875 = arith.addf %874, %873 : vector<16x1xf32>
    %876 = arith.divf %874, %875 : vector<16x1xf32>
    %877 = vector.broadcast %2 : vector<1x16xf32> to vector<16x16xf32>
    %878 = arith.mulf %862, %877 : vector<16x16xf32>
    %cst_336 = arith.constant dense<0.000000e+00> : vector<16xf32>
    %879 = vector.multi_reduction <add>, %878, %cst_336 [1] : vector<16x16xf32> to vector<16xf32>
    %880 = vector.shape_cast %879 : vector<16xf32> to vector<16x1xf32>
    %881 = vector.broadcast %244 : f32 to vector<16x1xf32>
    %882 = arith.mulf %880, %881 : vector<16x1xf32>
    %883 = arith.negf %882 : vector<16x1xf32>
    %884 = math.exp %883 : vector<16x1xf32>
    %cst_337 = arith.constant 1.000000e+00 : f32
    %885 = vector.broadcast %cst_337 : f32 to vector<16x1xf32>
    %886 = arith.addf %885, %884 : vector<16x1xf32>
    %887 = arith.divf %885, %886 : vector<16x1xf32>
    %888 = vector.broadcast %876 : vector<16x1xf32> to vector<16x16xf32>
    %889 = arith.addf %865, %888 : vector<16x16xf32>
    %890 = arith.mulf %889, %889 : vector<16x16xf32>
    %cst_338 = arith.constant -1.000000e+01 : f32
    %891 = vector.broadcast %cst_338 : f32 to vector<16x1xf32>
    %892 = arith.divf %891, %887 : vector<16x1xf32>
    %893 = vector.broadcast %892 : vector<16x1xf32> to vector<16x16xf32>
    %894 = arith.mulf %890, %893 : vector<16x16xf32>
    %895 = math.exp %894 : vector<16x16xf32>
    %cst_339 = arith.constant 4.000000e+00 : f32
    %896 = vector.broadcast %cst_339 : f32 to vector<16x16xf32>
    %897 = arith.mulf %895, %896 : vector<16x16xf32>
    %cst_340 = arith.constant dense<0xFF800000> : vector<16xf32>
    %898 = vector.multi_reduction <maximumf>, %897, %cst_340 [1] : vector<16x16xf32> to vector<16xf32>
    %899 = vector.shape_cast %898 : vector<16xf32> to vector<16x1xf32>
    %900 = vector.broadcast %899 : vector<16x1xf32> to vector<16x16xf32>
    %901 = arith.subf %897, %900 : vector<16x16xf32>
    %902 = math.exp %901 : vector<16x16xf32>
    %cst_341 = arith.constant dense<0.000000e+00> : vector<16xf32>
    %903 = vector.multi_reduction <add>, %902, %cst_341 [1] : vector<16x16xf32> to vector<16xf32>
    %904 = vector.shape_cast %903 : vector<16xf32> to vector<16x1xf32>
    %cst_342 = arith.constant 1.000000e+00 : f32
    %905 = vector.broadcast %cst_342 : f32 to vector<16x1xf32>
    %906 = arith.divf %905, %904 : vector<16x1xf32>
    %907 = vector.broadcast %906 : vector<16x1xf32> to vector<16x16xf32>
    %908 = arith.mulf %902, %907 : vector<16x16xf32>
    %909 = arith.addf %707, %908 : vector<16x16xf32>
    %c1_343 = arith.constant 1 : index
    %c0_344 = arith.constant 0 : index
    %c0_345 = arith.constant 0 : index
    %910 = vector.load %arg1[%c1_343, %c0_344, %c0_345] : memref<4x16x16xf32, #tpu.memory_space<vmem>>, vector<1x16x16xf32>
    %911 = vector.shape_cast %910 : vector<1x16x16xf32> to vector<16x16xf32>
    %cst_346 = arith.constant dense<0.000000e+00> : vector<16x16xf32>
    %912 = tpu.matmul %858, %911, %cst_346 {dimension_numbers = #tpu.dot_dimension_numbers<[1], [0], [0], [1], [0, 0, 1, 1], [], []>} : vector<16x16xf32>, vector<16x16xf32>, vector<16x16xf32> -> vector<16x16xf32>
    %cst_347 = arith.constant dense<0.000000e+00> : vector<16x16xf32>
    %913 = tpu.matmul %912, %859, %cst_347 {dimension_numbers = #tpu.dot_dimension_numbers<[1], [0], [0], [1], [0, 0, 1, 1], [], []>} : vector<16x16xf32>, vector<16x16xf32>, vector<16x16xf32> -> vector<16x16xf32>
    %914 = vector.broadcast %247 : f32 to vector<16x16xf32>
    %915 = arith.mulf %913, %914 : vector<16x16xf32>
    %916 = vector.broadcast %1 : vector<1x16xf32> to vector<16x16xf32>
    %917 = arith.mulf %912, %916 : vector<16x16xf32>
    %cst_348 = arith.constant dense<0.000000e+00> : vector<16xf32>
    %918 = vector.multi_reduction <add>, %917, %cst_348 [1] : vector<16x16xf32> to vector<16xf32>
    %919 = vector.shape_cast %918 : vector<16xf32> to vector<16x1xf32>
    %920 = vector.broadcast %244 : f32 to vector<16x1xf32>
    %921 = arith.mulf %919, %920 : vector<16x1xf32>
    %922 = arith.negf %921 : vector<16x1xf32>
    %923 = math.exp %922 : vector<16x1xf32>
    %cst_349 = arith.constant 1.000000e+00 : f32
    %924 = vector.broadcast %cst_349 : f32 to vector<16x1xf32>
    %925 = arith.addf %924, %923 : vector<16x1xf32>
    %926 = arith.divf %924, %925 : vector<16x1xf32>
    %927 = vector.broadcast %2 : vector<1x16xf32> to vector<16x16xf32>
    %928 = arith.mulf %912, %927 : vector<16x16xf32>
    %cst_350 = arith.constant dense<0.000000e+00> : vector<16xf32>
    %929 = vector.multi_reduction <add>, %928, %cst_350 [1] : vector<16x16xf32> to vector<16xf32>
    %930 = vector.shape_cast %929 : vector<16xf32> to vector<16x1xf32>
    %931 = vector.broadcast %244 : f32 to vector<16x1xf32>
    %932 = arith.mulf %930, %931 : vector<16x1xf32>
    %933 = arith.negf %932 : vector<16x1xf32>
    %934 = math.exp %933 : vector<16x1xf32>
    %cst_351 = arith.constant 1.000000e+00 : f32
    %935 = vector.broadcast %cst_351 : f32 to vector<16x1xf32>
    %936 = arith.addf %935, %934 : vector<16x1xf32>
    %937 = arith.divf %935, %936 : vector<16x1xf32>
    %938 = vector.broadcast %926 : vector<16x1xf32> to vector<16x16xf32>
    %939 = arith.addf %915, %938 : vector<16x16xf32>
    %940 = arith.mulf %939, %939 : vector<16x16xf32>
    %cst_352 = arith.constant -1.000000e+01 : f32
    %941 = vector.broadcast %cst_352 : f32 to vector<16x1xf32>
    %942 = arith.divf %941, %937 : vector<16x1xf32>
    %943 = vector.broadcast %942 : vector<16x1xf32> to vector<16x16xf32>
    %944 = arith.mulf %940, %943 : vector<16x16xf32>
    %945 = math.exp %944 : vector<16x16xf32>
    %cst_353 = arith.constant 4.000000e+00 : f32
    %946 = vector.broadcast %cst_353 : f32 to vector<16x16xf32>
    %947 = arith.mulf %945, %946 : vector<16x16xf32>
    %cst_354 = arith.constant dense<0xFF800000> : vector<16xf32>
    %948 = vector.multi_reduction <maximumf>, %947, %cst_354 [1] : vector<16x16xf32> to vector<16xf32>
    %949 = vector.shape_cast %948 : vector<16xf32> to vector<16x1xf32>
    %950 = vector.broadcast %949 : vector<16x1xf32> to vector<16x16xf32>
    %951 = arith.subf %947, %950 : vector<16x16xf32>
    %952 = math.exp %951 : vector<16x16xf32>
    %cst_355 = arith.constant dense<0.000000e+00> : vector<16xf32>
    %953 = vector.multi_reduction <add>, %952, %cst_355 [1] : vector<16x16xf32> to vector<16xf32>
    %954 = vector.shape_cast %953 : vector<16xf32> to vector<16x1xf32>
    %cst_356 = arith.constant 1.000000e+00 : f32
    %955 = vector.broadcast %cst_356 : f32 to vector<16x1xf32>
    %956 = arith.divf %955, %954 : vector<16x1xf32>
    %957 = vector.broadcast %956 : vector<16x1xf32> to vector<16x16xf32>
    %958 = arith.mulf %952, %957 : vector<16x16xf32>
    %959 = arith.addf %757, %958 : vector<16x16xf32>
    %c2_357 = arith.constant 2 : index
    %c0_358 = arith.constant 0 : index
    %c0_359 = arith.constant 0 : index
    %960 = vector.load %arg1[%c2_357, %c0_358, %c0_359] : memref<4x16x16xf32, #tpu.memory_space<vmem>>, vector<1x16x16xf32>
    %961 = vector.shape_cast %960 : vector<1x16x16xf32> to vector<16x16xf32>
    %cst_360 = arith.constant dense<0.000000e+00> : vector<16x16xf32>
    %962 = tpu.matmul %858, %961, %cst_360 {dimension_numbers = #tpu.dot_dimension_numbers<[1], [0], [0], [1], [0, 0, 1, 1], [], []>} : vector<16x16xf32>, vector<16x16xf32>, vector<16x16xf32> -> vector<16x16xf32>
    %cst_361 = arith.constant dense<0.000000e+00> : vector<16x16xf32>
    %963 = tpu.matmul %962, %859, %cst_361 {dimension_numbers = #tpu.dot_dimension_numbers<[1], [0], [0], [1], [0, 0, 1, 1], [], []>} : vector<16x16xf32>, vector<16x16xf32>, vector<16x16xf32> -> vector<16x16xf32>
    %964 = vector.broadcast %247 : f32 to vector<16x16xf32>
    %965 = arith.mulf %963, %964 : vector<16x16xf32>
    %966 = vector.broadcast %1 : vector<1x16xf32> to vector<16x16xf32>
    %967 = arith.mulf %962, %966 : vector<16x16xf32>
    %cst_362 = arith.constant dense<0.000000e+00> : vector<16xf32>
    %968 = vector.multi_reduction <add>, %967, %cst_362 [1] : vector<16x16xf32> to vector<16xf32>
    %969 = vector.shape_cast %968 : vector<16xf32> to vector<16x1xf32>
    %970 = vector.broadcast %244 : f32 to vector<16x1xf32>
    %971 = arith.mulf %969, %970 : vector<16x1xf32>
    %972 = arith.negf %971 : vector<16x1xf32>
    %973 = math.exp %972 : vector<16x1xf32>
    %cst_363 = arith.constant 1.000000e+00 : f32
    %974 = vector.broadcast %cst_363 : f32 to vector<16x1xf32>
    %975 = arith.addf %974, %973 : vector<16x1xf32>
    %976 = arith.divf %974, %975 : vector<16x1xf32>
    %977 = vector.broadcast %2 : vector<1x16xf32> to vector<16x16xf32>
    %978 = arith.mulf %962, %977 : vector<16x16xf32>
    %cst_364 = arith.constant dense<0.000000e+00> : vector<16xf32>
    %979 = vector.multi_reduction <add>, %978, %cst_364 [1] : vector<16x16xf32> to vector<16xf32>
    %980 = vector.shape_cast %979 : vector<16xf32> to vector<16x1xf32>
    %981 = vector.broadcast %244 : f32 to vector<16x1xf32>
    %982 = arith.mulf %980, %981 : vector<16x1xf32>
    %983 = arith.negf %982 : vector<16x1xf32>
    %984 = math.exp %983 : vector<16x1xf32>
    %cst_365 = arith.constant 1.000000e+00 : f32
    %985 = vector.broadcast %cst_365 : f32 to vector<16x1xf32>
    %986 = arith.addf %985, %984 : vector<16x1xf32>
    %987 = arith.divf %985, %986 : vector<16x1xf32>
    %988 = vector.broadcast %976 : vector<16x1xf32> to vector<16x16xf32>
    %989 = arith.addf %965, %988 : vector<16x16xf32>
    %990 = arith.mulf %989, %989 : vector<16x16xf32>
    %cst_366 = arith.constant -1.000000e+01 : f32
    %991 = vector.broadcast %cst_366 : f32 to vector<16x1xf32>
    %992 = arith.divf %991, %987 : vector<16x1xf32>
    %993 = vector.broadcast %992 : vector<16x1xf32> to vector<16x16xf32>
    %994 = arith.mulf %990, %993 : vector<16x16xf32>
    %995 = math.exp %994 : vector<16x16xf32>
    %cst_367 = arith.constant 4.000000e+00 : f32
    %996 = vector.broadcast %cst_367 : f32 to vector<16x16xf32>
    %997 = arith.mulf %995, %996 : vector<16x16xf32>
    %cst_368 = arith.constant dense<0xFF800000> : vector<16xf32>
    %998 = vector.multi_reduction <maximumf>, %997, %cst_368 [1] : vector<16x16xf32> to vector<16xf32>
    %999 = vector.shape_cast %998 : vector<16xf32> to vector<16x1xf32>
    %1000 = vector.broadcast %999 : vector<16x1xf32> to vector<16x16xf32>
    %1001 = arith.subf %997, %1000 : vector<16x16xf32>
    %1002 = math.exp %1001 : vector<16x16xf32>
    %cst_369 = arith.constant dense<0.000000e+00> : vector<16xf32>
    %1003 = vector.multi_reduction <add>, %1002, %cst_369 [1] : vector<16x16xf32> to vector<16xf32>
    %1004 = vector.shape_cast %1003 : vector<16xf32> to vector<16x1xf32>
    %cst_370 = arith.constant 1.000000e+00 : f32
    %1005 = vector.broadcast %cst_370 : f32 to vector<16x1xf32>
    %1006 = arith.divf %1005, %1004 : vector<16x1xf32>
    %1007 = vector.broadcast %1006 : vector<16x1xf32> to vector<16x16xf32>
    %1008 = arith.mulf %1002, %1007 : vector<16x16xf32>
    %1009 = arith.addf %807, %1008 : vector<16x16xf32>
    %c3_371 = arith.constant 3 : index
    %c0_372 = arith.constant 0 : index
    %c0_373 = arith.constant 0 : index
    %1010 = vector.load %arg1[%c3_371, %c0_372, %c0_373] : memref<4x16x16xf32, #tpu.memory_space<vmem>>, vector<1x16x16xf32>
    %1011 = vector.shape_cast %1010 : vector<1x16x16xf32> to vector<16x16xf32>
    %cst_374 = arith.constant dense<0.000000e+00> : vector<16x16xf32>
    %1012 = tpu.matmul %858, %1011, %cst_374 {dimension_numbers = #tpu.dot_dimension_numbers<[1], [0], [0], [1], [0, 0, 1, 1], [], []>} : vector<16x16xf32>, vector<16x16xf32>, vector<16x16xf32> -> vector<16x16xf32>
    %cst_375 = arith.constant dense<0.000000e+00> : vector<16x16xf32>
    %1013 = tpu.matmul %1012, %859, %cst_375 {dimension_numbers = #tpu.dot_dimension_numbers<[1], [0], [0], [1], [0, 0, 1, 1], [], []>} : vector<16x16xf32>, vector<16x16xf32>, vector<16x16xf32> -> vector<16x16xf32>
    %1014 = vector.broadcast %247 : f32 to vector<16x16xf32>
    %1015 = arith.mulf %1013, %1014 : vector<16x16xf32>
    %1016 = vector.broadcast %1 : vector<1x16xf32> to vector<16x16xf32>
    %1017 = arith.mulf %1012, %1016 : vector<16x16xf32>
    %cst_376 = arith.constant dense<0.000000e+00> : vector<16xf32>
    %1018 = vector.multi_reduction <add>, %1017, %cst_376 [1] : vector<16x16xf32> to vector<16xf32>
    %1019 = vector.shape_cast %1018 : vector<16xf32> to vector<16x1xf32>
    %1020 = vector.broadcast %244 : f32 to vector<16x1xf32>
    %1021 = arith.mulf %1019, %1020 : vector<16x1xf32>
    %1022 = arith.negf %1021 : vector<16x1xf32>
    %1023 = math.exp %1022 : vector<16x1xf32>
    %cst_377 = arith.constant 1.000000e+00 : f32
    %1024 = vector.broadcast %cst_377 : f32 to vector<16x1xf32>
    %1025 = arith.addf %1024, %1023 : vector<16x1xf32>
    %1026 = arith.divf %1024, %1025 : vector<16x1xf32>
    %1027 = vector.broadcast %2 : vector<1x16xf32> to vector<16x16xf32>
    %1028 = arith.mulf %1012, %1027 : vector<16x16xf32>
    %cst_378 = arith.constant dense<0.000000e+00> : vector<16xf32>
    %1029 = vector.multi_reduction <add>, %1028, %cst_378 [1] : vector<16x16xf32> to vector<16xf32>
    %1030 = vector.shape_cast %1029 : vector<16xf32> to vector<16x1xf32>
    %1031 = vector.broadcast %244 : f32 to vector<16x1xf32>
    %1032 = arith.mulf %1030, %1031 : vector<16x1xf32>
    %1033 = arith.negf %1032 : vector<16x1xf32>
    %1034 = math.exp %1033 : vector<16x1xf32>
    %cst_379 = arith.constant 1.000000e+00 : f32
    %1035 = vector.broadcast %cst_379 : f32 to vector<16x1xf32>
    %1036 = arith.addf %1035, %1034 : vector<16x1xf32>
    %1037 = arith.divf %1035, %1036 : vector<16x1xf32>
    %1038 = vector.broadcast %1026 : vector<16x1xf32> to vector<16x16xf32>
    %1039 = arith.addf %1015, %1038 : vector<16x16xf32>
    %1040 = arith.mulf %1039, %1039 : vector<16x16xf32>
    %cst_380 = arith.constant -1.000000e+01 : f32
    %1041 = vector.broadcast %cst_380 : f32 to vector<16x1xf32>
    %1042 = arith.divf %1041, %1037 : vector<16x1xf32>
    %1043 = vector.broadcast %1042 : vector<16x1xf32> to vector<16x16xf32>
    %1044 = arith.mulf %1040, %1043 : vector<16x16xf32>
    %1045 = math.exp %1044 : vector<16x16xf32>
    %cst_381 = arith.constant 4.000000e+00 : f32
    %1046 = vector.broadcast %cst_381 : f32 to vector<16x16xf32>
    %1047 = arith.mulf %1045, %1046 : vector<16x16xf32>
    %cst_382 = arith.constant dense<0xFF800000> : vector<16xf32>
    %1048 = vector.multi_reduction <maximumf>, %1047, %cst_382 [1] : vector<16x16xf32> to vector<16xf32>
    %1049 = vector.shape_cast %1048 : vector<16xf32> to vector<16x1xf32>
    %1050 = vector.broadcast %1049 : vector<16x1xf32> to vector<16x16xf32>
    %1051 = arith.subf %1047, %1050 : vector<16x16xf32>
    %1052 = math.exp %1051 : vector<16x16xf32>
    %cst_383 = arith.constant dense<0.000000e+00> : vector<16xf32>
    %1053 = vector.multi_reduction <add>, %1052, %cst_383 [1] : vector<16x16xf32> to vector<16xf32>
    %1054 = vector.shape_cast %1053 : vector<16xf32> to vector<16x1xf32>
    %cst_384 = arith.constant 1.000000e+00 : f32
    %1055 = vector.broadcast %cst_384 : f32 to vector<16x1xf32>
    %1056 = arith.divf %1055, %1054 : vector<16x1xf32>
    %1057 = vector.broadcast %1056 : vector<16x1xf32> to vector<16x16xf32>
    %1058 = arith.mulf %1052, %1057 : vector<16x16xf32>
    %1059 = arith.addf %857, %1058 : vector<16x16xf32>
    %1060 = tpu.concatenate %909, %959, %1009, %1059 in 0 : vector<16x16xf32>, vector<16x16xf32>, vector<16x16xf32>, vector<16x16xf32> -> vector<64x16xf32>
    %cst_385 = arith.constant 1.250000e+00 : f32
    %1061 = vector.broadcast %cst_385 : f32 to vector<64x16xf32>
    %1062 = arith.mulf %1060, %1061 : vector<64x16xf32>
    %c0_386 = arith.constant 0 : index
    %c0_387 = arith.constant 0 : index
    %1063 = vector.load %arg5[%c0_386, %c0_387] : memref<64x64xf32, #tpu.memory_space<vmem>>, vector<64x64xf32>
    %cst_388 = arith.constant dense<0.000000e+00> : vector<64x16xf32>
    %1064 = tpu.matmul %1063, %1062, %cst_388 {dimension_numbers = #tpu.dot_dimension_numbers<[1], [0], [0], [1], [0, 0, 1, 1], [], []>} : vector<64x64xf32>, vector<64x16xf32>, vector<64x16xf32> -> vector<64x16xf32>
    %1065 = tpu.transpose %1064, [1, 0] : vector<64x16xf32> -> vector<16x64xf32>
    %cst_389 = arith.constant dense<0.000000e+00> : vector<16x16xf32>
    %1066 = tpu.matmul %1065, %0, %cst_389 {dimension_numbers = #tpu.dot_dimension_numbers<[1], [0], [0], [1], [0, 0, 1, 1], [], []>} : vector<16x64xf32>, vector<64x16xf32>, vector<16x16xf32> -> vector<16x16xf32>
    %cst_390 = arith.constant dense<0.000000e+00> : vector<64x16xf32>
    %1067 = tpu.matmul %1064, %1066, %cst_390 {dimension_numbers = #tpu.dot_dimension_numbers<[1], [0], [0], [1], [0, 0, 1, 1], [], []>} : vector<64x16xf32>, vector<16x16xf32>, vector<64x16xf32> -> vector<64x16xf32>
    %c0_391 = arith.constant 0 : index
    %c0_392 = arith.constant 0 : index
    %1068 = vector.load %arg6[%c0_391, %c0_392] : memref<16x16xf32, #tpu.memory_space<vmem>>, vector<16x16xf32>
    %cst_393 = arith.constant dense<0.000000e+00> : vector<64x16xf32>
    %1069 = tpu.matmul %1067, %1068, %cst_393 {dimension_numbers = #tpu.dot_dimension_numbers<[1], [0], [0], [1], [0, 0, 1, 1], [], []>} : vector<64x16xf32>, vector<16x16xf32>, vector<64x16xf32> -> vector<64x16xf32>
    %c0_394 = arith.constant 0 : index
    %c0_395 = arith.constant 0 : index
    %1070 = vector.load %arg8[%c0_394, %c0_395] : memref<1x16xf32, #tpu.memory_space<vmem>>, vector<1x16xf32>
    %1071 = vector.broadcast %1070 : vector<1x16xf32> to vector<64x16xf32>
    %1072 = arith.addf %1069, %1071 : vector<64x16xf32>
    %c0_396 = arith.constant 0 : index
    %c0_397 = arith.constant 0 : index
    %1073 = vector.load %arg7[%c0_396, %c0_397] : memref<16x16xf32, #tpu.memory_space<vmem>>, vector<16x16xf32>
    %cst_398 = arith.constant dense<0.000000e+00> : vector<64x16xf32>
    %1074 = tpu.matmul %0, %1073, %cst_398 {dimension_numbers = #tpu.dot_dimension_numbers<[1], [0], [0], [1], [0, 0, 1, 1], [], []>} : vector<64x16xf32>, vector<16x16xf32>, vector<64x16xf32> -> vector<64x16xf32>
    %1075 = arith.addf %1072, %1074 : vector<64x16xf32>
    %c0_399 = arith.constant 0 : index
    %c0_400 = arith.constant 0 : index
    %1076 = vector.load %arg9[%c0_399, %c0_400] : memref<64x16xf32, #tpu.memory_space<vmem>>, vector<64x16xf32>
    tpu.vector_store %arg9[%c0_399, %c0_400], %1075 {strides = array<i32>} : memref<64x16xf32, #tpu.memory_space<vmem>>, vector<64x16xf32>,
    return
  }
}

</mosaic_0001>

<llo_original>
// kernel: tpu_custom_call.1
$region0: #{tpu_custom_call.1}
  #allocation0 [shape = 'u32[]', space=smem, size = 0x4, offset = 0x4, fixed_abs, tag = 'smem constant byte address 0x4 - core index']
  #allocation1 [shape = 'u32[144,128]{1,0:T(1,128)}', space=vmem, size = 0x12000, scoped, tag = 'internal scratch']
  %s0 = inlined_call_operand.vmem [shape: f32[64,16], index: 0, kind: input, shape index: {}]
  %s1 = inlined_call_operand.vmem [shape: f32[4,16,16], index: 1, kind: input, shape index: {}]
  %s2 = inlined_call_operand.hbm [shape: f32[4,16,16], index: 2, kind: input, shape index: {}]
  %s3 = inlined_call_operand.vmem [shape: f32[1,16], index: 3, kind: input, shape index: {}]
  %s4 = inlined_call_operand.vmem [shape: f32[1,16], index: 4, kind: input, shape index: {}]
  %s5 = inlined_call_operand.hbm [shape: f32[64,64], index: 5, kind: input, shape index: {}]
  %s6 = inlined_call_operand.vmem [shape: f32[16,16], index: 6, kind: input, shape index: {}]
  %s7 = inlined_call_operand.hbm [shape: f32[16,16], index: 7, kind: input, shape index: {}]
  %s8 = inlined_call_operand.vmem [shape: f32[1,16], index: 8, kind: input, shape index: {}]
  %s9 = inlined_call_operand.vmem [shape: f32[64,16], index: 9, kind: output, shape index: {}]
  %s10 = sld [smem:[#allocation0]]
  $region58: #{tpu_custom_call.1} parent=0
    _
  %s12 = ssub.s32 1, %s10
  %s13 = scalar_select 0, %s12, %s10
  $region1: #{tpu_custom_call.1} parent=0
    #allocation2 [shape = 'u8[32768]{0}', space=vmem, size = 0x8000, scoped, tag = 'input window, operand 2, single buffered']
    #allocation3 [shape = 's32[1]{0}', space=sflag, size = 0x4, scoped, tag = 'scoped memory for tpu_custom_call.1']
    #allocation4 [shape = 'u8[32768]{0}', space=vmem, size = 0x8000, scoped, tag = 'input window, operand 5, single buffered']
    #allocation5 [shape = 's32[1]{0}', space=sflag, size = 0x4, scoped, tag = 'scoped memory for tpu_custom_call.1']
    #allocation6 [shape = 'u8[8192]{0}', space=vmem, size = 0x2000, scoped, tag = 'input window, operand 7, single buffered']
    %14 = vsyncpa [#allocation3], 0
    %15 = vsyncpa [#allocation5], 0
    // Predicated region
    $region2: #{tpu_custom_call.1} parent=1 // pred_check
      _
    $region3: #{tpu_custom_call.1} parent=1 // pred_check_branch
      %17 = sbr.rel (0) target = $region5
    $region4: #{tpu_custom_call.1} parent=1 // pred_region
      _
    $region5: #{tpu_custom_call.1} parent=1 // pred_fallthru
      _
    // Predicated region
    $region6: #{tpu_custom_call.1} parent=1 // pred_check
      _
    $region7: #{tpu_custom_call.1} parent=1 // pred_check_branch
      %19 = sbr.rel (0) target = $region9
    $region8: #{tpu_custom_call.1} parent=1 // pred_region
      _
    $region9: #{tpu_custom_call.1} parent=1 // pred_fallthru
      _
    // Predicated region
    $region10: #{tpu_custom_call.1} parent=1 // pred_check
      _
    $region11: #{tpu_custom_call.1} parent=1 // pred_check_branch
      %21 = sbr.rel (0) target = $region13
    $region12: #{tpu_custom_call.1} parent=1 // pred_region
      %s23 = ssub.s32 1024, 1024
      %24 = vsyncadd [#allocation3], %s23
      %s25 = sshll.u32 [#allocation2], 4
      %s26 = int_to_ptr.vmem [resolvable:$true] %s25
      %31 = dma.hbm_to_vmem [thread:$0]  %s2, 1024, %s26, [#allocation3], 128, 128, 8
    $region13: #{tpu_custom_call.1} parent=1 // pred_fallthru
      _
    // Predicated region
    $region14: #{tpu_custom_call.1} parent=1 // pred_check
      _
    $region15: #{tpu_custom_call.1} parent=1 // pred_check_branch
      %33 = sbr.rel (0) target = $region17
    $region16: #{tpu_custom_call.1} parent=1 // pred_region
      _
    $region17: #{tpu_custom_call.1} parent=1 // pred_fallthru
      _
    // Predicated region
    $region18: #{tpu_custom_call.1} parent=1 // pred_check
      _
    $region19: #{tpu_custom_call.1} parent=1 // pred_check_branch
      %35 = sbr.rel (0) target = $region21
    $region20: #{tpu_custom_call.1} parent=1 // pred_region
      _
    $region21: #{tpu_custom_call.1} parent=1 // pred_fallthru
      _
    // Predicated region
    $region22: #{tpu_custom_call.1} parent=1 // pred_check
      _
    $region23: #{tpu_custom_call.1} parent=1 // pred_check_branch
      %37 = sbr.rel (0) target = $region25
    $region24: #{tpu_custom_call.1} parent=1 // pred_region
      %s39 = ssub.s32 1024, 1024
      %40 = vsyncadd [#allocation5], %s39
      %s41 = sshll.u32 [#allocation4], 4
      %s42 = int_to_ptr.vmem [resolvable:$true] %s41
      %47 = dma.hbm_to_vmem [thread:$0]  %s5, 1024, %s42, [#allocation5], 128, 128, 8
    $region25: #{tpu_custom_call.1} parent=1 // pred_fallthru
      _
    // Predicated region
    $region26: #{tpu_custom_call.1} parent=1 // pred_check
      _
    $region27: #{tpu_custom_call.1} parent=1 // pred_check_branch
      %49 = sbr.rel (0) target = $region29
    $region28: #{tpu_custom_call.1} parent=1 // pred_region
      _
    $region29: #{tpu_custom_call.1} parent=1 // pred_fallthru
      _
    // Predicated region
    $region30: #{tpu_custom_call.1} parent=1 // pred_check
      _
    $region31: #{tpu_custom_call.1} parent=1 // pred_check_branch
      %51 = sbr.rel (0) target = $region33
    $region32: #{tpu_custom_call.1} parent=1 // pred_region
      %s53 = ssub.s32 256, 256
      %54 = vsyncadd [#allocation5], %s53
      %s55 = sshll.u32 [#allocation6], 4
      %s56 = int_to_ptr.vmem [resolvable:$true] %s55
      %61 = dma.hbm_to_vmem [thread:$0]  %s7, 256, %s56, [#allocation5], 128, 128, 8
    $region33: #{tpu_custom_call.1} parent=1 // pred_fallthru
      _
    // Predicated region
    $region34: #{tpu_custom_call.1} parent=1 // pred_check
      _
    $region35: #{tpu_custom_call.1} parent=1 // pred_check_branch
      %63 = sbr.rel (0) target = $region37
    $region36: #{tpu_custom_call.1} parent=1 // pred_region
      _
    $region37: #{tpu_custom_call.1} parent=1 // pred_fallthru
      _
    // Predicated region
    $region38: #{tpu_custom_call.1} parent=1 // pred_check
      _
    $region39: #{tpu_custom_call.1} parent=1 // pred_check_branch
      %65 = sbr.rel (0) target = $region41
    $region40: #{tpu_custom_call.1} parent=1 // pred_region
      %66 = dma.done [#allocation3], 1024
    $region41: #{tpu_custom_call.1} parent=1 // pred_fallthru
      _
    // Predicated region
    $region42: #{tpu_custom_call.1} parent=1 // pred_check
      _
    $region43: #{tpu_custom_call.1} parent=1 // pred_check_branch
      %68 = sbr.rel (0) target = $region45
    $region44: #{tpu_custom_call.1} parent=1 // pred_region
      %69 = dma.done [#allocation5], 1024
    $region45: #{tpu_custom_call.1} parent=1 // pred_fallthru
      _
    // Predicated region
    $region46: #{tpu_custom_call.1} parent=1 // pred_check
      _
    $region47: #{tpu_custom_call.1} parent=1 // pred_check_branch
      %71 = sbr.rel (0) target = $region49
    $region48: #{tpu_custom_call.1} parent=1 // pred_region
      %72 = dma.done [#allocation5], 256
    $region49: #{tpu_custom_call.1} parent=1 // pred_fallthru
      _
    %v73 = vld [vmem:[%s0] sm:$0xff]
    %v74 = vld [vmem:[%s0 + $0x8] sm:$0xff]
    %v75 = vld [vmem:[%s0 + $0x10] sm:$0xff]
    %v76 = vld [vmem:[%s0 + $0x18] sm:$0xff]
    %v77 = vld [vmem:[%s0 + $0x20] sm:$0xff]
    %v78 = vld [vmem:[%s0 + $0x28] sm:$0xff]
    %v79 = vld [vmem:[%s0 + $0x30] sm:$0xff]
    %v80 = vld [vmem:[%s0 + $0x38] sm:$0xff]
    %v81 = vld [vmem:[%s3] sm:$0x1]
    %v82 = vld [vmem:[%s4] sm:$0x1]
    %v83 = vld [vmem:[%s1] sm:$0xff]
    %v84 = vld [vmem:[%s1 + $0x8] sm:$0xff]
    %vm85 = vcmask 130048
    %v87 = vsel %vm85, %v73, 0
    %v90 = vsel %vm85, %v74, 0
    %92 = vmatprep.subr.mxu0 0.0
    %93 = vmatpush1.msra.mxu0 0.0
    %94 = vmatprep.subr.mxu0 0.0
    %95 = vmatpush1.msra.mxu0 0.0
    %96 = vmatprep.subr.mxu0 0.0
    %97 = vmatpush1.msra.mxu0 0.0
    %98 = vmatprep.subr.mxu0 0.0
    %99 = vmatpush1.msra.mxu0 0.0
    %100 = vmatprep.subr.mxu0 0.0
    %101 = vmatpush1.msra.mxu0 0.0
    %102 = vmatprep.subr.mxu0 0.0
    %103 = vmatpush1.msra.mxu0 0.0
    %104 = vmatprep.subr.mxu0 0.0
    %105 = vmatpush1.msra.mxu0 0.0
    %106 = vmatprep.subr.mxu0 0.0
    %107 = vmatpush1.msra.mxu0 0.0
    %108 = vmatprep.subr.mxu0 0.0
    %109 = vmatpush1.msra.mxu0 0.0
    %110 = vmatprep.subr.mxu0 0.0
    %111 = vmatpush1.msra.mxu0 0.0
    %112 = vmatprep.subr.mxu0 0.0
    %113 = vmatpush1.msra.mxu0 0.0
    %114 = vmatprep.subr.mxu0 0.0
    %115 = vmatpush1.msra.mxu0 0.0
    %116 = vmatprep.subr.mxu0 0.0
    %117 = vmatpush1.msra.mxu0 0.0
    %118 = vmatprep.subr.mxu0 0.0
    %119 = vmatpush1.msra.mxu0 0.0
    %120 = vmatprep.subr.mxu0 0.0
    %121 = vmatpush1.msra.mxu0 %v84
    %122 = vmatprep.subr.mxu0 0.0
    %123 = vmatpush1.msra.mxu0 %v83
    %124 = vmatprep.subr.mxu0 0.0
    %125 = vmatpush2.msra.mxu0 0.0
    %126 = vmatprep.subr.mxu0 0.0
    %127 = vmatpush2.msra.mxu0 0.0
    %128 = vmatprep.subr.mxu0 0.0
    %129 = vmatpush2.msra.mxu0 0.0
    %130 = vmatprep.subr.mxu0 0.0
    %131 = vmatpush2.msra.mxu0 0.0
    %132 = vmatprep.subr.mxu0 0.0
    %133 = vmatpush2.msra.mxu0 0.0
    %134 = vmatprep.subr.mxu0 0.0
    %135 = vmatpush2.msra.mxu0 0.0
    %136 = vmatprep.subr.mxu0 0.0
    %137 = vmatpush2.msra.mxu0 0.0
    %138 = vmatprep.subr.mxu0 0.0
    %139 = vmatpush2.msra.mxu0 0.0
    %140 = vmatprep.subr.mxu0 0.0
    %141 = vmatpush2.msra.mxu0 0.0
    %142 = vmatprep.subr.mxu0 0.0
    %143 = vmatpush2.msra.mxu0 0.0
    %144 = vmatprep.subr.mxu0 0.0
    %145 = vmatpush2.msra.mxu0 0.0
    %146 = vmatprep.subr.mxu0 0.0
    %147 = vmatpush2.msra.mxu0 0.0
    %148 = vmatprep.subr.mxu0 0.0
    %149 = vmatpush2.msra.mxu0 0.0
    %150 = vmatprep.subr.mxu0 0.0
    %151 = vmatpush2.msra.mxu0 0.0
    %152 = vmatprep.subr.mxu0 0.0
    %153 = vmatpush2.msra.mxu0 0.0
    %154 = vmatprep.subr.mxu0 0.0
    %155 = vmatpush2.msra.mxu0 0.0
    %156 = vmatprep.mubr.f32.mxu0 0.0
    %157 = vmatmul.mubr.f32.gmra.mxu0 %v87
    %v158 = vpop.f32.mrf.mxu0
    %v159 = vadd.f32 0.0, %v158
    %v160 = vpop.f32.mrf.mxu0
    %161 = vmatprep.mubr.f32.mxu0 0.0
    %162 = vmatmul.mubr.f32.gmra.mxu0 %v90
    %v163 = vpop.f32.mrf.mxu0
    %v164 = vadd.f32 0.0, %v163
    %v165 = vpop.f32.mrf.mxu0
    %166 = vdwg.mxu0
    %v167 = vmul.f32 %v159, %v159
    %v168 = vmul.f32 %v164, %v164
    %v169 = vsel %vm85, %v167, 0.0
    %v170 = vsel %vm85, %v168, 0.0
    %v171 = vadd.f32 %v169, %v170
    %172 = vadd.xlane.f32.xlu0 %v171
    %v173 = vpop.xlane.xlu0 %172
    %v174 = vrot.slane %v173, 4
    %v175 = vadd.f32 %v173, %v174
    %v176 = vrot.slane %v175, 2
    %v177 = vadd.f32 %v175, %v176
    %v178 = vrot.slane %v177, 1
    %v179 = vadd.f32 %v177, %v178
    %s180 = vtos %v179
    %s181 = sadd.f32 %s180, 0.0
    %v182 = vld [vmem:[#allocation2] sm:$0xff]
    %v183 = vld [vmem:[#allocation2 + $0x8] sm:$0xff]
    %s184 = scalar_lea.vmem %s1, 16
    %v185 = vld [vmem:[%s184] sm:$0xff]
    %v186 = vld [vmem:[%s184 + $0x8] sm:$0xff]
    %187 = vmatprep.subr.mxu0 0.0
    %188 = vmatpush1.msra.mxu0 0.0
    %189 = vmatprep.subr.mxu0 0.0
    %190 = vmatpush1.msra.mxu0 0.0
    %191 = vmatprep.subr.mxu0 0.0
    %192 = vmatpush1.msra.mxu0 0.0
    %193 = vmatprep.subr.mxu0 0.0
    %194 = vmatpush1.msra.mxu0 0.0
    %195 = vmatprep.subr.mxu0 0.0
    %196 = vmatpush1.msra.mxu0 0.0
    %197 = vmatprep.subr.mxu0 0.0
    %198 = vmatpush1.msra.mxu0 0.0
    %199 = vmatprep.subr.mxu0 0.0
    %200 = vmatpush1.msra.mxu0 0.0
    %201 = vmatprep.subr.mxu0 0.0
    %202 = vmatpush1.msra.mxu0 0.0
    %203 = vmatprep.subr.mxu0 0.0
    %204 = vmatpush1.msra.mxu0 0.0
    %205 = vmatprep.subr.mxu0 0.0
    %206 = vmatpush1.msra.mxu0 0.0
    %207 = vmatprep.subr.mxu0 0.0
    %208 = vmatpush1.msra.mxu0 0.0
    %209 = vmatprep.subr.mxu0 0.0
    %210 = vmatpush1.msra.mxu0 0.0
    %211 = vmatprep.subr.mxu0 0.0
    %212 = vmatpush1.msra.mxu0 0.0
    %213 = vmatprep.subr.mxu0 0.0
    %214 = vmatpush1.msra.mxu0 0.0
    %215 = vmatprep.subr.mxu0 0.0
    %216 = vmatpush1.msra.mxu0 %v186
    %217 = vmatprep.subr.mxu0 0.0
    %218 = vmatpush1.msra.mxu0 %v185
    %219 = vmatprep.subr.mxu0 0.0
    %220 = vmatpush2.msra.mxu0 0.0
    %221 = vmatprep.subr.mxu0 0.0
    %222 = vmatpush2.msra.mxu0 0.0
    %223 = vmatprep.subr.mxu0 0.0
    %224 = vmatpush2.msra.mxu0 0.0
    %225 = vmatprep.subr.mxu0 0.0
    %226 = vmatpush2.msra.mxu0 0.0
    %227 = vmatprep.subr.mxu0 0.0
    %228 = vmatpush2.msra.mxu0 0.0
    %229 = vmatprep.subr.mxu0 0.0
    %230 = vmatpush2.msra.mxu0 0.0
    %231 = vmatprep.subr.mxu0 0.0
    %232 = vmatpush2.msra.mxu0 0.0
    %233 = vmatprep.subr.mxu0 0.0
    %234 = vmatpush2.msra.mxu0 0.0
    %235 = vmatprep.subr.mxu0 0.0
    %236 = vmatpush2.msra.mxu0 0.0
    %237 = vmatprep.subr.mxu0 0.0
    %238 = vmatpush2.msra.mxu0 0.0
    %239 = vmatprep.subr.mxu0 0.0
    %240 = vmatpush2.msra.mxu0 0.0
    %241 = vmatprep.subr.mxu0 0.0
    %242 = vmatpush2.msra.mxu0 0.0
    %243 = vmatprep.subr.mxu0 0.0
    %244 = vmatpush2.msra.mxu0 0.0
    %245 = vmatprep.subr.mxu0 0.0
    %246 = vmatpush2.msra.mxu0 0.0
    %247 = vmatprep.subr.mxu0 0.0
    %248 = vmatpush2.msra.mxu0 0.0
    %249 = vmatprep.subr.mxu0 0.0
    %250 = vmatpush2.msra.mxu0 0.0
    %251 = vmatprep.mubr.f32.mxu0 0.0
    %252 = vmatmul.mubr.f32.gmra.mxu0 %v87
    %v253 = vpop.f32.mrf.mxu0
    %v254 = vadd.f32 0.0, %v253
    %v255 = vpop.f32.mrf.mxu0
    %256 = vmatprep.mubr.f32.mxu0 0.0
    %257 = vmatmul.mubr.f32.gmra.mxu0 %v90
    %v258 = vpop.f32.mrf.mxu0
    %v259 = vadd.f32 0.0, %v258
    %v260 = vpop.f32.mrf.mxu0
    %261 = vdwg.mxu0
    %v262 = vmul.f32 %v254, %v254
    %v263 = vmul.f32 %v259, %v259
    %v264 = vsel %vm85, %v262, 0.0
    %v265 = vsel %vm85, %v263, 0.0
    %v266 = vadd.f32 %v264, %v265
    %267 = vadd.xlane.f32.xlu0 %v266
    %v268 = vpop.xlane.xlu0 %267
    %v269 = vrot.slane %v268, 4
    %v270 = vadd.f32 %v268, %v269
    %v271 = vrot.slane %v270, 2
    %v272 = vadd.f32 %v270, %v271
    %v273 = vrot.slane %v272, 1
    %v274 = vadd.f32 %v272, %v273
    %s275 = vtos %v274
    %s276 = sadd.f32 %s181, %s275
    %s277 = scalar_lea.vmem [#allocation2], 16
    %v278 = vld [vmem:[%s277] sm:$0xff]
    %v279 = vld [vmem:[%s277 + $0x8] sm:$0xff]
    %v281 = vsel %vm85, %v278, 0
    %v284 = vsel %vm85, %v279, 0
    %286 = vmatprep.subr.mxu0 0.0
    %287 = vmatpush1.msra.mxu0 0.0
    %288 = vmatprep.subr.mxu0 0.0
    %289 = vmatpush1.msra.mxu0 0.0
    %290 = vmatprep.subr.mxu0 0.0
    %291 = vmatpush1.msra.mxu0 0.0
    %292 = vmatprep.subr.mxu0 0.0
    %293 = vmatpush1.msra.mxu0 0.0
    %294 = vmatprep.subr.mxu0 0.0
    %295 = vmatpush1.msra.mxu0 0.0
    %296 = vmatprep.subr.mxu0 0.0
    %297 = vmatpush1.msra.mxu0 0.0
    %298 = vmatprep.subr.mxu0 0.0
    %299 = vmatpush1.msra.mxu0 0.0
    %300 = vmatprep.subr.mxu0 0.0
    %301 = vmatpush1.msra.mxu0 0.0
    %302 = vmatprep.subr.mxu0 0.0
    %303 = vmatpush1.msra.mxu0 0.0
    %304 = vmatprep.subr.mxu0 0.0
    %305 = vmatpush1.msra.mxu0 0.0
    %306 = vmatprep.subr.mxu0 0.0
    %307 = vmatpush1.msra.mxu0 0.0
    %308 = vmatprep.subr.mxu0 0.0
    %309 = vmatpush1.msra.mxu0 0.0
    %310 = vmatprep.subr.mxu0 0.0
    %311 = vmatpush1.msra.mxu0 0.0
    %312 = vmatprep.subr.mxu0 0.0
    %313 = vmatpush1.msra.mxu0 0.0
    %314 = vmatprep.subr.mxu0 0.0
    %315 = vmatpush1.msra.mxu0 %v259
    %316 = vmatprep.subr.mxu0 0.0
    %317 = vmatpush1.msra.mxu0 %v254
    %318 = vmatprep.subr.mxu0 0.0
    %319 = vmatpush2.msra.mxu0 0.0
    %320 = vmatprep.subr.mxu0 0.0
    %321 = vmatpush2.msra.mxu0 0.0
    %322 = vmatprep.subr.mxu0 0.0
    %323 = vmatpush2.msra.mxu0 0.0
    %324 = vmatprep.subr.mxu0 0.0
    %325 = vmatpush2.msra.mxu0 0.0
    %326 = vmatprep.subr.mxu0 0.0
    %327 = vmatpush2.msra.mxu0 0.0
    %328 = vmatprep.subr.mxu0 0.0
    %329 = vmatpush2.msra.mxu0 0.0
    %330 = vmatprep.subr.mxu0 0.0
    %331 = vmatpush2.msra.mxu0 0.0
    %332 = vmatprep.subr.mxu0 0.0
    %333 = vmatpush2.msra.mxu0 0.0
    %334 = vmatprep.subr.mxu0 0.0
    %335 = vmatpush2.msra.mxu0 0.0
    %336 = vmatprep.subr.mxu0 0.0
    %337 = vmatpush2.msra.mxu0 0.0
    %338 = vmatprep.subr.mxu0 0.0
    %339 = vmatpush2.msra.mxu0 0.0
    %340 = vmatprep.subr.mxu0 0.0
    %341 = vmatpush2.msra.mxu0 0.0
    %342 = vmatprep.subr.mxu0 0.0
    %343 = vmatpush2.msra.mxu0 0.0
    %344 = vmatprep.subr.mxu0 0.0
    %345 = vmatpush2.msra.mxu0 0.0
    %346 = vmatprep.subr.mxu0 0.0
    %347 = vmatpush2.msra.mxu0 0.0
    %348 = vmatprep.subr.mxu0 0.0
    %349 = vmatpush2.msra.mxu0 0.0
    %350 = vmatprep.mubr.f32.mxu0 0.0
    %351 = vmatmul.mubr.f32.gmra.mxu0 %v281
    %v352 = vpop.f32.mrf.mxu0
    %v353 = vadd.f32 0.0, %v352
    %v354 = vpop.f32.mrf.mxu0
    %355 = vmatprep.mubr.f32.mxu0 0.0
    %356 = vmatmul.mubr.f32.gmra.mxu0 %v284
    %v357 = vpop.f32.mrf.mxu0
    %v358 = vadd.f32 0.0, %v357
    %v359 = vpop.f32.mrf.mxu0
    %360 = vdwg.mxu0
    %v362 = vsel %vm85, %v182, 0
    %v365 = vsel %vm85, %v183, 0
    %367 = vmatprep.subr.mxu0 0.0
    %368 = vmatpush1.msra.mxu0 0.0
    %369 = vmatprep.subr.mxu0 0.0
    %370 = vmatpush1.msra.mxu0 0.0
    %371 = vmatprep.subr.mxu0 0.0
    %372 = vmatpush1.msra.mxu0 0.0
    %373 = vmatprep.subr.mxu0 0.0
    %374 = vmatpush1.msra.mxu0 0.0
    %375 = vmatprep.subr.mxu0 0.0
    %376 = vmatpush1.msra.mxu0 0.0
    %377 = vmatprep.subr.mxu0 0.0
    %378 = vmatpush1.msra.mxu0 0.0
    %379 = vmatprep.subr.mxu0 0.0
    %380 = vmatpush1.msra.mxu0 0.0
    %381 = vmatprep.subr.mxu0 0.0
    %382 = vmatpush1.msra.mxu0 0.0
    %383 = vmatprep.subr.mxu0 0.0
    %384 = vmatpush1.msra.mxu0 0.0
    %385 = vmatprep.subr.mxu0 0.0
    %386 = vmatpush1.msra.mxu0 0.0
    %387 = vmatprep.subr.mxu0 0.0
    %388 = vmatpush1.msra.mxu0 0.0
    %389 = vmatprep.subr.mxu0 0.0
    %390 = vmatpush1.msra.mxu0 0.0
    %391 = vmatprep.subr.mxu0 0.0
    %392 = vmatpush1.msra.mxu0 0.0
    %393 = vmatprep.subr.mxu0 0.0
    %394 = vmatpush1.msra.mxu0 0.0
    %395 = vmatprep.subr.mxu0 0.0
    %396 = vmatpush1.msra.mxu0 %v164
    %397 = vmatprep.subr.mxu0 0.0
    %398 = vmatpush1.msra.mxu0 %v159
    %399 = vmatprep.subr.mxu0 0.0
    %400 = vmatpush2.msra.mxu0 0.0
    %401 = vmatprep.subr.mxu0 0.0
    %402 = vmatpush2.msra.mxu0 0.0
    %403 = vmatprep.subr.mxu0 0.0
    %404 = vmatpush2.msra.mxu0 0.0
    %405 = vmatprep.subr.mxu0 0.0
    %406 = vmatpush2.msra.mxu0 0.0
    %407 = vmatprep.subr.mxu0 0.0
    %408 = vmatpush2.msra.mxu0 0.0
    %409 = vmatprep.subr.mxu0 0.0
    %410 = vmatpush2.msra.mxu0 0.0
    %411 = vmatprep.subr.mxu0 0.0
    %412 = vmatpush2.msra.mxu0 0.0
    %413 = vmatprep.subr.mxu0 0.0
    %414 = vmatpush2.msra.mxu0 0.0
    %415 = vmatprep.subr.mxu0 0.0
    %416 = vmatpush2.msra.mxu0 0.0
    %417 = vmatprep.subr.mxu0 0.0
    %418 = vmatpush2.msra.mxu0 0.0
    %419 = vmatprep.subr.mxu0 0.0
    %420 = vmatpush2.msra.mxu0 0.0
    %421 = vmatprep.subr.mxu0 0.0
    %422 = vmatpush2.msra.mxu0 0.0
    %423 = vmatprep.subr.mxu0 0.0
    %424 = vmatpush2.msra.mxu0 0.0
    %425 = vmatprep.subr.mxu0 0.0
    %426 = vmatpush2.msra.mxu0 0.0
    %427 = vmatprep.subr.mxu0 0.0
    %428 = vmatpush2.msra.mxu0 0.0
    %429 = vmatprep.subr.mxu0 0.0
    %430 = vmatpush2.msra.mxu0 0.0
    %431 = vmatprep.mubr.f32.mxu0 0.0
    %432 = vmatmul.mubr.f32.gmra.mxu0 %v362
    %v433 = vpop.f32.mrf.mxu0
    %v434 = vadd.f32 %v353, %v433
    %v435 = vpop.f32.mrf.mxu0
    %436 = vmatprep.mubr.f32.mxu0 0.0
    %437 = vmatmul.mubr.f32.gmra.mxu0 %v365
    %v438 = vpop.f32.mrf.mxu0
    %v439 = vadd.f32 %v358, %v438
    %v440 = vpop.f32.mrf.mxu0
    %441 = vdwg.mxu0
    %s442 = scalar_lea.vmem %s1, 32
    %v443 = vld [vmem:[%s442] sm:$0xff]
    %v444 = vld [vmem:[%s442 + $0x8] sm:$0xff]
    %445 = vmatprep.subr.mxu0 0.0
    %446 = vmatpush1.msra.mxu0 0.0
    %447 = vmatprep.subr.mxu0 0.0
    %448 = vmatpush1.msra.mxu0 0.0
    %449 = vmatprep.subr.mxu0 0.0
    %450 = vmatpush1.msra.mxu0 0.0
    %451 = vmatprep.subr.mxu0 0.0
    %452 = vmatpush1.msra.mxu0 0.0
    %453 = vmatprep.subr.mxu0 0.0
    %454 = vmatpush1.msra.mxu0 0.0
    %455 = vmatprep.subr.mxu0 0.0
    %456 = vmatpush1.msra.mxu0 0.0
    %457 = vmatprep.subr.mxu0 0.0
    %458 = vmatpush1.msra.mxu0 0.0
    %459 = vmatprep.subr.mxu0 0.0
    %460 = vmatpush1.msra.mxu0 0.0
    %461 = vmatprep.subr.mxu0 0.0
    %462 = vmatpush1.msra.mxu0 0.0
    %463 = vmatprep.subr.mxu0 0.0
    %464 = vmatpush1.msra.mxu0 0.0
    %465 = vmatprep.subr.mxu0 0.0
    %466 = vmatpush1.msra.mxu0 0.0
    %467 = vmatprep.subr.mxu0 0.0
    %468 = vmatpush1.msra.mxu0 0.0
    %469 = vmatprep.subr.mxu0 0.0
    %470 = vmatpush1.msra.mxu0 0.0
    %471 = vmatprep.subr.mxu0 0.0
    %472 = vmatpush1.msra.mxu0 0.0
    %473 = vmatprep.subr.mxu0 0.0
    %474 = vmatpush1.msra.mxu0 %v444
    %475 = vmatprep.subr.mxu0 0.0
    %476 = vmatpush1.msra.mxu0 %v443
    %477 = vmatprep.subr.mxu0 0.0
    %478 = vmatpush2.msra.mxu0 0.0
    %479 = vmatprep.subr.mxu0 0.0
    %480 = vmatpush2.msra.mxu0 0.0
    %481 = vmatprep.subr.mxu0 0.0
    %482 = vmatpush2.msra.mxu0 0.0
    %483 = vmatprep.subr.mxu0 0.0
    %484 = vmatpush2.msra.mxu0 0.0
    %485 = vmatprep.subr.mxu0 0.0
    %486 = vmatpush2.msra.mxu0 0.0
    %487 = vmatprep.subr.mxu0 0.0
    %488 = vmatpush2.msra.mxu0 0.0
    %489 = vmatprep.subr.mxu0 0.0
    %490 = vmatpush2.msra.mxu0 0.0
    %491 = vmatprep.subr.mxu0 0.0
    %492 = vmatpush2.msra.mxu0 0.0
    %493 = vmatprep.subr.mxu0 0.0
    %494 = vmatpush2.msra.mxu0 0.0
    %495 = vmatprep.subr.mxu0 0.0
    %496 = vmatpush2.msra.mxu0 0.0
    %497 = vmatprep.subr.mxu0 0.0
    %498 = vmatpush2.msra.mxu0 0.0
    %499 = vmatprep.subr.mxu0 0.0
    %500 = vmatpush2.msra.mxu0 0.0
    %501 = vmatprep.subr.mxu0 0.0
    %502 = vmatpush2.msra.mxu0 0.0
    %503 = vmatprep.subr.mxu0 0.0
    %504 = vmatpush2.msra.mxu0 0.0
    %505 = vmatprep.subr.mxu0 0.0
    %506 = vmatpush2.msra.mxu0 0.0
    %507 = vmatprep.subr.mxu0 0.0
    %508 = vmatpush2.msra.mxu0 0.0
    %509 = vmatprep.mubr.f32.mxu0 0.0
    %510 = vmatmul.mubr.f32.gmra.mxu0 %v87
    %v511 = vpop.f32.mrf.mxu0
    %v512 = vadd.f32 0.0, %v511
    %v513 = vpop.f32.mrf.mxu0
    %514 = vmatprep.mubr.f32.mxu0 0.0
    %515 = vmatmul.mubr.f32.gmra.mxu0 %v90
    %v516 = vpop.f32.mrf.mxu0
    %v517 = vadd.f32 0.0, %v516
    %v518 = vpop.f32.mrf.mxu0
    %519 = vdwg.mxu0
    %v520 = vmul.f32 %v512, %v512
    %v521 = vmul.f32 %v517, %v517
    %v522 = vsel %vm85, %v520, 0.0
    %v523 = vsel %vm85, %v521, 0.0
    %v524 = vadd.f32 %v522, %v523
    %525 = vadd.xlane.f32.xlu0 %v524
    %v526 = vpop.xlane.xlu0 %525
    %v527 = vrot.slane %v526, 4
    %v528 = vadd.f32 %v526, %v527
    %v529 = vrot.slane %v528, 2
    %v530 = vadd.f32 %v528, %v529
    %v531 = vrot.slane %v530, 1
    %v532 = vadd.f32 %v530, %v531
    %s533 = vtos %v532
    %s534 = sadd.f32 %s276, %s533
    %s535 = scalar_lea.vmem [#allocation2], 32
    %v536 = vld [vmem:[%s535] sm:$0xff]
    %v537 = vld [vmem:[%s535 + $0x8] sm:$0xff]
    %v539 = vsel %vm85, %v536, 0
    %v542 = vsel %vm85, %v537, 0
    %544 = vmatprep.subr.mxu0 0.0
    %545 = vmatpush1.msra.mxu0 0.0
    %546 = vmatprep.subr.mxu0 0.0
    %547 = vmatpush1.msra.mxu0 0.0
    %548 = vmatprep.subr.mxu0 0.0
    %549 = vmatpush1.msra.mxu0 0.0
    %550 = vmatprep.subr.mxu0 0.0
    %551 = vmatpush1.msra.mxu0 0.0
    %552 = vmatprep.subr.mxu0 0.0
    %553 = vmatpush1.msra.mxu0 0.0
    %554 = vmatprep.subr.mxu0 0.0
    %555 = vmatpush1.msra.mxu0 0.0
    %556 = vmatprep.subr.mxu0 0.0
    %557 = vmatpush1.msra.mxu0 0.0
    %558 = vmatprep.subr.mxu0 0.0
    %559 = vmatpush1.msra.mxu0 0.0
    %560 = vmatprep.subr.mxu0 0.0
    %561 = vmatpush1.msra.mxu0 0.0
    %562 = vmatprep.subr.mxu0 0.0
    %563 = vmatpush1.msra.mxu0 0.0
    %564 = vmatprep.subr.mxu0 0.0
    %565 = vmatpush1.msra.mxu0 0.0
    %566 = vmatprep.subr.mxu0 0.0
    %567 = vmatpush1.msra.mxu0 0.0
    %568 = vmatprep.subr.mxu0 0.0
    %569 = vmatpush1.msra.mxu0 0.0
    %570 = vmatprep.subr.mxu0 0.0
    %571 = vmatpush1.msra.mxu0 0.0
    %572 = vmatprep.subr.mxu0 0.0
    %573 = vmatpush1.msra.mxu0 %v517
    %574 = vmatprep.subr.mxu0 0.0
    %575 = vmatpush1.msra.mxu0 %v512
    %576 = vmatprep.subr.mxu0 0.0
    %577 = vmatpush2.msra.mxu0 0.0
    %578 = vmatprep.subr.mxu0 0.0
    %579 = vmatpush2.msra.mxu0 0.0
    %580 = vmatprep.subr.mxu0 0.0
    %581 = vmatpush2.msra.mxu0 0.0
    %582 = vmatprep.subr.mxu0 0.0
    %583 = vmatpush2.msra.mxu0 0.0
    %584 = vmatprep.subr.mxu0 0.0
    %585 = vmatpush2.msra.mxu0 0.0
    %586 = vmatprep.subr.mxu0 0.0
    %587 = vmatpush2.msra.mxu0 0.0
    %588 = vmatprep.subr.mxu0 0.0
    %589 = vmatpush2.msra.mxu0 0.0
    %590 = vmatprep.subr.mxu0 0.0
    %591 = vmatpush2.msra.mxu0 0.0
    %592 = vmatprep.subr.mxu0 0.0
    %593 = vmatpush2.msra.mxu0 0.0
    %594 = vmatprep.subr.mxu0 0.0
    %595 = vmatpush2.msra.mxu0 0.0
    %596 = vmatprep.subr.mxu0 0.0
    %597 = vmatpush2.msra.mxu0 0.0
    %598 = vmatprep.subr.mxu0 0.0
    %599 = vmatpush2.msra.mxu0 0.0
    %600 = vmatprep.subr.mxu0 0.0
    %601 = vmatpush2.msra.mxu0 0.0
    %602 = vmatprep.subr.mxu0 0.0
    %603 = vmatpush2.msra.mxu0 0.0
    %604 = vmatprep.subr.mxu0 0.0
    %605 = vmatpush2.msra.mxu0 0.0
    %606 = vmatprep.subr.mxu0 0.0
    %607 = vmatpush2.msra.mxu0 0.0
    %608 = vmatprep.mubr.f32.mxu0 0.0
    %609 = vmatmul.mubr.f32.gmra.mxu0 %v539
    %v610 = vpop.f32.mrf.mxu0
    %v611 = vadd.f32 0.0, %v610
    %v612 = vpop.f32.mrf.mxu0
    %613 = vmatprep.mubr.f32.mxu0 0.0
    %614 = vmatmul.mubr.f32.gmra.mxu0 %v542
    %v615 = vpop.f32.mrf.mxu0
    %v616 = vadd.f32 0.0, %v615
    %v617 = vpop.f32.mrf.mxu0
    %618 = vdwg.mxu0
    %v619 = vadd.f32 %v434, %v611
    %v620 = vadd.f32 %v439, %v616
    %s621 = scalar_lea.vmem %s1, 48
    %v622 = vld [vmem:[%s621] sm:$0xff]
    %v623 = vld [vmem:[%s621 + $0x8] sm:$0xff]
    %624 = vmatprep.subr.mxu0 0.0
    %625 = vmatpush1.msra.mxu0 0.0
    %626 = vmatprep.subr.mxu0 0.0
    %627 = vmatpush1.msra.mxu0 0.0
    %628 = vmatprep.subr.mxu0 0.0
    %629 = vmatpush1.msra.mxu0 0.0
    %630 = vmatprep.subr.mxu0 0.0
    %631 = vmatpush1.msra.mxu0 0.0
    %632 = vmatprep.subr.mxu0 0.0
    %633 = vmatpush1.msra.mxu0 0.0
    %634 = vmatprep.subr.mxu0 0.0
    %635 = vmatpush1.msra.mxu0 0.0
    %636 = vmatprep.subr.mxu0 0.0
    %637 = vmatpush1.msra.mxu0 0.0
    %638 = vmatprep.subr.mxu0 0.0
    %639 = vmatpush1.msra.mxu0 0.0
    %640 = vmatprep.subr.mxu0 0.0
    %641 = vmatpush1.msra.mxu0 0.0
    %642 = vmatprep.subr.mxu0 0.0
    %643 = vmatpush1.msra.mxu0 0.0
    %644 = vmatprep.subr.mxu0 0.0
    %645 = vmatpush1.msra.mxu0 0.0
    %646 = vmatprep.subr.mxu0 0.0
    %647 = vmatpush1.msra.mxu0 0.0
    %648 = vmatprep.subr.mxu0 0.0
    %649 = vmatpush1.msra.mxu0 0.0
    %650 = vmatprep.subr.mxu0 0.0
    %651 = vmatpush1.msra.mxu0 0.0
    %652 = vmatprep.subr.mxu0 0.0
    %653 = vmatpush1.msra.mxu0 %v623
    %654 = vmatprep.subr.mxu0 0.0
    %655 = vmatpush1.msra.mxu0 %v622
    %656 = vmatprep.subr.mxu0 0.0
    %657 = vmatpush2.msra.mxu0 0.0
    %658 = vmatprep.subr.mxu0 0.0
    %659 = vmatpush2.msra.mxu0 0.0
    %660 = vmatprep.subr.mxu0 0.0
    %661 = vmatpush2.msra.mxu0 0.0
    %662 = vmatprep.subr.mxu0 0.0
    %663 = vmatpush2.msra.mxu0 0.0
    %664 = vmatprep.subr.mxu0 0.0
    %665 = vmatpush2.msra.mxu0 0.0
    %666 = vmatprep.subr.mxu0 0.0
    %667 = vmatpush2.msra.mxu0 0.0
    %668 = vmatprep.subr.mxu0 0.0
    %669 = vmatpush2.msra.mxu0 0.0
    %670 = vmatprep.subr.mxu0 0.0
    %671 = vmatpush2.msra.mxu0 0.0
    %672 = vmatprep.subr.mxu0 0.0
    %673 = vmatpush2.msra.mxu0 0.0
    %674 = vmatprep.subr.mxu0 0.0
    %675 = vmatpush2.msra.mxu0 0.0
    %676 = vmatprep.subr.mxu0 0.0
    %677 = vmatpush2.msra.mxu0 0.0
    %678 = vmatprep.subr.mxu0 0.0
    %679 = vmatpush2.msra.mxu0 0.0
    %680 = vmatprep.subr.mxu0 0.0
    %681 = vmatpush2.msra.mxu0 0.0
    %682 = vmatprep.subr.mxu0 0.0
    %683 = vmatpush2.msra.mxu0 0.0
    %684 = vmatprep.subr.mxu0 0.0
    %685 = vmatpush2.msra.mxu0 0.0
    %686 = vmatprep.subr.mxu0 0.0
    %687 = vmatpush2.msra.mxu0 0.0
    %688 = vmatprep.mubr.f32.mxu0 0.0
    %689 = vmatmul.mubr.f32.gmra.mxu0 %v87
    %v690 = vpop.f32.mrf.mxu0
    %v691 = vadd.f32 0.0, %v690
    %v692 = vpop.f32.mrf.mxu0
    %693 = vmatprep.mubr.f32.mxu0 0.0
    %694 = vmatmul.mubr.f32.gmra.mxu0 %v90
    %v695 = vpop.f32.mrf.mxu0
    %v696 = vadd.f32 0.0, %v695
    %v697 = vpop.f32.mrf.mxu0
    %698 = vdwg.mxu0
    %v699 = vmul.f32 %v691, %v691
    %v700 = vmul.f32 %v696, %v696
    %v701 = vsel %vm85, %v699, 0.0
    %v702 = vsel %vm85, %v700, 0.0
    %v703 = vadd.f32 %v701, %v702
    %704 = vadd.xlane.f32.xlu0 %v703
    %v705 = vpop.xlane.xlu0 %704
    %v706 = vrot.slane %v705, 4
    %v707 = vadd.f32 %v705, %v706
    %v708 = vrot.slane %v707, 2
    %v709 = vadd.f32 %v707, %v708
    %v710 = vrot.slane %v709, 1
    %v711 = vadd.f32 %v709, %v710
    %s712 = vtos %v711
    %s713 = sadd.f32 %s534, %s712
    %s714 = scalar_lea.vmem [#allocation2], 48
    %v715 = vld [vmem:[%s714] sm:$0xff]
    %v716 = vld [vmem:[%s714 + $0x8] sm:$0xff]
    %v718 = vsel %vm85, %v715, 0
    %v721 = vsel %vm85, %v716, 0
    %723 = vmatprep.subr.mxu0 0.0
    %724 = vmatpush1.msra.mxu0 0.0
    %725 = vmatprep.subr.mxu0 0.0
    %726 = vmatpush1.msra.mxu0 0.0
    %727 = vmatprep.subr.mxu0 0.0
    %728 = vmatpush1.msra.mxu0 0.0
    %729 = vmatprep.subr.mxu0 0.0
    %730 = vmatpush1.msra.mxu0 0.0
    %731 = vmatprep.subr.mxu0 0.0
    %732 = vmatpush1.msra.mxu0 0.0
    %733 = vmatprep.subr.mxu0 0.0
    %734 = vmatpush1.msra.mxu0 0.0
    %735 = vmatprep.subr.mxu0 0.0
    %736 = vmatpush1.msra.mxu0 0.0
    %737 = vmatprep.subr.mxu0 0.0
    %738 = vmatpush1.msra.mxu0 0.0
    %739 = vmatprep.subr.mxu0 0.0
    %740 = vmatpush1.msra.mxu0 0.0
    %741 = vmatprep.subr.mxu0 0.0
    %742 = vmatpush1.msra.mxu0 0.0
    %743 = vmatprep.subr.mxu0 0.0
    %744 = vmatpush1.msra.mxu0 0.0
    %745 = vmatprep.subr.mxu0 0.0
    %746 = vmatpush1.msra.mxu0 0.0
    %747 = vmatprep.subr.mxu0 0.0
    %748 = vmatpush1.msra.mxu0 0.0
    %749 = vmatprep.subr.mxu0 0.0
    %750 = vmatpush1.msra.mxu0 0.0
    %751 = vmatprep.subr.mxu0 0.0
    %752 = vmatpush1.msra.mxu0 %v696
    %753 = vmatprep.subr.mxu0 0.0
    %754 = vmatpush1.msra.mxu0 %v691
    %755 = vmatprep.subr.mxu0 0.0
    %756 = vmatpush2.msra.mxu0 0.0
    %757 = vmatprep.subr.mxu0 0.0
    %758 = vmatpush2.msra.mxu0 0.0
    %759 = vmatprep.subr.mxu0 0.0
    %760 = vmatpush2.msra.mxu0 0.0
    %761 = vmatprep.subr.mxu0 0.0
    %762 = vmatpush2.msra.mxu0 0.0
    %763 = vmatprep.subr.mxu0 0.0
    %764 = vmatpush2.msra.mxu0 0.0
    %765 = vmatprep.subr.mxu0 0.0
    %766 = vmatpush2.msra.mxu0 0.0
    %767 = vmatprep.subr.mxu0 0.0
    %768 = vmatpush2.msra.mxu0 0.0
    %769 = vmatprep.subr.mxu0 0.0
    %770 = vmatpush2.msra.mxu0 0.0
    %771 = vmatprep.subr.mxu0 0.0
    %772 = vmatpush2.msra.mxu0 0.0
    %773 = vmatprep.subr.mxu0 0.0
    %774 = vmatpush2.msra.mxu0 0.0
    %775 = vmatprep.subr.mxu0 0.0
    %776 = vmatpush2.msra.mxu0 0.0
    %777 = vmatprep.subr.mxu0 0.0
    %778 = vmatpush2.msra.mxu0 0.0
    %779 = vmatprep.subr.mxu0 0.0
    %780 = vmatpush2.msra.mxu0 0.0
    %781 = vmatprep.subr.mxu0 0.0
    %782 = vmatpush2.msra.mxu0 0.0
    %783 = vmatprep.subr.mxu0 0.0
    %784 = vmatpush2.msra.mxu0 0.0
    %785 = vmatprep.subr.mxu0 0.0
    %786 = vmatpush2.msra.mxu0 0.0
    %787 = vmatprep.mubr.f32.mxu0 0.0
    %788 = vmatmul.mubr.f32.gmra.mxu0 %v718
    %v789 = vpop.f32.mrf.mxu0
    %v790 = vadd.f32 0.0, %v789
    %v791 = vpop.f32.mrf.mxu0
    %792 = vmatprep.mubr.f32.mxu0 0.0
    %793 = vmatmul.mubr.f32.gmra.mxu0 %v721
    %v794 = vpop.f32.mrf.mxu0
    %v795 = vadd.f32 0.0, %v794
    %v796 = vpop.f32.mrf.mxu0
    %797 = vdwg.mxu0
    %v798 = vadd.f32 %v619, %v790
    %v799 = vadd.f32 %v620, %v795
    %v800 = vmul.f32 %v798, %v798
    %v801 = vmul.f32 %v799, %v799
    %v802 = vsel %vm85, %v800, 0.0
    %v803 = vsel %vm85, %v801, 0.0
    %v804 = vadd.f32 %v802, %v803
    %805 = vadd.xlane.f32.xlu0 %v804
    %v806 = vpop.xlane.xlu0 %805
    %v807 = vrot.slane %v806, 4
    %v808 = vadd.f32 %v806, %v807
    %v809 = vrot.slane %v808, 2
    %v810 = vadd.f32 %v808, %v809
    %v811 = vrot.slane %v810, 1
    %v812 = vadd.f32 %v810, %v811
    %s813 = vtos %v812
    %s814 = sadd.f32 %s813, 0.0
    %v816 = vsel %vm85, %v75, 0
    %v819 = vsel %vm85, %v76, 0
    %821 = vmatprep.subr.mxu0 0.0
    %822 = vmatpush1.msra.mxu0 0.0
    %823 = vmatprep.subr.mxu0 0.0
    %824 = vmatpush1.msra.mxu0 0.0
    %825 = vmatprep.subr.mxu0 0.0
    %826 = vmatpush1.msra.mxu0 0.0
    %827 = vmatprep.subr.mxu0 0.0
    %828 = vmatpush1.msra.mxu0 0.0
    %829 = vmatprep.subr.mxu0 0.0
    %830 = vmatpush1.msra.mxu0 0.0
    %831 = vmatprep.subr.mxu0 0.0
    %832 = vmatpush1.msra.mxu0 0.0
    %833 = vmatprep.subr.mxu0 0.0
    %834 = vmatpush1.msra.mxu0 0.0
    %835 = vmatprep.subr.mxu0 0.0
    %836 = vmatpush1.msra.mxu0 0.0
    %837 = vmatprep.subr.mxu0 0.0
    %838 = vmatpush1.msra.mxu0 0.0
    %839 = vmatprep.subr.mxu0 0.0
    %840 = vmatpush1.msra.mxu0 0.0
    %841 = vmatprep.subr.mxu0 0.0
    %842 = vmatpush1.msra.mxu0 0.0
    %843 = vmatprep.subr.mxu0 0.0
    %844 = vmatpush1.msra.mxu0 0.0
    %845 = vmatprep.subr.mxu0 0.0
    %846 = vmatpush1.msra.mxu0 0.0
    %847 = vmatprep.subr.mxu0 0.0
    %848 = vmatpush1.msra.mxu0 0.0
    %849 = vmatprep.subr.mxu0 0.0
    %850 = vmatpush1.msra.mxu0 %v84
    %851 = vmatprep.subr.mxu0 0.0
    %852 = vmatpush1.msra.mxu0 %v83
    %853 = vmatprep.subr.mxu0 0.0
    %854 = vmatpush2.msra.mxu0 0.0
    %855 = vmatprep.subr.mxu0 0.0
    %856 = vmatpush2.msra.mxu0 0.0
    %857 = vmatprep.subr.mxu0 0.0
    %858 = vmatpush2.msra.mxu0 0.0
    %859 = vmatprep.subr.mxu0 0.0
    %860 = vmatpush2.msra.mxu0 0.0
    %861 = vmatprep.subr.mxu0 0.0
    %862 = vmatpush2.msra.mxu0 0.0
    %863 = vmatprep.subr.mxu0 0.0
    %864 = vmatpush2.msra.mxu0 0.0
    %865 = vmatprep.subr.mxu0 0.0
    %866 = vmatpush2.msra.mxu0 0.0
    %867 = vmatprep.subr.mxu0 0.0
    %868 = vmatpush2.msra.mxu0 0.0
    %869 = vmatprep.subr.mxu0 0.0
    %870 = vmatpush2.msra.mxu0 0.0
    %871 = vmatprep.subr.mxu0 0.0
    %872 = vmatpush2.msra.mxu0 0.0
    %873 = vmatprep.subr.mxu0 0.0
    %874 = vmatpush2.msra.mxu0 0.0
    %875 = vmatprep.subr.mxu0 0.0
    %876 = vmatpush2.msra.mxu0 0.0
    %877 = vmatprep.subr.mxu0 0.0
    %878 = vmatpush2.msra.mxu0 0.0
    %879 = vmatprep.subr.mxu0 0.0
    %880 = vmatpush2.msra.mxu0 0.0
    %881 = vmatprep.subr.mxu0 0.0
    %882 = vmatpush2.msra.mxu0 0.0
    %883 = vmatprep.subr.mxu0 0.0
    %884 = vmatpush2.msra.mxu0 0.0
    %885 = vmatprep.mubr.f32.mxu0 0.0
    %886 = vmatmul.mubr.f32.gmra.mxu0 %v816
    %v887 = vpop.f32.mrf.mxu0
    %v888 = vadd.f32 0.0, %v887
    %v889 = vpop.f32.mrf.mxu0
    %890 = vmatprep.mubr.f32.mxu0 0.0
    %891 = vmatmul.mubr.f32.gmra.mxu0 %v819
    %v892 = vpop.f32.mrf.mxu0
    %v893 = vadd.f32 0.0, %v892
    %v894 = vpop.f32.mrf.mxu0
    %895 = vdwg.mxu0
    %v896 = vmul.f32 %v888, %v888
    %v897 = vmul.f32 %v893, %v893
    %v898 = vsel %vm85, %v896, 0.0
    %v899 = vsel %vm85, %v897, 0.0
    %v900 = vadd.f32 %v898, %v899
    %901 = vadd.xlane.f32.xlu0 %v900
    %v902 = vpop.xlane.xlu0 %901
    %v903 = vrot.slane %v902, 4
    %v904 = vadd.f32 %v902, %v903
    %v905 = vrot.slane %v904, 2
    %v906 = vadd.f32 %v904, %v905
    %v907 = vrot.slane %v906, 1
    %v908 = vadd.f32 %v906, %v907
    %s909 = vtos %v908
    %s910 = sadd.f32 %s713, %s909
    %911 = vmatprep.subr.mxu0 0.0
    %912 = vmatpush1.msra.mxu0 0.0
    %913 = vmatprep.subr.mxu0 0.0
    %914 = vmatpush1.msra.mxu0 0.0
    %915 = vmatprep.subr.mxu0 0.0
    %916 = vmatpush1.msra.mxu0 0.0
    %917 = vmatprep.subr.mxu0 0.0
    %918 = vmatpush1.msra.mxu0 0.0
    %919 = vmatprep.subr.mxu0 0.0
    %920 = vmatpush1.msra.mxu0 0.0
    %921 = vmatprep.subr.mxu0 0.0
    %922 = vmatpush1.msra.mxu0 0.0
    %923 = vmatprep.subr.mxu0 0.0
    %924 = vmatpush1.msra.mxu0 0.0
    %925 = vmatprep.subr.mxu0 0.0
    %926 = vmatpush1.msra.mxu0 0.0
    %927 = vmatprep.subr.mxu0 0.0
    %928 = vmatpush1.msra.mxu0 0.0
    %929 = vmatprep.subr.mxu0 0.0
    %930 = vmatpush1.msra.mxu0 0.0
    %931 = vmatprep.subr.mxu0 0.0
    %932 = vmatpush1.msra.mxu0 0.0
    %933 = vmatprep.subr.mxu0 0.0
    %934 = vmatpush1.msra.mxu0 0.0
    %935 = vmatprep.subr.mxu0 0.0
    %936 = vmatpush1.msra.mxu0 0.0
    %937 = vmatprep.subr.mxu0 0.0
    %938 = vmatpush1.msra.mxu0 0.0
    %939 = vmatprep.subr.mxu0 0.0
    %940 = vmatpush1.msra.mxu0 %v186
    %941 = vmatprep.subr.mxu0 0.0
    %942 = vmatpush1.msra.mxu0 %v185
    %943 = vmatprep.subr.mxu0 0.0
    %944 = vmatpush2.msra.mxu0 0.0
    %945 = vmatprep.subr.mxu0 0.0
    %946 = vmatpush2.msra.mxu0 0.0
    %947 = vmatprep.subr.mxu0 0.0
    %948 = vmatpush2.msra.mxu0 0.0
    %949 = vmatprep.subr.mxu0 0.0
    %950 = vmatpush2.msra.mxu0 0.0
    %951 = vmatprep.subr.mxu0 0.0
    %952 = vmatpush2.msra.mxu0 0.0
    %953 = vmatprep.subr.mxu0 0.0
    %954 = vmatpush2.msra.mxu0 0.0
    %955 = vmatprep.subr.mxu0 0.0
    %956 = vmatpush2.msra.mxu0 0.0
    %957 = vmatprep.subr.mxu0 0.0
    %958 = vmatpush2.msra.mxu0 0.0
    %959 = vmatprep.subr.mxu0 0.0
    %960 = vmatpush2.msra.mxu0 0.0
    %961 = vmatprep.subr.mxu0 0.0
    %962 = vmatpush2.msra.mxu0 0.0
    %963 = vmatprep.subr.mxu0 0.0
    %964 = vmatpush2.msra.mxu0 0.0
    %965 = vmatprep.subr.mxu0 0.0
    %966 = vmatpush2.msra.mxu0 0.0
    %967 = vmatprep.subr.mxu0 0.0
    %968 = vmatpush2.msra.mxu0 0.0
    %969 = vmatprep.subr.mxu0 0.0
    %970 = vmatpush2.msra.mxu0 0.0
    %971 = vmatprep.subr.mxu0 0.0
    %972 = vmatpush2.msra.mxu0 0.0
    %973 = vmatprep.subr.mxu0 0.0
    %974 = vmatpush2.msra.mxu0 0.0
    %975 = vmatprep.mubr.f32.mxu0 0.0
    %976 = vmatmul.mubr.f32.gmra.mxu0 %v816
    %v977 = vpop.f32.mrf.mxu0
    %v978 = vadd.f32 0.0, %v977
    %v979 = vpop.f32.mrf.mxu0
    %980 = vmatprep.mubr.f32.mxu0 0.0
    %981 = vmatmul.mubr.f32.gmra.mxu0 %v819
    %v982 = vpop.f32.mrf.mxu0
    %v983 = vadd.f32 0.0, %v982
    %v984 = vpop.f32.mrf.mxu0
    %985 = vdwg.mxu0
    %v986 = vmul.f32 %v978, %v978
    %v987 = vmul.f32 %v983, %v983
    %v988 = vsel %vm85, %v986, 0.0
    %v989 = vsel %vm85, %v987, 0.0
    %v990 = vadd.f32 %v988, %v989
    %991 = vadd.xlane.f32.xlu0 %v990
    %v992 = vpop.xlane.xlu0 %991
    %v993 = vrot.slane %v992, 4
    %v994 = vadd.f32 %v992, %v993
    %v995 = vrot.slane %v994, 2
    %v996 = vadd.f32 %v994, %v995
    %v997 = vrot.slane %v996, 1
    %v998 = vadd.f32 %v996, %v997
    %s999 = vtos %v998
    %s1000 = sadd.f32 %s910, %s999
    %1001 = vmatprep.subr.mxu0 0.0
    %1002 = vmatpush1.msra.mxu0 0.0
    %1003 = vmatprep.subr.mxu0 0.0
    %1004 = vmatpush1.msra.mxu0 0.0
    %1005 = vmatprep.subr.mxu0 0.0
    %1006 = vmatpush1.msra.mxu0 0.0
    %1007 = vmatprep.subr.mxu0 0.0
    %1008 = vmatpush1.msra.mxu0 0.0
    %1009 = vmatprep.subr.mxu0 0.0
    %1010 = vmatpush1.msra.mxu0 0.0
    %1011 = vmatprep.subr.mxu0 0.0
    %1012 = vmatpush1.msra.mxu0 0.0
    %1013 = vmatprep.subr.mxu0 0.0
    %1014 = vmatpush1.msra.mxu0 0.0
    %1015 = vmatprep.subr.mxu0 0.0
    %1016 = vmatpush1.msra.mxu0 0.0
    %1017 = vmatprep.subr.mxu0 0.0
    %1018 = vmatpush1.msra.mxu0 0.0
    %1019 = vmatprep.subr.mxu0 0.0
    %1020 = vmatpush1.msra.mxu0 0.0
    %1021 = vmatprep.subr.mxu0 0.0
    %1022 = vmatpush1.msra.mxu0 0.0
    %1023 = vmatprep.subr.mxu0 0.0
    %1024 = vmatpush1.msra.mxu0 0.0
    %1025 = vmatprep.subr.mxu0 0.0
    %1026 = vmatpush1.msra.mxu0 0.0
    %1027 = vmatprep.subr.mxu0 0.0
    %1028 = vmatpush1.msra.mxu0 0.0
    %1029 = vmatprep.subr.mxu0 0.0
    %1030 = vmatpush1.msra.mxu0 %v983
    %1031 = vmatprep.subr.mxu0 0.0
    %1032 = vmatpush1.msra.mxu0 %v978
    %1033 = vmatprep.subr.mxu0 0.0
    %1034 = vmatpush2.msra.mxu0 0.0
    %1035 = vmatprep.subr.mxu0 0.0
    %1036 = vmatpush2.msra.mxu0 0.0
    %1037 = vmatprep.subr.mxu0 0.0
    %1038 = vmatpush2.msra.mxu0 0.0
    %1039 = vmatprep.subr.mxu0 0.0
    %1040 = vmatpush2.msra.mxu0 0.0
    %1041 = vmatprep.subr.mxu0 0.0
    %1042 = vmatpush2.msra.mxu0 0.0
    %1043 = vmatprep.subr.mxu0 0.0
    %1044 = vmatpush2.msra.mxu0 0.0
    %1045 = vmatprep.subr.mxu0 0.0
    %1046 = vmatpush2.msra.mxu0 0.0
    %1047 = vmatprep.subr.mxu0 0.0
    %1048 = vmatpush2.msra.mxu0 0.0
    %1049 = vmatprep.subr.mxu0 0.0
    %1050 = vmatpush2.msra.mxu0 0.0
    %1051 = vmatprep.subr.mxu0 0.0
    %1052 = vmatpush2.msra.mxu0 0.0
    %1053 = vmatprep.subr.mxu0 0.0
    %1054 = vmatpush2.msra.mxu0 0.0
    %1055 = vmatprep.subr.mxu0 0.0
    %1056 = vmatpush2.msra.mxu0 0.0
    %1057 = vmatprep.subr.mxu0 0.0
    %1058 = vmatpush2.msra.mxu0 0.0
    %1059 = vmatprep.subr.mxu0 0.0
    %1060 = vmatpush2.msra.mxu0 0.0
    %1061 = vmatprep.subr.mxu0 0.0
    %1062 = vmatpush2.msra.mxu0 0.0
    %1063 = vmatprep.subr.mxu0 0.0
    %1064 = vmatpush2.msra.mxu0 0.0
    %1065 = vmatprep.mubr.f32.mxu0 0.0
    %1066 = vmatmul.mubr.f32.gmra.mxu0 %v281
    %v1067 = vpop.f32.mrf.mxu0
    %v1068 = vadd.f32 0.0, %v1067
    %v1069 = vpop.f32.mrf.mxu0
    %1070 = vmatprep.mubr.f32.mxu0 0.0
    %1071 = vmatmul.mubr.f32.gmra.mxu0 %v284
    %v1072 = vpop.f32.mrf.mxu0
    %v1073 = vadd.f32 0.0, %v1072
    %v1074 = vpop.f32.mrf.mxu0
    %1075 = vdwg.mxu0
    %1076 = vmatprep.subr.mxu0 0.0
    %1077 = vmatpush1.msra.mxu0 0.0
    %1078 = vmatprep.subr.mxu0 0.0
    %1079 = vmatpush1.msra.mxu0 0.0
    %1080 = vmatprep.subr.mxu0 0.0
    %1081 = vmatpush1.msra.mxu0 0.0
    %1082 = vmatprep.subr.mxu0 0.0
    %1083 = vmatpush1.msra.mxu0 0.0
    %1084 = vmatprep.subr.mxu0 0.0
    %1085 = vmatpush1.msra.mxu0 0.0
    %1086 = vmatprep.subr.mxu0 0.0
    %1087 = vmatpush1.msra.mxu0 0.0
    %1088 = vmatprep.subr.mxu0 0.0
    %1089 = vmatpush1.msra.mxu0 0.0
    %1090 = vmatprep.subr.mxu0 0.0
    %1091 = vmatpush1.msra.mxu0 0.0
    %1092 = vmatprep.subr.mxu0 0.0
    %1093 = vmatpush1.msra.mxu0 0.0
    %1094 = vmatprep.subr.mxu0 0.0
    %1095 = vmatpush1.msra.mxu0 0.0
    %1096 = vmatprep.subr.mxu0 0.0
    %1097 = vmatpush1.msra.mxu0 0.0
    %1098 = vmatprep.subr.mxu0 0.0
    %1099 = vmatpush1.msra.mxu0 0.0
    %1100 = vmatprep.subr.mxu0 0.0
    %1101 = vmatpush1.msra.mxu0 0.0
    %1102 = vmatprep.subr.mxu0 0.0
    %1103 = vmatpush1.msra.mxu0 0.0
    %1104 = vmatprep.subr.mxu0 0.0
    %1105 = vmatpush1.msra.mxu0 %v893
    %1106 = vmatprep.subr.mxu0 0.0
    %1107 = vmatpush1.msra.mxu0 %v888
    %1108 = vmatprep.subr.mxu0 0.0
    %1109 = vmatpush2.msra.mxu0 0.0
    %1110 = vmatprep.subr.mxu0 0.0
    %1111 = vmatpush2.msra.mxu0 0.0
    %1112 = vmatprep.subr.mxu0 0.0
    %1113 = vmatpush2.msra.mxu0 0.0
    %1114 = vmatprep.subr.mxu0 0.0
    %1115 = vmatpush2.msra.mxu0 0.0
    %1116 = vmatprep.subr.mxu0 0.0
    %1117 = vmatpush2.msra.mxu0 0.0
    %1118 = vmatprep.subr.mxu0 0.0
    %1119 = vmatpush2.msra.mxu0 0.0
    %1120 = vmatprep.subr.mxu0 0.0
    %1121 = vmatpush2.msra.mxu0 0.0
    %1122 = vmatprep.subr.mxu0 0.0
    %1123 = vmatpush2.msra.mxu0 0.0
    %1124 = vmatprep.subr.mxu0 0.0
    %1125 = vmatpush2.msra.mxu0 0.0
    %1126 = vmatprep.subr.mxu0 0.0
    %1127 = vmatpush2.msra.mxu0 0.0
    %1128 = vmatprep.subr.mxu0 0.0
    %1129 = vmatpush2.msra.mxu0 0.0
    %1130 = vmatprep.subr.mxu0 0.0
    %1131 = vmatpush2.msra.mxu0 0.0
    %1132 = vmatprep.subr.mxu0 0.0
    %1133 = vmatpush2.msra.mxu0 0.0
    %1134 = vmatprep.subr.mxu0 0.0
    %1135 = vmatpush2.msra.mxu0 0.0
    %1136 = vmatprep.subr.mxu0 0.0
    %1137 = vmatpush2.msra.mxu0 0.0
    %1138 = vmatprep.subr.mxu0 0.0
    %1139 = vmatpush2.msra.mxu0 0.0
    %1140 = vmatprep.mubr.f32.mxu0 0.0
    %1141 = vmatmul.mubr.f32.gmra.mxu0 %v362
    %v1142 = vpop.f32.mrf.mxu0
    %v1143 = vadd.f32 %v1068, %v1142
    %v1144 = vpop.f32.mrf.mxu0
    %1145 = vmatprep.mubr.f32.mxu0 0.0
    %1146 = vmatmul.mubr.f32.gmra.mxu0 %v365
    %v1147 = vpop.f32.mrf.mxu0
    %v1148 = vadd.f32 %v1073, %v1147
    %v1149 = vpop.f32.mrf.mxu0
    %1150 = vdwg.mxu0
    %1151 = vmatprep.subr.mxu0 0.0
    %1152 = vmatpush1.msra.mxu0 0.0
    %1153 = vmatprep.subr.mxu0 0.0
    %1154 = vmatpush1.msra.mxu0 0.0
    %1155 = vmatprep.subr.mxu0 0.0
    %1156 = vmatpush1.msra.mxu0 0.0
    %1157 = vmatprep.subr.mxu0 0.0
    %1158 = vmatpush1.msra.mxu0 0.0
    %1159 = vmatprep.subr.mxu0 0.0
    %1160 = vmatpush1.msra.mxu0 0.0
    %1161 = vmatprep.subr.mxu0 0.0
    %1162 = vmatpush1.msra.mxu0 0.0
    %1163 = vmatprep.subr.mxu0 0.0
    %1164 = vmatpush1.msra.mxu0 0.0
    %1165 = vmatprep.subr.mxu0 0.0
    %1166 = vmatpush1.msra.mxu0 0.0
    %1167 = vmatprep.subr.mxu0 0.0
    %1168 = vmatpush1.msra.mxu0 0.0
    %1169 = vmatprep.subr.mxu0 0.0
    %1170 = vmatpush1.msra.mxu0 0.0
    %1171 = vmatprep.subr.mxu0 0.0
    %1172 = vmatpush1.msra.mxu0 0.0
    %1173 = vmatprep.subr.mxu0 0.0
    %1174 = vmatpush1.msra.mxu0 0.0
    %1175 = vmatprep.subr.mxu0 0.0
    %1176 = vmatpush1.msra.mxu0 0.0
    %1177 = vmatprep.subr.mxu0 0.0
    %1178 = vmatpush1.msra.mxu0 0.0
    %1179 = vmatprep.subr.mxu0 0.0
    %1180 = vmatpush1.msra.mxu0 %v444
    %1181 = vmatprep.subr.mxu0 0.0
    %1182 = vmatpush1.msra.mxu0 %v443
    %1183 = vmatprep.subr.mxu0 0.0
    %1184 = vmatpush2.msra.mxu0 0.0
    %1185 = vmatprep.subr.mxu0 0.0
    %1186 = vmatpush2.msra.mxu0 0.0
    %1187 = vmatprep.subr.mxu0 0.0
    %1188 = vmatpush2.msra.mxu0 0.0
    %1189 = vmatprep.subr.mxu0 0.0
    %1190 = vmatpush2.msra.mxu0 0.0
    %1191 = vmatprep.subr.mxu0 0.0
    %1192 = vmatpush2.msra.mxu0 0.0
    %1193 = vmatprep.subr.mxu0 0.0
    %1194 = vmatpush2.msra.mxu0 0.0
    %1195 = vmatprep.subr.mxu0 0.0
    %1196 = vmatpush2.msra.mxu0 0.0
    %1197 = vmatprep.subr.mxu0 0.0
    %1198 = vmatpush2.msra.mxu0 0.0
    %1199 = vmatprep.subr.mxu0 0.0
    %1200 = vmatpush2.msra.mxu0 0.0
    %1201 = vmatprep.subr.mxu0 0.0
    %1202 = vmatpush2.msra.mxu0 0.0
    %1203 = vmatprep.subr.mxu0 0.0
    %1204 = vmatpush2.msra.mxu0 0.0
    %1205 = vmatprep.subr.mxu0 0.0
    %1206 = vmatpush2.msra.mxu0 0.0
    %1207 = vmatprep.subr.mxu0 0.0
    %1208 = vmatpush2.msra.mxu0 0.0
    %1209 = vmatprep.subr.mxu0 0.0
    %1210 = vmatpush2.msra.mxu0 0.0
    %1211 = vmatprep.subr.mxu0 0.0
    %1212 = vmatpush2.msra.mxu0 0.0
    %1213 = vmatprep.subr.mxu0 0.0
    %1214 = vmatpush2.msra.mxu0 0.0
    %1215 = vmatprep.mubr.f32.mxu0 0.0
    %1216 = vmatmul.mubr.f32.gmra.mxu0 %v816
    %v1217 = vpop.f32.mrf.mxu0
    %v1218 = vadd.f32 0.0, %v1217
    %v1219 = vpop.f32.mrf.mxu0
    %1220 = vmatprep.mubr.f32.mxu0 0.0
    %1221 = vmatmul.mubr.f32.gmra.mxu0 %v819
    %v1222 = vpop.f32.mrf.mxu0
    %v1223 = vadd.f32 0.0, %v1222
    %v1224 = vpop.f32.mrf.mxu0
    %1225 = vdwg.mxu0
    %v1226 = vmul.f32 %v1218, %v1218
    %v1227 = vmul.f32 %v1223, %v1223
    %v1228 = vsel %vm85, %v1226, 0.0
    %v1229 = vsel %vm85, %v1227, 0.0
    %v1230 = vadd.f32 %v1228, %v1229
    %1231 = vadd.xlane.f32.xlu0 %v1230
    %v1232 = vpop.xlane.xlu0 %1231
    %v1233 = vrot.slane %v1232, 4
    %v1234 = vadd.f32 %v1232, %v1233
    %v1235 = vrot.slane %v1234, 2
    %v1236 = vadd.f32 %v1234, %v1235
    %v1237 = vrot.slane %v1236, 1
    %v1238 = vadd.f32 %v1236, %v1237
    %s1239 = vtos %v1238
    %s1240 = sadd.f32 %s1000, %s1239
    %1241 = vmatprep.subr.mxu0 0.0
    %1242 = vmatpush1.msra.mxu0 0.0
    %1243 = vmatprep.subr.mxu0 0.0
    %1244 = vmatpush1.msra.mxu0 0.0
    %1245 = vmatprep.subr.mxu0 0.0
    %1246 = vmatpush1.msra.mxu0 0.0
    %1247 = vmatprep.subr.mxu0 0.0
    %1248 = vmatpush1.msra.mxu0 0.0
    %1249 = vmatprep.subr.mxu0 0.0
    %1250 = vmatpush1.msra.mxu0 0.0
    %1251 = vmatprep.subr.mxu0 0.0
    %1252 = vmatpush1.msra.mxu0 0.0
    %1253 = vmatprep.subr.mxu0 0.0
    %1254 = vmatpush1.msra.mxu0 0.0
    %1255 = vmatprep.subr.mxu0 0.0
    %1256 = vmatpush1.msra.mxu0 0.0
    %1257 = vmatprep.subr.mxu0 0.0
    %1258 = vmatpush1.msra.mxu0 0.0
    %1259 = vmatprep.subr.mxu0 0.0
    %1260 = vmatpush1.msra.mxu0 0.0
    %1261 = vmatprep.subr.mxu0 0.0
    %1262 = vmatpush1.msra.mxu0 0.0
    %1263 = vmatprep.subr.mxu0 0.0
    %1264 = vmatpush1.msra.mxu0 0.0
    %1265 = vmatprep.subr.mxu0 0.0
    %1266 = vmatpush1.msra.mxu0 0.0
    %1267 = vmatprep.subr.mxu0 0.0
    %1268 = vmatpush1.msra.mxu0 0.0
    %1269 = vmatprep.subr.mxu0 0.0
    %1270 = vmatpush1.msra.mxu0 %v1223
    %1271 = vmatprep.subr.mxu0 0.0
    %1272 = vmatpush1.msra.mxu0 %v1218
    %1273 = vmatprep.subr.mxu0 0.0
    %1274 = vmatpush2.msra.mxu0 0.0
    %1275 = vmatprep.subr.mxu0 0.0
    %1276 = vmatpush2.msra.mxu0 0.0
    %1277 = vmatprep.subr.mxu0 0.0
    %1278 = vmatpush2.msra.mxu0 0.0
    %1279 = vmatprep.subr.mxu0 0.0
    %1280 = vmatpush2.msra.mxu0 0.0
    %1281 = vmatprep.subr.mxu0 0.0
    %1282 = vmatpush2.msra.mxu0 0.0
    %1283 = vmatprep.subr.mxu0 0.0
    %1284 = vmatpush2.msra.mxu0 0.0
    %1285 = vmatprep.subr.mxu0 0.0
    %1286 = vmatpush2.msra.mxu0 0.0
    %1287 = vmatprep.subr.mxu0 0.0
    %1288 = vmatpush2.msra.mxu0 0.0
    %1289 = vmatprep.subr.mxu0 0.0
    %1290 = vmatpush2.msra.mxu0 0.0
    %1291 = vmatprep.subr.mxu0 0.0
    %1292 = vmatpush2.msra.mxu0 0.0
    %1293 = vmatprep.subr.mxu0 0.0
    %1294 = vmatpush2.msra.mxu0 0.0
    %1295 = vmatprep.subr.mxu0 0.0
    %1296 = vmatpush2.msra.mxu0 0.0
    %1297 = vmatprep.subr.mxu0 0.0
    %1298 = vmatpush2.msra.mxu0 0.0
    %1299 = vmatprep.subr.mxu0 0.0
    %1300 = vmatpush2.msra.mxu0 0.0
    %1301 = vmatprep.subr.mxu0 0.0
    %1302 = vmatpush2.msra.mxu0 0.0
    %1303 = vmatprep.subr.mxu0 0.0
    %1304 = vmatpush2.msra.mxu0 0.0
    %1305 = vmatprep.mubr.f32.mxu0 0.0
    %1306 = vmatmul.mubr.f32.gmra.mxu0 %v539
    %v1307 = vpop.f32.mrf.mxu0
    %v1308 = vadd.f32 0.0, %v1307
    %v1309 = vpop.f32.mrf.mxu0
    %1310 = vmatprep.mubr.f32.mxu0 0.0
    %1311 = vmatmul.mubr.f32.gmra.mxu0 %v542
    %v1312 = vpop.f32.mrf.mxu0
    %v1313 = vadd.f32 0.0, %v1312
    %v1314 = vpop.f32.mrf.mxu0
    %1315 = vdwg.mxu0
    %v1316 = vadd.f32 %v1143, %v1308
    %v1317 = vadd.f32 %v1148, %v1313
    %1318 = vmatprep.subr.mxu0 0.0
    %1319 = vmatpush1.msra.mxu0 0.0
    %1320 = vmatprep.subr.mxu0 0.0
    %1321 = vmatpush1.msra.mxu0 0.0
    %1322 = vmatprep.subr.mxu0 0.0
    %1323 = vmatpush1.msra.mxu0 0.0
    %1324 = vmatprep.subr.mxu0 0.0
    %1325 = vmatpush1.msra.mxu0 0.0
    %1326 = vmatprep.subr.mxu0 0.0
    %1327 = vmatpush1.msra.mxu0 0.0
    %1328 = vmatprep.subr.mxu0 0.0
    %1329 = vmatpush1.msra.mxu0 0.0
    %1330 = vmatprep.subr.mxu0 0.0
    %1331 = vmatpush1.msra.mxu0 0.0
    %1332 = vmatprep.subr.mxu0 0.0
    %1333 = vmatpush1.msra.mxu0 0.0
    %1334 = vmatprep.subr.mxu0 0.0
    %1335 = vmatpush1.msra.mxu0 0.0
    %1336 = vmatprep.subr.mxu0 0.0
    %1337 = vmatpush1.msra.mxu0 0.0
    %1338 = vmatprep.subr.mxu0 0.0
    %1339 = vmatpush1.msra.mxu0 0.0
    %1340 = vmatprep.subr.mxu0 0.0
    %1341 = vmatpush1.msra.mxu0 0.0
    %1342 = vmatprep.subr.mxu0 0.0
    %1343 = vmatpush1.msra.mxu0 0.0
    %1344 = vmatprep.subr.mxu0 0.0
    %1345 = vmatpush1.msra.mxu0 0.0
    %1346 = vmatprep.subr.mxu0 0.0
    %1347 = vmatpush1.msra.mxu0 %v623
    %1348 = vmatprep.subr.mxu0 0.0
    %1349 = vmatpush1.msra.mxu0 %v622
    %1350 = vmatprep.subr.mxu0 0.0
    %1351 = vmatpush2.msra.mxu0 0.0
    %1352 = vmatprep.subr.mxu0 0.0
    %1353 = vmatpush2.msra.mxu0 0.0
    %1354 = vmatprep.subr.mxu0 0.0
    %1355 = vmatpush2.msra.mxu0 0.0
    %1356 = vmatprep.subr.mxu0 0.0
    %1357 = vmatpush2.msra.mxu0 0.0
    %1358 = vmatprep.subr.mxu0 0.0
    %1359 = vmatpush2.msra.mxu0 0.0
    %1360 = vmatprep.subr.mxu0 0.0
    %1361 = vmatpush2.msra.mxu0 0.0
    %1362 = vmatprep.subr.mxu0 0.0
    %1363 = vmatpush2.msra.mxu0 0.0
    %1364 = vmatprep.subr.mxu0 0.0
    %1365 = vmatpush2.msra.mxu0 0.0
    %1366 = vmatprep.subr.mxu0 0.0
    %1367 = vmatpush2.msra.mxu0 0.0
    %1368 = vmatprep.subr.mxu0 0.0
    %1369 = vmatpush2.msra.mxu0 0.0
    %1370 = vmatprep.subr.mxu0 0.0
    %1371 = vmatpush2.msra.mxu0 0.0
    %1372 = vmatprep.subr.mxu0 0.0
    %1373 = vmatpush2.msra.mxu0 0.0
    %1374 = vmatprep.subr.mxu0 0.0
    %1375 = vmatpush2.msra.mxu0 0.0
    %1376 = vmatprep.subr.mxu0 0.0
    %1377 = vmatpush2.msra.mxu0 0.0
    %1378 = vmatprep.subr.mxu0 0.0
    %1379 = vmatpush2.msra.mxu0 0.0
    %1380 = vmatprep.subr.mxu0 0.0
    %1381 = vmatpush2.msra.mxu0 0.0
    %1382 = vmatprep.mubr.f32.mxu0 0.0
    %1383 = vmatmul.mubr.f32.gmra.mxu0 %v816
    %v1384 = vpop.f32.mrf.mxu0
    %v1385 = vadd.f32 0.0, %v1384
    %v1386 = vpop.f32.mrf.mxu0
    %1387 = vmatprep.mubr.f32.mxu0 0.0
    %1388 = vmatmul.mubr.f32.gmra.mxu0 %v819
    %v1389 = vpop.f32.mrf.mxu0
    %v1390 = vadd.f32 0.0, %v1389
    %v1391 = vpop.f32.mrf.mxu0
    %1392 = vdwg.mxu0
    %v1393 = vmul.f32 %v1385, %v1385
    %v1394 = vmul.f32 %v1390, %v1390
    %v1395 = vsel %vm85, %v1393, 0.0
    %v1396 = vsel %vm85, %v1394, 0.0
    %v1397 = vadd.f32 %v1395, %v1396
    %1398 = vadd.xlane.f32.xlu0 %v1397
    %v1399 = vpop.xlane.xlu0 %1398
    %v1400 = vrot.slane %v1399, 4
    %v1401 = vadd.f32 %v1399, %v1400
    %v1402 = vrot.slane %v1401, 2
    %v1403 = vadd.f32 %v1401, %v1402
    %v1404 = vrot.slane %v1403, 1
    %v1405 = vadd.f32 %v1403, %v1404
    %s1406 = vtos %v1405
    %s1407 = sadd.f32 %s1240, %s1406
    %1408 = vmatprep.subr.mxu0 0.0
    %1409 = vmatpush1.msra.mxu0 0.0
    %1410 = vmatprep.subr.mxu0 0.0
    %1411 = vmatpush1.msra.mxu0 0.0
    %1412 = vmatprep.subr.mxu0 0.0
    %1413 = vmatpush1.msra.mxu0 0.0
    %1414 = vmatprep.subr.mxu0 0.0
    %1415 = vmatpush1.msra.mxu0 0.0
    %1416 = vmatprep.subr.mxu0 0.0
    %1417 = vmatpush1.msra.mxu0 0.0
    %1418 = vmatprep.subr.mxu0 0.0
    %1419 = vmatpush1.msra.mxu0 0.0
    %1420 = vmatprep.subr.mxu0 0.0
    %1421 = vmatpush1.msra.mxu0 0.0
    %1422 = vmatprep.subr.mxu0 0.0
    %1423 = vmatpush1.msra.mxu0 0.0
    %1424 = vmatprep.subr.mxu0 0.0
    %1425 = vmatpush1.msra.mxu0 0.0
    %1426 = vmatprep.subr.mxu0 0.0
    %1427 = vmatpush1.msra.mxu0 0.0
    %1428 = vmatprep.subr.mxu0 0.0
    %1429 = vmatpush1.msra.mxu0 0.0
    %1430 = vmatprep.subr.mxu0 0.0
    %1431 = vmatpush1.msra.mxu0 0.0
    %1432 = vmatprep.subr.mxu0 0.0
    %1433 = vmatpush1.msra.mxu0 0.0
    %1434 = vmatprep.subr.mxu0 0.0
    %1435 = vmatpush1.msra.mxu0 0.0
    %1436 = vmatprep.subr.mxu0 0.0
    %1437 = vmatpush1.msra.mxu0 %v1390
    %1438 = vmatprep.subr.mxu0 0.0
    %1439 = vmatpush1.msra.mxu0 %v1385
    %1440 = vmatprep.subr.mxu0 0.0
    %1441 = vmatpush2.msra.mxu0 0.0
    %1442 = vmatprep.subr.mxu0 0.0
    %1443 = vmatpush2.msra.mxu0 0.0
    %1444 = vmatprep.subr.mxu0 0.0
    %1445 = vmatpush2.msra.mxu0 0.0
    %1446 = vmatprep.subr.mxu0 0.0
    %1447 = vmatpush2.msra.mxu0 0.0
    %1448 = vmatprep.subr.mxu0 0.0
    %1449 = vmatpush2.msra.mxu0 0.0
    %1450 = vmatprep.subr.mxu0 0.0
    %1451 = vmatpush2.msra.mxu0 0.0
    %1452 = vmatprep.subr.mxu0 0.0
    %1453 = vmatpush2.msra.mxu0 0.0
    %1454 = vmatprep.subr.mxu0 0.0
    %1455 = vmatpush2.msra.mxu0 0.0
    %1456 = vmatprep.subr.mxu0 0.0
    %1457 = vmatpush2.msra.mxu0 0.0
    %1458 = vmatprep.subr.mxu0 0.0
    %1459 = vmatpush2.msra.mxu0 0.0
    %1460 = vmatprep.subr.mxu0 0.0
    %1461 = vmatpush2.msra.mxu0 0.0
    %1462 = vmatprep.subr.mxu0 0.0
    %1463 = vmatpush2.msra.mxu0 0.0
    %1464 = vmatprep.subr.mxu0 0.0
    %1465 = vmatpush2.msra.mxu0 0.0
    %1466 = vmatprep.subr.mxu0 0.0
    %1467 = vmatpush2.msra.mxu0 0.0
    %1468 = vmatprep.subr.mxu0 0.0
    %1469 = vmatpush2.msra.mxu0 0.0
    %1470 = vmatprep.subr.mxu0 0.0
    %1471 = vmatpush2.msra.mxu0 0.0
    %1472 = vmatprep.mubr.f32.mxu0 0.0
    %1473 = vmatmul.mubr.f32.gmra.mxu0 %v718
    %v1474 = vpop.f32.mrf.mxu0
    %v1475 = vadd.f32 0.0, %v1474
    %v1476 = vpop.f32.mrf.mxu0
    %1477 = vmatprep.mubr.f32.mxu0 0.0
    %1478 = vmatmul.mubr.f32.gmra.mxu0 %v721
    %v1479 = vpop.f32.mrf.mxu0
    %v1480 = vadd.f32 0.0, %v1479
    %v1481 = vpop.f32.mrf.mxu0
    %1482 = vdwg.mxu0
    %v1483 = vadd.f32 %v1316, %v1475
    %v1484 = vadd.f32 %v1317, %v1480
    %v1485 = vmul.f32 %v1483, %v1483
    %v1486 = vmul.f32 %v1484, %v1484
    %v1487 = vsel %vm85, %v1485, 0.0
    %v1488 = vsel %vm85, %v1486, 0.0
    %v1489 = vadd.f32 %v1487, %v1488
    %1490 = vadd.xlane.f32.xlu0 %v1489
    %v1491 = vpop.xlane.xlu0 %1490
    %v1492 = vrot.slane %v1491, 4
    %v1493 = vadd.f32 %v1491, %v1492
    %v1494 = vrot.slane %v1493, 2
    %v1495 = vadd.f32 %v1493, %v1494
    %v1496 = vrot.slane %v1495, 1
    %v1497 = vadd.f32 %v1495, %v1496
    %s1498 = vtos %v1497
    %s1499 = sadd.f32 %s814, %s1498
    %v1501 = vsel %vm85, %v77, 0
    %v1504 = vsel %vm85, %v78, 0
    %1506 = vmatprep.subr.mxu0 0.0
    %1507 = vmatpush1.msra.mxu0 0.0
    %1508 = vmatprep.subr.mxu0 0.0
    %1509 = vmatpush1.msra.mxu0 0.0
    %1510 = vmatprep.subr.mxu0 0.0
    %1511 = vmatpush1.msra.mxu0 0.0
    %1512 = vmatprep.subr.mxu0 0.0
    %1513 = vmatpush1.msra.mxu0 0.0
    %1514 = vmatprep.subr.mxu0 0.0
    %1515 = vmatpush1.msra.mxu0 0.0
    %1516 = vmatprep.subr.mxu0 0.0
    %1517 = vmatpush1.msra.mxu0 0.0
    %1518 = vmatprep.subr.mxu0 0.0
    %1519 = vmatpush1.msra.mxu0 0.0
    %1520 = vmatprep.subr.mxu0 0.0
    %1521 = vmatpush1.msra.mxu0 0.0
    %1522 = vmatprep.subr.mxu0 0.0
    %1523 = vmatpush1.msra.mxu0 0.0
    %1524 = vmatprep.subr.mxu0 0.0
    %1525 = vmatpush1.msra.mxu0 0.0
    %1526 = vmatprep.subr.mxu0 0.0
    %1527 = vmatpush1.msra.mxu0 0.0
    %1528 = vmatprep.subr.mxu0 0.0
    %1529 = vmatpush1.msra.mxu0 0.0
    %1530 = vmatprep.subr.mxu0 0.0
    %1531 = vmatpush1.msra.mxu0 0.0
    %1532 = vmatprep.subr.mxu0 0.0
    %1533 = vmatpush1.msra.mxu0 0.0
    %1534 = vmatprep.subr.mxu0 0.0
    %1535 = vmatpush1.msra.mxu0 %v84
    %1536 = vmatprep.subr.mxu0 0.0
    %1537 = vmatpush1.msra.mxu0 %v83
    %1538 = vmatprep.subr.mxu0 0.0
    %1539 = vmatpush2.msra.mxu0 0.0
    %1540 = vmatprep.subr.mxu0 0.0
    %1541 = vmatpush2.msra.mxu0 0.0
    %1542 = vmatprep.subr.mxu0 0.0
    %1543 = vmatpush2.msra.mxu0 0.0
    %1544 = vmatprep.subr.mxu0 0.0
    %1545 = vmatpush2.msra.mxu0 0.0
    %1546 = vmatprep.subr.mxu0 0.0
    %1547 = vmatpush2.msra.mxu0 0.0
    %1548 = vmatprep.subr.mxu0 0.0
    %1549 = vmatpush2.msra.mxu0 0.0
    %1550 = vmatprep.subr.mxu0 0.0
    %1551 = vmatpush2.msra.mxu0 0.0
    %1552 = vmatprep.subr.mxu0 0.0
    %1553 = vmatpush2.msra.mxu0 0.0
    %1554 = vmatprep.subr.mxu0 0.0
    %1555 = vmatpush2.msra.mxu0 0.0
    %1556 = vmatprep.subr.mxu0 0.0
    %1557 = vmatpush2.msra.mxu0 0.0
    %1558 = vmatprep.subr.mxu0 0.0
    %1559 = vmatpush2.msra.mxu0 0.0
    %1560 = vmatprep.subr.mxu0 0.0
    %1561 = vmatpush2.msra.mxu0 0.0
    %1562 = vmatprep.subr.mxu0 0.0
    %1563 = vmatpush2.msra.mxu0 0.0
    %1564 = vmatprep.subr.mxu0 0.0
    %1565 = vmatpush2.msra.mxu0 0.0
    %1566 = vmatprep.subr.mxu0 0.0
    %1567 = vmatpush2.msra.mxu0 0.0
    %1568 = vmatprep.subr.mxu0 0.0
    %1569 = vmatpush2.msra.mxu0 0.0
    %1570 = vmatprep.mubr.f32.mxu0 0.0
    %1571 = vmatmul.mubr.f32.gmra.mxu0 %v1501
    %v1572 = vpop.f32.mrf.mxu0
    %v1573 = vadd.f32 0.0, %v1572
    %v1574 = vpop.f32.mrf.mxu0
    %1575 = vmatprep.mubr.f32.mxu0 0.0
    %1576 = vmatmul.mubr.f32.gmra.mxu0 %v1504
    %v1577 = vpop.f32.mrf.mxu0
    %v1578 = vadd.f32 0.0, %v1577
    %v1579 = vpop.f32.mrf.mxu0
    %1580 = vdwg.mxu0
    %v1581 = vmul.f32 %v1573, %v1573
    %v1582 = vmul.f32 %v1578, %v1578
    %v1583 = vsel %vm85, %v1581, 0.0
    %v1584 = vsel %vm85, %v1582, 0.0
    %v1585 = vadd.f32 %v1583, %v1584
    %1586 = vadd.xlane.f32.xlu0 %v1585
    %v1587 = vpop.xlane.xlu0 %1586
    %v1588 = vrot.slane %v1587, 4
    %v1589 = vadd.f32 %v1587, %v1588
    %v1590 = vrot.slane %v1589, 2
    %v1591 = vadd.f32 %v1589, %v1590
    %v1592 = vrot.slane %v1591, 1
    %v1593 = vadd.f32 %v1591, %v1592
    %s1594 = vtos %v1593
    %s1595 = sadd.f32 %s1407, %s1594
    %1596 = vmatprep.subr.mxu0 0.0
    %1597 = vmatpush1.msra.mxu0 0.0
    %1598 = vmatprep.subr.mxu0 0.0
    %1599 = vmatpush1.msra.mxu0 0.0
    %1600 = vmatprep.subr.mxu0 0.0
    %1601 = vmatpush1.msra.mxu0 0.0
    %1602 = vmatprep.subr.mxu0 0.0
    %1603 = vmatpush1.msra.mxu0 0.0
    %1604 = vmatprep.subr.mxu0 0.0
    %1605 = vmatpush1.msra.mxu0 0.0
    %1606 = vmatprep.subr.mxu0 0.0
    %1607 = vmatpush1.msra.mxu0 0.0
    %1608 = vmatprep.subr.mxu0 0.0
    %1609 = vmatpush1.msra.mxu0 0.0
    %1610 = vmatprep.subr.mxu0 0.0
    %1611 = vmatpush1.msra.mxu0 0.0
    %1612 = vmatprep.subr.mxu0 0.0
    %1613 = vmatpush1.msra.mxu0 0.0
    %1614 = vmatprep.subr.mxu0 0.0
    %1615 = vmatpush1.msra.mxu0 0.0
    %1616 = vmatprep.subr.mxu0 0.0
    %1617 = vmatpush1.msra.mxu0 0.0
    %1618 = vmatprep.subr.mxu0 0.0
    %1619 = vmatpush1.msra.mxu0 0.0
    %1620 = vmatprep.subr.mxu0 0.0
    %1621 = vmatpush1.msra.mxu0 0.0
    %1622 = vmatprep.subr.mxu0 0.0
    %1623 = vmatpush1.msra.mxu0 0.0
    %1624 = vmatprep.subr.mxu0 0.0
    %1625 = vmatpush1.msra.mxu0 %v186
    %1626 = vmatprep.subr.mxu0 0.0
    %1627 = vmatpush1.msra.mxu0 %v185
    %1628 = vmatprep.subr.mxu0 0.0
    %1629 = vmatpush2.msra.mxu0 0.0
    %1630 = vmatprep.subr.mxu0 0.0
    %1631 = vmatpush2.msra.mxu0 0.0
    %1632 = vmatprep.subr.mxu0 0.0
    %1633 = vmatpush2.msra.mxu0 0.0
    %1634 = vmatprep.subr.mxu0 0.0
    %1635 = vmatpush2.msra.mxu0 0.0
    %1636 = vmatprep.subr.mxu0 0.0
    %1637 = vmatpush2.msra.mxu0 0.0
    %1638 = vmatprep.subr.mxu0 0.0
    %1639 = vmatpush2.msra.mxu0 0.0
    %1640 = vmatprep.subr.mxu0 0.0
    %1641 = vmatpush2.msra.mxu0 0.0
    %1642 = vmatprep.subr.mxu0 0.0
    %1643 = vmatpush2.msra.mxu0 0.0
    %1644 = vmatprep.subr.mxu0 0.0
    %1645 = vmatpush2.msra.mxu0 0.0
    %1646 = vmatprep.subr.mxu0 0.0
    %1647 = vmatpush2.msra.mxu0 0.0
    %1648 = vmatprep.subr.mxu0 0.0
    %1649 = vmatpush2.msra.mxu0 0.0
    %1650 = vmatprep.subr.mxu0 0.0
    %1651 = vmatpush2.msra.mxu0 0.0
    %1652 = vmatprep.subr.mxu0 0.0
    %1653 = vmatpush2.msra.mxu0 0.0
    %1654 = vmatprep.subr.mxu0 0.0
    %1655 = vmatpush2.msra.mxu0 0.0
    %1656 = vmatprep.subr.mxu0 0.0
    %1657 = vmatpush2.msra.mxu0 0.0
    %1658 = vmatprep.subr.mxu0 0.0
    %1659 = vmatpush2.msra.mxu0 0.0
    %1660 = vmatprep.mubr.f32.mxu0 0.0
    %1661 = vmatmul.mubr.f32.gmra.mxu0 %v1501
    %v1662 = vpop.f32.mrf.mxu0
    %v1663 = vadd.f32 0.0, %v1662
    %v1664 = vpop.f32.mrf.mxu0
    %1665 = vmatprep.mubr.f32.mxu0 0.0
    %1666 = vmatmul.mubr.f32.gmra.mxu0 %v1504
    %v1667 = vpop.f32.mrf.mxu0
    %v1668 = vadd.f32 0.0, %v1667
    %v1669 = vpop.f32.mrf.mxu0
    %1670 = vdwg.mxu0
    %v1671 = vmul.f32 %v1663, %v1663
    %v1672 = vmul.f32 %v1668, %v1668
    %v1673 = vsel %vm85, %v1671, 0.0
    %v1674 = vsel %vm85, %v1672, 0.0
    %v1675 = vadd.f32 %v1673, %v1674
    %1676 = vadd.xlane.f32.xlu0 %v1675
    %v1677 = vpop.xlane.xlu0 %1676
    %v1678 = vrot.slane %v1677, 4
    %v1679 = vadd.f32 %v1677, %v1678
    %v1680 = vrot.slane %v1679, 2
    %v1681 = vadd.f32 %v1679, %v1680
    %v1682 = vrot.slane %v1681, 1
    %v1683 = vadd.f32 %v1681, %v1682
    %s1684 = vtos %v1683
    %s1685 = sadd.f32 %s1595, %s1684
    %1686 = vmatprep.subr.mxu0 0.0
    %1687 = vmatpush1.msra.mxu0 0.0
    %1688 = vmatprep.subr.mxu0 0.0
    %1689 = vmatpush1.msra.mxu0 0.0
    %1690 = vmatprep.subr.mxu0 0.0
    %1691 = vmatpush1.msra.mxu0 0.0
    %1692 = vmatprep.subr.mxu0 0.0
    %1693 = vmatpush1.msra.mxu0 0.0
    %1694 = vmatprep.subr.mxu0 0.0
    %1695 = vmatpush1.msra.mxu0 0.0
    %1696 = vmatprep.subr.mxu0 0.0
    %1697 = vmatpush1.msra.mxu0 0.0
    %1698 = vmatprep.subr.mxu0 0.0
    %1699 = vmatpush1.msra.mxu0 0.0
    %1700 = vmatprep.subr.mxu0 0.0
    %1701 = vmatpush1.msra.mxu0 0.0
    %1702 = vmatprep.subr.mxu0 0.0
    %1703 = vmatpush1.msra.mxu0 0.0
    %1704 = vmatprep.subr.mxu0 0.0
    %1705 = vmatpush1.msra.mxu0 0.0
    %1706 = vmatprep.subr.mxu0 0.0
    %1707 = vmatpush1.msra.mxu0 0.0
    %1708 = vmatprep.subr.mxu0 0.0
    %1709 = vmatpush1.msra.mxu0 0.0
    %1710 = vmatprep.subr.mxu0 0.0
    %1711 = vmatpush1.msra.mxu0 0.0
    %1712 = vmatprep.subr.mxu0 0.0
    %1713 = vmatpush1.msra.mxu0 0.0
    %1714 = vmatprep.subr.mxu0 0.0
    %1715 = vmatpush1.msra.mxu0 %v1668
    %1716 = vmatprep.subr.mxu0 0.0
    %1717 = vmatpush1.msra.mxu0 %v1663
    %1718 = vmatprep.subr.mxu0 0.0
    %1719 = vmatpush2.msra.mxu0 0.0
    %1720 = vmatprep.subr.mxu0 0.0
    %1721 = vmatpush2.msra.mxu0 0.0
    %1722 = vmatprep.subr.mxu0 0.0
    %1723 = vmatpush2.msra.mxu0 0.0
    %1724 = vmatprep.subr.mxu0 0.0
    %1725 = vmatpush2.msra.mxu0 0.0
    %1726 = vmatprep.subr.mxu0 0.0
    %1727 = vmatpush2.msra.mxu0 0.0
    %1728 = vmatprep.subr.mxu0 0.0
    %1729 = vmatpush2.msra.mxu0 0.0
    %1730 = vmatprep.subr.mxu0 0.0
    %1731 = vmatpush2.msra.mxu0 0.0
    %1732 = vmatprep.subr.mxu0 0.0
    %1733 = vmatpush2.msra.mxu0 0.0
    %1734 = vmatprep.subr.mxu0 0.0
    %1735 = vmatpush2.msra.mxu0 0.0
    %1736 = vmatprep.subr.mxu0 0.0
    %1737 = vmatpush2.msra.mxu0 0.0
    %1738 = vmatprep.subr.mxu0 0.0
    %1739 = vmatpush2.msra.mxu0 0.0
    %1740 = vmatprep.subr.mxu0 0.0
    %1741 = vmatpush2.msra.mxu0 0.0
    %1742 = vmatprep.subr.mxu0 0.0
    %1743 = vmatpush2.msra.mxu0 0.0
    %1744 = vmatprep.subr.mxu0 0.0
    %1745 = vmatpush2.msra.mxu0 0.0
    %1746 = vmatprep.subr.mxu0 0.0
    %1747 = vmatpush2.msra.mxu0 0.0
    %1748 = vmatprep.subr.mxu0 0.0
    %1749 = vmatpush2.msra.mxu0 0.0
    %1750 = vmatprep.mubr.f32.mxu0 0.0
    %1751 = vmatmul.mubr.f32.gmra.mxu0 %v281
    %v1752 = vpop.f32.mrf.mxu0
    %v1753 = vadd.f32 0.0, %v1752
    %v1754 = vpop.f32.mrf.mxu0
    %1755 = vmatprep.mubr.f32.mxu0 0.0
    %1756 = vmatmul.mubr.f32.gmra.mxu0 %v284
    %v1757 = vpop.f32.mrf.mxu0
    %v1758 = vadd.f32 0.0, %v1757
    %v1759 = vpop.f32.mrf.mxu0
    %1760 = vdwg.mxu0
    %1761 = vmatprep.subr.mxu0 0.0
    %1762 = vmatpush1.msra.mxu0 0.0
    %1763 = vmatprep.subr.mxu0 0.0
    %1764 = vmatpush1.msra.mxu0 0.0
    %1765 = vmatprep.subr.mxu0 0.0
    %1766 = vmatpush1.msra.mxu0 0.0
    %1767 = vmatprep.subr.mxu0 0.0
    %1768 = vmatpush1.msra.mxu0 0.0
    %1769 = vmatprep.subr.mxu0 0.0
    %1770 = vmatpush1.msra.mxu0 0.0
    %1771 = vmatprep.subr.mxu0 0.0
    %1772 = vmatpush1.msra.mxu0 0.0
    %1773 = vmatprep.subr.mxu0 0.0
    %1774 = vmatpush1.msra.mxu0 0.0
    %1775 = vmatprep.subr.mxu0 0.0
    %1776 = vmatpush1.msra.mxu0 0.0
    %1777 = vmatprep.subr.mxu0 0.0
    %1778 = vmatpush1.msra.mxu0 0.0
    %1779 = vmatprep.subr.mxu0 0.0
    %1780 = vmatpush1.msra.mxu0 0.0
    %1781 = vmatprep.subr.mxu0 0.0
    %1782 = vmatpush1.msra.mxu0 0.0
    %1783 = vmatprep.subr.mxu0 0.0
    %1784 = vmatpush1.msra.mxu0 0.0
    %1785 = vmatprep.subr.mxu0 0.0
    %1786 = vmatpush1.msra.mxu0 0.0
    %1787 = vmatprep.subr.mxu0 0.0
    %1788 = vmatpush1.msra.mxu0 0.0
    %1789 = vmatprep.subr.mxu0 0.0
    %1790 = vmatpush1.msra.mxu0 %v1578
    %1791 = vmatprep.subr.mxu0 0.0
    %1792 = vmatpush1.msra.mxu0 %v1573
    %1793 = vmatprep.subr.mxu0 0.0
    %1794 = vmatpush2.msra.mxu0 0.0
    %1795 = vmatprep.subr.mxu0 0.0
    %1796 = vmatpush2.msra.mxu0 0.0
    %1797 = vmatprep.subr.mxu0 0.0
    %1798 = vmatpush2.msra.mxu0 0.0
    %1799 = vmatprep.subr.mxu0 0.0
    %1800 = vmatpush2.msra.mxu0 0.0
    %1801 = vmatprep.subr.mxu0 0.0
    %1802 = vmatpush2.msra.mxu0 0.0
    %1803 = vmatprep.subr.mxu0 0.0
    %1804 = vmatpush2.msra.mxu0 0.0
    %1805 = vmatprep.subr.mxu0 0.0
    %1806 = vmatpush2.msra.mxu0 0.0
    %1807 = vmatprep.subr.mxu0 0.0
    %1808 = vmatpush2.msra.mxu0 0.0
    %1809 = vmatprep.subr.mxu0 0.0
    %1810 = vmatpush2.msra.mxu0 0.0
    %1811 = vmatprep.subr.mxu0 0.0
    %1812 = vmatpush2.msra.mxu0 0.0
    %1813 = vmatprep.subr.mxu0 0.0
    %1814 = vmatpush2.msra.mxu0 0.0
    %1815 = vmatprep.subr.mxu0 0.0
    %1816 = vmatpush2.msra.mxu0 0.0
    %1817 = vmatprep.subr.mxu0 0.0
    %1818 = vmatpush2.msra.mxu0 0.0
    %1819 = vmatprep.subr.mxu0 0.0
    %1820 = vmatpush2.msra.mxu0 0.0
    %1821 = vmatprep.subr.mxu0 0.0
    %1822 = vmatpush2.msra.mxu0 0.0
    %1823 = vmatprep.subr.mxu0 0.0
    %1824 = vmatpush2.msra.mxu0 0.0
    %1825 = vmatprep.mubr.f32.mxu0 0.0
    %1826 = vmatmul.mubr.f32.gmra.mxu0 %v362
    %v1827 = vpop.f32.mrf.mxu0
    %v1828 = vadd.f32 %v1753, %v1827
    %v1829 = vpop.f32.mrf.mxu0
    %1830 = vmatprep.mubr.f32.mxu0 0.0
    %1831 = vmatmul.mubr.f32.gmra.mxu0 %v365
    %v1832 = vpop.f32.mrf.mxu0
    %v1833 = vadd.f32 %v1758, %v1832
    %v1834 = vpop.f32.mrf.mxu0
    %1835 = vdwg.mxu0
    %1836 = vmatprep.subr.mxu0 0.0
    %1837 = vmatpush1.msra.mxu0 0.0
    %1838 = vmatprep.subr.mxu0 0.0
    %1839 = vmatpush1.msra.mxu0 0.0
    %1840 = vmatprep.subr.mxu0 0.0
    %1841 = vmatpush1.msra.mxu0 0.0
    %1842 = vmatprep.subr.mxu0 0.0
    %1843 = vmatpush1.msra.mxu0 0.0
    %1844 = vmatprep.subr.mxu0 0.0
    %1845 = vmatpush1.msra.mxu0 0.0
    %1846 = vmatprep.subr.mxu0 0.0
    %1847 = vmatpush1.msra.mxu0 0.0
    %1848 = vmatprep.subr.mxu0 0.0
    %1849 = vmatpush1.msra.mxu0 0.0
    %1850 = vmatprep.subr.mxu0 0.0
    %1851 = vmatpush1.msra.mxu0 0.0
    %1852 = vmatprep.subr.mxu0 0.0
    %1853 = vmatpush1.msra.mxu0 0.0
    %1854 = vmatprep.subr.mxu0 0.0
    %1855 = vmatpush1.msra.mxu0 0.0
    %1856 = vmatprep.subr.mxu0 0.0
    %1857 = vmatpush1.msra.mxu0 0.0
    %1858 = vmatprep.subr.mxu0 0.0
    %1859 = vmatpush1.msra.mxu0 0.0
    %1860 = vmatprep.subr.mxu0 0.0
    %1861 = vmatpush1.msra.mxu0 0.0
    %1862 = vmatprep.subr.mxu0 0.0
    %1863 = vmatpush1.msra.mxu0 0.0
    %1864 = vmatprep.subr.mxu0 0.0
    %1865 = vmatpush1.msra.mxu0 %v444
    %1866 = vmatprep.subr.mxu0 0.0
    %1867 = vmatpush1.msra.mxu0 %v443
    %1868 = vmatprep.subr.mxu0 0.0
    %1869 = vmatpush2.msra.mxu0 0.0
    %1870 = vmatprep.subr.mxu0 0.0
    %1871 = vmatpush2.msra.mxu0 0.0
    %1872 = vmatprep.subr.mxu0 0.0
    %1873 = vmatpush2.msra.mxu0 0.0
    %1874 = vmatprep.subr.mxu0 0.0
    %1875 = vmatpush2.msra.mxu0 0.0
    %1876 = vmatprep.subr.mxu0 0.0
    %1877 = vmatpush2.msra.mxu0 0.0
    %1878 = vmatprep.subr.mxu0 0.0
    %1879 = vmatpush2.msra.mxu0 0.0
    %1880 = vmatprep.subr.mxu0 0.0
    %1881 = vmatpush2.msra.mxu0 0.0
    %1882 = vmatprep.subr.mxu0 0.0
    %1883 = vmatpush2.msra.mxu0 0.0
    %1884 = vmatprep.subr.mxu0 0.0
    %1885 = vmatpush2.msra.mxu0 0.0
    %1886 = vmatprep.subr.mxu0 0.0
    %1887 = vmatpush2.msra.mxu0 0.0
    %1888 = vmatprep.subr.mxu0 0.0
    %1889 = vmatpush2.msra.mxu0 0.0
    %1890 = vmatprep.subr.mxu0 0.0
    %1891 = vmatpush2.msra.mxu0 0.0
    %1892 = vmatprep.subr.mxu0 0.0
    %1893 = vmatpush2.msra.mxu0 0.0
    %1894 = vmatprep.subr.mxu0 0.0
    %1895 = vmatpush2.msra.mxu0 0.0
    %1896 = vmatprep.subr.mxu0 0.0
    %1897 = vmatpush2.msra.mxu0 0.0
    %1898 = vmatprep.subr.mxu0 0.0
    %1899 = vmatpush2.msra.mxu0 0.0
    %1900 = vmatprep.mubr.f32.mxu0 0.0
    %1901 = vmatmul.mubr.f32.gmra.mxu0 %v1501
    %v1902 = vpop.f32.mrf.mxu0
    %v1903 = vadd.f32 0.0, %v1902
    %v1904 = vpop.f32.mrf.mxu0
    %1905 = vmatprep.mubr.f32.mxu0 0.0
    %1906 = vmatmul.mubr.f32.gmra.mxu0 %v1504
    %v1907 = vpop.f32.mrf.mxu0
    %v1908 = vadd.f32 0.0, %v1907
    %v1909 = vpop.f32.mrf.mxu0
    %1910 = vdwg.mxu0
    %v1911 = vmul.f32 %v1903, %v1903
    %v1912 = vmul.f32 %v1908, %v1908
    %v1913 = vsel %vm85, %v1911, 0.0
    %v1914 = vsel %vm85, %v1912, 0.0
    %v1915 = vadd.f32 %v1913, %v1914
    %1916 = vadd.xlane.f32.xlu0 %v1915
    %v1917 = vpop.xlane.xlu0 %1916
    %v1918 = vrot.slane %v1917, 4
    %v1919 = vadd.f32 %v1917, %v1918
    %v1920 = vrot.slane %v1919, 2
    %v1921 = vadd.f32 %v1919, %v1920
    %v1922 = vrot.slane %v1921, 1
    %v1923 = vadd.f32 %v1921, %v1922
    %s1924 = vtos %v1923
    %s1925 = sadd.f32 %s1685, %s1924
    %1926 = vmatprep.subr.mxu0 0.0
    %1927 = vmatpush1.msra.mxu0 0.0
    %1928 = vmatprep.subr.mxu0 0.0
    %1929 = vmatpush1.msra.mxu0 0.0
    %1930 = vmatprep.subr.mxu0 0.0
    %1931 = vmatpush1.msra.mxu0 0.0
    %1932 = vmatprep.subr.mxu0 0.0
    %1933 = vmatpush1.msra.mxu0 0.0
    %1934 = vmatprep.subr.mxu0 0.0
    %1935 = vmatpush1.msra.mxu0 0.0
    %1936 = vmatprep.subr.mxu0 0.0
    %1937 = vmatpush1.msra.mxu0 0.0
    %1938 = vmatprep.subr.mxu0 0.0
    %1939 = vmatpush1.msra.mxu0 0.0
    %1940 = vmatprep.subr.mxu0 0.0
    %1941 = vmatpush1.msra.mxu0 0.0
    %1942 = vmatprep.subr.mxu0 0.0
    %1943 = vmatpush1.msra.mxu0 0.0
    %1944 = vmatprep.subr.mxu0 0.0
    %1945 = vmatpush1.msra.mxu0 0.0
    %1946 = vmatprep.subr.mxu0 0.0
    %1947 = vmatpush1.msra.mxu0 0.0
    %1948 = vmatprep.subr.mxu0 0.0
    %1949 = vmatpush1.msra.mxu0 0.0
    %1950 = vmatprep.subr.mxu0 0.0
    %1951 = vmatpush1.msra.mxu0 0.0
    %1952 = vmatprep.subr.mxu0 0.0
    %1953 = vmatpush1.msra.mxu0 0.0
    %1954 = vmatprep.subr.mxu0 0.0
    %1955 = vmatpush1.msra.mxu0 %v1908
    %1956 = vmatprep.subr.mxu0 0.0
    %1957 = vmatpush1.msra.mxu0 %v1903
    %1958 = vmatprep.subr.mxu0 0.0
    %1959 = vmatpush2.msra.mxu0 0.0
    %1960 = vmatprep.subr.mxu0 0.0
    %1961 = vmatpush2.msra.mxu0 0.0
    %1962 = vmatprep.subr.mxu0 0.0
    %1963 = vmatpush2.msra.mxu0 0.0
    %1964 = vmatprep.subr.mxu0 0.0
    %1965 = vmatpush2.msra.mxu0 0.0
    %1966 = vmatprep.subr.mxu0 0.0
    %1967 = vmatpush2.msra.mxu0 0.0
    %1968 = vmatprep.subr.mxu0 0.0
    %1969 = vmatpush2.msra.mxu0 0.0
    %1970 = vmatprep.subr.mxu0 0.0
    %1971 = vmatpush2.msra.mxu0 0.0
    %1972 = vmatprep.subr.mxu0 0.0
    %1973 = vmatpush2.msra.mxu0 0.0
    %1974 = vmatprep.subr.mxu0 0.0
    %1975 = vmatpush2.msra.mxu0 0.0
    %1976 = vmatprep.subr.mxu0 0.0
    %1977 = vmatpush2.msra.mxu0 0.0
    %1978 = vmatprep.subr.mxu0 0.0
    %1979 = vmatpush2.msra.mxu0 0.0
    %1980 = vmatprep.subr.mxu0 0.0
    %1981 = vmatpush2.msra.mxu0 0.0
    %1982 = vmatprep.subr.mxu0 0.0
    %1983 = vmatpush2.msra.mxu0 0.0
    %1984 = vmatprep.subr.mxu0 0.0
    %1985 = vmatpush2.msra.mxu0 0.0
    %1986 = vmatprep.subr.mxu0 0.0
    %1987 = vmatpush2.msra.mxu0 0.0
    %1988 = vmatprep.subr.mxu0 0.0
    %1989 = vmatpush2.msra.mxu0 0.0
    %1990 = vmatprep.mubr.f32.mxu0 0.0
    %1991 = vmatmul.mubr.f32.gmra.mxu0 %v539
    %v1992 = vpop.f32.mrf.mxu0
    %v1993 = vadd.f32 0.0, %v1992
    %v1994 = vpop.f32.mrf.mxu0
    %1995 = vmatprep.mubr.f32.mxu0 0.0
    %1996 = vmatmul.mubr.f32.gmra.mxu0 %v542
    %v1997 = vpop.f32.mrf.mxu0
    %v1998 = vadd.f32 0.0, %v1997
    %v1999 = vpop.f32.mrf.mxu0
    %2000 = vdwg.mxu0
    %v2001 = vadd.f32 %v1828, %v1993
    %v2002 = vadd.f32 %v1833, %v1998
    %2003 = vmatprep.subr.mxu0 0.0
    %2004 = vmatpush1.msra.mxu0 0.0
    %2005 = vmatprep.subr.mxu0 0.0
    %2006 = vmatpush1.msra.mxu0 0.0
    %2007 = vmatprep.subr.mxu0 0.0
    %2008 = vmatpush1.msra.mxu0 0.0
    %2009 = vmatprep.subr.mxu0 0.0
    %2010 = vmatpush1.msra.mxu0 0.0
    %2011 = vmatprep.subr.mxu0 0.0
    %2012 = vmatpush1.msra.mxu0 0.0
    %2013 = vmatprep.subr.mxu0 0.0
    %2014 = vmatpush1.msra.mxu0 0.0
    %2015 = vmatprep.subr.mxu0 0.0
    %2016 = vmatpush1.msra.mxu0 0.0
    %2017 = vmatprep.subr.mxu0 0.0
    %2018 = vmatpush1.msra.mxu0 0.0
    %2019 = vmatprep.subr.mxu0 0.0
    %2020 = vmatpush1.msra.mxu0 0.0
    %2021 = vmatprep.subr.mxu0 0.0
    %2022 = vmatpush1.msra.mxu0 0.0
    %2023 = vmatprep.subr.mxu0 0.0
    %2024 = vmatpush1.msra.mxu0 0.0
    %2025 = vmatprep.subr.mxu0 0.0
    %2026 = vmatpush1.msra.mxu0 0.0
    %2027 = vmatprep.subr.mxu0 0.0
    %2028 = vmatpush1.msra.mxu0 0.0
    %2029 = vmatprep.subr.mxu0 0.0
    %2030 = vmatpush1.msra.mxu0 0.0
    %2031 = vmatprep.subr.mxu0 0.0
    %2032 = vmatpush1.msra.mxu0 %v623
    %2033 = vmatprep.subr.mxu0 0.0
    %2034 = vmatpush1.msra.mxu0 %v622
    %2035 = vmatprep.subr.mxu0 0.0
    %2036 = vmatpush2.msra.mxu0 0.0
    %2037 = vmatprep.subr.mxu0 0.0
    %2038 = vmatpush2.msra.mxu0 0.0
    %2039 = vmatprep.subr.mxu0 0.0
    %2040 = vmatpush2.msra.mxu0 0.0
    %2041 = vmatprep.subr.mxu0 0.0
    %2042 = vmatpush2.msra.mxu0 0.0
    %2043 = vmatprep.subr.mxu0 0.0
    %2044 = vmatpush2.msra.mxu0 0.0
    %2045 = vmatprep.subr.mxu0 0.0
    %2046 = vmatpush2.msra.mxu0 0.0
    %2047 = vmatprep.subr.mxu0 0.0
    %2048 = vmatpush2.msra.mxu0 0.0
    %2049 = vmatprep.subr.mxu0 0.0
    %2050 = vmatpush2.msra.mxu0 0.0
    %2051 = vmatprep.subr.mxu0 0.0
    %2052 = vmatpush2.msra.mxu0 0.0
    %2053 = vmatprep.subr.mxu0 0.0
    %2054 = vmatpush2.msra.mxu0 0.0
    %2055 = vmatprep.subr.mxu0 0.0
    %2056 = vmatpush2.msra.mxu0 0.0
    %2057 = vmatprep.subr.mxu0 0.0
    %2058 = vmatpush2.msra.mxu0 0.0
    %2059 = vmatprep.subr.mxu0 0.0
    %2060 = vmatpush2.msra.mxu0 0.0
    %2061 = vmatprep.subr.mxu0 0.0
    %2062 = vmatpush2.msra.mxu0 0.0
    %2063 = vmatprep.subr.mxu0 0.0
    %2064 = vmatpush2.msra.mxu0 0.0
    %2065 = vmatprep.subr.mxu0 0.0
    %2066 = vmatpush2.msra.mxu0 0.0
    %2067 = vmatprep.mubr.f32.mxu0 0.0
    %2068 = vmatmul.mubr.f32.gmra.mxu0 %v1501
    %v2069 = vpop.f32.mrf.mxu0
    %v2070 = vadd.f32 0.0, %v2069
    %v2071 = vpop.f32.mrf.mxu0
    %2072 = vmatprep.mubr.f32.mxu0 0.0
    %2073 = vmatmul.mubr.f32.gmra.mxu0 %v1504
    %v2074 = vpop.f32.mrf.mxu0
    %v2075 = vadd.f32 0.0, %v2074
    %v2076 = vpop.f32.mrf.mxu0
    %2077 = vdwg.mxu0
    %v2078 = vmul.f32 %v2070, %v2070
    %v2079 = vmul.f32 %v2075, %v2075
    %v2080 = vsel %vm85, %v2078, 0.0
    %v2081 = vsel %vm85, %v2079, 0.0
    %v2082 = vadd.f32 %v2080, %v2081
    %2083 = vadd.xlane.f32.xlu0 %v2082
    %v2084 = vpop.xlane.xlu0 %2083
    %v2085 = vrot.slane %v2084, 4
    %v2086 = vadd.f32 %v2084, %v2085
    %v2087 = vrot.slane %v2086, 2
    %v2088 = vadd.f32 %v2086, %v2087
    %v2089 = vrot.slane %v2088, 1
    %v2090 = vadd.f32 %v2088, %v2089
    %s2091 = vtos %v2090
    %s2092 = sadd.f32 %s1925, %s2091
    %2093 = vmatprep.subr.mxu0 0.0
    %2094 = vmatpush1.msra.mxu0 0.0
    %2095 = vmatprep.subr.mxu0 0.0
    %2096 = vmatpush1.msra.mxu0 0.0
    %2097 = vmatprep.subr.mxu0 0.0
    %2098 = vmatpush1.msra.mxu0 0.0
    %2099 = vmatprep.subr.mxu0 0.0
    %2100 = vmatpush1.msra.mxu0 0.0
    %2101 = vmatprep.subr.mxu0 0.0
    %2102 = vmatpush1.msra.mxu0 0.0
    %2103 = vmatprep.subr.mxu0 0.0
    %2104 = vmatpush1.msra.mxu0 0.0
    %2105 = vmatprep.subr.mxu0 0.0
    %2106 = vmatpush1.msra.mxu0 0.0
    %2107 = vmatprep.subr.mxu0 0.0
    %2108 = vmatpush1.msra.mxu0 0.0
    %2109 = vmatprep.subr.mxu0 0.0
    %2110 = vmatpush1.msra.mxu0 0.0
    %2111 = vmatprep.subr.mxu0 0.0
    %2112 = vmatpush1.msra.mxu0 0.0
    %2113 = vmatprep.subr.mxu0 0.0
    %2114 = vmatpush1.msra.mxu0 0.0
    %2115 = vmatprep.subr.mxu0 0.0
    %2116 = vmatpush1.msra.mxu0 0.0
    %2117 = vmatprep.subr.mxu0 0.0
    %2118 = vmatpush1.msra.mxu0 0.0
    %2119 = vmatprep.subr.mxu0 0.0
    %2120 = vmatpush1.msra.mxu0 0.0
    %2121 = vmatprep.subr.mxu0 0.0
    %2122 = vmatpush1.msra.mxu0 %v2075
    %2123 = vmatprep.subr.mxu0 0.0
    %2124 = vmatpush1.msra.mxu0 %v2070
    %2125 = vmatprep.subr.mxu0 0.0
    %2126 = vmatpush2.msra.mxu0 0.0
    %2127 = vmatprep.subr.mxu0 0.0
    %2128 = vmatpush2.msra.mxu0 0.0
    %2129 = vmatprep.subr.mxu0 0.0
    %2130 = vmatpush2.msra.mxu0 0.0
    %2131 = vmatprep.subr.mxu0 0.0
    %2132 = vmatpush2.msra.mxu0 0.0
    %2133 = vmatprep.subr.mxu0 0.0
    %2134 = vmatpush2.msra.mxu0 0.0
    %2135 = vmatprep.subr.mxu0 0.0
    %2136 = vmatpush2.msra.mxu0 0.0
    %2137 = vmatprep.subr.mxu0 0.0
    %2138 = vmatpush2.msra.mxu0 0.0
    %2139 = vmatprep.subr.mxu0 0.0
    %2140 = vmatpush2.msra.mxu0 0.0
    %2141 = vmatprep.subr.mxu0 0.0
    %2142 = vmatpush2.msra.mxu0 0.0
    %2143 = vmatprep.subr.mxu0 0.0
    %2144 = vmatpush2.msra.mxu0 0.0
    %2145 = vmatprep.subr.mxu0 0.0
    %2146 = vmatpush2.msra.mxu0 0.0
    %2147 = vmatprep.subr.mxu0 0.0
    %2148 = vmatpush2.msra.mxu0 0.0
    %2149 = vmatprep.subr.mxu0 0.0
    %2150 = vmatpush2.msra.mxu0 0.0
    %2151 = vmatprep.subr.mxu0 0.0
    %2152 = vmatpush2.msra.mxu0 0.0
    %2153 = vmatprep.subr.mxu0 0.0
    %2154 = vmatpush2.msra.mxu0 0.0
    %2155 = vmatprep.subr.mxu0 0.0
    %2156 = vmatpush2.msra.mxu0 0.0
    %2157 = vmatprep.mubr.f32.mxu0 0.0
    %2158 = vmatmul.mubr.f32.gmra.mxu0 %v718
    %v2159 = vpop.f32.mrf.mxu0
    %v2160 = vadd.f32 0.0, %v2159
    %v2161 = vpop.f32.mrf.mxu0
    %2162 = vmatprep.mubr.f32.mxu0 0.0
    %2163 = vmatmul.mubr.f32.gmra.mxu0 %v721
    %v2164 = vpop.f32.mrf.mxu0
    %v2165 = vadd.f32 0.0, %v2164
    %v2166 = vpop.f32.mrf.mxu0
    %2167 = vdwg.mxu0
    %v2168 = vadd.f32 %v2001, %v2160
    %v2169 = vadd.f32 %v2002, %v2165
    %v2170 = vmul.f32 %v2168, %v2168
    %v2171 = vmul.f32 %v2169, %v2169
    %v2172 = vsel %vm85, %v2170, 0.0
    %v2173 = vsel %vm85, %v2171, 0.0
    %v2174 = vadd.f32 %v2172, %v2173
    %2175 = vadd.xlane.f32.xlu0 %v2174
    %v2176 = vpop.xlane.xlu0 %2175
    %v2177 = vrot.slane %v2176, 4
    %v2178 = vadd.f32 %v2176, %v2177
    %v2179 = vrot.slane %v2178, 2
    %v2180 = vadd.f32 %v2178, %v2179
    %v2181 = vrot.slane %v2180, 1
    %v2182 = vadd.f32 %v2180, %v2181
    %s2183 = vtos %v2182
    %s2184 = sadd.f32 %s1499, %s2183
    %v2186 = vsel %vm85, %v79, 0
    %v2189 = vsel %vm85, %v80, 0
    %2191 = vmatprep.subr.mxu0 0.0
    %2192 = vmatpush1.msra.mxu0 0.0
    %2193 = vmatprep.subr.mxu0 0.0
    %2194 = vmatpush1.msra.mxu0 0.0
    %2195 = vmatprep.subr.mxu0 0.0
    %2196 = vmatpush1.msra.mxu0 0.0
    %2197 = vmatprep.subr.mxu0 0.0
    %2198 = vmatpush1.msra.mxu0 0.0
    %2199 = vmatprep.subr.mxu0 0.0
    %2200 = vmatpush1.msra.mxu0 0.0
    %2201 = vmatprep.subr.mxu0 0.0
    %2202 = vmatpush1.msra.mxu0 0.0
    %2203 = vmatprep.subr.mxu0 0.0
    %2204 = vmatpush1.msra.mxu0 0.0
    %2205 = vmatprep.subr.mxu0 0.0
    %2206 = vmatpush1.msra.mxu0 0.0
    %2207 = vmatprep.subr.mxu0 0.0
    %2208 = vmatpush1.msra.mxu0 0.0
    %2209 = vmatprep.subr.mxu0 0.0
    %2210 = vmatpush1.msra.mxu0 0.0
    %2211 = vmatprep.subr.mxu0 0.0
    %2212 = vmatpush1.msra.mxu0 0.0
    %2213 = vmatprep.subr.mxu0 0.0
    %2214 = vmatpush1.msra.mxu0 0.0
    %2215 = vmatprep.subr.mxu0 0.0
    %2216 = vmatpush1.msra.mxu0 0.0
    %2217 = vmatprep.subr.mxu0 0.0
    %2218 = vmatpush1.msra.mxu0 0.0
    %2219 = vmatprep.subr.mxu0 0.0
    %2220 = vmatpush1.msra.mxu0 %v84
    %2221 = vmatprep.subr.mxu0 0.0
    %2222 = vmatpush1.msra.mxu0 %v83
    %2223 = vmatprep.subr.mxu0 0.0
    %2224 = vmatpush2.msra.mxu0 0.0
    %2225 = vmatprep.subr.mxu0 0.0
    %2226 = vmatpush2.msra.mxu0 0.0
    %2227 = vmatprep.subr.mxu0 0.0
    %2228 = vmatpush2.msra.mxu0 0.0
    %2229 = vmatprep.subr.mxu0 0.0
    %2230 = vmatpush2.msra.mxu0 0.0
    %2231 = vmatprep.subr.mxu0 0.0
    %2232 = vmatpush2.msra.mxu0 0.0
    %2233 = vmatprep.subr.mxu0 0.0
    %2234 = vmatpush2.msra.mxu0 0.0
    %2235 = vmatprep.subr.mxu0 0.0
    %2236 = vmatpush2.msra.mxu0 0.0
    %2237 = vmatprep.subr.mxu0 0.0
    %2238 = vmatpush2.msra.mxu0 0.0
    %2239 = vmatprep.subr.mxu0 0.0
    %2240 = vmatpush2.msra.mxu0 0.0
    %2241 = vmatprep.subr.mxu0 0.0
    %2242 = vmatpush2.msra.mxu0 0.0
    %2243 = vmatprep.subr.mxu0 0.0
    %2244 = vmatpush2.msra.mxu0 0.0
    %2245 = vmatprep.subr.mxu0 0.0
    %2246 = vmatpush2.msra.mxu0 0.0
    %2247 = vmatprep.subr.mxu0 0.0
    %2248 = vmatpush2.msra.mxu0 0.0
    %2249 = vmatprep.subr.mxu0 0.0
    %2250 = vmatpush2.msra.mxu0 0.0
    %2251 = vmatprep.subr.mxu0 0.0
    %2252 = vmatpush2.msra.mxu0 0.0
    %2253 = vmatprep.subr.mxu0 0.0
    %2254 = vmatpush2.msra.mxu0 0.0
    %2255 = vmatprep.mubr.f32.mxu0 0.0
    %2256 = vmatmul.mubr.f32.gmra.mxu0 %v2186
    %v2257 = vpop.f32.mrf.mxu0
    %v2258 = vadd.f32 0.0, %v2257
    %v2259 = vpop.f32.mrf.mxu0
    %2260 = vmatprep.mubr.f32.mxu0 0.0
    %2261 = vmatmul.mubr.f32.gmra.mxu0 %v2189
    %v2262 = vpop.f32.mrf.mxu0
    %v2263 = vadd.f32 0.0, %v2262
    %v2264 = vpop.f32.mrf.mxu0
    %2265 = vdwg.mxu0
    %v2266 = vmul.f32 %v2258, %v2258
    %v2267 = vmul.f32 %v2263, %v2263
    %v2268 = vsel %vm85, %v2266, 0.0
    %v2269 = vsel %vm85, %v2267, 0.0
    %v2270 = vadd.f32 %v2268, %v2269
    %2271 = vadd.xlane.f32.xlu0 %v2270
    %v2272 = vpop.xlane.xlu0 %2271
    %v2273 = vrot.slane %v2272, 4
    %v2274 = vadd.f32 %v2272, %v2273
    %v2275 = vrot.slane %v2274, 2
    %v2276 = vadd.f32 %v2274, %v2275
    %v2277 = vrot.slane %v2276, 1
    %v2278 = vadd.f32 %v2276, %v2277
    %s2279 = vtos %v2278
    %s2280 = sadd.f32 %s2092, %s2279
    %2281 = vmatprep.subr.mxu0 0.0
    %2282 = vmatpush1.msra.mxu0 0.0
    %2283 = vmatprep.subr.mxu0 0.0
    %2284 = vmatpush1.msra.mxu0 0.0
    %2285 = vmatprep.subr.mxu0 0.0
    %2286 = vmatpush1.msra.mxu0 0.0
    %2287 = vmatprep.subr.mxu0 0.0
    %2288 = vmatpush1.msra.mxu0 0.0
    %2289 = vmatprep.subr.mxu0 0.0
    %2290 = vmatpush1.msra.mxu0 0.0
    %2291 = vmatprep.subr.mxu0 0.0
    %2292 = vmatpush1.msra.mxu0 0.0
    %2293 = vmatprep.subr.mxu0 0.0
    %2294 = vmatpush1.msra.mxu0 0.0
    %2295 = vmatprep.subr.mxu0 0.0
    %2296 = vmatpush1.msra.mxu0 0.0
    %2297 = vmatprep.subr.mxu0 0.0
    %2298 = vmatpush1.msra.mxu0 0.0
    %2299 = vmatprep.subr.mxu0 0.0
    %2300 = vmatpush1.msra.mxu0 0.0
    %2301 = vmatprep.subr.mxu0 0.0
    %2302 = vmatpush1.msra.mxu0 0.0
    %2303 = vmatprep.subr.mxu0 0.0
    %2304 = vmatpush1.msra.mxu0 0.0
    %2305 = vmatprep.subr.mxu0 0.0
    %2306 = vmatpush1.msra.mxu0 0.0
    %2307 = vmatprep.subr.mxu0 0.0
    %2308 = vmatpush1.msra.mxu0 0.0
    %2309 = vmatprep.subr.mxu0 0.0
    %2310 = vmatpush1.msra.mxu0 %v186
    %2311 = vmatprep.subr.mxu0 0.0
    %2312 = vmatpush1.msra.mxu0 %v185
    %2313 = vmatprep.subr.mxu0 0.0
    %2314 = vmatpush2.msra.mxu0 0.0
    %2315 = vmatprep.subr.mxu0 0.0
    %2316 = vmatpush2.msra.mxu0 0.0
    %2317 = vmatprep.subr.mxu0 0.0
    %2318 = vmatpush2.msra.mxu0 0.0
    %2319 = vmatprep.subr.mxu0 0.0
    %2320 = vmatpush2.msra.mxu0 0.0
    %2321 = vmatprep.subr.mxu0 0.0
    %2322 = vmatpush2.msra.mxu0 0.0
    %2323 = vmatprep.subr.mxu0 0.0
    %2324 = vmatpush2.msra.mxu0 0.0
    %2325 = vmatprep.subr.mxu0 0.0
    %2326 = vmatpush2.msra.mxu0 0.0
    %2327 = vmatprep.subr.mxu0 0.0
    %2328 = vmatpush2.msra.mxu0 0.0
    %2329 = vmatprep.subr.mxu0 0.0
    %2330 = vmatpush2.msra.mxu0 0.0
    %2331 = vmatprep.subr.mxu0 0.0
    %2332 = vmatpush2.msra.mxu0 0.0
    %2333 = vmatprep.subr.mxu0 0.0
    %2334 = vmatpush2.msra.mxu0 0.0
    %2335 = vmatprep.subr.mxu0 0.0
    %2336 = vmatpush2.msra.mxu0 0.0
    %2337 = vmatprep.subr.mxu0 0.0
    %2338 = vmatpush2.msra.mxu0 0.0
    %2339 = vmatprep.subr.mxu0 0.0
    %2340 = vmatpush2.msra.mxu0 0.0
    %2341 = vmatprep.subr.mxu0 0.0
    %2342 = vmatpush2.msra.mxu0 0.0
    %2343 = vmatprep.subr.mxu0 0.0
    %2344 = vmatpush2.msra.mxu0 0.0
    %2345 = vmatprep.mubr.f32.mxu0 0.0
    %2346 = vmatmul.mubr.f32.gmra.mxu0 %v2186
    %v2347 = vpop.f32.mrf.mxu0
    %v2348 = vadd.f32 0.0, %v2347
    %v2349 = vpop.f32.mrf.mxu0
    %2350 = vmatprep.mubr.f32.mxu0 0.0
    %2351 = vmatmul.mubr.f32.gmra.mxu0 %v2189
    %v2352 = vpop.f32.mrf.mxu0
    %v2353 = vadd.f32 0.0, %v2352
    %v2354 = vpop.f32.mrf.mxu0
    %2355 = vdwg.mxu0
    %v2356 = vmul.f32 %v2348, %v2348
    %v2357 = vmul.f32 %v2353, %v2353
    %v2358 = vsel %vm85, %v2356, 0.0
    %v2359 = vsel %vm85, %v2357, 0.0
    %v2360 = vadd.f32 %v2358, %v2359
    %2361 = vadd.xlane.f32.xlu0 %v2360
    %v2362 = vpop.xlane.xlu0 %2361
    %v2363 = vrot.slane %v2362, 4
    %v2364 = vadd.f32 %v2362, %v2363
    %v2365 = vrot.slane %v2364, 2
    %v2366 = vadd.f32 %v2364, %v2365
    %v2367 = vrot.slane %v2366, 1
    %v2368 = vadd.f32 %v2366, %v2367
    %s2369 = vtos %v2368
    %s2370 = sadd.f32 %s2280, %s2369
    %2371 = vmatprep.subr.mxu0 0.0
    %2372 = vmatpush1.msra.mxu0 0.0
    %2373 = vmatprep.subr.mxu0 0.0
    %2374 = vmatpush1.msra.mxu0 0.0
    %2375 = vmatprep.subr.mxu0 0.0
    %2376 = vmatpush1.msra.mxu0 0.0
    %2377 = vmatprep.subr.mxu0 0.0
    %2378 = vmatpush1.msra.mxu0 0.0
    %2379 = vmatprep.subr.mxu0 0.0
    %2380 = vmatpush1.msra.mxu0 0.0
    %2381 = vmatprep.subr.mxu0 0.0
    %2382 = vmatpush1.msra.mxu0 0.0
    %2383 = vmatprep.subr.mxu0 0.0
    %2384 = vmatpush1.msra.mxu0 0.0
    %2385 = vmatprep.subr.mxu0 0.0
    %2386 = vmatpush1.msra.mxu0 0.0
    %2387 = vmatprep.subr.mxu0 0.0
    %2388 = vmatpush1.msra.mxu0 0.0
    %2389 = vmatprep.subr.mxu0 0.0
    %2390 = vmatpush1.msra.mxu0 0.0
    %2391 = vmatprep.subr.mxu0 0.0
    %2392 = vmatpush1.msra.mxu0 0.0
    %2393 = vmatprep.subr.mxu0 0.0
    %2394 = vmatpush1.msra.mxu0 0.0
    %2395 = vmatprep.subr.mxu0 0.0
    %2396 = vmatpush1.msra.mxu0 0.0
    %2397 = vmatprep.subr.mxu0 0.0
    %2398 = vmatpush1.msra.mxu0 0.0
    %2399 = vmatprep.subr.mxu0 0.0
    %2400 = vmatpush1.msra.mxu0 %v2353
    %2401 = vmatprep.subr.mxu0 0.0
    %2402 = vmatpush1.msra.mxu0 %v2348
    %2403 = vmatprep.subr.mxu0 0.0
    %2404 = vmatpush2.msra.mxu0 0.0
    %2405 = vmatprep.subr.mxu0 0.0
    %2406 = vmatpush2.msra.mxu0 0.0
    %2407 = vmatprep.subr.mxu0 0.0
    %2408 = vmatpush2.msra.mxu0 0.0
    %2409 = vmatprep.subr.mxu0 0.0
    %2410 = vmatpush2.msra.mxu0 0.0
    %2411 = vmatprep.subr.mxu0 0.0
    %2412 = vmatpush2.msra.mxu0 0.0
    %2413 = vmatprep.subr.mxu0 0.0
    %2414 = vmatpush2.msra.mxu0 0.0
    %2415 = vmatprep.subr.mxu0 0.0
    %2416 = vmatpush2.msra.mxu0 0.0
    %2417 = vmatprep.subr.mxu0 0.0
    %2418 = vmatpush2.msra.mxu0 0.0
    %2419 = vmatprep.subr.mxu0 0.0
    %2420 = vmatpush2.msra.mxu0 0.0
    %2421 = vmatprep.subr.mxu0 0.0
    %2422 = vmatpush2.msra.mxu0 0.0
    %2423 = vmatprep.subr.mxu0 0.0
    %2424 = vmatpush2.msra.mxu0 0.0
    %2425 = vmatprep.subr.mxu0 0.0
    %2426 = vmatpush2.msra.mxu0 0.0
    %2427 = vmatprep.subr.mxu0 0.0
    %2428 = vmatpush2.msra.mxu0 0.0
    %2429 = vmatprep.subr.mxu0 0.0
    %2430 = vmatpush2.msra.mxu0 0.0
    %2431 = vmatprep.subr.mxu0 0.0
    %2432 = vmatpush2.msra.mxu0 0.0
    %2433 = vmatprep.subr.mxu0 0.0
    %2434 = vmatpush2.msra.mxu0 0.0
    %2435 = vmatprep.mubr.f32.mxu0 0.0
    %2436 = vmatmul.mubr.f32.gmra.mxu0 %v281
    %v2437 = vpop.f32.mrf.mxu0
    %v2438 = vadd.f32 0.0, %v2437
    %v2439 = vpop.f32.mrf.mxu0
    %2440 = vmatprep.mubr.f32.mxu0 0.0
    %2441 = vmatmul.mubr.f32.gmra.mxu0 %v284
    %v2442 = vpop.f32.mrf.mxu0
    %v2443 = vadd.f32 0.0, %v2442
    %v2444 = vpop.f32.mrf.mxu0
    %2445 = vdwg.mxu0
    %2446 = vmatprep.subr.mxu0 0.0
    %2447 = vmatpush1.msra.mxu0 0.0
    %2448 = vmatprep.subr.mxu0 0.0
    %2449 = vmatpush1.msra.mxu0 0.0
    %2450 = vmatprep.subr.mxu0 0.0
    %2451 = vmatpush1.msra.mxu0 0.0
    %2452 = vmatprep.subr.mxu0 0.0
    %2453 = vmatpush1.msra.mxu0 0.0
    %2454 = vmatprep.subr.mxu0 0.0
    %2455 = vmatpush1.msra.mxu0 0.0
    %2456 = vmatprep.subr.mxu0 0.0
    %2457 = vmatpush1.msra.mxu0 0.0
    %2458 = vmatprep.subr.mxu0 0.0
    %2459 = vmatpush1.msra.mxu0 0.0
    %2460 = vmatprep.subr.mxu0 0.0
    %2461 = vmatpush1.msra.mxu0 0.0
    %2462 = vmatprep.subr.mxu0 0.0
    %2463 = vmatpush1.msra.mxu0 0.0
    %2464 = vmatprep.subr.mxu0 0.0
    %2465 = vmatpush1.msra.mxu0 0.0
    %2466 = vmatprep.subr.mxu0 0.0
    %2467 = vmatpush1.msra.mxu0 0.0
    %2468 = vmatprep.subr.mxu0 0.0
    %2469 = vmatpush1.msra.mxu0 0.0
    %2470 = vmatprep.subr.mxu0 0.0
    %2471 = vmatpush1.msra.mxu0 0.0
    %2472 = vmatprep.subr.mxu0 0.0
    %2473 = vmatpush1.msra.mxu0 0.0
    %2474 = vmatprep.subr.mxu0 0.0
    %2475 = vmatpush1.msra.mxu0 %v2263
    %2476 = vmatprep.subr.mxu0 0.0
    %2477 = vmatpush1.msra.mxu0 %v2258
    %2478 = vmatprep.subr.mxu0 0.0
    %2479 = vmatpush2.msra.mxu0 0.0
    %2480 = vmatprep.subr.mxu0 0.0
    %2481 = vmatpush2.msra.mxu0 0.0
    %2482 = vmatprep.subr.mxu0 0.0
    %2483 = vmatpush2.msra.mxu0 0.0
    %2484 = vmatprep.subr.mxu0 0.0
    %2485 = vmatpush2.msra.mxu0 0.0
    %2486 = vmatprep.subr.mxu0 0.0
    %2487 = vmatpush2.msra.mxu0 0.0
    %2488 = vmatprep.subr.mxu0 0.0
    %2489 = vmatpush2.msra.mxu0 0.0
    %2490 = vmatprep.subr.mxu0 0.0
    %2491 = vmatpush2.msra.mxu0 0.0
    %2492 = vmatprep.subr.mxu0 0.0
    %2493 = vmatpush2.msra.mxu0 0.0
    %2494 = vmatprep.subr.mxu0 0.0
    %2495 = vmatpush2.msra.mxu0 0.0
    %2496 = vmatprep.subr.mxu0 0.0
    %2497 = vmatpush2.msra.mxu0 0.0
    %2498 = vmatprep.subr.mxu0 0.0
    %2499 = vmatpush2.msra.mxu0 0.0
    %2500 = vmatprep.subr.mxu0 0.0
    %2501 = vmatpush2.msra.mxu0 0.0
    %2502 = vmatprep.subr.mxu0 0.0
    %2503 = vmatpush2.msra.mxu0 0.0
    %2504 = vmatprep.subr.mxu0 0.0
    %2505 = vmatpush2.msra.mxu0 0.0
    %2506 = vmatprep.subr.mxu0 0.0
    %2507 = vmatpush2.msra.mxu0 0.0
    %2508 = vmatprep.subr.mxu0 0.0
    %2509 = vmatpush2.msra.mxu0 0.0
    %2510 = vmatprep.mubr.f32.mxu0 0.0
    %2511 = vmatmul.mubr.f32.gmra.mxu0 %v362
    %v2512 = vpop.f32.mrf.mxu0
    %v2513 = vadd.f32 %v2438, %v2512
    %v2514 = vpop.f32.mrf.mxu0
    %2515 = vmatprep.mubr.f32.mxu0 0.0
    %2516 = vmatmul.mubr.f32.gmra.mxu0 %v365
    %v2517 = vpop.f32.mrf.mxu0
    %v2518 = vadd.f32 %v2443, %v2517
    %v2519 = vpop.f32.mrf.mxu0
    %2520 = vdwg.mxu0
    %2521 = vmatprep.subr.mxu0 0.0
    %2522 = vmatpush1.msra.mxu0 0.0
    %2523 = vmatprep.subr.mxu0 0.0
    %2524 = vmatpush1.msra.mxu0 0.0
    %2525 = vmatprep.subr.mxu0 0.0
    %2526 = vmatpush1.msra.mxu0 0.0
    %2527 = vmatprep.subr.mxu0 0.0
    %2528 = vmatpush1.msra.mxu0 0.0
    %2529 = vmatprep.subr.mxu0 0.0
    %2530 = vmatpush1.msra.mxu0 0.0
    %2531 = vmatprep.subr.mxu0 0.0
    %2532 = vmatpush1.msra.mxu0 0.0
    %2533 = vmatprep.subr.mxu0 0.0
    %2534 = vmatpush1.msra.mxu0 0.0
    %2535 = vmatprep.subr.mxu0 0.0
    %2536 = vmatpush1.msra.mxu0 0.0
    %2537 = vmatprep.subr.mxu0 0.0
    %2538 = vmatpush1.msra.mxu0 0.0
    %2539 = vmatprep.subr.mxu0 0.0
    %2540 = vmatpush1.msra.mxu0 0.0
    %2541 = vmatprep.subr.mxu0 0.0
    %2542 = vmatpush1.msra.mxu0 0.0
    %2543 = vmatprep.subr.mxu0 0.0
    %2544 = vmatpush1.msra.mxu0 0.0
    %2545 = vmatprep.subr.mxu0 0.0
    %2546 = vmatpush1.msra.mxu0 0.0
    %2547 = vmatprep.subr.mxu0 0.0
    %2548 = vmatpush1.msra.mxu0 0.0
    %2549 = vmatprep.subr.mxu0 0.0
    %2550 = vmatpush1.msra.mxu0 %v444
    %2551 = vmatprep.subr.mxu0 0.0
    %2552 = vmatpush1.msra.mxu0 %v443
    %2553 = vmatprep.subr.mxu0 0.0
    %2554 = vmatpush2.msra.mxu0 0.0
    %2555 = vmatprep.subr.mxu0 0.0
    %2556 = vmatpush2.msra.mxu0 0.0
    %2557 = vmatprep.subr.mxu0 0.0
    %2558 = vmatpush2.msra.mxu0 0.0
    %2559 = vmatprep.subr.mxu0 0.0
    %2560 = vmatpush2.msra.mxu0 0.0
    %2561 = vmatprep.subr.mxu0 0.0
    %2562 = vmatpush2.msra.mxu0 0.0
    %2563 = vmatprep.subr.mxu0 0.0
    %2564 = vmatpush2.msra.mxu0 0.0
    %2565 = vmatprep.subr.mxu0 0.0
    %2566 = vmatpush2.msra.mxu0 0.0
    %2567 = vmatprep.subr.mxu0 0.0
    %2568 = vmatpush2.msra.mxu0 0.0
    %2569 = vmatprep.subr.mxu0 0.0
    %2570 = vmatpush2.msra.mxu0 0.0
    %2571 = vmatprep.subr.mxu0 0.0
    %2572 = vmatpush2.msra.mxu0 0.0
    %2573 = vmatprep.subr.mxu0 0.0
    %2574 = vmatpush2.msra.mxu0 0.0
    %2575 = vmatprep.subr.mxu0 0.0
    %2576 = vmatpush2.msra.mxu0 0.0
    %2577 = vmatprep.subr.mxu0 0.0
    %2578 = vmatpush2.msra.mxu0 0.0
    %2579 = vmatprep.subr.mxu0 0.0
    %2580 = vmatpush2.msra.mxu0 0.0
    %2581 = vmatprep.subr.mxu0 0.0
    %2582 = vmatpush2.msra.mxu0 0.0
    %2583 = vmatprep.subr.mxu0 0.0
    %2584 = vmatpush2.msra.mxu0 0.0
    %2585 = vmatprep.mubr.f32.mxu0 0.0
    %2586 = vmatmul.mubr.f32.gmra.mxu0 %v2186
    %v2587 = vpop.f32.mrf.mxu0
    %v2588 = vadd.f32 0.0, %v2587
    %v2589 = vpop.f32.mrf.mxu0
    %2590 = vmatprep.mubr.f32.mxu0 0.0
    %2591 = vmatmul.mubr.f32.gmra.mxu0 %v2189
    %v2592 = vpop.f32.mrf.mxu0
    %v2593 = vadd.f32 0.0, %v2592
    %v2594 = vpop.f32.mrf.mxu0
    %2595 = vdwg.mxu0
    %v2596 = vmul.f32 %v2588, %v2588
    %v2597 = vmul.f32 %v2593, %v2593
    %v2598 = vsel %vm85, %v2596, 0.0
    %v2599 = vsel %vm85, %v2597, 0.0
    %v2600 = vadd.f32 %v2598, %v2599
    %2601 = vadd.xlane.f32.xlu0 %v2600
    %v2602 = vpop.xlane.xlu0 %2601
    %v2603 = vrot.slane %v2602, 4
    %v2604 = vadd.f32 %v2602, %v2603
    %v2605 = vrot.slane %v2604, 2
    %v2606 = vadd.f32 %v2604, %v2605
    %v2607 = vrot.slane %v2606, 1
    %v2608 = vadd.f32 %v2606, %v2607
    %s2609 = vtos %v2608
    %s2610 = sadd.f32 %s2370, %s2609
    %2611 = vmatprep.subr.mxu0 0.0
    %2612 = vmatpush1.msra.mxu0 0.0
    %2613 = vmatprep.subr.mxu0 0.0
    %2614 = vmatpush1.msra.mxu0 0.0
    %2615 = vmatprep.subr.mxu0 0.0
    %2616 = vmatpush1.msra.mxu0 0.0
    %2617 = vmatprep.subr.mxu0 0.0
    %2618 = vmatpush1.msra.mxu0 0.0
    %2619 = vmatprep.subr.mxu0 0.0
    %2620 = vmatpush1.msra.mxu0 0.0
    %2621 = vmatprep.subr.mxu0 0.0
    %2622 = vmatpush1.msra.mxu0 0.0
    %2623 = vmatprep.subr.mxu0 0.0
    %2624 = vmatpush1.msra.mxu0 0.0
    %2625 = vmatprep.subr.mxu0 0.0
    %2626 = vmatpush1.msra.mxu0 0.0
    %2627 = vmatprep.subr.mxu0 0.0
    %2628 = vmatpush1.msra.mxu0 0.0
    %2629 = vmatprep.subr.mxu0 0.0
    %2630 = vmatpush1.msra.mxu0 0.0
    %2631 = vmatprep.subr.mxu0 0.0
    %2632 = vmatpush1.msra.mxu0 0.0
    %2633 = vmatprep.subr.mxu0 0.0
    %2634 = vmatpush1.msra.mxu0 0.0
    %2635 = vmatprep.subr.mxu0 0.0
    %2636 = vmatpush1.msra.mxu0 0.0
    %2637 = vmatprep.subr.mxu0 0.0
    %2638 = vmatpush1.msra.mxu0 0.0
    %2639 = vmatprep.subr.mxu0 0.0
    %2640 = vmatpush1.msra.mxu0 %v2593
    %2641 = vmatprep.subr.mxu0 0.0
    %2642 = vmatpush1.msra.mxu0 %v2588
    %2643 = vmatprep.subr.mxu0 0.0
    %2644 = vmatpush2.msra.mxu0 0.0
    %2645 = vmatprep.subr.mxu0 0.0
    %2646 = vmatpush2.msra.mxu0 0.0
    %2647 = vmatprep.subr.mxu0 0.0
    %2648 = vmatpush2.msra.mxu0 0.0
    %2649 = vmatprep.subr.mxu0 0.0
    %2650 = vmatpush2.msra.mxu0 0.0
    %2651 = vmatprep.subr.mxu0 0.0
    %2652 = vmatpush2.msra.mxu0 0.0
    %2653 = vmatprep.subr.mxu0 0.0
    %2654 = vmatpush2.msra.mxu0 0.0
    %2655 = vmatprep.subr.mxu0 0.0
    %2656 = vmatpush2.msra.mxu0 0.0
    %2657 = vmatprep.subr.mxu0 0.0
    %2658 = vmatpush2.msra.mxu0 0.0
    %2659 = vmatprep.subr.mxu0 0.0
    %2660 = vmatpush2.msra.mxu0 0.0
    %2661 = vmatprep.subr.mxu0 0.0
    %2662 = vmatpush2.msra.mxu0 0.0
    %2663 = vmatprep.subr.mxu0 0.0
    %2664 = vmatpush2.msra.mxu0 0.0
    %2665 = vmatprep.subr.mxu0 0.0
    %2666 = vmatpush2.msra.mxu0 0.0
    %2667 = vmatprep.subr.mxu0 0.0
    %2668 = vmatpush2.msra.mxu0 0.0
    %2669 = vmatprep.subr.mxu0 0.0
    %2670 = vmatpush2.msra.mxu0 0.0
    %2671 = vmatprep.subr.mxu0 0.0
    %2672 = vmatpush2.msra.mxu0 0.0
    %2673 = vmatprep.subr.mxu0 0.0
    %2674 = vmatpush2.msra.mxu0 0.0
    %2675 = vmatprep.mubr.f32.mxu0 0.0
    %2676 = vmatmul.mubr.f32.gmra.mxu0 %v539
    %v2677 = vpop.f32.mrf.mxu0
    %v2678 = vadd.f32 0.0, %v2677
    %v2679 = vpop.f32.mrf.mxu0
    %2680 = vmatprep.mubr.f32.mxu0 0.0
    %2681 = vmatmul.mubr.f32.gmra.mxu0 %v542
    %v2682 = vpop.f32.mrf.mxu0
    %v2683 = vadd.f32 0.0, %v2682
    %v2684 = vpop.f32.mrf.mxu0
    %2685 = vdwg.mxu0
    %v2686 = vadd.f32 %v2513, %v2678
    %v2687 = vadd.f32 %v2518, %v2683
    %2688 = vmatprep.subr.mxu0 0.0
    %2689 = vmatpush1.msra.mxu0 0.0
    %2690 = vmatprep.subr.mxu0 0.0
    %2691 = vmatpush1.msra.mxu0 0.0
    %2692 = vmatprep.subr.mxu0 0.0
    %2693 = vmatpush1.msra.mxu0 0.0
    %2694 = vmatprep.subr.mxu0 0.0
    %2695 = vmatpush1.msra.mxu0 0.0
    %2696 = vmatprep.subr.mxu0 0.0
    %2697 = vmatpush1.msra.mxu0 0.0
    %2698 = vmatprep.subr.mxu0 0.0
    %2699 = vmatpush1.msra.mxu0 0.0
    %2700 = vmatprep.subr.mxu0 0.0
    %2701 = vmatpush1.msra.mxu0 0.0
    %2702 = vmatprep.subr.mxu0 0.0
    %2703 = vmatpush1.msra.mxu0 0.0
    %2704 = vmatprep.subr.mxu0 0.0
    %2705 = vmatpush1.msra.mxu0 0.0
    %2706 = vmatprep.subr.mxu0 0.0
    %2707 = vmatpush1.msra.mxu0 0.0
    %2708 = vmatprep.subr.mxu0 0.0
    %2709 = vmatpush1.msra.mxu0 0.0
    %2710 = vmatprep.subr.mxu0 0.0
    %2711 = vmatpush1.msra.mxu0 0.0
    %2712 = vmatprep.subr.mxu0 0.0
    %2713 = vmatpush1.msra.mxu0 0.0
    %2714 = vmatprep.subr.mxu0 0.0
    %2715 = vmatpush1.msra.mxu0 0.0
    %2716 = vmatprep.subr.mxu0 0.0
    %2717 = vmatpush1.msra.mxu0 %v623
    %2718 = vmatprep.subr.mxu0 0.0
    %2719 = vmatpush1.msra.mxu0 %v622
    %2720 = vmatprep.subr.mxu0 0.0
    %2721 = vmatpush2.msra.mxu0 0.0
    %2722 = vmatprep.subr.mxu0 0.0
    %2723 = vmatpush2.msra.mxu0 0.0
    %2724 = vmatprep.subr.mxu0 0.0
    %2725 = vmatpush2.msra.mxu0 0.0
    %2726 = vmatprep.subr.mxu0 0.0
    %2727 = vmatpush2.msra.mxu0 0.0
    %2728 = vmatprep.subr.mxu0 0.0
    %2729 = vmatpush2.msra.mxu0 0.0
    %2730 = vmatprep.subr.mxu0 0.0
    %2731 = vmatpush2.msra.mxu0 0.0
    %2732 = vmatprep.subr.mxu0 0.0
    %2733 = vmatpush2.msra.mxu0 0.0
    %2734 = vmatprep.subr.mxu0 0.0
    %2735 = vmatpush2.msra.mxu0 0.0
    %2736 = vmatprep.subr.mxu0 0.0
    %2737 = vmatpush2.msra.mxu0 0.0
    %2738 = vmatprep.subr.mxu0 0.0
    %2739 = vmatpush2.msra.mxu0 0.0
    %2740 = vmatprep.subr.mxu0 0.0
    %2741 = vmatpush2.msra.mxu0 0.0
    %2742 = vmatprep.subr.mxu0 0.0
    %2743 = vmatpush2.msra.mxu0 0.0
    %2744 = vmatprep.subr.mxu0 0.0
    %2745 = vmatpush2.msra.mxu0 0.0
    %2746 = vmatprep.subr.mxu0 0.0
    %2747 = vmatpush2.msra.mxu0 0.0
    %2748 = vmatprep.subr.mxu0 0.0
    %2749 = vmatpush2.msra.mxu0 0.0
    %2750 = vmatprep.subr.mxu0 0.0
    %2751 = vmatpush2.msra.mxu0 0.0
    %2752 = vmatprep.mubr.f32.mxu0 0.0
    %2753 = vmatmul.mubr.f32.gmra.mxu0 %v2186
    %v2754 = vpop.f32.mrf.mxu0
    %v2755 = vadd.f32 0.0, %v2754
    %v2756 = vpop.f32.mrf.mxu0
    %2757 = vmatprep.mubr.f32.mxu0 0.0
    %2758 = vmatmul.mubr.f32.gmra.mxu0 %v2189
    %v2759 = vpop.f32.mrf.mxu0
    %v2760 = vadd.f32 0.0, %v2759
    %v2761 = vpop.f32.mrf.mxu0
    %2762 = vdwg.mxu0
    %v2763 = vmul.f32 %v2755, %v2755
    %v2764 = vmul.f32 %v2760, %v2760
    %v2765 = vsel %vm85, %v2763, 0.0
    %v2766 = vsel %vm85, %v2764, 0.0
    %v2767 = vadd.f32 %v2765, %v2766
    %2768 = vadd.xlane.f32.xlu0 %v2767
    %v2769 = vpop.xlane.xlu0 %2768
    %v2770 = vrot.slane %v2769, 4
    %v2771 = vadd.f32 %v2769, %v2770
    %v2772 = vrot.slane %v2771, 2
    %v2773 = vadd.f32 %v2771, %v2772
    %v2774 = vrot.slane %v2773, 1
    %v2775 = vadd.f32 %v2773, %v2774
    %s2776 = vtos %v2775
    %s2777 = sadd.f32 %s2610, %s2776
    %2778 = vmatprep.subr.mxu0 0.0
    %2779 = vmatpush1.msra.mxu0 0.0
    %2780 = vmatprep.subr.mxu0 0.0
    %2781 = vmatpush1.msra.mxu0 0.0
    %2782 = vmatprep.subr.mxu0 0.0
    %2783 = vmatpush1.msra.mxu0 0.0
    %2784 = vmatprep.subr.mxu0 0.0
    %2785 = vmatpush1.msra.mxu0 0.0
    %2786 = vmatprep.subr.mxu0 0.0
    %2787 = vmatpush1.msra.mxu0 0.0
    %2788 = vmatprep.subr.mxu0 0.0
    %2789 = vmatpush1.msra.mxu0 0.0
    %2790 = vmatprep.subr.mxu0 0.0
    %2791 = vmatpush1.msra.mxu0 0.0
    %2792 = vmatprep.subr.mxu0 0.0
    %2793 = vmatpush1.msra.mxu0 0.0
    %2794 = vmatprep.subr.mxu0 0.0
    %2795 = vmatpush1.msra.mxu0 0.0
    %2796 = vmatprep.subr.mxu0 0.0
    %2797 = vmatpush1.msra.mxu0 0.0
    %2798 = vmatprep.subr.mxu0 0.0
    %2799 = vmatpush1.msra.mxu0 0.0
    %2800 = vmatprep.subr.mxu0 0.0
    %2801 = vmatpush1.msra.mxu0 0.0
    %2802 = vmatprep.subr.mxu0 0.0
    %2803 = vmatpush1.msra.mxu0 0.0
    %2804 = vmatprep.subr.mxu0 0.0
    %2805 = vmatpush1.msra.mxu0 0.0
    %2806 = vmatprep.subr.mxu0 0.0
    %2807 = vmatpush1.msra.mxu0 %v2760
    %2808 = vmatprep.subr.mxu0 0.0
    %2809 = vmatpush1.msra.mxu0 %v2755
    %2810 = vmatprep.subr.mxu0 0.0
    %2811 = vmatpush2.msra.mxu0 0.0
    %2812 = vmatprep.subr.mxu0 0.0
    %2813 = vmatpush2.msra.mxu0 0.0
    %2814 = vmatprep.subr.mxu0 0.0
    %2815 = vmatpush2.msra.mxu0 0.0
    %2816 = vmatprep.subr.mxu0 0.0
    %2817 = vmatpush2.msra.mxu0 0.0
    %2818 = vmatprep.subr.mxu0 0.0
    %2819 = vmatpush2.msra.mxu0 0.0
    %2820 = vmatprep.subr.mxu0 0.0
    %2821 = vmatpush2.msra.mxu0 0.0
    %2822 = vmatprep.subr.mxu0 0.0
    %2823 = vmatpush2.msra.mxu0 0.0
    %2824 = vmatprep.subr.mxu0 0.0
    %2825 = vmatpush2.msra.mxu0 0.0
    %2826 = vmatprep.subr.mxu0 0.0
    %2827 = vmatpush2.msra.mxu0 0.0
    %2828 = vmatprep.subr.mxu0 0.0
    %2829 = vmatpush2.msra.mxu0 0.0
    %2830 = vmatprep.subr.mxu0 0.0
    %2831 = vmatpush2.msra.mxu0 0.0
    %2832 = vmatprep.subr.mxu0 0.0
    %2833 = vmatpush2.msra.mxu0 0.0
    %2834 = vmatprep.subr.mxu0 0.0
    %2835 = vmatpush2.msra.mxu0 0.0
    %2836 = vmatprep.subr.mxu0 0.0
    %2837 = vmatpush2.msra.mxu0 0.0
    %2838 = vmatprep.subr.mxu0 0.0
    %2839 = vmatpush2.msra.mxu0 0.0
    %2840 = vmatprep.subr.mxu0 0.0
    %2841 = vmatpush2.msra.mxu0 0.0
    %2842 = vmatprep.mubr.f32.mxu0 0.0
    %2843 = vmatmul.mubr.f32.gmra.mxu0 %v718
    %v2844 = vpop.f32.mrf.mxu0
    %v2845 = vadd.f32 0.0, %v2844
    %v2846 = vpop.f32.mrf.mxu0
    %2847 = vmatprep.mubr.f32.mxu0 0.0
    %2848 = vmatmul.mubr.f32.gmra.mxu0 %v721
    %v2849 = vpop.f32.mrf.mxu0
    %v2850 = vadd.f32 0.0, %v2849
    %v2851 = vpop.f32.mrf.mxu0
    %2852 = vdwg.mxu0
    %v2853 = vadd.f32 %v2686, %v2845
    %v2854 = vadd.f32 %v2687, %v2850
    %v2855 = vmul.f32 %v2853, %v2853
    %v2856 = vmul.f32 %v2854, %v2854
    %v2857 = vsel %vm85, %v2855, 0.0
    %v2858 = vsel %vm85, %v2856, 0.0
    %v2859 = vadd.f32 %v2857, %v2858
    %2860 = vadd.xlane.f32.xlu0 %v2859
    %v2861 = vpop.xlane.xlu0 %2860
    %v2862 = vrot.slane %v2861, 4
    %v2863 = vadd.f32 %v2861, %v2862
    %v2864 = vrot.slane %v2863, 2
    %v2865 = vadd.f32 %v2863, %v2864
    %v2866 = vrot.slane %v2865, 1
    %v2867 = vadd.f32 %v2865, %v2866
    %s2868 = vtos %v2867
    %s2869 = sadd.f32 %s2184, %s2868
    %s2870 = sadd.f32 %s2777, 1e-20
    %v2871 = vstv %s2870
    %v2872 = vrsqrt.pop %v2871
    %s2873 = vtos %v2872
    %s2874 = sadd.f32 %s2869, 1e-20
    %v2875 = vstv %s2874
    %v2876 = vrsqrt.pop %v2875
    %s2877 = vtos %v2876
    %s2878 = smul.f32 %s2873, %s2877
    %v2880 = vsel %vm85, %v159, 0
    %v2883 = vsel %vm85, %v164, 0
    %v2886 = vsel %vm85, %v798, 0
    %v2889 = vsel %vm85, %v799, 0
    %2891 = vmatprep.subr.mxu0 0.0
    %2892 = vmatpush1.xpose.msra.mxu0 0.0
    %2893 = vmatprep.subr.mxu0 0.0
    %2894 = vmatpush1.xpose.msra.mxu0 0.0
    %2895 = vmatprep.subr.mxu0 0.0
    %2896 = vmatpush1.xpose.msra.mxu0 0.0
    %2897 = vmatprep.subr.mxu0 0.0
    %2898 = vmatpush1.xpose.msra.mxu0 0.0
    %2899 = vmatprep.subr.mxu0 0.0
    %2900 = vmatpush1.xpose.msra.mxu0 0.0
    %2901 = vmatprep.subr.mxu0 0.0
    %2902 = vmatpush1.xpose.msra.mxu0 0.0
    %2903 = vmatprep.subr.mxu0 0.0
    %2904 = vmatpush1.xpose.msra.mxu0 0.0
    %2905 = vmatprep.subr.mxu0 0.0
    %2906 = vmatpush1.xpose.msra.mxu0 0.0
    %2907 = vmatprep.subr.mxu0 0.0
    %2908 = vmatpush1.xpose.msra.mxu0 0.0
    %2909 = vmatprep.subr.mxu0 0.0
    %2910 = vmatpush1.xpose.msra.mxu0 0.0
    %2911 = vmatprep.subr.mxu0 0.0
    %2912 = vmatpush1.xpose.msra.mxu0 0.0
    %2913 = vmatprep.subr.mxu0 0.0
    %2914 = vmatpush1.xpose.msra.mxu0 0.0
    %2915 = vmatprep.subr.mxu0 0.0
    %2916 = vmatpush1.xpose.msra.mxu0 0.0
    %2917 = vmatprep.subr.mxu0 0.0
    %2918 = vmatpush1.xpose.msra.mxu0 0.0
    %2919 = vmatprep.subr.mxu0 0.0
    %2920 = vmatpush1.xpose.msra.mxu0 %v2889
    %2921 = vmatprep.subr.mxu0 0.0
    %2922 = vmatpush1.xpose.msra.mxu0 %v2886
    %2923 = vmatprep.subr.mxu0 0.0
    %2924 = vmatpush2.xpose.msra.mxu0 0.0
    %2925 = vmatprep.subr.mxu0 0.0
    %2926 = vmatpush2.xpose.msra.mxu0 0.0
    %2927 = vmatprep.subr.mxu0 0.0
    %2928 = vmatpush2.xpose.msra.mxu0 0.0
    %2929 = vmatprep.subr.mxu0 0.0
    %2930 = vmatpush2.xpose.msra.mxu0 0.0
    %2931 = vmatprep.subr.mxu0 0.0
    %2932 = vmatpush2.xpose.msra.mxu0 0.0
    %2933 = vmatprep.subr.mxu0 0.0
    %2934 = vmatpush2.xpose.msra.mxu0 0.0
    %2935 = vmatprep.subr.mxu0 0.0
    %2936 = vmatpush2.xpose.msra.mxu0 0.0
    %2937 = vmatprep.subr.mxu0 0.0
    %2938 = vmatpush2.xpose.msra.mxu0 0.0
    %2939 = vmatprep.subr.mxu0 0.0
    %2940 = vmatpush2.xpose.msra.mxu0 0.0
    %2941 = vmatprep.subr.mxu0 0.0
    %2942 = vmatpush2.xpose.msra.mxu0 0.0
    %2943 = vmatprep.subr.mxu0 0.0
    %2944 = vmatpush2.xpose.msra.mxu0 0.0
    %2945 = vmatprep.subr.mxu0 0.0
    %2946 = vmatpush2.xpose.msra.mxu0 0.0
    %2947 = vmatprep.subr.mxu0 0.0
    %2948 = vmatpush2.xpose.msra.mxu0 0.0
    %2949 = vmatprep.subr.mxu0 0.0
    %2950 = vmatpush2.xpose.msra.mxu0 0.0
    %2951 = vmatprep.subr.mxu0 0.0
    %2952 = vmatpush2.xpose.msra.mxu0 0.0
    %2953 = vmatprep.subr.mxu0 0.0
    %2954 = vmatpush2.xpose.msra.mxu0 0.0
    %2955 = vmatprep.mubr.f32.mxu0 0.0
    %2956 = vmatmul.mubr.f32.gmra.mxu0 %v2880
    %v2957 = vpop.f32.mrf.mxu0
    %v2958 = vadd.f32 0.0, %v2957
    %v2959 = vpop.f32.mrf.mxu0
    %2960 = vmatprep.mubr.f32.mxu0 0.0
    %2961 = vmatmul.mubr.f32.gmra.mxu0 %v2883
    %v2962 = vpop.f32.mrf.mxu0
    %v2963 = vadd.f32 0.0, %v2962
    %v2964 = vpop.f32.mrf.mxu0
    %2965 = vdwg.mxu0
    %v2966 = vstv %s2878
    %v2967 = vmul.f32 %v2958, %v2966
    %v2968 = vmul.f32 %v2963, %v2966
    %v2970 = vlaneseq
    %v2971 = vshrl.u32 %v2970, 7
    %v2972 = vsub.s32 0, %v2971
    %v2973 = vrot.slane %v81, %v2972
    %v2975 = vmul.f32 %v159, %v2973
    %v2976 = vmul.f32 %v164, %v2973
    %v2977 = vsel %vm85, %v2975, 0.0
    %2978 = vadd.xlane.f32.xlu0 %v2977
    %v2979 = vpop.xlane.xlu0 %2978
    %v2980 = vsel %vm85, %v2976, 0.0
    %2981 = vadd.xlane.f32.xlu0 %v2980
    %v2982 = vpop.xlane.xlu0 %2981
    %v2983 = vstv %s2873
    %v2984 = vmul.f32 %v2979, %v2983
    %v2985 = vmul.f32 %v2982, %v2983
    %v2986 = vxor.u32 %v2984, 2147483648
    %v2987 = vxor.u32 %v2985, 2147483648
    %v2988 = vmul.f32 %v2986, 1.442695
    %v2989 = vpow.pop %v2988
    %v2990 = vmul.f32 %v2987, 1.442695
    %v2991 = vpow.pop %v2990
    %v2992 = vadd.f32 %v2989, 1.0
    %v2993 = vadd.f32 %v2991, 1.0
    %v2994 = vrcp.pop %v2992
    %v2995 = vmul.f32 1.0, %v2994
    %v2996 = vrcp.pop %v2993
    %v2997 = vmul.f32 1.0, %v2996
    %v2999 = vlaneseq
    %v3000 = vshrl.u32 %v2999, 7
    %v3001 = vsub.s32 0, %v3000
    %v3002 = vrot.slane %v82, %v3001
    %v3004 = vmul.f32 %v159, %v3002
    %v3005 = vmul.f32 %v164, %v3002
    %v3006 = vsel %vm85, %v3004, 0.0
    %3007 = vadd.xlane.f32.xlu0 %v3006
    %v3008 = vpop.xlane.xlu0 %3007
    %v3009 = vsel %vm85, %v3005, 0.0
    %3010 = vadd.xlane.f32.xlu0 %v3009
    %v3011 = vpop.xlane.xlu0 %3010
    %v3012 = vmul.f32 %v3008, %v2983
    %v3013 = vmul.f32 %v3011, %v2983
    %v3014 = vxor.u32 %v3012, 2147483648
    %v3015 = vxor.u32 %v3013, 2147483648
    %v3016 = vmul.f32 %v3014, 1.442695
    %v3017 = vpow.pop %v3016
    %v3018 = vmul.f32 %v3015, 1.442695
    %v3019 = vpow.pop %v3018
    %v3020 = vadd.f32 %v3017, 1.0
    %v3021 = vadd.f32 %v3019, 1.0
    %v3022 = vrcp.pop %v3020
    %v3023 = vmul.f32 1.0, %v3022
    %v3024 = vrcp.pop %v3021
    %v3025 = vmul.f32 1.0, %v3024
    %v3026 = vadd.f32 %v2967, %v2995
    %v3027 = vadd.f32 %v2968, %v2997
    %v3028 = vmul.f32 %v3026, %v3026
    %v3029 = vmul.f32 %v3027, %v3027
    %v3030 = vrcp.pop %v3023
    %v3031 = vmul.f32 -10.0, %v3030
    %v3032 = vrcp.pop %v3025
    %v3033 = vmul.f32 -10.0, %v3032
    %v3034 = vmul.f32 %v3028, %v3031
    %v3035 = vmul.f32 %v3029, %v3033
    %v3036 = vmul.f32 %v3034, 1.442695
    %v3037 = vpow.pop %v3036
    %v3038 = vmul.f32 %v3035, 1.442695
    %v3039 = vpow.pop %v3038
    %v3040 = vmul.f32 %v3037, 4.0
    %v3041 = vmul.f32 %v3039, 4.0
    %v3042 = vsel %vm85, %v3040, -inf
    %3043 = vmax.xlane.f32.xlu0 %v3042
    %v3044 = vpop.xlane.xlu0 %3043
    %v3045 = vsel %vm85, %v3041, -inf
    %3046 = vmax.xlane.f32.xlu0 %v3045
    %v3047 = vpop.xlane.xlu0 %3046
    %v3048 = vsub.f32 %v3040, %v3044
    %v3049 = vsub.f32 %v3041, %v3047
    %v3050 = vmul.f32 %v3048, 1.442695
    %v3051 = vpow.pop %v3050
    %v3052 = vmul.f32 %v3049, 1.442695
    %v3053 = vpow.pop %v3052
    %v3054 = vsel %vm85, %v3051, 0.0
    %3055 = vadd.xlane.f32.xlu0 %v3054
    %v3056 = vpop.xlane.xlu0 %3055
    %v3057 = vsel %vm85, %v3053, 0.0
    %3058 = vadd.xlane.f32.xlu0 %v3057
    %v3059 = vpop.xlane.xlu0 %3058
    %v3060 = vrcp.pop %v3056
    %v3061 = vmul.f32 1.0, %v3060
    %v3062 = vrcp.pop %v3059
    %v3063 = vmul.f32 1.0, %v3062
    %v3064 = vmul.f32 %v3051, %v3061
    %v3065 = vmul.f32 %v3053, %v3063
    %v3066 = vadd.f32 %v3064, 0.0
    %v3067 = vadd.f32 %v3065, 0.0
    %v3069 = vsel %vm85, %v254, 0
    %v3072 = vsel %vm85, %v259, 0
    %3074 = vmatprep.subr.mxu0 0.0
    %3075 = vmatpush1.xpose.msra.mxu0 0.0
    %3076 = vmatprep.subr.mxu0 0.0
    %3077 = vmatpush1.xpose.msra.mxu0 0.0
    %3078 = vmatprep.subr.mxu0 0.0
    %3079 = vmatpush1.xpose.msra.mxu0 0.0
    %3080 = vmatprep.subr.mxu0 0.0
    %3081 = vmatpush1.xpose.msra.mxu0 0.0
    %3082 = vmatprep.subr.mxu0 0.0
    %3083 = vmatpush1.xpose.msra.mxu0 0.0
    %3084 = vmatprep.subr.mxu0 0.0
    %3085 = vmatpush1.xpose.msra.mxu0 0.0
    %3086 = vmatprep.subr.mxu0 0.0
    %3087 = vmatpush1.xpose.msra.mxu0 0.0
    %3088 = vmatprep.subr.mxu0 0.0
    %3089 = vmatpush1.xpose.msra.mxu0 0.0
    %3090 = vmatprep.subr.mxu0 0.0
    %3091 = vmatpush1.xpose.msra.mxu0 0.0
    %3092 = vmatprep.subr.mxu0 0.0
    %3093 = vmatpush1.xpose.msra.mxu0 0.0
    %3094 = vmatprep.subr.mxu0 0.0
    %3095 = vmatpush1.xpose.msra.mxu0 0.0
    %3096 = vmatprep.subr.mxu0 0.0
    %3097 = vmatpush1.xpose.msra.mxu0 0.0
    %3098 = vmatprep.subr.mxu0 0.0
    %3099 = vmatpush1.xpose.msra.mxu0 0.0
    %3100 = vmatprep.subr.mxu0 0.0
    %3101 = vmatpush1.xpose.msra.mxu0 0.0
    %3102 = vmatprep.subr.mxu0 0.0
    %3103 = vmatpush1.xpose.msra.mxu0 %v2889
    %3104 = vmatprep.subr.mxu0 0.0
    %3105 = vmatpush1.xpose.msra.mxu0 %v2886
    %3106 = vmatprep.subr.mxu0 0.0
    %3107 = vmatpush2.xpose.msra.mxu0 0.0
    %3108 = vmatprep.subr.mxu0 0.0
    %3109 = vmatpush2.xpose.msra.mxu0 0.0
    %3110 = vmatprep.subr.mxu0 0.0
    %3111 = vmatpush2.xpose.msra.mxu0 0.0
    %3112 = vmatprep.subr.mxu0 0.0
    %3113 = vmatpush2.xpose.msra.mxu0 0.0
    %3114 = vmatprep.subr.mxu0 0.0
    %3115 = vmatpush2.xpose.msra.mxu0 0.0
    %3116 = vmatprep.subr.mxu0 0.0
    %3117 = vmatpush2.xpose.msra.mxu0 0.0
    %3118 = vmatprep.subr.mxu0 0.0
    %3119 = vmatpush2.xpose.msra.mxu0 0.0
    %3120 = vmatprep.subr.mxu0 0.0
    %3121 = vmatpush2.xpose.msra.mxu0 0.0
    %3122 = vmatprep.subr.mxu0 0.0
    %3123 = vmatpush2.xpose.msra.mxu0 0.0
    %3124 = vmatprep.subr.mxu0 0.0
    %3125 = vmatpush2.xpose.msra.mxu0 0.0
    %3126 = vmatprep.subr.mxu0 0.0
    %3127 = vmatpush2.xpose.msra.mxu0 0.0
    %3128 = vmatprep.subr.mxu0 0.0
    %3129 = vmatpush2.xpose.msra.mxu0 0.0
    %3130 = vmatprep.subr.mxu0 0.0
    %3131 = vmatpush2.xpose.msra.mxu0 0.0
    %3132 = vmatprep.subr.mxu0 0.0
    %3133 = vmatpush2.xpose.msra.mxu0 0.0
    %3134 = vmatprep.subr.mxu0 0.0
    %3135 = vmatpush2.xpose.msra.mxu0 0.0
    %3136 = vmatprep.subr.mxu0 0.0
    %3137 = vmatpush2.xpose.msra.mxu0 0.0
    %3138 = vmatprep.mubr.f32.mxu0 0.0
    %3139 = vmatmul.mubr.f32.gmra.mxu0 %v3069
    %v3140 = vpop.f32.mrf.mxu0
    %v3141 = vadd.f32 0.0, %v3140
    %v3142 = vpop.f32.mrf.mxu0
    %3143 = vmatprep.mubr.f32.mxu0 0.0
    %3144 = vmatmul.mubr.f32.gmra.mxu0 %v3072
    %v3145 = vpop.f32.mrf.mxu0
    %v3146 = vadd.f32 0.0, %v3145
    %v3147 = vpop.f32.mrf.mxu0
    %3148 = vdwg.mxu0
    %v3149 = vmul.f32 %v3141, %v2966
    %v3150 = vmul.f32 %v3146, %v2966
    %v3151 = vmul.f32 %v254, %v2973
    %v3152 = vmul.f32 %v259, %v2973
    %v3153 = vsel %vm85, %v3151, 0.0
    %3154 = vadd.xlane.f32.xlu0 %v3153
    %v3155 = vpop.xlane.xlu0 %3154
    %v3156 = vsel %vm85, %v3152, 0.0
    %3157 = vadd.xlane.f32.xlu0 %v3156
    %v3158 = vpop.xlane.xlu0 %3157
    %v3159 = vmul.f32 %v3155, %v2983
    %v3160 = vmul.f32 %v3158, %v2983
    %v3161 = vxor.u32 %v3159, 2147483648
    %v3162 = vxor.u32 %v3160, 2147483648
    %v3163 = vmul.f32 %v3161, 1.442695
    %v3164 = vpow.pop %v3163
    %v3165 = vmul.f32 %v3162, 1.442695
    %v3166 = vpow.pop %v3165
    %v3167 = vadd.f32 %v3164, 1.0
    %v3168 = vadd.f32 %v3166, 1.0
    %v3169 = vrcp.pop %v3167
    %v3170 = vmul.f32 1.0, %v3169
    %v3171 = vrcp.pop %v3168
    %v3172 = vmul.f32 1.0, %v3171
    %v3173 = vmul.f32 %v254, %v3002
    %v3174 = vmul.f32 %v259, %v3002
    %v3175 = vsel %vm85, %v3173, 0.0
    %3176 = vadd.xlane.f32.xlu0 %v3175
    %v3177 = vpop.xlane.xlu0 %3176
    %v3178 = vsel %vm85, %v3174, 0.0
    %3179 = vadd.xlane.f32.xlu0 %v3178
    %v3180 = vpop.xlane.xlu0 %3179
    %v3181 = vmul.f32 %v3177, %v2983
    %v3182 = vmul.f32 %v3180, %v2983
    %v3183 = vxor.u32 %v3181, 2147483648
    %v3184 = vxor.u32 %v3182, 2147483648
    %v3185 = vmul.f32 %v3183, 1.442695
    %v3186 = vpow.pop %v3185
    %v3187 = vmul.f32 %v3184, 1.442695
    %v3188 = vpow.pop %v3187
    %v3189 = vadd.f32 %v3186, 1.0
    %v3190 = vadd.f32 %v3188, 1.0
    %v3191 = vrcp.pop %v3189
    %v3192 = vmul.f32 1.0, %v3191
    %v3193 = vrcp.pop %v3190
    %v3194 = vmul.f32 1.0, %v3193
    %v3195 = vadd.f32 %v3149, %v3170
    %v3196 = vadd.f32 %v3150, %v3172
    %v3197 = vmul.f32 %v3195, %v3195
    %v3198 = vmul.f32 %v3196, %v3196
    %v3199 = vrcp.pop %v3192
    %v3200 = vmul.f32 -10.0, %v3199
    %v3201 = vrcp.pop %v3194
    %v3202 = vmul.f32 -10.0, %v3201
    %v3203 = vmul.f32 %v3197, %v3200
    %v3204 = vmul.f32 %v3198, %v3202
    %v3205 = vmul.f32 %v3203, 1.442695
    %v3206 = vpow.pop %v3205
    %v3207 = vmul.f32 %v3204, 1.442695
    %v3208 = vpow.pop %v3207
    %v3209 = vmul.f32 %v3206, 4.0
    %v3210 = vmul.f32 %v3208, 4.0
    %v3211 = vsel %vm85, %v3209, -inf
    %3212 = vmax.xlane.f32.xlu0 %v3211
    %v3213 = vpop.xlane.xlu0 %3212
    %v3214 = vsel %vm85, %v3210, -inf
    %3215 = vmax.xlane.f32.xlu0 %v3214
    %v3216 = vpop.xlane.xlu0 %3215
    %v3217 = vsub.f32 %v3209, %v3213
    %v3218 = vsub.f32 %v3210, %v3216
    %v3219 = vmul.f32 %v3217, 1.442695
    %v3220 = vpow.pop %v3219
    %v3221 = vmul.f32 %v3218, 1.442695
    %v3222 = vpow.pop %v3221
    %v3223 = vsel %vm85, %v3220, 0.0
    %3224 = vadd.xlane.f32.xlu0 %v3223
    %v3225 = vpop.xlane.xlu0 %3224
    %v3226 = vsel %vm85, %v3222, 0.0
    %3227 = vadd.xlane.f32.xlu0 %v3226
    %v3228 = vpop.xlane.xlu0 %3227
    %v3229 = vrcp.pop %v3225
    %v3230 = vmul.f32 1.0, %v3229
    %v3231 = vrcp.pop %v3228
    %v3232 = vmul.f32 1.0, %v3231
    %v3233 = vmul.f32 %v3220, %v3230
    %v3234 = vmul.f32 %v3222, %v3232
    %v3235 = vadd.f32 %v3233, 0.0
    %v3236 = vadd.f32 %v3234, 0.0
    %v3238 = vsel %vm85, %v512, 0
    %v3241 = vsel %vm85, %v517, 0
    %3243 = vmatprep.subr.mxu0 0.0
    %3244 = vmatpush1.xpose.msra.mxu0 0.0
    %3245 = vmatprep.subr.mxu0 0.0
    %3246 = vmatpush1.xpose.msra.mxu0 0.0
    %3247 = vmatprep.subr.mxu0 0.0
    %3248 = vmatpush1.xpose.msra.mxu0 0.0
    %3249 = vmatprep.subr.mxu0 0.0
    %3250 = vmatpush1.xpose.msra.mxu0 0.0
    %3251 = vmatprep.subr.mxu0 0.0
    %3252 = vmatpush1.xpose.msra.mxu0 0.0
    %3253 = vmatprep.subr.mxu0 0.0
    %3254 = vmatpush1.xpose.msra.mxu0 0.0
    %3255 = vmatprep.subr.mxu0 0.0
    %3256 = vmatpush1.xpose.msra.mxu0 0.0
    %3257 = vmatprep.subr.mxu0 0.0
    %3258 = vmatpush1.xpose.msra.mxu0 0.0
    %3259 = vmatprep.subr.mxu0 0.0
    %3260 = vmatpush1.xpose.msra.mxu0 0.0
    %3261 = vmatprep.subr.mxu0 0.0
    %3262 = vmatpush1.xpose.msra.mxu0 0.0
    %3263 = vmatprep.subr.mxu0 0.0
    %3264 = vmatpush1.xpose.msra.mxu0 0.0
    %3265 = vmatprep.subr.mxu0 0.0
    %3266 = vmatpush1.xpose.msra.mxu0 0.0
    %3267 = vmatprep.subr.mxu0 0.0
    %3268 = vmatpush1.xpose.msra.mxu0 0.0
    %3269 = vmatprep.subr.mxu0 0.0
    %3270 = vmatpush1.xpose.msra.mxu0 0.0
    %3271 = vmatprep.subr.mxu0 0.0
    %3272 = vmatpush1.xpose.msra.mxu0 %v2889
    %3273 = vmatprep.subr.mxu0 0.0
    %3274 = vmatpush1.xpose.msra.mxu0 %v2886
    %3275 = vmatprep.subr.mxu0 0.0
    %3276 = vmatpush2.xpose.msra.mxu0 0.0
    %3277 = vmatprep.subr.mxu0 0.0
    %3278 = vmatpush2.xpose.msra.mxu0 0.0
    %3279 = vmatprep.subr.mxu0 0.0
    %3280 = vmatpush2.xpose.msra.mxu0 0.0
    %3281 = vmatprep.subr.mxu0 0.0
    %3282 = vmatpush2.xpose.msra.mxu0 0.0
    %3283 = vmatprep.subr.mxu0 0.0
    %3284 = vmatpush2.xpose.msra.mxu0 0.0
    %3285 = vmatprep.subr.mxu0 0.0
    %3286 = vmatpush2.xpose.msra.mxu0 0.0
    %3287 = vmatprep.subr.mxu0 0.0
    %3288 = vmatpush2.xpose.msra.mxu0 0.0
    %3289 = vmatprep.subr.mxu0 0.0
    %3290 = vmatpush2.xpose.msra.mxu0 0.0
    %3291 = vmatprep.subr.mxu0 0.0
    %3292 = vmatpush2.xpose.msra.mxu0 0.0
    %3293 = vmatprep.subr.mxu0 0.0
    %3294 = vmatpush2.xpose.msra.mxu0 0.0
    %3295 = vmatprep.subr.mxu0 0.0
    %3296 = vmatpush2.xpose.msra.mxu0 0.0
    %3297 = vmatprep.subr.mxu0 0.0
    %3298 = vmatpush2.xpose.msra.mxu0 0.0
    %3299 = vmatprep.subr.mxu0 0.0
    %3300 = vmatpush2.xpose.msra.mxu0 0.0
    %3301 = vmatprep.subr.mxu0 0.0
    %3302 = vmatpush2.xpose.msra.mxu0 0.0
    %3303 = vmatprep.subr.mxu0 0.0
    %3304 = vmatpush2.xpose.msra.mxu0 0.0
    %3305 = vmatprep.subr.mxu0 0.0
    %3306 = vmatpush2.xpose.msra.mxu0 0.0
    %3307 = vmatprep.mubr.f32.mxu0 0.0
    %3308 = vmatmul.mubr.f32.gmra.mxu0 %v3238
    %v3309 = vpop.f32.mrf.mxu0
    %v3310 = vadd.f32 0.0, %v3309
    %v3311 = vpop.f32.mrf.mxu0
    %3312 = vmatprep.mubr.f32.mxu0 0.0
    %3313 = vmatmul.mubr.f32.gmra.mxu0 %v3241
    %v3314 = vpop.f32.mrf.mxu0
    %v3315 = vadd.f32 0.0, %v3314
    %v3316 = vpop.f32.mrf.mxu0
    %3317 = vdwg.mxu0
    %v3318 = vmul.f32 %v3310, %v2966
    %v3319 = vmul.f32 %v3315, %v2966
    %v3320 = vmul.f32 %v512, %v2973
    %v3321 = vmul.f32 %v517, %v2973
    %v3322 = vsel %vm85, %v3320, 0.0
    %3323 = vadd.xlane.f32.xlu0 %v3322
    %v3324 = vpop.xlane.xlu0 %3323
    %v3325 = vsel %vm85, %v3321, 0.0
    %3326 = vadd.xlane.f32.xlu0 %v3325
    %v3327 = vpop.xlane.xlu0 %3326
    %v3328 = vmul.f32 %v3324, %v2983
    %v3329 = vmul.f32 %v3327, %v2983
    %v3330 = vxor.u32 %v3328, 2147483648
    %v3331 = vxor.u32 %v3329, 2147483648
    %v3332 = vmul.f32 %v3330, 1.442695
    %v3333 = vpow.pop %v3332
    %v3334 = vmul.f32 %v3331, 1.442695
    %v3335 = vpow.pop %v3334
    %v3336 = vadd.f32 %v3333, 1.0
    %v3337 = vadd.f32 %v3335, 1.0
    %v3338 = vrcp.pop %v3336
    %v3339 = vmul.f32 1.0, %v3338
    %v3340 = vrcp.pop %v3337
    %v3341 = vmul.f32 1.0, %v3340
    %v3342 = vmul.f32 %v512, %v3002
    %v3343 = vmul.f32 %v517, %v3002
    %v3344 = vsel %vm85, %v3342, 0.0
    %3345 = vadd.xlane.f32.xlu0 %v3344
    %v3346 = vpop.xlane.xlu0 %3345
    %v3347 = vsel %vm85, %v3343, 0.0
    %3348 = vadd.xlane.f32.xlu0 %v3347
    %v3349 = vpop.xlane.xlu0 %3348
    %v3350 = vmul.f32 %v3346, %v2983
    %v3351 = vmul.f32 %v3349, %v2983
    %v3352 = vxor.u32 %v3350, 2147483648
    %v3353 = vxor.u32 %v3351, 2147483648
    %v3354 = vmul.f32 %v3352, 1.442695
    %v3355 = vpow.pop %v3354
    %v3356 = vmul.f32 %v3353, 1.442695
    %v3357 = vpow.pop %v3356
    %v3358 = vadd.f32 %v3355, 1.0
    %v3359 = vadd.f32 %v3357, 1.0
    %v3360 = vrcp.pop %v3358
    %v3361 = vmul.f32 1.0, %v3360
    %v3362 = vrcp.pop %v3359
    %v3363 = vmul.f32 1.0, %v3362
    %v3364 = vadd.f32 %v3318, %v3339
    %v3365 = vadd.f32 %v3319, %v3341
    %v3366 = vmul.f32 %v3364, %v3364
    %v3367 = vmul.f32 %v3365, %v3365
    %v3368 = vrcp.pop %v3361
    %v3369 = vmul.f32 -10.0, %v3368
    %v3370 = vrcp.pop %v3363
    %v3371 = vmul.f32 -10.0, %v3370
    %v3372 = vmul.f32 %v3366, %v3369
    %v3373 = vmul.f32 %v3367, %v3371
    %v3374 = vmul.f32 %v3372, 1.442695
    %v3375 = vpow.pop %v3374
    %v3376 = vmul.f32 %v3373, 1.442695
    %v3377 = vpow.pop %v3376
    %v3378 = vmul.f32 %v3375, 4.0
    %v3379 = vmul.f32 %v3377, 4.0
    %v3380 = vsel %vm85, %v3378, -inf
    %3381 = vmax.xlane.f32.xlu0 %v3380
    %v3382 = vpop.xlane.xlu0 %3381
    %v3383 = vsel %vm85, %v3379, -inf
    %3384 = vmax.xlane.f32.xlu0 %v3383
    %v3385 = vpop.xlane.xlu0 %3384
    %v3386 = vsub.f32 %v3378, %v3382
    %v3387 = vsub.f32 %v3379, %v3385
    %v3388 = vmul.f32 %v3386, 1.442695
    %v3389 = vpow.pop %v3388
    %v3390 = vmul.f32 %v3387, 1.442695
    %v3391 = vpow.pop %v3390
    %v3392 = vsel %vm85, %v3389, 0.0
    %3393 = vadd.xlane.f32.xlu0 %v3392
    %v3394 = vpop.xlane.xlu0 %3393
    %v3395 = vsel %vm85, %v3391, 0.0
    %3396 = vadd.xlane.f32.xlu0 %v3395
    %v3397 = vpop.xlane.xlu0 %3396
    %v3398 = vrcp.pop %v3394
    %v3399 = vmul.f32 1.0, %v3398
    %v3400 = vrcp.pop %v3397
    %v3401 = vmul.f32 1.0, %v3400
    %v3402 = vmul.f32 %v3389, %v3399
    %v3403 = vmul.f32 %v3391, %v3401
    %v3404 = vadd.f32 %v3402, 0.0
    %v3405 = vadd.f32 %v3403, 0.0
    %v3407 = vsel %vm85, %v691, 0
    %v3410 = vsel %vm85, %v696, 0
    %3412 = vmatprep.subr.mxu0 0.0
    %3413 = vmatpush1.xpose.msra.mxu0 0.0
    %3414 = vmatprep.subr.mxu0 0.0
    %3415 = vmatpush1.xpose.msra.mxu0 0.0
    %3416 = vmatprep.subr.mxu0 0.0
    %3417 = vmatpush1.xpose.msra.mxu0 0.0
    %3418 = vmatprep.subr.mxu0 0.0
    %3419 = vmatpush1.xpose.msra.mxu0 0.0
    %3420 = vmatprep.subr.mxu0 0.0
    %3421 = vmatpush1.xpose.msra.mxu0 0.0
    %3422 = vmatprep.subr.mxu0 0.0
    %3423 = vmatpush1.xpose.msra.mxu0 0.0
    %3424 = vmatprep.subr.mxu0 0.0
    %3425 = vmatpush1.xpose.msra.mxu0 0.0
    %3426 = vmatprep.subr.mxu0 0.0
    %3427 = vmatpush1.xpose.msra.mxu0 0.0
    %3428 = vmatprep.subr.mxu0 0.0
    %3429 = vmatpush1.xpose.msra.mxu0 0.0
    %3430 = vmatprep.subr.mxu0 0.0
    %3431 = vmatpush1.xpose.msra.mxu0 0.0
    %3432 = vmatprep.subr.mxu0 0.0
    %3433 = vmatpush1.xpose.msra.mxu0 0.0
    %3434 = vmatprep.subr.mxu0 0.0
    %3435 = vmatpush1.xpose.msra.mxu0 0.0
    %3436 = vmatprep.subr.mxu0 0.0
    %3437 = vmatpush1.xpose.msra.mxu0 0.0
    %3438 = vmatprep.subr.mxu0 0.0
    %3439 = vmatpush1.xpose.msra.mxu0 0.0
    %3440 = vmatprep.subr.mxu0 0.0
    %3441 = vmatpush1.xpose.msra.mxu0 %v2889
    %3442 = vmatprep.subr.mxu0 0.0
    %3443 = vmatpush1.xpose.msra.mxu0 %v2886
    %3444 = vmatprep.subr.mxu0 0.0
    %3445 = vmatpush2.xpose.msra.mxu0 0.0
    %3446 = vmatprep.subr.mxu0 0.0
    %3447 = vmatpush2.xpose.msra.mxu0 0.0
    %3448 = vmatprep.subr.mxu0 0.0
    %3449 = vmatpush2.xpose.msra.mxu0 0.0
    %3450 = vmatprep.subr.mxu0 0.0
    %3451 = vmatpush2.xpose.msra.mxu0 0.0
    %3452 = vmatprep.subr.mxu0 0.0
    %3453 = vmatpush2.xpose.msra.mxu0 0.0
    %3454 = vmatprep.subr.mxu0 0.0
    %3455 = vmatpush2.xpose.msra.mxu0 0.0
    %3456 = vmatprep.subr.mxu0 0.0
    %3457 = vmatpush2.xpose.msra.mxu0 0.0
    %3458 = vmatprep.subr.mxu0 0.0
    %3459 = vmatpush2.xpose.msra.mxu0 0.0
    %3460 = vmatprep.subr.mxu0 0.0
    %3461 = vmatpush2.xpose.msra.mxu0 0.0
    %3462 = vmatprep.subr.mxu0 0.0
    %3463 = vmatpush2.xpose.msra.mxu0 0.0
    %3464 = vmatprep.subr.mxu0 0.0
    %3465 = vmatpush2.xpose.msra.mxu0 0.0
    %3466 = vmatprep.subr.mxu0 0.0
    %3467 = vmatpush2.xpose.msra.mxu0 0.0
    %3468 = vmatprep.subr.mxu0 0.0
    %3469 = vmatpush2.xpose.msra.mxu0 0.0
    %3470 = vmatprep.subr.mxu0 0.0
    %3471 = vmatpush2.xpose.msra.mxu0 0.0
    %3472 = vmatprep.subr.mxu0 0.0
    %3473 = vmatpush2.xpose.msra.mxu0 0.0
    %3474 = vmatprep.subr.mxu0 0.0
    %3475 = vmatpush2.xpose.msra.mxu0 0.0
    %3476 = vmatprep.mubr.f32.mxu0 0.0
    %3477 = vmatmul.mubr.f32.gmra.mxu0 %v3407
    %v3478 = vpop.f32.mrf.mxu0
    %v3479 = vadd.f32 0.0, %v3478
    %v3480 = vpop.f32.mrf.mxu0
    %3481 = vmatprep.mubr.f32.mxu0 0.0
    %3482 = vmatmul.mubr.f32.gmra.mxu0 %v3410
    %v3483 = vpop.f32.mrf.mxu0
    %v3484 = vadd.f32 0.0, %v3483
    %v3485 = vpop.f32.mrf.mxu0
    %3486 = vdwg.mxu0
    %v3487 = vmul.f32 %v3479, %v2966
    %v3488 = vmul.f32 %v3484, %v2966
    %v3489 = vmul.f32 %v691, %v2973
    %v3490 = vmul.f32 %v696, %v2973
    %v3491 = vsel %vm85, %v3489, 0.0
    %3492 = vadd.xlane.f32.xlu0 %v3491
    %v3493 = vpop.xlane.xlu0 %3492
    %v3494 = vsel %vm85, %v3490, 0.0
    %3495 = vadd.xlane.f32.xlu0 %v3494
    %v3496 = vpop.xlane.xlu0 %3495
    %v3497 = vmul.f32 %v3493, %v2983
    %v3498 = vmul.f32 %v3496, %v2983
    %v3499 = vxor.u32 %v3497, 2147483648
    %v3500 = vxor.u32 %v3498, 2147483648
    %v3501 = vmul.f32 %v3499, 1.442695
    %v3502 = vpow.pop %v3501
    %v3503 = vmul.f32 %v3500, 1.442695
    %v3504 = vpow.pop %v3503
    %v3505 = vadd.f32 %v3502, 1.0
    %v3506 = vadd.f32 %v3504, 1.0
    %v3507 = vrcp.pop %v3505
    %v3508 = vmul.f32 1.0, %v3507
    %v3509 = vrcp.pop %v3506
    %v3510 = vmul.f32 1.0, %v3509
    %v3511 = vmul.f32 %v691, %v3002
    %v3512 = vmul.f32 %v696, %v3002
    %v3513 = vsel %vm85, %v3511, 0.0
    %3514 = vadd.xlane.f32.xlu0 %v3513
    %v3515 = vpop.xlane.xlu0 %3514
    %v3516 = vsel %vm85, %v3512, 0.0
    %3517 = vadd.xlane.f32.xlu0 %v3516
    %v3518 = vpop.xlane.xlu0 %3517
    %v3519 = vmul.f32 %v3515, %v2983
    %v3520 = vmul.f32 %v3518, %v2983
    %v3521 = vxor.u32 %v3519, 2147483648
    %v3522 = vxor.u32 %v3520, 2147483648
    %v3523 = vmul.f32 %v3521, 1.442695
    %v3524 = vpow.pop %v3523
    %v3525 = vmul.f32 %v3522, 1.442695
    %v3526 = vpow.pop %v3525
    %v3527 = vadd.f32 %v3524, 1.0
    %v3528 = vadd.f32 %v3526, 1.0
    %v3529 = vrcp.pop %v3527
    %v3530 = vmul.f32 1.0, %v3529
    %v3531 = vrcp.pop %v3528
    %v3532 = vmul.f32 1.0, %v3531
    %v3533 = vadd.f32 %v3487, %v3508
    %v3534 = vadd.f32 %v3488, %v3510
    %v3535 = vmul.f32 %v3533, %v3533
    %v3536 = vmul.f32 %v3534, %v3534
    %v3537 = vrcp.pop %v3530
    %v3538 = vmul.f32 -10.0, %v3537
    %v3539 = vrcp.pop %v3532
    %v3540 = vmul.f32 -10.0, %v3539
    %v3541 = vmul.f32 %v3535, %v3538
    %v3542 = vmul.f32 %v3536, %v3540
    %v3543 = vmul.f32 %v3541, 1.442695
    %v3544 = vpow.pop %v3543
    %v3545 = vmul.f32 %v3542, 1.442695
    %v3546 = vpow.pop %v3545
    %v3547 = vmul.f32 %v3544, 4.0
    %v3548 = vmul.f32 %v3546, 4.0
    %v3549 = vsel %vm85, %v3547, -inf
    %3550 = vmax.xlane.f32.xlu0 %v3549
    %v3551 = vpop.xlane.xlu0 %3550
    %v3552 = vsel %vm85, %v3548, -inf
    %3553 = vmax.xlane.f32.xlu0 %v3552
    %v3554 = vpop.xlane.xlu0 %3553
    %v3555 = vsub.f32 %v3547, %v3551
    %v3556 = vsub.f32 %v3548, %v3554
    %v3557 = vmul.f32 %v3555, 1.442695
    %v3558 = vpow.pop %v3557
    %v3559 = vmul.f32 %v3556, 1.442695
    %v3560 = vpow.pop %v3559
    %v3561 = vsel %vm85, %v3558, 0.0
    %3562 = vadd.xlane.f32.xlu0 %v3561
    %v3563 = vpop.xlane.xlu0 %3562
    %v3564 = vsel %vm85, %v3560, 0.0
    %3565 = vadd.xlane.f32.xlu0 %v3564
    %v3566 = vpop.xlane.xlu0 %3565
    %v3567 = vrcp.pop %v3563
    %v3568 = vmul.f32 1.0, %v3567
    %v3569 = vrcp.pop %v3566
    %v3570 = vmul.f32 1.0, %v3569
    %v3571 = vmul.f32 %v3558, %v3568
    %v3572 = vmul.f32 %v3560, %v3570
    %v3573 = vadd.f32 %v3571, 0.0
    %v3574 = vadd.f32 %v3572, 0.0
    %v3576 = vsel %vm85, %v888, 0
    %v3579 = vsel %vm85, %v893, 0
    %v3582 = vsel %vm85, %v1483, 0
    %v3585 = vsel %vm85, %v1484, 0
    %3587 = vmatprep.subr.mxu0 0.0
    %3588 = vmatpush1.xpose.msra.mxu0 0.0
    %3589 = vmatprep.subr.mxu0 0.0
    %3590 = vmatpush1.xpose.msra.mxu0 0.0
    %3591 = vmatprep.subr.mxu0 0.0
    %3592 = vmatpush1.xpose.msra.mxu0 0.0
    %3593 = vmatprep.subr.mxu0 0.0
    %3594 = vmatpush1.xpose.msra.mxu0 0.0
    %3595 = vmatprep.subr.mxu0 0.0
    %3596 = vmatpush1.xpose.msra.mxu0 0.0
    %3597 = vmatprep.subr.mxu0 0.0
    %3598 = vmatpush1.xpose.msra.mxu0 0.0
    %3599 = vmatprep.subr.mxu0 0.0
    %3600 = vmatpush1.xpose.msra.mxu0 0.0
    %3601 = vmatprep.subr.mxu0 0.0
    %3602 = vmatpush1.xpose.msra.mxu0 0.0
    %3603 = vmatprep.subr.mxu0 0.0
    %3604 = vmatpush1.xpose.msra.mxu0 0.0
    %3605 = vmatprep.subr.mxu0 0.0
    %3606 = vmatpush1.xpose.msra.mxu0 0.0
    %3607 = vmatprep.subr.mxu0 0.0
    %3608 = vmatpush1.xpose.msra.mxu0 0.0
    %3609 = vmatprep.subr.mxu0 0.0
    %3610 = vmatpush1.xpose.msra.mxu0 0.0
    %3611 = vmatprep.subr.mxu0 0.0
    %3612 = vmatpush1.xpose.msra.mxu0 0.0
    %3613 = vmatprep.subr.mxu0 0.0
    %3614 = vmatpush1.xpose.msra.mxu0 0.0
    %3615 = vmatprep.subr.mxu0 0.0
    %3616 = vmatpush1.xpose.msra.mxu0 %v3585
    %3617 = vmatprep.subr.mxu0 0.0
    %3618 = vmatpush1.xpose.msra.mxu0 %v3582
    %3619 = vmatprep.subr.mxu0 0.0
    %3620 = vmatpush2.xpose.msra.mxu0 0.0
    %3621 = vmatprep.subr.mxu0 0.0
    %3622 = vmatpush2.xpose.msra.mxu0 0.0
    %3623 = vmatprep.subr.mxu0 0.0
    %3624 = vmatpush2.xpose.msra.mxu0 0.0
    %3625 = vmatprep.subr.mxu0 0.0
    %3626 = vmatpush2.xpose.msra.mxu0 0.0
    %3627 = vmatprep.subr.mxu0 0.0
    %3628 = vmatpush2.xpose.msra.mxu0 0.0
    %3629 = vmatprep.subr.mxu0 0.0
    %3630 = vmatpush2.xpose.msra.mxu0 0.0
    %3631 = vmatprep.subr.mxu0 0.0
    %3632 = vmatpush2.xpose.msra.mxu0 0.0
    %3633 = vmatprep.subr.mxu0 0.0
    %3634 = vmatpush2.xpose.msra.mxu0 0.0
    %3635 = vmatprep.subr.mxu0 0.0
    %3636 = vmatpush2.xpose.msra.mxu0 0.0
    %3637 = vmatprep.subr.mxu0 0.0
    %3638 = vmatpush2.xpose.msra.mxu0 0.0
    %3639 = vmatprep.subr.mxu0 0.0
    %3640 = vmatpush2.xpose.msra.mxu0 0.0
    %3641 = vmatprep.subr.mxu0 0.0
    %3642 = vmatpush2.xpose.msra.mxu0 0.0
    %3643 = vmatprep.subr.mxu0 0.0
    %3644 = vmatpush2.xpose.msra.mxu0 0.0
    %3645 = vmatprep.subr.mxu0 0.0
    %3646 = vmatpush2.xpose.msra.mxu0 0.0
    %3647 = vmatprep.subr.mxu0 0.0
    %3648 = vmatpush2.xpose.msra.mxu0 0.0
    %3649 = vmatprep.subr.mxu0 0.0
    %3650 = vmatpush2.xpose.msra.mxu0 0.0
    %3651 = vmatprep.mubr.f32.mxu0 0.0
    %3652 = vmatmul.mubr.f32.gmra.mxu0 %v3576
    %v3653 = vpop.f32.mrf.mxu0
    %v3654 = vadd.f32 0.0, %v3653
    %v3655 = vpop.f32.mrf.mxu0
    %3656 = vmatprep.mubr.f32.mxu0 0.0
    %3657 = vmatmul.mubr.f32.gmra.mxu0 %v3579
    %v3658 = vpop.f32.mrf.mxu0
    %v3659 = vadd.f32 0.0, %v3658
    %v3660 = vpop.f32.mrf.mxu0
    %3661 = vdwg.mxu0
    %v3662 = vmul.f32 %v3654, %v2966
    %v3663 = vmul.f32 %v3659, %v2966
    %v3664 = vmul.f32 %v888, %v2973
    %v3665 = vmul.f32 %v893, %v2973
    %v3666 = vsel %vm85, %v3664, 0.0
    %3667 = vadd.xlane.f32.xlu0 %v3666
    %v3668 = vpop.xlane.xlu0 %3667
    %v3669 = vsel %vm85, %v3665, 0.0
    %3670 = vadd.xlane.f32.xlu0 %v3669
    %v3671 = vpop.xlane.xlu0 %3670
    %v3672 = vmul.f32 %v3668, %v2983
    %v3673 = vmul.f32 %v3671, %v2983
    %v3674 = vxor.u32 %v3672, 2147483648
    %v3675 = vxor.u32 %v3673, 2147483648
    %v3676 = vmul.f32 %v3674, 1.442695
    %v3677 = vpow.pop %v3676
    %v3678 = vmul.f32 %v3675, 1.442695
    %v3679 = vpow.pop %v3678
    %v3680 = vadd.f32 %v3677, 1.0
    %v3681 = vadd.f32 %v3679, 1.0
    %v3682 = vrcp.pop %v3680
    %v3683 = vmul.f32 1.0, %v3682
    %v3684 = vrcp.pop %v3681
    %v3685 = vmul.f32 1.0, %v3684
    %v3686 = vmul.f32 %v888, %v3002
    %v3687 = vmul.f32 %v893, %v3002
    %v3688 = vsel %vm85, %v3686, 0.0
    %3689 = vadd.xlane.f32.xlu0 %v3688
    %v3690 = vpop.xlane.xlu0 %3689
    %v3691 = vsel %vm85, %v3687, 0.0
    %3692 = vadd.xlane.f32.xlu0 %v3691
    %v3693 = vpop.xlane.xlu0 %3692
    %v3694 = vmul.f32 %v3690, %v2983
    %v3695 = vmul.f32 %v3693, %v2983
    %v3696 = vxor.u32 %v3694, 2147483648
    %v3697 = vxor.u32 %v3695, 2147483648
    %v3698 = vmul.f32 %v3696, 1.442695
    %v3699 = vpow.pop %v3698
    %v3700 = vmul.f32 %v3697, 1.442695
    %v3701 = vpow.pop %v3700
    %v3702 = vadd.f32 %v3699, 1.0
    %v3703 = vadd.f32 %v3701, 1.0
    %v3704 = vrcp.pop %v3702
    %v3705 = vmul.f32 1.0, %v3704
    %v3706 = vrcp.pop %v3703
    %v3707 = vmul.f32 1.0, %v3706
    %v3708 = vadd.f32 %v3662, %v3683
    %v3709 = vadd.f32 %v3663, %v3685
    %v3710 = vmul.f32 %v3708, %v3708
    %v3711 = vmul.f32 %v3709, %v3709
    %v3712 = vrcp.pop %v3705
    %v3713 = vmul.f32 -10.0, %v3712
    %v3714 = vrcp.pop %v3707
    %v3715 = vmul.f32 -10.0, %v3714
    %v3716 = vmul.f32 %v3710, %v3713
    %v3717 = vmul.f32 %v3711, %v3715
    %v3718 = vmul.f32 %v3716, 1.442695
    %v3719 = vpow.pop %v3718
    %v3720 = vmul.f32 %v3717, 1.442695
    %v3721 = vpow.pop %v3720
    %v3722 = vmul.f32 %v3719, 4.0
    %v3723 = vmul.f32 %v3721, 4.0
    %v3724 = vsel %vm85, %v3722, -inf
    %3725 = vmax.xlane.f32.xlu0 %v3724
    %v3726 = vpop.xlane.xlu0 %3725
    %v3727 = vsel %vm85, %v3723, -inf
    %3728 = vmax.xlane.f32.xlu0 %v3727
    %v3729 = vpop.xlane.xlu0 %3728
    %v3730 = vsub.f32 %v3722, %v3726
    %v3731 = vsub.f32 %v3723, %v3729
    %v3732 = vmul.f32 %v3730, 1.442695
    %v3733 = vpow.pop %v3732
    %v3734 = vmul.f32 %v3731, 1.442695
    %v3735 = vpow.pop %v3734
    %v3736 = vsel %vm85, %v3733, 0.0
    %3737 = vadd.xlane.f32.xlu0 %v3736
    %v3738 = vpop.xlane.xlu0 %3737
    %v3739 = vsel %vm85, %v3735, 0.0
    %3740 = vadd.xlane.f32.xlu0 %v3739
    %v3741 = vpop.xlane.xlu0 %3740
    %v3742 = vrcp.pop %v3738
    %v3743 = vmul.f32 1.0, %v3742
    %v3744 = vrcp.pop %v3741
    %v3745 = vmul.f32 1.0, %v3744
    %v3746 = vmul.f32 %v3733, %v3743
    %v3747 = vmul.f32 %v3735, %v3745
    %v3748 = vadd.f32 %v3066, %v3746
    %v3749 = vadd.f32 %v3067, %v3747
    %v3751 = vsel %vm85, %v978, 0
    %v3754 = vsel %vm85, %v983, 0
    %3756 = vmatprep.subr.mxu0 0.0
    %3757 = vmatpush1.xpose.msra.mxu0 0.0
    %3758 = vmatprep.subr.mxu0 0.0
    %3759 = vmatpush1.xpose.msra.mxu0 0.0
    %3760 = vmatprep.subr.mxu0 0.0
    %3761 = vmatpush1.xpose.msra.mxu0 0.0
    %3762 = vmatprep.subr.mxu0 0.0
    %3763 = vmatpush1.xpose.msra.mxu0 0.0
    %3764 = vmatprep.subr.mxu0 0.0
    %3765 = vmatpush1.xpose.msra.mxu0 0.0
    %3766 = vmatprep.subr.mxu0 0.0
    %3767 = vmatpush1.xpose.msra.mxu0 0.0
    %3768 = vmatprep.subr.mxu0 0.0
    %3769 = vmatpush1.xpose.msra.mxu0 0.0
    %3770 = vmatprep.subr.mxu0 0.0
    %3771 = vmatpush1.xpose.msra.mxu0 0.0
    %3772 = vmatprep.subr.mxu0 0.0
    %3773 = vmatpush1.xpose.msra.mxu0 0.0
    %3774 = vmatprep.subr.mxu0 0.0
    %3775 = vmatpush1.xpose.msra.mxu0 0.0
    %3776 = vmatprep.subr.mxu0 0.0
    %3777 = vmatpush1.xpose.msra.mxu0 0.0
    %3778 = vmatprep.subr.mxu0 0.0
    %3779 = vmatpush1.xpose.msra.mxu0 0.0
    %3780 = vmatprep.subr.mxu0 0.0
    %3781 = vmatpush1.xpose.msra.mxu0 0.0
    %3782 = vmatprep.subr.mxu0 0.0
    %3783 = vmatpush1.xpose.msra.mxu0 0.0
    %3784 = vmatprep.subr.mxu0 0.0
    %3785 = vmatpush1.xpose.msra.mxu0 %v3585
    %3786 = vmatprep.subr.mxu0 0.0
    %3787 = vmatpush1.xpose.msra.mxu0 %v3582
    %3788 = vmatprep.subr.mxu0 0.0
    %3789 = vmatpush2.xpose.msra.mxu0 0.0
    %3790 = vmatprep.subr.mxu0 0.0
    %3791 = vmatpush2.xpose.msra.mxu0 0.0
    %3792 = vmatprep.subr.mxu0 0.0
    %3793 = vmatpush2.xpose.msra.mxu0 0.0
    %3794 = vmatprep.subr.mxu0 0.0
    %3795 = vmatpush2.xpose.msra.mxu0 0.0
    %3796 = vmatprep.subr.mxu0 0.0
    %3797 = vmatpush2.xpose.msra.mxu0 0.0
    %3798 = vmatprep.subr.mxu0 0.0
    %3799 = vmatpush2.xpose.msra.mxu0 0.0
    %3800 = vmatprep.subr.mxu0 0.0
    %3801 = vmatpush2.xpose.msra.mxu0 0.0
    %3802 = vmatprep.subr.mxu0 0.0
    %3803 = vmatpush2.xpose.msra.mxu0 0.0
    %3804 = vmatprep.subr.mxu0 0.0
    %3805 = vmatpush2.xpose.msra.mxu0 0.0
    %3806 = vmatprep.subr.mxu0 0.0
    %3807 = vmatpush2.xpose.msra.mxu0 0.0
    %3808 = vmatprep.subr.mxu0 0.0
    %3809 = vmatpush2.xpose.msra.mxu0 0.0
    %3810 = vmatprep.subr.mxu0 0.0
    %3811 = vmatpush2.xpose.msra.mxu0 0.0
    %3812 = vmatprep.subr.mxu0 0.0
    %3813 = vmatpush2.xpose.msra.mxu0 0.0
    %3814 = vmatprep.subr.mxu0 0.0
    %3815 = vmatpush2.xpose.msra.mxu0 0.0
    %3816 = vmatprep.subr.mxu0 0.0
    %3817 = vmatpush2.xpose.msra.mxu0 0.0
    %3818 = vmatprep.subr.mxu0 0.0
    %3819 = vmatpush2.xpose.msra.mxu0 0.0
    %3820 = vmatprep.mubr.f32.mxu0 0.0
    %3821 = vmatmul.mubr.f32.gmra.mxu0 %v3751
    %v3822 = vpop.f32.mrf.mxu0
    %v3823 = vadd.f32 0.0, %v3822
    %v3824 = vpop.f32.mrf.mxu0
    %3825 = vmatprep.mubr.f32.mxu0 0.0
    %3826 = vmatmul.mubr.f32.gmra.mxu0 %v3754
    %v3827 = vpop.f32.mrf.mxu0
    %v3828 = vadd.f32 0.0, %v3827
    %v3829 = vpop.f32.mrf.mxu0
    %3830 = vdwg.mxu0
    %v3831 = vmul.f32 %v3823, %v2966
    %v3832 = vmul.f32 %v3828, %v2966
    %v3833 = vmul.f32 %v978, %v2973
    %v3834 = vmul.f32 %v983, %v2973
    %v3835 = vsel %vm85, %v3833, 0.0
    %3836 = vadd.xlane.f32.xlu0 %v3835
    %v3837 = vpop.xlane.xlu0 %3836
    %v3838 = vsel %vm85, %v3834, 0.0
    %3839 = vadd.xlane.f32.xlu0 %v3838
    %v3840 = vpop.xlane.xlu0 %3839
    %v3841 = vmul.f32 %v3837, %v2983
    %v3842 = vmul.f32 %v3840, %v2983
    %v3843 = vxor.u32 %v3841, 2147483648
    %v3844 = vxor.u32 %v3842, 2147483648
    %v3845 = vmul.f32 %v3843, 1.442695
    %v3846 = vpow.pop %v3845
    %v3847 = vmul.f32 %v3844, 1.442695
    %v3848 = vpow.pop %v3847
    %v3849 = vadd.f32 %v3846, 1.0
    %v3850 = vadd.f32 %v3848, 1.0
    %v3851 = vrcp.pop %v3849
    %v3852 = vmul.f32 1.0, %v3851
    %v3853 = vrcp.pop %v3850
    %v3854 = vmul.f32 1.0, %v3853
    %v3855 = vmul.f32 %v978, %v3002
    %v3856 = vmul.f32 %v983, %v3002
    %v3857 = vsel %vm85, %v3855, 0.0
    %3858 = vadd.xlane.f32.xlu0 %v3857
    %v3859 = vpop.xlane.xlu0 %3858
    %v3860 = vsel %vm85, %v3856, 0.0
    %3861 = vadd.xlane.f32.xlu0 %v3860
    %v3862 = vpop.xlane.xlu0 %3861
    %v3863 = vmul.f32 %v3859, %v2983
    %v3864 = vmul.f32 %v3862, %v2983
    %v3865 = vxor.u32 %v3863, 2147483648
    %v3866 = vxor.u32 %v3864, 2147483648
    %v3867 = vmul.f32 %v3865, 1.442695
    %v3868 = vpow.pop %v3867
    %v3869 = vmul.f32 %v3866, 1.442695
    %v3870 = vpow.pop %v3869
    %v3871 = vadd.f32 %v3868, 1.0
    %v3872 = vadd.f32 %v3870, 1.0
    %v3873 = vrcp.pop %v3871
    %v3874 = vmul.f32 1.0, %v3873
    %v3875 = vrcp.pop %v3872
    %v3876 = vmul.f32 1.0, %v3875
    %v3877 = vadd.f32 %v3831, %v3852
    %v3878 = vadd.f32 %v3832, %v3854
    %v3879 = vmul.f32 %v3877, %v3877
    %v3880 = vmul.f32 %v3878, %v3878
    %v3881 = vrcp.pop %v3874
    %v3882 = vmul.f32 -10.0, %v3881
    %v3883 = vrcp.pop %v3876
    %v3884 = vmul.f32 -10.0, %v3883
    %v3885 = vmul.f32 %v3879, %v3882
    %v3886 = vmul.f32 %v3880, %v3884
    %v3887 = vmul.f32 %v3885, 1.442695
    %v3888 = vpow.pop %v3887
    %v3889 = vmul.f32 %v3886, 1.442695
    %v3890 = vpow.pop %v3889
    %v3891 = vmul.f32 %v3888, 4.0
    %v3892 = vmul.f32 %v3890, 4.0
    %v3893 = vsel %vm85, %v3891, -inf
    %3894 = vmax.xlane.f32.xlu0 %v3893
    %v3895 = vpop.xlane.xlu0 %3894
    %v3896 = vsel %vm85, %v3892, -inf
    %3897 = vmax.xlane.f32.xlu0 %v3896
    %v3898 = vpop.xlane.xlu0 %3897
    %v3899 = vsub.f32 %v3891, %v3895
    %v3900 = vsub.f32 %v3892, %v3898
    %v3901 = vmul.f32 %v3899, 1.442695
    %v3902 = vpow.pop %v3901
    %v3903 = vmul.f32 %v3900, 1.442695
    %v3904 = vpow.pop %v3903
    %v3905 = vsel %vm85, %v3902, 0.0
    %3906 = vadd.xlane.f32.xlu0 %v3905
    %v3907 = vpop.xlane.xlu0 %3906
    %v3908 = vsel %vm85, %v3904, 0.0
    %3909 = vadd.xlane.f32.xlu0 %v3908
    %v3910 = vpop.xlane.xlu0 %3909
    %v3911 = vrcp.pop %v3907
    %v3912 = vmul.f32 1.0, %v3911
    %v3913 = vrcp.pop %v3910
    %v3914 = vmul.f32 1.0, %v3913
    %v3915 = vmul.f32 %v3902, %v3912
    %v3916 = vmul.f32 %v3904, %v3914
    %v3917 = vadd.f32 %v3235, %v3915
    %v3918 = vadd.f32 %v3236, %v3916
    %v3920 = vsel %vm85, %v1218, 0
    %v3923 = vsel %vm85, %v1223, 0
    %3925 = vmatprep.subr.mxu0 0.0
    %3926 = vmatpush1.xpose.msra.mxu0 0.0
    %3927 = vmatprep.subr.mxu0 0.0
    %3928 = vmatpush1.xpose.msra.mxu0 0.0
    %3929 = vmatprep.subr.mxu0 0.0
    %3930 = vmatpush1.xpose.msra.mxu0 0.0
    %3931 = vmatprep.subr.mxu0 0.0
    %3932 = vmatpush1.xpose.msra.mxu0 0.0
    %3933 = vmatprep.subr.mxu0 0.0
    %3934 = vmatpush1.xpose.msra.mxu0 0.0
    %3935 = vmatprep.subr.mxu0 0.0
    %3936 = vmatpush1.xpose.msra.mxu0 0.0
    %3937 = vmatprep.subr.mxu0 0.0
    %3938 = vmatpush1.xpose.msra.mxu0 0.0
    %3939 = vmatprep.subr.mxu0 0.0
    %3940 = vmatpush1.xpose.msra.mxu0 0.0
    %3941 = vmatprep.subr.mxu0 0.0
    %3942 = vmatpush1.xpose.msra.mxu0 0.0
    %3943 = vmatprep.subr.mxu0 0.0
    %3944 = vmatpush1.xpose.msra.mxu0 0.0
    %3945 = vmatprep.subr.mxu0 0.0
    %3946 = vmatpush1.xpose.msra.mxu0 0.0
    %3947 = vmatprep.subr.mxu0 0.0
    %3948 = vmatpush1.xpose.msra.mxu0 0.0
    %3949 = vmatprep.subr.mxu0 0.0
    %3950 = vmatpush1.xpose.msra.mxu0 0.0
    %3951 = vmatprep.subr.mxu0 0.0
    %3952 = vmatpush1.xpose.msra.mxu0 0.0
    %3953 = vmatprep.subr.mxu0 0.0
    %3954 = vmatpush1.xpose.msra.mxu0 %v3585
    %3955 = vmatprep.subr.mxu0 0.0
    %3956 = vmatpush1.xpose.msra.mxu0 %v3582
    %3957 = vmatprep.subr.mxu0 0.0
    %3958 = vmatpush2.xpose.msra.mxu0 0.0
    %3959 = vmatprep.subr.mxu0 0.0
    %3960 = vmatpush2.xpose.msra.mxu0 0.0
    %3961 = vmatprep.subr.mxu0 0.0
    %3962 = vmatpush2.xpose.msra.mxu0 0.0
    %3963 = vmatprep.subr.mxu0 0.0
    %3964 = vmatpush2.xpose.msra.mxu0 0.0
    %3965 = vmatprep.subr.mxu0 0.0
    %3966 = vmatpush2.xpose.msra.mxu0 0.0
    %3967 = vmatprep.subr.mxu0 0.0
    %3968 = vmatpush2.xpose.msra.mxu0 0.0
    %3969 = vmatprep.subr.mxu0 0.0
    %3970 = vmatpush2.xpose.msra.mxu0 0.0
    %3971 = vmatprep.subr.mxu0 0.0
    %3972 = vmatpush2.xpose.msra.mxu0 0.0
    %3973 = vmatprep.subr.mxu0 0.0
    %3974 = vmatpush2.xpose.msra.mxu0 0.0
    %3975 = vmatprep.subr.mxu0 0.0
    %3976 = vmatpush2.xpose.msra.mxu0 0.0
    %3977 = vmatprep.subr.mxu0 0.0
    %3978 = vmatpush2.xpose.msra.mxu0 0.0
    %3979 = vmatprep.subr.mxu0 0.0
    %3980 = vmatpush2.xpose.msra.mxu0 0.0
    %3981 = vmatprep.subr.mxu0 0.0
    %3982 = vmatpush2.xpose.msra.mxu0 0.0
    %3983 = vmatprep.subr.mxu0 0.0
    %3984 = vmatpush2.xpose.msra.mxu0 0.0
    %3985 = vmatprep.subr.mxu0 0.0
    %3986 = vmatpush2.xpose.msra.mxu0 0.0
    %3987 = vmatprep.subr.mxu0 0.0
    %3988 = vmatpush2.xpose.msra.mxu0 0.0
    %3989 = vmatprep.mubr.f32.mxu0 0.0
    %3990 = vmatmul.mubr.f32.gmra.mxu0 %v3920
    %v3991 = vpop.f32.mrf.mxu0
    %v3992 = vadd.f32 0.0, %v3991
    %v3993 = vpop.f32.mrf.mxu0
    %3994 = vmatprep.mubr.f32.mxu0 0.0
    %3995 = vmatmul.mubr.f32.gmra.mxu0 %v3923
    %v3996 = vpop.f32.mrf.mxu0
    %v3997 = vadd.f32 0.0, %v3996
    %v3998 = vpop.f32.mrf.mxu0
    %3999 = vdwg.mxu0
    %v4000 = vmul.f32 %v3992, %v2966
    %v4001 = vmul.f32 %v3997, %v2966
    %v4002 = vmul.f32 %v1218, %v2973
    %v4003 = vmul.f32 %v1223, %v2973
    %v4004 = vsel %vm85, %v4002, 0.0
    %4005 = vadd.xlane.f32.xlu0 %v4004
    %v4006 = vpop.xlane.xlu0 %4005
    %v4007 = vsel %vm85, %v4003, 0.0
    %4008 = vadd.xlane.f32.xlu0 %v4007
    %v4009 = vpop.xlane.xlu0 %4008
    %v4010 = vmul.f32 %v4006, %v2983
    %v4011 = vmul.f32 %v4009, %v2983
    %v4012 = vxor.u32 %v4010, 2147483648
    %v4013 = vxor.u32 %v4011, 2147483648
    %v4014 = vmul.f32 %v4012, 1.442695
    %v4015 = vpow.pop %v4014
    %v4016 = vmul.f32 %v4013, 1.442695
    %v4017 = vpow.pop %v4016
    %v4018 = vadd.f32 %v4015, 1.0
    %v4019 = vadd.f32 %v4017, 1.0
    %v4020 = vrcp.pop %v4018
    %v4021 = vmul.f32 1.0, %v4020
    %v4022 = vrcp.pop %v4019
    %v4023 = vmul.f32 1.0, %v4022
    %v4024 = vmul.f32 %v1218, %v3002
    %v4025 = vmul.f32 %v1223, %v3002
    %v4026 = vsel %vm85, %v4024, 0.0
    %4027 = vadd.xlane.f32.xlu0 %v4026
    %v4028 = vpop.xlane.xlu0 %4027
    %v4029 = vsel %vm85, %v4025, 0.0
    %4030 = vadd.xlane.f32.xlu0 %v4029
    %v4031 = vpop.xlane.xlu0 %4030
    %v4032 = vmul.f32 %v4028, %v2983
    %v4033 = vmul.f32 %v4031, %v2983
    %v4034 = vxor.u32 %v4032, 2147483648
    %v4035 = vxor.u32 %v4033, 2147483648
    %v4036 = vmul.f32 %v4034, 1.442695
    %v4037 = vpow.pop %v4036
    %v4038 = vmul.f32 %v4035, 1.442695
    %v4039 = vpow.pop %v4038
    %v4040 = vadd.f32 %v4037, 1.0
    %v4041 = vadd.f32 %v4039, 1.0
    %v4042 = vrcp.pop %v4040
    %v4043 = vmul.f32 1.0, %v4042
    %v4044 = vrcp.pop %v4041
    %v4045 = vmul.f32 1.0, %v4044
    %v4046 = vadd.f32 %v4000, %v4021
    %v4047 = vadd.f32 %v4001, %v4023
    %v4048 = vmul.f32 %v4046, %v4046
    %v4049 = vmul.f32 %v4047, %v4047
    %v4050 = vrcp.pop %v4043
    %v4051 = vmul.f32 -10.0, %v4050
    %v4052 = vrcp.pop %v4045
    %v4053 = vmul.f32 -10.0, %v4052
    %v4054 = vmul.f32 %v4048, %v4051
    %v4055 = vmul.f32 %v4049, %v4053
    %v4056 = vmul.f32 %v4054, 1.442695
    %v4057 = vpow.pop %v4056
    %v4058 = vmul.f32 %v4055, 1.442695
    %v4059 = vpow.pop %v4058
    %v4060 = vmul.f32 %v4057, 4.0
    %v4061 = vmul.f32 %v4059, 4.0
    %v4062 = vsel %vm85, %v4060, -inf
    %4063 = vmax.xlane.f32.xlu0 %v4062
    %v4064 = vpop.xlane.xlu0 %4063
    %v4065 = vsel %vm85, %v4061, -inf
    %4066 = vmax.xlane.f32.xlu0 %v4065
    %v4067 = vpop.xlane.xlu0 %4066
    %v4068 = vsub.f32 %v4060, %v4064
    %v4069 = vsub.f32 %v4061, %v4067
    %v4070 = vmul.f32 %v4068, 1.442695
    %v4071 = vpow.pop %v4070
    %v4072 = vmul.f32 %v4069, 1.442695
    %v4073 = vpow.pop %v4072
    %v4074 = vsel %vm85, %v4071, 0.0
    %4075 = vadd.xlane.f32.xlu0 %v4074
    %v4076 = vpop.xlane.xlu0 %4075
    %v4077 = vsel %vm85, %v4073, 0.0
    %4078 = vadd.xlane.f32.xlu0 %v4077
    %v4079 = vpop.xlane.xlu0 %4078
    %v4080 = vrcp.pop %v4076
    %v4081 = vmul.f32 1.0, %v4080
    %v4082 = vrcp.pop %v4079
    %v4083 = vmul.f32 1.0, %v4082
    %v4084 = vmul.f32 %v4071, %v4081
    %v4085 = vmul.f32 %v4073, %v4083
    %v4086 = vadd.f32 %v3404, %v4084
    %v4087 = vadd.f32 %v3405, %v4085
    %v4089 = vsel %vm85, %v1385, 0
    %v4092 = vsel %vm85, %v1390, 0
    %4094 = vmatprep.subr.mxu0 0.0
    %4095 = vmatpush1.xpose.msra.mxu0 0.0
    %4096 = vmatprep.subr.mxu0 0.0
    %4097 = vmatpush1.xpose.msra.mxu0 0.0
    %4098 = vmatprep.subr.mxu0 0.0
    %4099 = vmatpush1.xpose.msra.mxu0 0.0
    %4100 = vmatprep.subr.mxu0 0.0
    %4101 = vmatpush1.xpose.msra.mxu0 0.0
    %4102 = vmatprep.subr.mxu0 0.0
    %4103 = vmatpush1.xpose.msra.mxu0 0.0
    %4104 = vmatprep.subr.mxu0 0.0
    %4105 = vmatpush1.xpose.msra.mxu0 0.0
    %4106 = vmatprep.subr.mxu0 0.0
    %4107 = vmatpush1.xpose.msra.mxu0 0.0
    %4108 = vmatprep.subr.mxu0 0.0
    %4109 = vmatpush1.xpose.msra.mxu0 0.0
    %4110 = vmatprep.subr.mxu0 0.0
    %4111 = vmatpush1.xpose.msra.mxu0 0.0
    %4112 = vmatprep.subr.mxu0 0.0
    %4113 = vmatpush1.xpose.msra.mxu0 0.0
    %4114 = vmatprep.subr.mxu0 0.0
    %4115 = vmatpush1.xpose.msra.mxu0 0.0
    %4116 = vmatprep.subr.mxu0 0.0
    %4117 = vmatpush1.xpose.msra.mxu0 0.0
    %4118 = vmatprep.subr.mxu0 0.0
    %4119 = vmatpush1.xpose.msra.mxu0 0.0
    %4120 = vmatprep.subr.mxu0 0.0
    %4121 = vmatpush1.xpose.msra.mxu0 0.0
    %4122 = vmatprep.subr.mxu0 0.0
    %4123 = vmatpush1.xpose.msra.mxu0 %v3585
    %4124 = vmatprep.subr.mxu0 0.0
    %4125 = vmatpush1.xpose.msra.mxu0 %v3582
    %4126 = vmatprep.subr.mxu0 0.0
    %4127 = vmatpush2.xpose.msra.mxu0 0.0
    %4128 = vmatprep.subr.mxu0 0.0
    %4129 = vmatpush2.xpose.msra.mxu0 0.0
    %4130 = vmatprep.subr.mxu0 0.0
    %4131 = vmatpush2.xpose.msra.mxu0 0.0
    %4132 = vmatprep.subr.mxu0 0.0
    %4133 = vmatpush2.xpose.msra.mxu0 0.0
    %4134 = vmatprep.subr.mxu0 0.0
    %4135 = vmatpush2.xpose.msra.mxu0 0.0
    %4136 = vmatprep.subr.mxu0 0.0
    %4137 = vmatpush2.xpose.msra.mxu0 0.0
    %4138 = vmatprep.subr.mxu0 0.0
    %4139 = vmatpush2.xpose.msra.mxu0 0.0
    %4140 = vmatprep.subr.mxu0 0.0
    %4141 = vmatpush2.xpose.msra.mxu0 0.0
    %4142 = vmatprep.subr.mxu0 0.0
    %4143 = vmatpush2.xpose.msra.mxu0 0.0
    %4144 = vmatprep.subr.mxu0 0.0
    %4145 = vmatpush2.xpose.msra.mxu0 0.0
    %4146 = vmatprep.subr.mxu0 0.0
    %4147 = vmatpush2.xpose.msra.mxu0 0.0
    %4148 = vmatprep.subr.mxu0 0.0
    %4149 = vmatpush2.xpose.msra.mxu0 0.0
    %4150 = vmatprep.subr.mxu0 0.0
    %4151 = vmatpush2.xpose.msra.mxu0 0.0
    %4152 = vmatprep.subr.mxu0 0.0
    %4153 = vmatpush2.xpose.msra.mxu0 0.0
    %4154 = vmatprep.subr.mxu0 0.0
    %4155 = vmatpush2.xpose.msra.mxu0 0.0
    %4156 = vmatprep.subr.mxu0 0.0
    %4157 = vmatpush2.xpose.msra.mxu0 0.0
    %4158 = vmatprep.mubr.f32.mxu0 0.0
    %4159 = vmatmul.mubr.f32.gmra.mxu0 %v4089
    %v4160 = vpop.f32.mrf.mxu0
    %v4161 = vadd.f32 0.0, %v4160
    %v4162 = vpop.f32.mrf.mxu0
    %4163 = vmatprep.mubr.f32.mxu0 0.0
    %4164 = vmatmul.mubr.f32.gmra.mxu0 %v4092
    %v4165 = vpop.f32.mrf.mxu0
    %v4166 = vadd.f32 0.0, %v4165
    %v4167 = vpop.f32.mrf.mxu0
    %4168 = vdwg.mxu0
    %v4169 = vmul.f32 %v4161, %v2966
    %v4170 = vmul.f32 %v4166, %v2966
    %v4171 = vmul.f32 %v1385, %v2973
    %v4172 = vmul.f32 %v1390, %v2973
    %v4173 = vsel %vm85, %v4171, 0.0
    %4174 = vadd.xlane.f32.xlu0 %v4173
    %v4175 = vpop.xlane.xlu0 %4174
    %v4176 = vsel %vm85, %v4172, 0.0
    %4177 = vadd.xlane.f32.xlu0 %v4176
    %v4178 = vpop.xlane.xlu0 %4177
    %v4179 = vmul.f32 %v4175, %v2983
    %v4180 = vmul.f32 %v4178, %v2983
    %v4181 = vxor.u32 %v4179, 2147483648
    %v4182 = vxor.u32 %v4180, 2147483648
    %v4183 = vmul.f32 %v4181, 1.442695
    %v4184 = vpow.pop %v4183
    %v4185 = vmul.f32 %v4182, 1.442695
    %v4186 = vpow.pop %v4185
    %v4187 = vadd.f32 %v4184, 1.0
    %v4188 = vadd.f32 %v4186, 1.0
    %v4189 = vrcp.pop %v4187
    %v4190 = vmul.f32 1.0, %v4189
    %v4191 = vrcp.pop %v4188
    %v4192 = vmul.f32 1.0, %v4191
    %v4193 = vmul.f32 %v1385, %v3002
    %v4194 = vmul.f32 %v1390, %v3002
    %v4195 = vsel %vm85, %v4193, 0.0
    %4196 = vadd.xlane.f32.xlu0 %v4195
    %v4197 = vpop.xlane.xlu0 %4196
    %v4198 = vsel %vm85, %v4194, 0.0
    %4199 = vadd.xlane.f32.xlu0 %v4198
    %v4200 = vpop.xlane.xlu0 %4199
    %v4201 = vmul.f32 %v4197, %v2983
    %v4202 = vmul.f32 %v4200, %v2983
    %v4203 = vxor.u32 %v4201, 2147483648
    %v4204 = vxor.u32 %v4202, 2147483648
    %v4205 = vmul.f32 %v4203, 1.442695
    %v4206 = vpow.pop %v4205
    %v4207 = vmul.f32 %v4204, 1.442695
    %v4208 = vpow.pop %v4207
    %v4209 = vadd.f32 %v4206, 1.0
    %v4210 = vadd.f32 %v4208, 1.0
    %v4211 = vrcp.pop %v4209
    %v4212 = vmul.f32 1.0, %v4211
    %v4213 = vrcp.pop %v4210
    %v4214 = vmul.f32 1.0, %v4213
    %v4215 = vadd.f32 %v4169, %v4190
    %v4216 = vadd.f32 %v4170, %v4192
    %v4217 = vmul.f32 %v4215, %v4215
    %v4218 = vmul.f32 %v4216, %v4216
    %v4219 = vrcp.pop %v4212
    %v4220 = vmul.f32 -10.0, %v4219
    %v4221 = vrcp.pop %v4214
    %v4222 = vmul.f32 -10.0, %v4221
    %v4223 = vmul.f32 %v4217, %v4220
    %v4224 = vmul.f32 %v4218, %v4222
    %v4225 = vmul.f32 %v4223, 1.442695
    %v4226 = vpow.pop %v4225
    %v4227 = vmul.f32 %v4224, 1.442695
    %v4228 = vpow.pop %v4227
    %v4229 = vmul.f32 %v4226, 4.0
    %v4230 = vmul.f32 %v4228, 4.0
    %v4231 = vsel %vm85, %v4229, -inf
    %4232 = vmax.xlane.f32.xlu0 %v4231
    %v4233 = vpop.xlane.xlu0 %4232
    %v4234 = vsel %vm85, %v4230, -inf
    %4235 = vmax.xlane.f32.xlu0 %v4234
    %v4236 = vpop.xlane.xlu0 %4235
    %v4237 = vsub.f32 %v4229, %v4233
    %v4238 = vsub.f32 %v4230, %v4236
    %v4239 = vmul.f32 %v4237, 1.442695
    %v4240 = vpow.pop %v4239
    %v4241 = vmul.f32 %v4238, 1.442695
    %v4242 = vpow.pop %v4241
    %v4243 = vsel %vm85, %v4240, 0.0
    %4244 = vadd.xlane.f32.xlu0 %v4243
    %v4245 = vpop.xlane.xlu0 %4244
    %v4246 = vsel %vm85, %v4242, 0.0
    %4247 = vadd.xlane.f32.xlu0 %v4246
    %v4248 = vpop.xlane.xlu0 %4247
    %v4249 = vrcp.pop %v4245
    %v4250 = vmul.f32 1.0, %v4249
    %v4251 = vrcp.pop %v4248
    %v4252 = vmul.f32 1.0, %v4251
    %v4253 = vmul.f32 %v4240, %v4250
    %v4254 = vmul.f32 %v4242, %v4252
    %v4255 = vadd.f32 %v3573, %v4253
    %v4256 = vadd.f32 %v3574, %v4254
    %v4258 = vsel %vm85, %v1573, 0
    %v4261 = vsel %vm85, %v1578, 0
    %v4264 = vsel %vm85, %v2168, 0
    %v4267 = vsel %vm85, %v2169, 0
    %4269 = vmatprep.subr.mxu0 0.0
    %4270 = vmatpush1.xpose.msra.mxu0 0.0
    %4271 = vmatprep.subr.mxu0 0.0
    %4272 = vmatpush1.xpose.msra.mxu0 0.0
    %4273 = vmatprep.subr.mxu0 0.0
    %4274 = vmatpush1.xpose.msra.mxu0 0.0
    %4275 = vmatprep.subr.mxu0 0.0
    %4276 = vmatpush1.xpose.msra.mxu0 0.0
    %4277 = vmatprep.subr.mxu0 0.0
    %4278 = vmatpush1.xpose.msra.mxu0 0.0
    %4279 = vmatprep.subr.mxu0 0.0
    %4280 = vmatpush1.xpose.msra.mxu0 0.0
    %4281 = vmatprep.subr.mxu0 0.0
    %4282 = vmatpush1.xpose.msra.mxu0 0.0
    %4283 = vmatprep.subr.mxu0 0.0
    %4284 = vmatpush1.xpose.msra.mxu0 0.0
    %4285 = vmatprep.subr.mxu0 0.0
    %4286 = vmatpush1.xpose.msra.mxu0 0.0
    %4287 = vmatprep.subr.mxu0 0.0
    %4288 = vmatpush1.xpose.msra.mxu0 0.0
    %4289 = vmatprep.subr.mxu0 0.0
    %4290 = vmatpush1.xpose.msra.mxu0 0.0
    %4291 = vmatprep.subr.mxu0 0.0
    %4292 = vmatpush1.xpose.msra.mxu0 0.0
    %4293 = vmatprep.subr.mxu0 0.0
    %4294 = vmatpush1.xpose.msra.mxu0 0.0
    %4295 = vmatprep.subr.mxu0 0.0
    %4296 = vmatpush1.xpose.msra.mxu0 0.0
    %4297 = vmatprep.subr.mxu0 0.0
    %4298 = vmatpush1.xpose.msra.mxu0 %v4267
    %4299 = vmatprep.subr.mxu0 0.0
    %4300 = vmatpush1.xpose.msra.mxu0 %v4264
    %4301 = vmatprep.subr.mxu0 0.0
    %4302 = vmatpush2.xpose.msra.mxu0 0.0
    %4303 = vmatprep.subr.mxu0 0.0
    %4304 = vmatpush2.xpose.msra.mxu0 0.0
    %4305 = vmatprep.subr.mxu0 0.0
    %4306 = vmatpush2.xpose.msra.mxu0 0.0
    %4307 = vmatprep.subr.mxu0 0.0
    %4308 = vmatpush2.xpose.msra.mxu0 0.0
    %4309 = vmatprep.subr.mxu0 0.0
    %4310 = vmatpush2.xpose.msra.mxu0 0.0
    %4311 = vmatprep.subr.mxu0 0.0
    %4312 = vmatpush2.xpose.msra.mxu0 0.0
    %4313 = vmatprep.subr.mxu0 0.0
    %4314 = vmatpush2.xpose.msra.mxu0 0.0
    %4315 = vmatprep.subr.mxu0 0.0
    %4316 = vmatpush2.xpose.msra.mxu0 0.0
    %4317 = vmatprep.subr.mxu0 0.0
    %4318 = vmatpush2.xpose.msra.mxu0 0.0
    %4319 = vmatprep.subr.mxu0 0.0
    %4320 = vmatpush2.xpose.msra.mxu0 0.0
    %4321 = vmatprep.subr.mxu0 0.0
    %4322 = vmatpush2.xpose.msra.mxu0 0.0
    %4323 = vmatprep.subr.mxu0 0.0
    %4324 = vmatpush2.xpose.msra.mxu0 0.0
    %4325 = vmatprep.subr.mxu0 0.0
    %4326 = vmatpush2.xpose.msra.mxu0 0.0
    %4327 = vmatprep.subr.mxu0 0.0
    %4328 = vmatpush2.xpose.msra.mxu0 0.0
    %4329 = vmatprep.subr.mxu0 0.0
    %4330 = vmatpush2.xpose.msra.mxu0 0.0
    %4331 = vmatprep.subr.mxu0 0.0
    %4332 = vmatpush2.xpose.msra.mxu0 0.0
    %4333 = vmatprep.mubr.f32.mxu0 0.0
    %4334 = vmatmul.mubr.f32.gmra.mxu0 %v4258
    %v4335 = vpop.f32.mrf.mxu0
    %v4336 = vadd.f32 0.0, %v4335
    %v4337 = vpop.f32.mrf.mxu0
    %4338 = vmatprep.mubr.f32.mxu0 0.0
    %4339 = vmatmul.mubr.f32.gmra.mxu0 %v4261
    %v4340 = vpop.f32.mrf.mxu0
    %v4341 = vadd.f32 0.0, %v4340
    %v4342 = vpop.f32.mrf.mxu0
    %4343 = vdwg.mxu0
    %v4344 = vmul.f32 %v4336, %v2966
    %v4345 = vmul.f32 %v4341, %v2966
    %v4346 = vmul.f32 %v1573, %v2973
    %v4347 = vmul.f32 %v1578, %v2973
    %v4348 = vsel %vm85, %v4346, 0.0
    %4349 = vadd.xlane.f32.xlu0 %v4348
    %v4350 = vpop.xlane.xlu0 %4349
    %v4351 = vsel %vm85, %v4347, 0.0
    %4352 = vadd.xlane.f32.xlu0 %v4351
    %v4353 = vpop.xlane.xlu0 %4352
    %v4354 = vmul.f32 %v4350, %v2983
    %v4355 = vmul.f32 %v4353, %v2983
    %v4356 = vxor.u32 %v4354, 2147483648
    %v4357 = vxor.u32 %v4355, 2147483648
    %v4358 = vmul.f32 %v4356, 1.442695
    %v4359 = vpow.pop %v4358
    %v4360 = vmul.f32 %v4357, 1.442695
    %v4361 = vpow.pop %v4360
    %v4362 = vadd.f32 %v4359, 1.0
    %v4363 = vadd.f32 %v4361, 1.0
    %v4364 = vrcp.pop %v4362
    %v4365 = vmul.f32 1.0, %v4364
    %v4366 = vrcp.pop %v4363
    %v4367 = vmul.f32 1.0, %v4366
    %v4368 = vmul.f32 %v1573, %v3002
    %v4369 = vmul.f32 %v1578, %v3002
    %v4370 = vsel %vm85, %v4368, 0.0
    %4371 = vadd.xlane.f32.xlu0 %v4370
    %v4372 = vpop.xlane.xlu0 %4371
    %v4373 = vsel %vm85, %v4369, 0.0
    %4374 = vadd.xlane.f32.xlu0 %v4373
    %v4375 = vpop.xlane.xlu0 %4374
    %v4376 = vmul.f32 %v4372, %v2983
    %v4377 = vmul.f32 %v4375, %v2983
    %v4378 = vxor.u32 %v4376, 2147483648
    %v4379 = vxor.u32 %v4377, 2147483648
    %v4380 = vmul.f32 %v4378, 1.442695
    %v4381 = vpow.pop %v4380
    %v4382 = vmul.f32 %v4379, 1.442695
    %v4383 = vpow.pop %v4382
    %v4384 = vadd.f32 %v4381, 1.0
    %v4385 = vadd.f32 %v4383, 1.0
    %v4386 = vrcp.pop %v4384
    %v4387 = vmul.f32 1.0, %v4386
    %v4388 = vrcp.pop %v4385
    %v4389 = vmul.f32 1.0, %v4388
    %v4390 = vadd.f32 %v4344, %v4365
    %v4391 = vadd.f32 %v4345, %v4367
    %v4392 = vmul.f32 %v4390, %v4390
    %v4393 = vmul.f32 %v4391, %v4391
    %v4394 = vrcp.pop %v4387
    %v4395 = vmul.f32 -10.0, %v4394
    %v4396 = vrcp.pop %v4389
    %v4397 = vmul.f32 -10.0, %v4396
    %v4398 = vmul.f32 %v4392, %v4395
    %v4399 = vmul.f32 %v4393, %v4397
    %v4400 = vmul.f32 %v4398, 1.442695
    %v4401 = vpow.pop %v4400
    %v4402 = vmul.f32 %v4399, 1.442695
    %v4403 = vpow.pop %v4402
    %v4404 = vmul.f32 %v4401, 4.0
    %v4405 = vmul.f32 %v4403, 4.0
    %v4406 = vsel %vm85, %v4404, -inf
    %4407 = vmax.xlane.f32.xlu0 %v4406
    %v4408 = vpop.xlane.xlu0 %4407
    %v4409 = vsel %vm85, %v4405, -inf
    %4410 = vmax.xlane.f32.xlu0 %v4409
    %v4411 = vpop.xlane.xlu0 %4410
    %v4412 = vsub.f32 %v4404, %v4408
    %v4413 = vsub.f32 %v4405, %v4411
    %v4414 = vmul.f32 %v4412, 1.442695
    %v4415 = vpow.pop %v4414
    %v4416 = vmul.f32 %v4413, 1.442695
    %v4417 = vpow.pop %v4416
    %v4418 = vsel %vm85, %v4415, 0.0
    %4419 = vadd.xlane.f32.xlu0 %v4418
    %v4420 = vpop.xlane.xlu0 %4419
    %v4421 = vsel %vm85, %v4417, 0.0
    %4422 = vadd.xlane.f32.xlu0 %v4421
    %v4423 = vpop.xlane.xlu0 %4422
    %v4424 = vrcp.pop %v4420
    %v4425 = vmul.f32 1.0, %v4424
    %v4426 = vrcp.pop %v4423
    %v4427 = vmul.f32 1.0, %v4426
    %v4428 = vmul.f32 %v4415, %v4425
    %v4429 = vmul.f32 %v4417, %v4427
    %v4430 = vadd.f32 %v3748, %v4428
    %v4431 = vadd.f32 %v3749, %v4429
    %v4433 = vsel %vm85, %v1663, 0
    %v4436 = vsel %vm85, %v1668, 0
    %4438 = vmatprep.subr.mxu0 0.0
    %4439 = vmatpush1.xpose.msra.mxu0 0.0
    %4440 = vmatprep.subr.mxu0 0.0
    %4441 = vmatpush1.xpose.msra.mxu0 0.0
    %4442 = vmatprep.subr.mxu0 0.0
    %4443 = vmatpush1.xpose.msra.mxu0 0.0
    %4444 = vmatprep.subr.mxu0 0.0
    %4445 = vmatpush1.xpose.msra.mxu0 0.0
    %4446 = vmatprep.subr.mxu0 0.0
    %4447 = vmatpush1.xpose.msra.mxu0 0.0
    %4448 = vmatprep.subr.mxu0 0.0
    %4449 = vmatpush1.xpose.msra.mxu0 0.0
    %4450 = vmatprep.subr.mxu0 0.0
    %4451 = vmatpush1.xpose.msra.mxu0 0.0
    %4452 = vmatprep.subr.mxu0 0.0
    %4453 = vmatpush1.xpose.msra.mxu0 0.0
    %4454 = vmatprep.subr.mxu0 0.0
    %4455 = vmatpush1.xpose.msra.mxu0 0.0
    %4456 = vmatprep.subr.mxu0 0.0
    %4457 = vmatpush1.xpose.msra.mxu0 0.0
    %4458 = vmatprep.subr.mxu0 0.0
    %4459 = vmatpush1.xpose.msra.mxu0 0.0
    %4460 = vmatprep.subr.mxu0 0.0
    %4461 = vmatpush1.xpose.msra.mxu0 0.0
    %4462 = vmatprep.subr.mxu0 0.0
    %4463 = vmatpush1.xpose.msra.mxu0 0.0
    %4464 = vmatprep.subr.mxu0 0.0
    %4465 = vmatpush1.xpose.msra.mxu0 0.0
    %4466 = vmatprep.subr.mxu0 0.0
    %4467 = vmatpush1.xpose.msra.mxu0 %v4267
    %4468 = vmatprep.subr.mxu0 0.0
    %4469 = vmatpush1.xpose.msra.mxu0 %v4264
    %4470 = vmatprep.subr.mxu0 0.0
    %4471 = vmatpush2.xpose.msra.mxu0 0.0
    %4472 = vmatprep.subr.mxu0 0.0
    %4473 = vmatpush2.xpose.msra.mxu0 0.0
    %4474 = vmatprep.subr.mxu0 0.0
    %4475 = vmatpush2.xpose.msra.mxu0 0.0
    %4476 = vmatprep.subr.mxu0 0.0
    %4477 = vmatpush2.xpose.msra.mxu0 0.0
    %4478 = vmatprep.subr.mxu0 0.0
    %4479 = vmatpush2.xpose.msra.mxu0 0.0
    %4480 = vmatprep.subr.mxu0 0.0
    %4481 = vmatpush2.xpose.msra.mxu0 0.0
    %4482 = vmatprep.subr.mxu0 0.0
    %4483 = vmatpush2.xpose.msra.mxu0 0.0
    %4484 = vmatprep.subr.mxu0 0.0
    %4485 = vmatpush2.xpose.msra.mxu0 0.0
    %4486 = vmatprep.subr.mxu0 0.0
    %4487 = vmatpush2.xpose.msra.mxu0 0.0
    %4488 = vmatprep.subr.mxu0 0.0
    %4489 = vmatpush2.xpose.msra.mxu0 0.0
    %4490 = vmatprep.subr.mxu0 0.0
    %4491 = vmatpush2.xpose.msra.mxu0 0.0
    %4492 = vmatprep.subr.mxu0 0.0
    %4493 = vmatpush2.xpose.msra.mxu0 0.0
    %4494 = vmatprep.subr.mxu0 0.0
    %4495 = vmatpush2.xpose.msra.mxu0 0.0
    %4496 = vmatprep.subr.mxu0 0.0
    %4497 = vmatpush2.xpose.msra.mxu0 0.0
    %4498 = vmatprep.subr.mxu0 0.0
    %4499 = vmatpush2.xpose.msra.mxu0 0.0
    %4500 = vmatprep.subr.mxu0 0.0
    %4501 = vmatpush2.xpose.msra.mxu0 0.0
    %4502 = vmatprep.mubr.f32.mxu0 0.0
    %4503 = vmatmul.mubr.f32.gmra.mxu0 %v4433
    %v4504 = vpop.f32.mrf.mxu0
    %v4505 = vadd.f32 0.0, %v4504
    %v4506 = vpop.f32.mrf.mxu0
    %4507 = vmatprep.mubr.f32.mxu0 0.0
    %4508 = vmatmul.mubr.f32.gmra.mxu0 %v4436
    %v4509 = vpop.f32.mrf.mxu0
    %v4510 = vadd.f32 0.0, %v4509
    %v4511 = vpop.f32.mrf.mxu0
    %4512 = vdwg.mxu0
    %v4513 = vmul.f32 %v4505, %v2966
    %v4514 = vmul.f32 %v4510, %v2966
    %v4515 = vmul.f32 %v1663, %v2973
    %v4516 = vmul.f32 %v1668, %v2973
    %v4517 = vsel %vm85, %v4515, 0.0
    %4518 = vadd.xlane.f32.xlu0 %v4517
    %v4519 = vpop.xlane.xlu0 %4518
    %v4520 = vsel %vm85, %v4516, 0.0
    %4521 = vadd.xlane.f32.xlu0 %v4520
    %v4522 = vpop.xlane.xlu0 %4521
    %v4523 = vmul.f32 %v4519, %v2983
    %v4524 = vmul.f32 %v4522, %v2983
    %v4525 = vxor.u32 %v4523, 2147483648
    %v4526 = vxor.u32 %v4524, 2147483648
    %v4527 = vmul.f32 %v4525, 1.442695
    %v4528 = vpow.pop %v4527
    %v4529 = vmul.f32 %v4526, 1.442695
    %v4530 = vpow.pop %v4529
    %v4531 = vadd.f32 %v4528, 1.0
    %v4532 = vadd.f32 %v4530, 1.0
    %v4533 = vrcp.pop %v4531
    %v4534 = vmul.f32 1.0, %v4533
    %v4535 = vrcp.pop %v4532
    %v4536 = vmul.f32 1.0, %v4535
    %v4537 = vmul.f32 %v1663, %v3002
    %v4538 = vmul.f32 %v1668, %v3002
    %v4539 = vsel %vm85, %v4537, 0.0
    %4540 = vadd.xlane.f32.xlu0 %v4539
    %v4541 = vpop.xlane.xlu0 %4540
    %v4542 = vsel %vm85, %v4538, 0.0
    %4543 = vadd.xlane.f32.xlu0 %v4542
    %v4544 = vpop.xlane.xlu0 %4543
    %v4545 = vmul.f32 %v4541, %v2983
    %v4546 = vmul.f32 %v4544, %v2983
    %v4547 = vxor.u32 %v4545, 2147483648
    %v4548 = vxor.u32 %v4546, 2147483648
    %v4549 = vmul.f32 %v4547, 1.442695
    %v4550 = vpow.pop %v4549
    %v4551 = vmul.f32 %v4548, 1.442695
    %v4552 = vpow.pop %v4551
    %v4553 = vadd.f32 %v4550, 1.0
    %v4554 = vadd.f32 %v4552, 1.0
    %v4555 = vrcp.pop %v4553
    %v4556 = vmul.f32 1.0, %v4555
    %v4557 = vrcp.pop %v4554
    %v4558 = vmul.f32 1.0, %v4557
    %v4559 = vadd.f32 %v4513, %v4534
    %v4560 = vadd.f32 %v4514, %v4536
    %v4561 = vmul.f32 %v4559, %v4559
    %v4562 = vmul.f32 %v4560, %v4560
    %v4563 = vrcp.pop %v4556
    %v4564 = vmul.f32 -10.0, %v4563
    %v4565 = vrcp.pop %v4558
    %v4566 = vmul.f32 -10.0, %v4565
    %v4567 = vmul.f32 %v4561, %v4564
    %v4568 = vmul.f32 %v4562, %v4566
    %v4569 = vmul.f32 %v4567, 1.442695
    %v4570 = vpow.pop %v4569
    %v4571 = vmul.f32 %v4568, 1.442695
    %v4572 = vpow.pop %v4571
    %v4573 = vmul.f32 %v4570, 4.0
    %v4574 = vmul.f32 %v4572, 4.0
    %v4575 = vsel %vm85, %v4573, -inf
    %4576 = vmax.xlane.f32.xlu0 %v4575
    %v4577 = vpop.xlane.xlu0 %4576
    %v4578 = vsel %vm85, %v4574, -inf
    %4579 = vmax.xlane.f32.xlu0 %v4578
    %v4580 = vpop.xlane.xlu0 %4579
    %v4581 = vsub.f32 %v4573, %v4577
    %v4582 = vsub.f32 %v4574, %v4580
    %v4583 = vmul.f32 %v4581, 1.442695
    %v4584 = vpow.pop %v4583
    %v4585 = vmul.f32 %v4582, 1.442695
    %v4586 = vpow.pop %v4585
    %v4587 = vsel %vm85, %v4584, 0.0
    %4588 = vadd.xlane.f32.xlu0 %v4587
    %v4589 = vpop.xlane.xlu0 %4588
    %v4590 = vsel %vm85, %v4586, 0.0
    %4591 = vadd.xlane.f32.xlu0 %v4590
    %v4592 = vpop.xlane.xlu0 %4591
    %v4593 = vrcp.pop %v4589
    %v4594 = vmul.f32 1.0, %v4593
    %v4595 = vrcp.pop %v4592
    %v4596 = vmul.f32 1.0, %v4595
    %v4597 = vmul.f32 %v4584, %v4594
    %v4598 = vmul.f32 %v4586, %v4596
    %v4599 = vadd.f32 %v3917, %v4597
    %v4600 = vadd.f32 %v3918, %v4598
    %v4602 = vsel %vm85, %v1903, 0
    %v4605 = vsel %vm85, %v1908, 0
    %4607 = vmatprep.subr.mxu0 0.0
    %4608 = vmatpush1.xpose.msra.mxu0 0.0
    %4609 = vmatprep.subr.mxu0 0.0
    %4610 = vmatpush1.xpose.msra.mxu0 0.0
    %4611 = vmatprep.subr.mxu0 0.0
    %4612 = vmatpush1.xpose.msra.mxu0 0.0
    %4613 = vmatprep.subr.mxu0 0.0
    %4614 = vmatpush1.xpose.msra.mxu0 0.0
    %4615 = vmatprep.subr.mxu0 0.0
    %4616 = vmatpush1.xpose.msra.mxu0 0.0
    %4617 = vmatprep.subr.mxu0 0.0
    %4618 = vmatpush1.xpose.msra.mxu0 0.0
    %4619 = vmatprep.subr.mxu0 0.0
    %4620 = vmatpush1.xpose.msra.mxu0 0.0
    %4621 = vmatprep.subr.mxu0 0.0
    %4622 = vmatpush1.xpose.msra.mxu0 0.0
    %4623 = vmatprep.subr.mxu0 0.0
    %4624 = vmatpush1.xpose.msra.mxu0 0.0
    %4625 = vmatprep.subr.mxu0 0.0
    %4626 = vmatpush1.xpose.msra.mxu0 0.0
    %4627 = vmatprep.subr.mxu0 0.0
    %4628 = vmatpush1.xpose.msra.mxu0 0.0
    %4629 = vmatprep.subr.mxu0 0.0
    %4630 = vmatpush1.xpose.msra.mxu0 0.0
    %4631 = vmatprep.subr.mxu0 0.0
    %4632 = vmatpush1.xpose.msra.mxu0 0.0
    %4633 = vmatprep.subr.mxu0 0.0
    %4634 = vmatpush1.xpose.msra.mxu0 0.0
    %4635 = vmatprep.subr.mxu0 0.0
    %4636 = vmatpush1.xpose.msra.mxu0 %v4267
    %4637 = vmatprep.subr.mxu0 0.0
    %4638 = vmatpush1.xpose.msra.mxu0 %v4264
    %4639 = vmatprep.subr.mxu0 0.0
    %4640 = vmatpush2.xpose.msra.mxu0 0.0
    %4641 = vmatprep.subr.mxu0 0.0
    %4642 = vmatpush2.xpose.msra.mxu0 0.0
    %4643 = vmatprep.subr.mxu0 0.0
    %4644 = vmatpush2.xpose.msra.mxu0 0.0
    %4645 = vmatprep.subr.mxu0 0.0
    %4646 = vmatpush2.xpose.msra.mxu0 0.0
    %4647 = vmatprep.subr.mxu0 0.0
    %4648 = vmatpush2.xpose.msra.mxu0 0.0
    %4649 = vmatprep.subr.mxu0 0.0
    %4650 = vmatpush2.xpose.msra.mxu0 0.0
    %4651 = vmatprep.subr.mxu0 0.0
    %4652 = vmatpush2.xpose.msra.mxu0 0.0
    %4653 = vmatprep.subr.mxu0 0.0
    %4654 = vmatpush2.xpose.msra.mxu0 0.0
    %4655 = vmatprep.subr.mxu0 0.0
    %4656 = vmatpush2.xpose.msra.mxu0 0.0
    %4657 = vmatprep.subr.mxu0 0.0
    %4658 = vmatpush2.xpose.msra.mxu0 0.0
    %4659 = vmatprep.subr.mxu0 0.0
    %4660 = vmatpush2.xpose.msra.mxu0 0.0
    %4661 = vmatprep.subr.mxu0 0.0
    %4662 = vmatpush2.xpose.msra.mxu0 0.0
    %4663 = vmatprep.subr.mxu0 0.0
    %4664 = vmatpush2.xpose.msra.mxu0 0.0
    %4665 = vmatprep.subr.mxu0 0.0
    %4666 = vmatpush2.xpose.msra.mxu0 0.0
    %4667 = vmatprep.subr.mxu0 0.0
    %4668 = vmatpush2.xpose.msra.mxu0 0.0
    %4669 = vmatprep.subr.mxu0 0.0
    %4670 = vmatpush2.xpose.msra.mxu0 0.0
    %4671 = vmatprep.mubr.f32.mxu0 0.0
    %4672 = vmatmul.mubr.f32.gmra.mxu0 %v4602
    %v4673 = vpop.f32.mrf.mxu0
    %v4674 = vadd.f32 0.0, %v4673
    %v4675 = vpop.f32.mrf.mxu0
    %4676 = vmatprep.mubr.f32.mxu0 0.0
    %4677 = vmatmul.mubr.f32.gmra.mxu0 %v4605
    %v4678 = vpop.f32.mrf.mxu0
    %v4679 = vadd.f32 0.0, %v4678
    %v4680 = vpop.f32.mrf.mxu0
    %4681 = vdwg.mxu0
    %v4682 = vmul.f32 %v4674, %v2966
    %v4683 = vmul.f32 %v4679, %v2966
    %v4684 = vmul.f32 %v1903, %v2973
    %v4685 = vmul.f32 %v1908, %v2973
    %v4686 = vsel %vm85, %v4684, 0.0
    %4687 = vadd.xlane.f32.xlu0 %v4686
    %v4688 = vpop.xlane.xlu0 %4687
    %v4689 = vsel %vm85, %v4685, 0.0
    %4690 = vadd.xlane.f32.xlu0 %v4689
    %v4691 = vpop.xlane.xlu0 %4690
    %v4692 = vmul.f32 %v4688, %v2983
    %v4693 = vmul.f32 %v4691, %v2983
    %v4694 = vxor.u32 %v4692, 2147483648
    %v4695 = vxor.u32 %v4693, 2147483648
    %v4696 = vmul.f32 %v4694, 1.442695
    %v4697 = vpow.pop %v4696
    %v4698 = vmul.f32 %v4695, 1.442695
    %v4699 = vpow.pop %v4698
    %v4700 = vadd.f32 %v4697, 1.0
    %v4701 = vadd.f32 %v4699, 1.0
    %v4702 = vrcp.pop %v4700
    %v4703 = vmul.f32 1.0, %v4702
    %v4704 = vrcp.pop %v4701
    %v4705 = vmul.f32 1.0, %v4704
    %v4706 = vmul.f32 %v1903, %v3002
    %v4707 = vmul.f32 %v1908, %v3002
    %v4708 = vsel %vm85, %v4706, 0.0
    %4709 = vadd.xlane.f32.xlu0 %v4708
    %v4710 = vpop.xlane.xlu0 %4709
    %v4711 = vsel %vm85, %v4707, 0.0
    %4712 = vadd.xlane.f32.xlu0 %v4711
    %v4713 = vpop.xlane.xlu0 %4712
    %v4714 = vmul.f32 %v4710, %v2983
    %v4715 = vmul.f32 %v4713, %v2983
    %v4716 = vxor.u32 %v4714, 2147483648
    %v4717 = vxor.u32 %v4715, 2147483648
    %v4718 = vmul.f32 %v4716, 1.442695
    %v4719 = vpow.pop %v4718
    %v4720 = vmul.f32 %v4717, 1.442695
    %v4721 = vpow.pop %v4720
    %v4722 = vadd.f32 %v4719, 1.0
    %v4723 = vadd.f32 %v4721, 1.0
    %v4724 = vrcp.pop %v4722
    %v4725 = vmul.f32 1.0, %v4724
    %v4726 = vrcp.pop %v4723
    %v4727 = vmul.f32 1.0, %v4726
    %v4728 = vadd.f32 %v4682, %v4703
    %v4729 = vadd.f32 %v4683, %v4705
    %v4730 = vmul.f32 %v4728, %v4728
    %v4731 = vmul.f32 %v4729, %v4729
    %v4732 = vrcp.pop %v4725
    %v4733 = vmul.f32 -10.0, %v4732
    %v4734 = vrcp.pop %v4727
    %v4735 = vmul.f32 -10.0, %v4734
    %v4736 = vmul.f32 %v4730, %v4733
    %v4737 = vmul.f32 %v4731, %v4735
    %v4738 = vmul.f32 %v4736, 1.442695
    %v4739 = vpow.pop %v4738
    %v4740 = vmul.f32 %v4737, 1.442695
    %v4741 = vpow.pop %v4740
    %v4742 = vmul.f32 %v4739, 4.0
    %v4743 = vmul.f32 %v4741, 4.0
    %v4744 = vsel %vm85, %v4742, -inf
    %4745 = vmax.xlane.f32.xlu0 %v4744
    %v4746 = vpop.xlane.xlu0 %4745
    %v4747 = vsel %vm85, %v4743, -inf
    %4748 = vmax.xlane.f32.xlu0 %v4747
    %v4749 = vpop.xlane.xlu0 %4748
    %v4750 = vsub.f32 %v4742, %v4746
    %v4751 = vsub.f32 %v4743, %v4749
    %v4752 = vmul.f32 %v4750, 1.442695
    %v4753 = vpow.pop %v4752
    %v4754 = vmul.f32 %v4751, 1.442695
    %v4755 = vpow.pop %v4754
    %v4756 = vsel %vm85, %v4753, 0.0
    %4757 = vadd.xlane.f32.xlu0 %v4756
    %v4758 = vpop.xlane.xlu0 %4757
    %v4759 = vsel %vm85, %v4755, 0.0
    %4760 = vadd.xlane.f32.xlu0 %v4759
    %v4761 = vpop.xlane.xlu0 %4760
    %v4762 = vrcp.pop %v4758
    %v4763 = vmul.f32 1.0, %v4762
    %v4764 = vrcp.pop %v4761
    %v4765 = vmul.f32 1.0, %v4764
    %v4766 = vmul.f32 %v4753, %v4763
    %v4767 = vmul.f32 %v4755, %v4765
    %v4768 = vadd.f32 %v4086, %v4766
    %v4769 = vadd.f32 %v4087, %v4767
    %v4771 = vsel %vm85, %v2070, 0
    %v4774 = vsel %vm85, %v2075, 0
    %4776 = vmatprep.subr.mxu0 0.0
    %4777 = vmatpush1.xpose.msra.mxu0 0.0
    %4778 = vmatprep.subr.mxu0 0.0
    %4779 = vmatpush1.xpose.msra.mxu0 0.0
    %4780 = vmatprep.subr.mxu0 0.0
    %4781 = vmatpush1.xpose.msra.mxu0 0.0
    %4782 = vmatprep.subr.mxu0 0.0
    %4783 = vmatpush1.xpose.msra.mxu0 0.0
    %4784 = vmatprep.subr.mxu0 0.0
    %4785 = vmatpush1.xpose.msra.mxu0 0.0
    %4786 = vmatprep.subr.mxu0 0.0
    %4787 = vmatpush1.xpose.msra.mxu0 0.0
    %4788 = vmatprep.subr.mxu0 0.0
    %4789 = vmatpush1.xpose.msra.mxu0 0.0
    %4790 = vmatprep.subr.mxu0 0.0
    %4791 = vmatpush1.xpose.msra.mxu0 0.0
    %4792 = vmatprep.subr.mxu0 0.0
    %4793 = vmatpush1.xpose.msra.mxu0 0.0
    %4794 = vmatprep.subr.mxu0 0.0
    %4795 = vmatpush1.xpose.msra.mxu0 0.0
    %4796 = vmatprep.subr.mxu0 0.0
    %4797 = vmatpush1.xpose.msra.mxu0 0.0
    %4798 = vmatprep.subr.mxu0 0.0
    %4799 = vmatpush1.xpose.msra.mxu0 0.0
    %4800 = vmatprep.subr.mxu0 0.0
    %4801 = vmatpush1.xpose.msra.mxu0 0.0
    %4802 = vmatprep.subr.mxu0 0.0
    %4803 = vmatpush1.xpose.msra.mxu0 0.0
    %4804 = vmatprep.subr.mxu0 0.0
    %4805 = vmatpush1.xpose.msra.mxu0 %v4267
    %4806 = vmatprep.subr.mxu0 0.0
    %4807 = vmatpush1.xpose.msra.mxu0 %v4264
    %4808 = vmatprep.subr.mxu0 0.0
    %4809 = vmatpush2.xpose.msra.mxu0 0.0
    %4810 = vmatprep.subr.mxu0 0.0
    %4811 = vmatpush2.xpose.msra.mxu0 0.0
    %4812 = vmatprep.subr.mxu0 0.0
    %4813 = vmatpush2.xpose.msra.mxu0 0.0
    %4814 = vmatprep.subr.mxu0 0.0
    %4815 = vmatpush2.xpose.msra.mxu0 0.0
    %4816 = vmatprep.subr.mxu0 0.0
    %4817 = vmatpush2.xpose.msra.mxu0 0.0
    %4818 = vmatprep.subr.mxu0 0.0
    %4819 = vmatpush2.xpose.msra.mxu0 0.0
    %4820 = vmatprep.subr.mxu0 0.0
    %4821 = vmatpush2.xpose.msra.mxu0 0.0
    %4822 = vmatprep.subr.mxu0 0.0
    %4823 = vmatpush2.xpose.msra.mxu0 0.0
    %4824 = vmatprep.subr.mxu0 0.0
    %4825 = vmatpush2.xpose.msra.mxu0 0.0
    %4826 = vmatprep.subr.mxu0 0.0
    %4827 = vmatpush2.xpose.msra.mxu0 0.0
    %4828 = vmatprep.subr.mxu0 0.0
    %4829 = vmatpush2.xpose.msra.mxu0 0.0
    %4830 = vmatprep.subr.mxu0 0.0
    %4831 = vmatpush2.xpose.msra.mxu0 0.0
    %4832 = vmatprep.subr.mxu0 0.0
    %4833 = vmatpush2.xpose.msra.mxu0 0.0
    %4834 = vmatprep.subr.mxu0 0.0
    %4835 = vmatpush2.xpose.msra.mxu0 0.0
    %4836 = vmatprep.subr.mxu0 0.0
    %4837 = vmatpush2.xpose.msra.mxu0 0.0
    %4838 = vmatprep.subr.mxu0 0.0
    %4839 = vmatpush2.xpose.msra.mxu0 0.0
    %4840 = vmatprep.mubr.f32.mxu0 0.0
    %4841 = vmatmul.mubr.f32.gmra.mxu0 %v4771
    %v4842 = vpop.f32.mrf.mxu0
    %v4843 = vadd.f32 0.0, %v4842
    %v4844 = vpop.f32.mrf.mxu0
    %4845 = vmatprep.mubr.f32.mxu0 0.0
    %4846 = vmatmul.mubr.f32.gmra.mxu0 %v4774
    %v4847 = vpop.f32.mrf.mxu0
    %v4848 = vadd.f32 0.0, %v4847
    %v4849 = vpop.f32.mrf.mxu0
    %4850 = vdwg.mxu0
    %v4851 = vmul.f32 %v4843, %v2966
    %v4852 = vmul.f32 %v4848, %v2966
    %v4853 = vmul.f32 %v2070, %v2973
    %v4854 = vmul.f32 %v2075, %v2973
    %v4855 = vsel %vm85, %v4853, 0.0
    %4856 = vadd.xlane.f32.xlu0 %v4855
    %v4857 = vpop.xlane.xlu0 %4856
    %v4858 = vsel %vm85, %v4854, 0.0
    %4859 = vadd.xlane.f32.xlu0 %v4858
    %v4860 = vpop.xlane.xlu0 %4859
    %v4861 = vmul.f32 %v4857, %v2983
    %v4862 = vmul.f32 %v4860, %v2983
    %v4863 = vxor.u32 %v4861, 2147483648
    %v4864 = vxor.u32 %v4862, 2147483648
    %v4865 = vmul.f32 %v4863, 1.442695
    %v4866 = vpow.pop %v4865
    %v4867 = vmul.f32 %v4864, 1.442695
    %v4868 = vpow.pop %v4867
    %v4869 = vadd.f32 %v4866, 1.0
    %v4870 = vadd.f32 %v4868, 1.0
    %v4871 = vrcp.pop %v4869
    %v4872 = vmul.f32 1.0, %v4871
    %v4873 = vrcp.pop %v4870
    %v4874 = vmul.f32 1.0, %v4873
    %v4875 = vmul.f32 %v2070, %v3002
    %v4876 = vmul.f32 %v2075, %v3002
    %v4877 = vsel %vm85, %v4875, 0.0
    %4878 = vadd.xlane.f32.xlu0 %v4877
    %v4879 = vpop.xlane.xlu0 %4878
    %v4880 = vsel %vm85, %v4876, 0.0
    %4881 = vadd.xlane.f32.xlu0 %v4880
    %v4882 = vpop.xlane.xlu0 %4881
    %v4883 = vmul.f32 %v4879, %v2983
    %v4884 = vmul.f32 %v4882, %v2983
    %v4885 = vxor.u32 %v4883, 2147483648
    %v4886 = vxor.u32 %v4884, 2147483648
    %v4887 = vmul.f32 %v4885, 1.442695
    %v4888 = vpow.pop %v4887
    %v4889 = vmul.f32 %v4886, 1.442695
    %v4890 = vpow.pop %v4889
    %v4891 = vadd.f32 %v4888, 1.0
    %v4892 = vadd.f32 %v4890, 1.0
    %v4893 = vrcp.pop %v4891
    %v4894 = vmul.f32 1.0, %v4893
    %v4895 = vrcp.pop %v4892
    %v4896 = vmul.f32 1.0, %v4895
    %v4897 = vadd.f32 %v4851, %v4872
    %v4898 = vadd.f32 %v4852, %v4874
    %v4899 = vmul.f32 %v4897, %v4897
    %v4900 = vmul.f32 %v4898, %v4898
    %v4901 = vrcp.pop %v4894
    %v4902 = vmul.f32 -10.0, %v4901
    %v4903 = vrcp.pop %v4896
    %v4904 = vmul.f32 -10.0, %v4903
    %v4905 = vmul.f32 %v4899, %v4902
    %v4906 = vmul.f32 %v4900, %v4904
    %v4907 = vmul.f32 %v4905, 1.442695
    %v4908 = vpow.pop %v4907
    %v4909 = vmul.f32 %v4906, 1.442695
    %v4910 = vpow.pop %v4909
    %v4911 = vmul.f32 %v4908, 4.0
    %v4912 = vmul.f32 %v4910, 4.0
    %v4913 = vsel %vm85, %v4911, -inf
    %4914 = vmax.xlane.f32.xlu0 %v4913
    %v4915 = vpop.xlane.xlu0 %4914
    %v4916 = vsel %vm85, %v4912, -inf
    %4917 = vmax.xlane.f32.xlu0 %v4916
    %v4918 = vpop.xlane.xlu0 %4917
    %v4919 = vsub.f32 %v4911, %v4915
    %v4920 = vsub.f32 %v4912, %v4918
    %v4921 = vmul.f32 %v4919, 1.442695
    %v4922 = vpow.pop %v4921
    %v4923 = vmul.f32 %v4920, 1.442695
    %v4924 = vpow.pop %v4923
    %v4925 = vsel %vm85, %v4922, 0.0
    %4926 = vadd.xlane.f32.xlu0 %v4925
    %v4927 = vpop.xlane.xlu0 %4926
    %v4928 = vsel %vm85, %v4924, 0.0
    %4929 = vadd.xlane.f32.xlu0 %v4928
    %v4930 = vpop.xlane.xlu0 %4929
    %v4931 = vrcp.pop %v4927
    %v4932 = vmul.f32 1.0, %v4931
    %v4933 = vrcp.pop %v4930
    %v4934 = vmul.f32 1.0, %v4933
    %v4935 = vmul.f32 %v4922, %v4932
    %v4936 = vmul.f32 %v4924, %v4934
    %v4937 = vadd.f32 %v4255, %v4935
    %v4938 = vadd.f32 %v4256, %v4936
    %v4940 = vsel %vm85, %v2258, 0
    %v4943 = vsel %vm85, %v2263, 0
    %v4946 = vsel %vm85, %v2853, 0
    %v4949 = vsel %vm85, %v2854, 0
    %4951 = vmatprep.subr.mxu0 0.0
    %4952 = vmatpush1.xpose.msra.mxu0 0.0
    %4953 = vmatprep.subr.mxu0 0.0
    %4954 = vmatpush1.xpose.msra.mxu0 0.0
    %4955 = vmatprep.subr.mxu0 0.0
    %4956 = vmatpush1.xpose.msra.mxu0 0.0
    %4957 = vmatprep.subr.mxu0 0.0
    %4958 = vmatpush1.xpose.msra.mxu0 0.0
    %4959 = vmatprep.subr.mxu0 0.0
    %4960 = vmatpush1.xpose.msra.mxu0 0.0
    %4961 = vmatprep.subr.mxu0 0.0
    %4962 = vmatpush1.xpose.msra.mxu0 0.0
    %4963 = vmatprep.subr.mxu0 0.0
    %4964 = vmatpush1.xpose.msra.mxu0 0.0
    %4965 = vmatprep.subr.mxu0 0.0
    %4966 = vmatpush1.xpose.msra.mxu0 0.0
    %4967 = vmatprep.subr.mxu0 0.0
    %4968 = vmatpush1.xpose.msra.mxu0 0.0
    %4969 = vmatprep.subr.mxu0 0.0
    %4970 = vmatpush1.xpose.msra.mxu0 0.0
    %4971 = vmatprep.subr.mxu0 0.0
    %4972 = vmatpush1.xpose.msra.mxu0 0.0
    %4973 = vmatprep.subr.mxu0 0.0
    %4974 = vmatpush1.xpose.msra.mxu0 0.0
    %4975 = vmatprep.subr.mxu0 0.0
    %4976 = vmatpush1.xpose.msra.mxu0 0.0
    %4977 = vmatprep.subr.mxu0 0.0
    %4978 = vmatpush1.xpose.msra.mxu0 0.0
    %4979 = vmatprep.subr.mxu0 0.0
    %4980 = vmatpush1.xpose.msra.mxu0 %v4949
    %4981 = vmatprep.subr.mxu0 0.0
    %4982 = vmatpush1.xpose.msra.mxu0 %v4946
    %4983 = vmatprep.subr.mxu0 0.0
    %4984 = vmatpush2.xpose.msra.mxu0 0.0
    %4985 = vmatprep.subr.mxu0 0.0
    %4986 = vmatpush2.xpose.msra.mxu0 0.0
    %4987 = vmatprep.subr.mxu0 0.0
    %4988 = vmatpush2.xpose.msra.mxu0 0.0
    %4989 = vmatprep.subr.mxu0 0.0
    %4990 = vmatpush2.xpose.msra.mxu0 0.0
    %4991 = vmatprep.subr.mxu0 0.0
    %4992 = vmatpush2.xpose.msra.mxu0 0.0
    %4993 = vmatprep.subr.mxu0 0.0
    %4994 = vmatpush2.xpose.msra.mxu0 0.0
    %4995 = vmatprep.subr.mxu0 0.0
    %4996 = vmatpush2.xpose.msra.mxu0 0.0
    %4997 = vmatprep.subr.mxu0 0.0
    %4998 = vmatpush2.xpose.msra.mxu0 0.0
    %4999 = vmatprep.subr.mxu0 0.0
    %5000 = vmatpush2.xpose.msra.mxu0 0.0
    %5001 = vmatprep.subr.mxu0 0.0
    %5002 = vmatpush2.xpose.msra.mxu0 0.0
    %5003 = vmatprep.subr.mxu0 0.0
    %5004 = vmatpush2.xpose.msra.mxu0 0.0
    %5005 = vmatprep.subr.mxu0 0.0
    %5006 = vmatpush2.xpose.msra.mxu0 0.0
    %5007 = vmatprep.subr.mxu0 0.0
    %5008 = vmatpush2.xpose.msra.mxu0 0.0
    %5009 = vmatprep.subr.mxu0 0.0
    %5010 = vmatpush2.xpose.msra.mxu0 0.0
    %5011 = vmatprep.subr.mxu0 0.0
    %5012 = vmatpush2.xpose.msra.mxu0 0.0
    %5013 = vmatprep.subr.mxu0 0.0
    %5014 = vmatpush2.xpose.msra.mxu0 0.0
    %5015 = vmatprep.mubr.f32.mxu0 0.0
    %5016 = vmatmul.mubr.f32.gmra.mxu0 %v4940
    %v5017 = vpop.f32.mrf.mxu0
    %v5018 = vadd.f32 0.0, %v5017
    %v5019 = vpop.f32.mrf.mxu0
    %5020 = vmatprep.mubr.f32.mxu0 0.0
    %5021 = vmatmul.mubr.f32.gmra.mxu0 %v4943
    %v5022 = vpop.f32.mrf.mxu0
    %v5023 = vadd.f32 0.0, %v5022
    %v5024 = vpop.f32.mrf.mxu0
    %5025 = vdwg.mxu0
    %v5026 = vmul.f32 %v5018, %v2966
    %v5027 = vmul.f32 %v5023, %v2966
    %v5028 = vmul.f32 %v2258, %v2973
    %v5029 = vmul.f32 %v2263, %v2973
    %v5030 = vsel %vm85, %v5028, 0.0
    %5031 = vadd.xlane.f32.xlu0 %v5030
    %v5032 = vpop.xlane.xlu0 %5031
    %v5033 = vsel %vm85, %v5029, 0.0
    %5034 = vadd.xlane.f32.xlu0 %v5033
    %v5035 = vpop.xlane.xlu0 %5034
    %v5036 = vmul.f32 %v5032, %v2983
    %v5037 = vmul.f32 %v5035, %v2983
    %v5038 = vxor.u32 %v5036, 2147483648
    %v5039 = vxor.u32 %v5037, 2147483648
    %v5040 = vmul.f32 %v5038, 1.442695
    %v5041 = vpow.pop %v5040
    %v5042 = vmul.f32 %v5039, 1.442695
    %v5043 = vpow.pop %v5042
    %v5044 = vadd.f32 %v5041, 1.0
    %v5045 = vadd.f32 %v5043, 1.0
    %v5046 = vrcp.pop %v5044
    %v5047 = vmul.f32 1.0, %v5046
    %v5048 = vrcp.pop %v5045
    %v5049 = vmul.f32 1.0, %v5048
    %v5050 = vmul.f32 %v2258, %v3002
    %v5051 = vmul.f32 %v2263, %v3002
    %v5052 = vsel %vm85, %v5050, 0.0
    %5053 = vadd.xlane.f32.xlu0 %v5052
    %v5054 = vpop.xlane.xlu0 %5053
    %v5055 = vsel %vm85, %v5051, 0.0
    %5056 = vadd.xlane.f32.xlu0 %v5055
    %v5057 = vpop.xlane.xlu0 %5056
    %v5058 = vmul.f32 %v5054, %v2983
    %v5059 = vmul.f32 %v5057, %v2983
    %v5060 = vxor.u32 %v5058, 2147483648
    %v5061 = vxor.u32 %v5059, 2147483648
    %v5062 = vmul.f32 %v5060, 1.442695
    %v5063 = vpow.pop %v5062
    %v5064 = vmul.f32 %v5061, 1.442695
    %v5065 = vpow.pop %v5064
    %v5066 = vadd.f32 %v5063, 1.0
    %v5067 = vadd.f32 %v5065, 1.0
    %v5068 = vrcp.pop %v5066
    %v5069 = vmul.f32 1.0, %v5068
    %v5070 = vrcp.pop %v5067
    %v5071 = vmul.f32 1.0, %v5070
    %v5072 = vadd.f32 %v5026, %v5047
    %v5073 = vadd.f32 %v5027, %v5049
    %v5074 = vmul.f32 %v5072, %v5072
    %v5075 = vmul.f32 %v5073, %v5073
    %v5076 = vrcp.pop %v5069
    %v5077 = vmul.f32 -10.0, %v5076
    %v5078 = vrcp.pop %v5071
    %v5079 = vmul.f32 -10.0, %v5078
    %v5080 = vmul.f32 %v5074, %v5077
    %v5081 = vmul.f32 %v5075, %v5079
    %v5082 = vmul.f32 %v5080, 1.442695
    %v5083 = vpow.pop %v5082
    %v5084 = vmul.f32 %v5081, 1.442695
    %v5085 = vpow.pop %v5084
    %v5086 = vmul.f32 %v5083, 4.0
    %v5087 = vmul.f32 %v5085, 4.0
    %v5088 = vsel %vm85, %v5086, -inf
    %5089 = vmax.xlane.f32.xlu0 %v5088
    %v5090 = vpop.xlane.xlu0 %5089
    %v5091 = vsel %vm85, %v5087, -inf
    %5092 = vmax.xlane.f32.xlu0 %v5091
    %v5093 = vpop.xlane.xlu0 %5092
    %v5094 = vsub.f32 %v5086, %v5090
    %v5095 = vsub.f32 %v5087, %v5093
    %v5096 = vmul.f32 %v5094, 1.442695
    %v5097 = vpow.pop %v5096
    %v5098 = vmul.f32 %v5095, 1.442695
    %v5099 = vpow.pop %v5098
    %v5100 = vsel %vm85, %v5097, 0.0
    %5101 = vadd.xlane.f32.xlu0 %v5100
    %v5102 = vpop.xlane.xlu0 %5101
    %v5103 = vsel %vm85, %v5099, 0.0
    %5104 = vadd.xlane.f32.xlu0 %v5103
    %v5105 = vpop.xlane.xlu0 %5104
    %v5106 = vrcp.pop %v5102
    %v5107 = vmul.f32 1.0, %v5106
    %v5108 = vrcp.pop %v5105
    %v5109 = vmul.f32 1.0, %v5108
    %v5110 = vmul.f32 %v5097, %v5107
    %v5111 = vmul.f32 %v5099, %v5109
    %v5112 = vadd.f32 %v4430, %v5110
    %v5113 = vadd.f32 %v4431, %v5111
    %v5115 = vsel %vm85, %v2348, 0
    %v5118 = vsel %vm85, %v2353, 0
    %5120 = vmatprep.subr.mxu0 0.0
    %5121 = vmatpush1.xpose.msra.mxu0 0.0
    %5122 = vmatprep.subr.mxu0 0.0
    %5123 = vmatpush1.xpose.msra.mxu0 0.0
    %5124 = vmatprep.subr.mxu0 0.0
    %5125 = vmatpush1.xpose.msra.mxu0 0.0
    %5126 = vmatprep.subr.mxu0 0.0
    %5127 = vmatpush1.xpose.msra.mxu0 0.0
    %5128 = vmatprep.subr.mxu0 0.0
    %5129 = vmatpush1.xpose.msra.mxu0 0.0
    %5130 = vmatprep.subr.mxu0 0.0
    %5131 = vmatpush1.xpose.msra.mxu0 0.0
    %5132 = vmatprep.subr.mxu0 0.0
    %5133 = vmatpush1.xpose.msra.mxu0 0.0
    %5134 = vmatprep.subr.mxu0 0.0
    %5135 = vmatpush1.xpose.msra.mxu0 0.0
    %5136 = vmatprep.subr.mxu0 0.0
    %5137 = vmatpush1.xpose.msra.mxu0 0.0
    %5138 = vmatprep.subr.mxu0 0.0
    %5139 = vmatpush1.xpose.msra.mxu0 0.0
    %5140 = vmatprep.subr.mxu0 0.0
    %5141 = vmatpush1.xpose.msra.mxu0 0.0
    %5142 = vmatprep.subr.mxu0 0.0
    %5143 = vmatpush1.xpose.msra.mxu0 0.0
    %5144 = vmatprep.subr.mxu0 0.0
    %5145 = vmatpush1.xpose.msra.mxu0 0.0
    %5146 = vmatprep.subr.mxu0 0.0
    %5147 = vmatpush1.xpose.msra.mxu0 0.0
    %5148 = vmatprep.subr.mxu0 0.0
    %5149 = vmatpush1.xpose.msra.mxu0 %v4949
    %5150 = vmatprep.subr.mxu0 0.0
    %5151 = vmatpush1.xpose.msra.mxu0 %v4946
    %5152 = vmatprep.subr.mxu0 0.0
    %5153 = vmatpush2.xpose.msra.mxu0 0.0
    %5154 = vmatprep.subr.mxu0 0.0
    %5155 = vmatpush2.xpose.msra.mxu0 0.0
    %5156 = vmatprep.subr.mxu0 0.0
    %5157 = vmatpush2.xpose.msra.mxu0 0.0
    %5158 = vmatprep.subr.mxu0 0.0
    %5159 = vmatpush2.xpose.msra.mxu0 0.0
    %5160 = vmatprep.subr.mxu0 0.0
    %5161 = vmatpush2.xpose.msra.mxu0 0.0
    %5162 = vmatprep.subr.mxu0 0.0
    %5163 = vmatpush2.xpose.msra.mxu0 0.0
    %5164 = vmatprep.subr.mxu0 0.0
    %5165 = vmatpush2.xpose.msra.mxu0 0.0
    %5166 = vmatprep.subr.mxu0 0.0
    %5167 = vmatpush2.xpose.msra.mxu0 0.0
    %5168 = vmatprep.subr.mxu0 0.0
    %5169 = vmatpush2.xpose.msra.mxu0 0.0
    %5170 = vmatprep.subr.mxu0 0.0
    %5171 = vmatpush2.xpose.msra.mxu0 0.0
    %5172 = vmatprep.subr.mxu0 0.0
    %5173 = vmatpush2.xpose.msra.mxu0 0.0
    %5174 = vmatprep.subr.mxu0 0.0
    %5175 = vmatpush2.xpose.msra.mxu0 0.0
    %5176 = vmatprep.subr.mxu0 0.0
    %5177 = vmatpush2.xpose.msra.mxu0 0.0
    %5178 = vmatprep.subr.mxu0 0.0
    %5179 = vmatpush2.xpose.msra.mxu0 0.0
    %5180 = vmatprep.subr.mxu0 0.0
    %5181 = vmatpush2.xpose.msra.mxu0 0.0
    %5182 = vmatprep.subr.mxu0 0.0
    %5183 = vmatpush2.xpose.msra.mxu0 0.0
    %5184 = vmatprep.mubr.f32.mxu0 0.0
    %5185 = vmatmul.mubr.f32.gmra.mxu0 %v5115
    %v5186 = vpop.f32.mrf.mxu0
    %v5187 = vadd.f32 0.0, %v5186
    %v5188 = vpop.f32.mrf.mxu0
    %5189 = vmatprep.mubr.f32.mxu0 0.0
    %5190 = vmatmul.mubr.f32.gmra.mxu0 %v5118
    %v5191 = vpop.f32.mrf.mxu0
    %v5192 = vadd.f32 0.0, %v5191
    %v5193 = vpop.f32.mrf.mxu0
    %5194 = vdwg.mxu0
    %v5195 = vmul.f32 %v5187, %v2966
    %v5196 = vmul.f32 %v5192, %v2966
    %v5197 = vmul.f32 %v2348, %v2973
    %v5198 = vmul.f32 %v2353, %v2973
    %v5199 = vsel %vm85, %v5197, 0.0
    %5200 = vadd.xlane.f32.xlu0 %v5199
    %v5201 = vpop.xlane.xlu0 %5200
    %v5202 = vsel %vm85, %v5198, 0.0
    %5203 = vadd.xlane.f32.xlu0 %v5202
    %v5204 = vpop.xlane.xlu0 %5203
    %v5205 = vmul.f32 %v5201, %v2983
    %v5206 = vmul.f32 %v5204, %v2983
    %v5207 = vxor.u32 %v5205, 2147483648
    %v5208 = vxor.u32 %v5206, 2147483648
    %v5209 = vmul.f32 %v5207, 1.442695
    %v5210 = vpow.pop %v5209
    %v5211 = vmul.f32 %v5208, 1.442695
    %v5212 = vpow.pop %v5211
    %v5213 = vadd.f32 %v5210, 1.0
    %v5214 = vadd.f32 %v5212, 1.0
    %v5215 = vrcp.pop %v5213
    %v5216 = vmul.f32 1.0, %v5215
    %v5217 = vrcp.pop %v5214
    %v5218 = vmul.f32 1.0, %v5217
    %v5219 = vmul.f32 %v2348, %v3002
    %v5220 = vmul.f32 %v2353, %v3002
    %v5221 = vsel %vm85, %v5219, 0.0
    %5222 = vadd.xlane.f32.xlu0 %v5221
    %v5223 = vpop.xlane.xlu0 %5222
    %v5224 = vsel %vm85, %v5220, 0.0
    %5225 = vadd.xlane.f32.xlu0 %v5224
    %v5226 = vpop.xlane.xlu0 %5225
    %v5227 = vmul.f32 %v5223, %v2983
    %v5228 = vmul.f32 %v5226, %v2983
    %v5229 = vxor.u32 %v5227, 2147483648
    %v5230 = vxor.u32 %v5228, 2147483648
    %v5231 = vmul.f32 %v5229, 1.442695
    %v5232 = vpow.pop %v5231
    %v5233 = vmul.f32 %v5230, 1.442695
    %v5234 = vpow.pop %v5233
    %v5235 = vadd.f32 %v5232, 1.0
    %v5236 = vadd.f32 %v5234, 1.0
    %v5237 = vrcp.pop %v5235
    %v5238 = vmul.f32 1.0, %v5237
    %v5239 = vrcp.pop %v5236
    %v5240 = vmul.f32 1.0, %v5239
    %v5241 = vadd.f32 %v5195, %v5216
    %v5242 = vadd.f32 %v5196, %v5218
    %v5243 = vmul.f32 %v5241, %v5241
    %v5244 = vmul.f32 %v5242, %v5242
    %v5245 = vrcp.pop %v5238
    %v5246 = vmul.f32 -10.0, %v5245
    %v5247 = vrcp.pop %v5240
    %v5248 = vmul.f32 -10.0, %v5247
    %v5249 = vmul.f32 %v5243, %v5246
    %v5250 = vmul.f32 %v5244, %v5248
    %v5251 = vmul.f32 %v5249, 1.442695
    %v5252 = vpow.pop %v5251
    %v5253 = vmul.f32 %v5250, 1.442695
    %v5254 = vpow.pop %v5253
    %v5255 = vmul.f32 %v5252, 4.0
    %v5256 = vmul.f32 %v5254, 4.0
    %v5257 = vsel %vm85, %v5255, -inf
    %5258 = vmax.xlane.f32.xlu0 %v5257
    %v5259 = vpop.xlane.xlu0 %5258
    %v5260 = vsel %vm85, %v5256, -inf
    %5261 = vmax.xlane.f32.xlu0 %v5260
    %v5262 = vpop.xlane.xlu0 %5261
    %v5263 = vsub.f32 %v5255, %v5259
    %v5264 = vsub.f32 %v5256, %v5262
    %v5265 = vmul.f32 %v5263, 1.442695
    %v5266 = vpow.pop %v5265
    %v5267 = vmul.f32 %v5264, 1.442695
    %v5268 = vpow.pop %v5267
    %v5269 = vsel %vm85, %v5266, 0.0
    %5270 = vadd.xlane.f32.xlu0 %v5269
    %v5271 = vpop.xlane.xlu0 %5270
    %v5272 = vsel %vm85, %v5268, 0.0
    %5273 = vadd.xlane.f32.xlu0 %v5272
    %v5274 = vpop.xlane.xlu0 %5273
    %v5275 = vrcp.pop %v5271
    %v5276 = vmul.f32 1.0, %v5275
    %v5277 = vrcp.pop %v5274
    %v5278 = vmul.f32 1.0, %v5277
    %v5279 = vmul.f32 %v5266, %v5276
    %v5280 = vmul.f32 %v5268, %v5278
    %v5281 = vadd.f32 %v4599, %v5279
    %v5282 = vadd.f32 %v4600, %v5280
    %v5284 = vsel %vm85, %v2588, 0
    %v5287 = vsel %vm85, %v2593, 0
    %5289 = vmatprep.subr.mxu0 0.0
    %5290 = vmatpush1.xpose.msra.mxu0 0.0
    %5291 = vmatprep.subr.mxu0 0.0
    %5292 = vmatpush1.xpose.msra.mxu0 0.0
    %5293 = vmatprep.subr.mxu0 0.0
    %5294 = vmatpush1.xpose.msra.mxu0 0.0
    %5295 = vmatprep.subr.mxu0 0.0
    %5296 = vmatpush1.xpose.msra.mxu0 0.0
    %5297 = vmatprep.subr.mxu0 0.0
    %5298 = vmatpush1.xpose.msra.mxu0 0.0
    %5299 = vmatprep.subr.mxu0 0.0
    %5300 = vmatpush1.xpose.msra.mxu0 0.0
    %5301 = vmatprep.subr.mxu0 0.0
    %5302 = vmatpush1.xpose.msra.mxu0 0.0
    %5303 = vmatprep.subr.mxu0 0.0
    %5304 = vmatpush1.xpose.msra.mxu0 0.0
    %5305 = vmatprep.subr.mxu0 0.0
    %5306 = vmatpush1.xpose.msra.mxu0 0.0
    %5307 = vmatprep.subr.mxu0 0.0
    %5308 = vmatpush1.xpose.msra.mxu0 0.0
    %5309 = vmatprep.subr.mxu0 0.0
    %5310 = vmatpush1.xpose.msra.mxu0 0.0
    %5311 = vmatprep.subr.mxu0 0.0
    %5312 = vmatpush1.xpose.msra.mxu0 0.0
    %5313 = vmatprep.subr.mxu0 0.0
    %5314 = vmatpush1.xpose.msra.mxu0 0.0
    %5315 = vmatprep.subr.mxu0 0.0
    %5316 = vmatpush1.xpose.msra.mxu0 0.0
    %5317 = vmatprep.subr.mxu0 0.0
    %5318 = vmatpush1.xpose.msra.mxu0 %v4949
    %5319 = vmatprep.subr.mxu0 0.0
    %5320 = vmatpush1.xpose.msra.mxu0 %v4946
    %5321 = vmatprep.subr.mxu0 0.0
    %5322 = vmatpush2.xpose.msra.mxu0 0.0
    %5323 = vmatprep.subr.mxu0 0.0
    %5324 = vmatpush2.xpose.msra.mxu0 0.0
    %5325 = vmatprep.subr.mxu0 0.0
    %5326 = vmatpush2.xpose.msra.mxu0 0.0
    %5327 = vmatprep.subr.mxu0 0.0
    %5328 = vmatpush2.xpose.msra.mxu0 0.0
    %5329 = vmatprep.subr.mxu0 0.0
    %5330 = vmatpush2.xpose.msra.mxu0 0.0
    %5331 = vmatprep.subr.mxu0 0.0
    %5332 = vmatpush2.xpose.msra.mxu0 0.0
    %5333 = vmatprep.subr.mxu0 0.0
    %5334 = vmatpush2.xpose.msra.mxu0 0.0
    %5335 = vmatprep.subr.mxu0 0.0
    %5336 = vmatpush2.xpose.msra.mxu0 0.0
    %5337 = vmatprep.subr.mxu0 0.0
    %5338 = vmatpush2.xpose.msra.mxu0 0.0
    %5339 = vmatprep.subr.mxu0 0.0
    %5340 = vmatpush2.xpose.msra.mxu0 0.0
    %5341 = vmatprep.subr.mxu0 0.0
    %5342 = vmatpush2.xpose.msra.mxu0 0.0
    %5343 = vmatprep.subr.mxu0 0.0
    %5344 = vmatpush2.xpose.msra.mxu0 0.0
    %5345 = vmatprep.subr.mxu0 0.0
    %5346 = vmatpush2.xpose.msra.mxu0 0.0
    %5347 = vmatprep.subr.mxu0 0.0
    %5348 = vmatpush2.xpose.msra.mxu0 0.0
    %5349 = vmatprep.subr.mxu0 0.0
    %5350 = vmatpush2.xpose.msra.mxu0 0.0
    %5351 = vmatprep.subr.mxu0 0.0
    %5352 = vmatpush2.xpose.msra.mxu0 0.0
    %5353 = vmatprep.mubr.f32.mxu0 0.0
    %5354 = vmatmul.mubr.f32.gmra.mxu0 %v5284
    %v5355 = vpop.f32.mrf.mxu0
    %v5356 = vadd.f32 0.0, %v5355
    %v5357 = vpop.f32.mrf.mxu0
    %5358 = vmatprep.mubr.f32.mxu0 0.0
    %5359 = vmatmul.mubr.f32.gmra.mxu0 %v5287
    %v5360 = vpop.f32.mrf.mxu0
    %v5361 = vadd.f32 0.0, %v5360
    %v5362 = vpop.f32.mrf.mxu0
    %5363 = vdwg.mxu0
    %v5364 = vmul.f32 %v5356, %v2966
    %v5365 = vmul.f32 %v5361, %v2966
    %v5366 = vmul.f32 %v2588, %v2973
    %v5367 = vmul.f32 %v2593, %v2973
    %v5368 = vsel %vm85, %v5366, 0.0
    %5369 = vadd.xlane.f32.xlu0 %v5368
    %v5370 = vpop.xlane.xlu0 %5369
    %v5371 = vsel %vm85, %v5367, 0.0
    %5372 = vadd.xlane.f32.xlu0 %v5371
    %v5373 = vpop.xlane.xlu0 %5372
    %v5374 = vmul.f32 %v5370, %v2983
    %v5375 = vmul.f32 %v5373, %v2983
    %v5376 = vxor.u32 %v5374, 2147483648
    %v5377 = vxor.u32 %v5375, 2147483648
    %v5378 = vmul.f32 %v5376, 1.442695
    %v5379 = vpow.pop %v5378
    %v5380 = vmul.f32 %v5377, 1.442695
    %v5381 = vpow.pop %v5380
    %v5382 = vadd.f32 %v5379, 1.0
    %v5383 = vadd.f32 %v5381, 1.0
    %v5384 = vrcp.pop %v5382
    %v5385 = vmul.f32 1.0, %v5384
    %v5386 = vrcp.pop %v5383
    %v5387 = vmul.f32 1.0, %v5386
    %v5388 = vmul.f32 %v2588, %v3002
    %v5389 = vmul.f32 %v2593, %v3002
    %v5390 = vsel %vm85, %v5388, 0.0
    %5391 = vadd.xlane.f32.xlu0 %v5390
    %v5392 = vpop.xlane.xlu0 %5391
    %v5393 = vsel %vm85, %v5389, 0.0
    %5394 = vadd.xlane.f32.xlu0 %v5393
    %v5395 = vpop.xlane.xlu0 %5394
    %v5396 = vmul.f32 %v5392, %v2983
    %v5397 = vmul.f32 %v5395, %v2983
    %v5398 = vxor.u32 %v5396, 2147483648
    %v5399 = vxor.u32 %v5397, 2147483648
    %v5400 = vmul.f32 %v5398, 1.442695
    %v5401 = vpow.pop %v5400
    %v5402 = vmul.f32 %v5399, 1.442695
    %v5403 = vpow.pop %v5402
    %v5404 = vadd.f32 %v5401, 1.0
    %v5405 = vadd.f32 %v5403, 1.0
    %v5406 = vrcp.pop %v5404
    %v5407 = vmul.f32 1.0, %v5406
    %v5408 = vrcp.pop %v5405
    %v5409 = vmul.f32 1.0, %v5408
    %v5410 = vadd.f32 %v5364, %v5385
    %v5411 = vadd.f32 %v5365, %v5387
    %v5412 = vmul.f32 %v5410, %v5410
    %v5413 = vmul.f32 %v5411, %v5411
    %v5414 = vrcp.pop %v5407
    %v5415 = vmul.f32 -10.0, %v5414
    %v5416 = vrcp.pop %v5409
    %v5417 = vmul.f32 -10.0, %v5416
    %v5418 = vmul.f32 %v5412, %v5415
    %v5419 = vmul.f32 %v5413, %v5417
    %v5420 = vmul.f32 %v5418, 1.442695
    %v5421 = vpow.pop %v5420
    %v5422 = vmul.f32 %v5419, 1.442695
    %v5423 = vpow.pop %v5422
    %v5424 = vmul.f32 %v5421, 4.0
    %v5425 = vmul.f32 %v5423, 4.0
    %v5426 = vsel %vm85, %v5424, -inf
    %5427 = vmax.xlane.f32.xlu0 %v5426
    %v5428 = vpop.xlane.xlu0 %5427
    %v5429 = vsel %vm85, %v5425, -inf
    %5430 = vmax.xlane.f32.xlu0 %v5429
    %v5431 = vpop.xlane.xlu0 %5430
    %v5432 = vsub.f32 %v5424, %v5428
    %v5433 = vsub.f32 %v5425, %v5431
    %v5434 = vmul.f32 %v5432, 1.442695
    %v5435 = vpow.pop %v5434
    %v5436 = vmul.f32 %v5433, 1.442695
    %v5437 = vpow.pop %v5436
    %v5438 = vsel %vm85, %v5435, 0.0
    %5439 = vadd.xlane.f32.xlu0 %v5438
    %v5440 = vpop.xlane.xlu0 %5439
    %v5441 = vsel %vm85, %v5437, 0.0
    %5442 = vadd.xlane.f32.xlu0 %v5441
    %v5443 = vpop.xlane.xlu0 %5442
    %v5444 = vrcp.pop %v5440
    %v5445 = vmul.f32 1.0, %v5444
    %v5446 = vrcp.pop %v5443
    %v5447 = vmul.f32 1.0, %v5446
    %v5448 = vmul.f32 %v5435, %v5445
    %v5449 = vmul.f32 %v5437, %v5447
    %v5450 = vadd.f32 %v4768, %v5448
    %v5451 = vadd.f32 %v4769, %v5449
    %v5453 = vsel %vm85, %v2755, 0
    %v5456 = vsel %vm85, %v2760, 0
    %5458 = vmatprep.subr.mxu0 0.0
    %5459 = vmatpush1.xpose.msra.mxu0 0.0
    %5460 = vmatprep.subr.mxu0 0.0
    %5461 = vmatpush1.xpose.msra.mxu0 0.0
    %5462 = vmatprep.subr.mxu0 0.0
    %5463 = vmatpush1.xpose.msra.mxu0 0.0
    %5464 = vmatprep.subr.mxu0 0.0
    %5465 = vmatpush1.xpose.msra.mxu0 0.0
    %5466 = vmatprep.subr.mxu0 0.0
    %5467 = vmatpush1.xpose.msra.mxu0 0.0
    %5468 = vmatprep.subr.mxu0 0.0
    %5469 = vmatpush1.xpose.msra.mxu0 0.0
    %5470 = vmatprep.subr.mxu0 0.0
    %5471 = vmatpush1.xpose.msra.mxu0 0.0
    %5472 = vmatprep.subr.mxu0 0.0
    %5473 = vmatpush1.xpose.msra.mxu0 0.0
    %5474 = vmatprep.subr.mxu0 0.0
    %5475 = vmatpush1.xpose.msra.mxu0 0.0
    %5476 = vmatprep.subr.mxu0 0.0
    %5477 = vmatpush1.xpose.msra.mxu0 0.0
    %5478 = vmatprep.subr.mxu0 0.0
    %5479 = vmatpush1.xpose.msra.mxu0 0.0
    %5480 = vmatprep.subr.mxu0 0.0
    %5481 = vmatpush1.xpose.msra.mxu0 0.0
    %5482 = vmatprep.subr.mxu0 0.0
    %5483 = vmatpush1.xpose.msra.mxu0 0.0
    %5484 = vmatprep.subr.mxu0 0.0
    %5485 = vmatpush1.xpose.msra.mxu0 0.0
    %5486 = vmatprep.subr.mxu0 0.0
    %5487 = vmatpush1.xpose.msra.mxu0 %v4949
    %5488 = vmatprep.subr.mxu0 0.0
    %5489 = vmatpush1.xpose.msra.mxu0 %v4946
    %5490 = vmatprep.subr.mxu0 0.0
    %5491 = vmatpush2.xpose.msra.mxu0 0.0
    %5492 = vmatprep.subr.mxu0 0.0
    %5493 = vmatpush2.xpose.msra.mxu0 0.0
    %5494 = vmatprep.subr.mxu0 0.0
    %5495 = vmatpush2.xpose.msra.mxu0 0.0
    %5496 = vmatprep.subr.mxu0 0.0
    %5497 = vmatpush2.xpose.msra.mxu0 0.0
    %5498 = vmatprep.subr.mxu0 0.0
    %5499 = vmatpush2.xpose.msra.mxu0 0.0
    %5500 = vmatprep.subr.mxu0 0.0
    %5501 = vmatpush2.xpose.msra.mxu0 0.0
    %5502 = vmatprep.subr.mxu0 0.0
    %5503 = vmatpush2.xpose.msra.mxu0 0.0
    %5504 = vmatprep.subr.mxu0 0.0
    %5505 = vmatpush2.xpose.msra.mxu0 0.0
    %5506 = vmatprep.subr.mxu0 0.0
    %5507 = vmatpush2.xpose.msra.mxu0 0.0
    %5508 = vmatprep.subr.mxu0 0.0
    %5509 = vmatpush2.xpose.msra.mxu0 0.0
    %5510 = vmatprep.subr.mxu0 0.0
    %5511 = vmatpush2.xpose.msra.mxu0 0.0
    %5512 = vmatprep.subr.mxu0 0.0
    %5513 = vmatpush2.xpose.msra.mxu0 0.0
    %5514 = vmatprep.subr.mxu0 0.0
    %5515 = vmatpush2.xpose.msra.mxu0 0.0
    %5516 = vmatprep.subr.mxu0 0.0
    %5517 = vmatpush2.xpose.msra.mxu0 0.0
    %5518 = vmatprep.subr.mxu0 0.0
    %5519 = vmatpush2.xpose.msra.mxu0 0.0
    %5520 = vmatprep.subr.mxu0 0.0
    %5521 = vmatpush2.xpose.msra.mxu0 0.0
    %5522 = vmatprep.mubr.f32.mxu0 0.0
    %5523 = vmatmul.mubr.f32.gmra.mxu0 %v5453
    %v5524 = vpop.f32.mrf.mxu0
    %v5525 = vadd.f32 0.0, %v5524
    %v5526 = vpop.f32.mrf.mxu0
    %5527 = vmatprep.mubr.f32.mxu0 0.0
    %5528 = vmatmul.mubr.f32.gmra.mxu0 %v5456
    %v5529 = vpop.f32.mrf.mxu0
    %v5530 = vadd.f32 0.0, %v5529
    %v5531 = vpop.f32.mrf.mxu0
    %5532 = vdwg.mxu0
    %v5533 = vmul.f32 %v5525, %v2966
    %v5534 = vmul.f32 %v5530, %v2966
    %v5535 = vmul.f32 %v2755, %v2973
    %v5536 = vmul.f32 %v2760, %v2973
    %v5537 = vsel %vm85, %v5535, 0.0
    %5538 = vadd.xlane.f32.xlu0 %v5537
    %v5539 = vpop.xlane.xlu0 %5538
    %v5540 = vsel %vm85, %v5536, 0.0
    %5541 = vadd.xlane.f32.xlu0 %v5540
    %v5542 = vpop.xlane.xlu0 %5541
    %v5543 = vmul.f32 %v5539, %v2983
    %v5544 = vmul.f32 %v5542, %v2983
    %v5545 = vxor.u32 %v5543, 2147483648
    %v5546 = vxor.u32 %v5544, 2147483648
    %v5547 = vmul.f32 %v5545, 1.442695
    %v5548 = vpow.pop %v5547
    %v5549 = vmul.f32 %v5546, 1.442695
    %v5550 = vpow.pop %v5549
    %v5551 = vadd.f32 %v5548, 1.0
    %v5552 = vadd.f32 %v5550, 1.0
    %v5553 = vrcp.pop %v5551
    %v5554 = vmul.f32 1.0, %v5553
    %v5555 = vrcp.pop %v5552
    %v5556 = vmul.f32 1.0, %v5555
    %v5557 = vmul.f32 %v2755, %v3002
    %v5558 = vmul.f32 %v2760, %v3002
    %v5559 = vsel %vm85, %v5557, 0.0
    %5560 = vadd.xlane.f32.xlu0 %v5559
    %v5561 = vpop.xlane.xlu0 %5560
    %v5562 = vsel %vm85, %v5558, 0.0
    %5563 = vadd.xlane.f32.xlu0 %v5562
    %v5564 = vpop.xlane.xlu0 %5563
    %v5565 = vmul.f32 %v5561, %v2983
    %v5566 = vmul.f32 %v5564, %v2983
    %v5567 = vxor.u32 %v5565, 2147483648
    %v5568 = vxor.u32 %v5566, 2147483648
    %v5569 = vmul.f32 %v5567, 1.442695
    %v5570 = vpow.pop %v5569
    %v5571 = vmul.f32 %v5568, 1.442695
    %v5572 = vpow.pop %v5571
    %v5573 = vadd.f32 %v5570, 1.0
    %v5574 = vadd.f32 %v5572, 1.0
    %v5575 = vrcp.pop %v5573
    %v5576 = vmul.f32 1.0, %v5575
    %v5577 = vrcp.pop %v5574
    %v5578 = vmul.f32 1.0, %v5577
    %v5579 = vadd.f32 %v5533, %v5554
    %v5580 = vadd.f32 %v5534, %v5556
    %v5581 = vmul.f32 %v5579, %v5579
    %v5582 = vmul.f32 %v5580, %v5580
    %v5583 = vrcp.pop %v5576
    %v5584 = vmul.f32 -10.0, %v5583
    %v5585 = vrcp.pop %v5578
    %v5586 = vmul.f32 -10.0, %v5585
    %v5587 = vmul.f32 %v5581, %v5584
    %v5588 = vmul.f32 %v5582, %v5586
    %v5589 = vmul.f32 %v5587, 1.442695
    %v5590 = vpow.pop %v5589
    %v5591 = vmul.f32 %v5588, 1.442695
    %v5592 = vpow.pop %v5591
    %v5593 = vmul.f32 %v5590, 4.0
    %v5594 = vmul.f32 %v5592, 4.0
    %v5595 = vsel %vm85, %v5593, -inf
    %5596 = vmax.xlane.f32.xlu0 %v5595
    %v5597 = vpop.xlane.xlu0 %5596
    %v5598 = vsel %vm85, %v5594, -inf
    %5599 = vmax.xlane.f32.xlu0 %v5598
    %v5600 = vpop.xlane.xlu0 %5599
    %v5601 = vsub.f32 %v5593, %v5597
    %v5602 = vsub.f32 %v5594, %v5600
    %v5603 = vmul.f32 %v5601, 1.442695
    %v5604 = vpow.pop %v5603
    %v5605 = vmul.f32 %v5602, 1.442695
    %v5606 = vpow.pop %v5605
    %v5607 = vsel %vm85, %v5604, 0.0
    %5608 = vadd.xlane.f32.xlu0 %v5607
    %v5609 = vpop.xlane.xlu0 %5608
    %v5610 = vsel %vm85, %v5606, 0.0
    %5611 = vadd.xlane.f32.xlu0 %v5610
    %v5612 = vpop.xlane.xlu0 %5611
    %v5613 = vrcp.pop %v5609
    %v5614 = vmul.f32 1.0, %v5613
    %v5615 = vrcp.pop %v5612
    %v5616 = vmul.f32 1.0, %v5615
    %v5617 = vmul.f32 %v5604, %v5614
    %v5618 = vmul.f32 %v5606, %v5616
    %v5619 = vadd.f32 %v4937, %v5617
    %v5620 = vadd.f32 %v4938, %v5618
    %v5621 = vmul.f32 %v5112, 1.25
    %v5622 = vmul.f32 %v5113, 1.25
    %v5623 = vmul.f32 %v5281, 1.25
    %v5624 = vmul.f32 %v5282, 1.25
    %v5625 = vmul.f32 %v5450, 1.25
    %v5626 = vmul.f32 %v5451, 1.25
    %v5627 = vmul.f32 %v5619, 1.25
    %v5628 = vmul.f32 %v5620, 1.25
    %v5629 = vld [vmem:[#allocation4] sm:$0xff]
    %v5630 = vld [vmem:[#allocation4 + $0x8] sm:$0xff]
    %v5631 = vld [vmem:[#allocation4 + $0x10] sm:$0xff]
    %v5632 = vld [vmem:[#allocation4 + $0x18] sm:$0xff]
    %v5633 = vld [vmem:[#allocation4 + $0x20] sm:$0xff]
    %v5634 = vld [vmem:[#allocation4 + $0x28] sm:$0xff]
    %v5635 = vld [vmem:[#allocation4 + $0x30] sm:$0xff]
    %v5636 = vld [vmem:[#allocation4 + $0x38] sm:$0xff]
    %vm5637 = vcmask 523264
    %v5639 = vsel %vm5637, %v5629, 0
    %v5642 = vsel %vm5637, %v5630, 0
    %v5645 = vsel %vm5637, %v5631, 0
    %v5648 = vsel %vm5637, %v5632, 0
    %v5651 = vsel %vm5637, %v5633, 0
    %v5654 = vsel %vm5637, %v5634, 0
    %v5657 = vsel %vm5637, %v5635, 0
    %v5660 = vsel %vm5637, %v5636, 0
    %5662 = vmatprep.subr.mxu0 0.0
    %5663 = vmatpush1.msra.mxu0 0.0
    %5664 = vmatprep.subr.mxu0 0.0
    %5665 = vmatpush1.msra.mxu0 0.0
    %5666 = vmatprep.subr.mxu0 0.0
    %5667 = vmatpush1.msra.mxu0 0.0
    %5668 = vmatprep.subr.mxu0 0.0
    %5669 = vmatpush1.msra.mxu0 0.0
    %5670 = vmatprep.subr.mxu0 0.0
    %5671 = vmatpush1.msra.mxu0 0.0
    %5672 = vmatprep.subr.mxu0 0.0
    %5673 = vmatpush1.msra.mxu0 0.0
    %5674 = vmatprep.subr.mxu0 0.0
    %5675 = vmatpush1.msra.mxu0 0.0
    %5676 = vmatprep.subr.mxu0 0.0
    %5677 = vmatpush1.msra.mxu0 0.0
    %5678 = vmatprep.subr.mxu0 0.0
    %5679 = vmatpush1.msra.mxu0 %v5628
    %5680 = vmatprep.subr.mxu0 0.0
    %5681 = vmatpush1.msra.mxu0 %v5627
    %5682 = vmatprep.subr.mxu0 0.0
    %5683 = vmatpush1.msra.mxu0 %v5626
    %5684 = vmatprep.subr.mxu0 0.0
    %5685 = vmatpush1.msra.mxu0 %v5625
    %5686 = vmatprep.subr.mxu0 0.0
    %5687 = vmatpush1.msra.mxu0 %v5624
    %5688 = vmatprep.subr.mxu0 0.0
    %5689 = vmatpush1.msra.mxu0 %v5623
    %5690 = vmatprep.subr.mxu0 0.0
    %5691 = vmatpush1.msra.mxu0 %v5622
    %5692 = vmatprep.subr.mxu0 0.0
    %5693 = vmatpush1.msra.mxu0 %v5621
    %5694 = vmatprep.subr.mxu0 0.0
    %5695 = vmatpush2.msra.mxu0 0.0
    %5696 = vmatprep.subr.mxu0 0.0
    %5697 = vmatpush2.msra.mxu0 0.0
    %5698 = vmatprep.subr.mxu0 0.0
    %5699 = vmatpush2.msra.mxu0 0.0
    %5700 = vmatprep.subr.mxu0 0.0
    %5701 = vmatpush2.msra.mxu0 0.0
    %5702 = vmatprep.subr.mxu0 0.0
    %5703 = vmatpush2.msra.mxu0 0.0
    %5704 = vmatprep.subr.mxu0 0.0
    %5705 = vmatpush2.msra.mxu0 0.0
    %5706 = vmatprep.subr.mxu0 0.0
    %5707 = vmatpush2.msra.mxu0 0.0
    %5708 = vmatprep.subr.mxu0 0.0
    %5709 = vmatpush2.msra.mxu0 0.0
    %5710 = vmatprep.subr.mxu0 0.0
    %5711 = vmatpush2.msra.mxu0 0.0
    %5712 = vmatprep.subr.mxu0 0.0
    %5713 = vmatpush2.msra.mxu0 0.0
    %5714 = vmatprep.subr.mxu0 0.0
    %5715 = vmatpush2.msra.mxu0 0.0
    %5716 = vmatprep.subr.mxu0 0.0
    %5717 = vmatpush2.msra.mxu0 0.0
    %5718 = vmatprep.subr.mxu0 0.0
    %5719 = vmatpush2.msra.mxu0 0.0
    %5720 = vmatprep.subr.mxu0 0.0
    %5721 = vmatpush2.msra.mxu0 0.0
    %5722 = vmatprep.subr.mxu0 0.0
    %5723 = vmatpush2.msra.mxu0 0.0
    %5724 = vmatprep.subr.mxu0 0.0
    %5725 = vmatpush2.msra.mxu0 0.0
    %5726 = vmatprep.mubr.f32.mxu0 0.0
    %5727 = vmatmul.mubr.f32.gmra.mxu0 %v5639
    %v5728 = vpop.f32.mrf.mxu0
    %v5729 = vadd.f32 0.0, %v5728
    %v5730 = vpop.f32.mrf.mxu0
    %5731 = vmatprep.mubr.f32.mxu0 0.0
    %5732 = vmatmul.mubr.f32.gmra.mxu0 %v5642
    %v5733 = vpop.f32.mrf.mxu0
    %v5734 = vadd.f32 0.0, %v5733
    %v5735 = vpop.f32.mrf.mxu0
    %5736 = vmatprep.mubr.f32.mxu0 0.0
    %5737 = vmatmul.mubr.f32.gmra.mxu0 %v5645
    %v5738 = vpop.f32.mrf.mxu0
    %v5739 = vadd.f32 0.0, %v5738
    %v5740 = vpop.f32.mrf.mxu0
    %5741 = vmatprep.mubr.f32.mxu0 0.0
    %5742 = vmatmul.mubr.f32.gmra.mxu0 %v5648
    %v5743 = vpop.f32.mrf.mxu0
    %v5744 = vadd.f32 0.0, %v5743
    %v5745 = vpop.f32.mrf.mxu0
    %5746 = vmatprep.mubr.f32.mxu0 0.0
    %5747 = vmatmul.mubr.f32.gmra.mxu0 %v5651
    %v5748 = vpop.f32.mrf.mxu0
    %v5749 = vadd.f32 0.0, %v5748
    %v5750 = vpop.f32.mrf.mxu0
    %5751 = vmatprep.mubr.f32.mxu0 0.0
    %5752 = vmatmul.mubr.f32.gmra.mxu0 %v5654
    %v5753 = vpop.f32.mrf.mxu0
    %v5754 = vadd.f32 0.0, %v5753
    %v5755 = vpop.f32.mrf.mxu0
    %5756 = vmatprep.mubr.f32.mxu0 0.0
    %5757 = vmatmul.mubr.f32.gmra.mxu0 %v5657
    %v5758 = vpop.f32.mrf.mxu0
    %v5759 = vadd.f32 0.0, %v5758
    %v5760 = vpop.f32.mrf.mxu0
    %5761 = vmatprep.mubr.f32.mxu0 0.0
    %5762 = vmatmul.mubr.f32.gmra.mxu0 %v5660
    %v5763 = vpop.f32.mrf.mxu0
    %v5764 = vadd.f32 0.0, %v5763
    %v5765 = vpop.f32.mrf.mxu0
    %5766 = vdwg.mxu0
    %5767 = vxpose.xlu0.b32.start [1/16] %v5729, 128
    %5768 = vxpose.xlu0.b32.cont [2/16] %v5734, 128
    %5769 = vxpose.xlu0.b32.cont [3/16] %v5739, 128
    %5770 = vxpose.xlu0.b32.cont [4/16] %v5744, 128
    %5771 = vxpose.xlu0.b32.cont [5/16] %v5749, 128
    %5772 = vxpose.xlu0.b32.cont [6/16] %v5754, 128
    %5773 = vxpose.xlu0.b32.cont [7/16] %v5759, 128
    %5774 = vxpose.xlu0.b32.cont [8/16] %v5764, 128
    %5775 = vxpose.xlu0.b32.cont [9/16] 0.0, 128
    %5776 = vxpose.xlu0.b32.cont [10/16] 0.0, 128
    %5777 = vxpose.xlu0.b32.cont [11/16] 0.0, 128
    %5778 = vxpose.xlu0.b32.cont [12/16] 0.0, 128
    %5779 = vxpose.xlu0.b32.cont [13/16] 0.0, 128
    %5780 = vxpose.xlu0.b32.cont [14/16] 0.0, 128
    %5781 = vxpose.xlu0.b32.cont [15/16] 0.0, 128
    %5782 = vxpose.xlu0.b32.end [16/16] 0.0, 128
    %v5783 = vpop.trf.xlu0
    %v5784 = vpop.trf.xlu0
    %v5785 = vpop.trf.xlu0
    %v5786 = vpop.trf.xlu0
    %v5787 = vpop.trf.xlu0
    %v5788 = vpop.trf.xlu0
    %v5789 = vpop.trf.xlu0
    %v5790 = vpop.trf.xlu0
    %v5791 = vpop.trf.xlu0
    %v5792 = vpop.trf.xlu0
    %v5793 = vpop.trf.xlu0
    %v5794 = vpop.trf.xlu0
    %v5795 = vpop.trf.xlu0
    %v5796 = vpop.trf.xlu0
    %v5797 = vpop.trf.xlu0
    %v5798 = vpop.trf.xlu0
    %v5800 = vsel %vm5637, %v5783, 0
    %v5803 = vsel %vm5637, %v5784, 0
    %5805 = vmatprep.subr.mxu0 0.0
    %5806 = vmatpush1.msra.mxu0 0.0
    %5807 = vmatprep.subr.mxu0 0.0
    %5808 = vmatpush1.msra.mxu0 0.0
    %5809 = vmatprep.subr.mxu0 0.0
    %5810 = vmatpush1.msra.mxu0 0.0
    %5811 = vmatprep.subr.mxu0 0.0
    %5812 = vmatpush1.msra.mxu0 0.0
    %5813 = vmatprep.subr.mxu0 0.0
    %5814 = vmatpush1.msra.mxu0 0.0
    %5815 = vmatprep.subr.mxu0 0.0
    %5816 = vmatpush1.msra.mxu0 0.0
    %5817 = vmatprep.subr.mxu0 0.0
    %5818 = vmatpush1.msra.mxu0 0.0
    %5819 = vmatprep.subr.mxu0 0.0
    %5820 = vmatpush1.msra.mxu0 0.0
    %5821 = vmatprep.subr.mxu0 0.0
    %5822 = vmatpush1.msra.mxu0 %v80
    %5823 = vmatprep.subr.mxu0 0.0
    %5824 = vmatpush1.msra.mxu0 %v79
    %5825 = vmatprep.subr.mxu0 0.0
    %5826 = vmatpush1.msra.mxu0 %v78
    %5827 = vmatprep.subr.mxu0 0.0
    %5828 = vmatpush1.msra.mxu0 %v77
    %5829 = vmatprep.subr.mxu0 0.0
    %5830 = vmatpush1.msra.mxu0 %v76
    %5831 = vmatprep.subr.mxu0 0.0
    %5832 = vmatpush1.msra.mxu0 %v75
    %5833 = vmatprep.subr.mxu0 0.0
    %5834 = vmatpush1.msra.mxu0 %v74
    %5835 = vmatprep.subr.mxu0 0.0
    %5836 = vmatpush1.msra.mxu0 %v73
    %5837 = vmatprep.subr.mxu0 0.0
    %5838 = vmatpush2.msra.mxu0 0.0
    %5839 = vmatprep.subr.mxu0 0.0
    %5840 = vmatpush2.msra.mxu0 0.0
    %5841 = vmatprep.subr.mxu0 0.0
    %5842 = vmatpush2.msra.mxu0 0.0
    %5843 = vmatprep.subr.mxu0 0.0
    %5844 = vmatpush2.msra.mxu0 0.0
    %5845 = vmatprep.subr.mxu0 0.0
    %5846 = vmatpush2.msra.mxu0 0.0
    %5847 = vmatprep.subr.mxu0 0.0
    %5848 = vmatpush2.msra.mxu0 0.0
    %5849 = vmatprep.subr.mxu0 0.0
    %5850 = vmatpush2.msra.mxu0 0.0
    %5851 = vmatprep.subr.mxu0 0.0
    %5852 = vmatpush2.msra.mxu0 0.0
    %5853 = vmatprep.subr.mxu0 0.0
    %5854 = vmatpush2.msra.mxu0 0.0
    %5855 = vmatprep.subr.mxu0 0.0
    %5856 = vmatpush2.msra.mxu0 0.0
    %5857 = vmatprep.subr.mxu0 0.0
    %5858 = vmatpush2.msra.mxu0 0.0
    %5859 = vmatprep.subr.mxu0 0.0
    %5860 = vmatpush2.msra.mxu0 0.0
    %5861 = vmatprep.subr.mxu0 0.0
    %5862 = vmatpush2.msra.mxu0 0.0
    %5863 = vmatprep.subr.mxu0 0.0
    %5864 = vmatpush2.msra.mxu0 0.0
    %5865 = vmatprep.subr.mxu0 0.0
    %5866 = vmatpush2.msra.mxu0 0.0
    %5867 = vmatprep.subr.mxu0 0.0
    %5868 = vmatpush2.msra.mxu0 0.0
    %5869 = vmatprep.mubr.f32.mxu0 0.0
    %5870 = vmatmul.mubr.f32.gmra.mxu0 %v5800
    %v5871 = vpop.f32.mrf.mxu0
    %v5872 = vadd.f32 0.0, %v5871
    %v5873 = vpop.f32.mrf.mxu0
    %5874 = vmatprep.mubr.f32.mxu0 0.0
    %5875 = vmatmul.mubr.f32.gmra.mxu0 %v5803
    %v5876 = vpop.f32.mrf.mxu0
    %v5877 = vadd.f32 0.0, %v5876
    %v5878 = vpop.f32.mrf.mxu0
    %5879 = vdwg.mxu0
    %v5881 = vsel %vm85, %v5729, 0
    %v5884 = vsel %vm85, %v5734, 0
    %v5887 = vsel %vm85, %v5739, 0
    %v5890 = vsel %vm85, %v5744, 0
    %v5893 = vsel %vm85, %v5749, 0
    %v5896 = vsel %vm85, %v5754, 0
    %v5899 = vsel %vm85, %v5759, 0
    %v5902 = vsel %vm85, %v5764, 0
    %5904 = vmatprep.subr.mxu0 0.0
    %5905 = vmatpush1.msra.mxu0 0.0
    %5906 = vmatprep.subr.mxu0 0.0
    %5907 = vmatpush1.msra.mxu0 0.0
    %5908 = vmatprep.subr.mxu0 0.0
    %5909 = vmatpush1.msra.mxu0 0.0
    %5910 = vmatprep.subr.mxu0 0.0
    %5911 = vmatpush1.msra.mxu0 0.0
    %5912 = vmatprep.subr.mxu0 0.0
    %5913 = vmatpush1.msra.mxu0 0.0
    %5914 = vmatprep.subr.mxu0 0.0
    %5915 = vmatpush1.msra.mxu0 0.0
    %5916 = vmatprep.subr.mxu0 0.0
    %5917 = vmatpush1.msra.mxu0 0.0
    %5918 = vmatprep.subr.mxu0 0.0
    %5919 = vmatpush1.msra.mxu0 0.0
    %5920 = vmatprep.subr.mxu0 0.0
    %5921 = vmatpush1.msra.mxu0 0.0
    %5922 = vmatprep.subr.mxu0 0.0
    %5923 = vmatpush1.msra.mxu0 0.0
    %5924 = vmatprep.subr.mxu0 0.0
    %5925 = vmatpush1.msra.mxu0 0.0
    %5926 = vmatprep.subr.mxu0 0.0
    %5927 = vmatpush1.msra.mxu0 0.0
    %5928 = vmatprep.subr.mxu0 0.0
    %5929 = vmatpush1.msra.mxu0 0.0
    %5930 = vmatprep.subr.mxu0 0.0
    %5931 = vmatpush1.msra.mxu0 0.0
    %5932 = vmatprep.subr.mxu0 0.0
    %5933 = vmatpush1.msra.mxu0 %v5877
    %5934 = vmatprep.subr.mxu0 0.0
    %5935 = vmatpush1.msra.mxu0 %v5872
    %5936 = vmatprep.subr.mxu0 0.0
    %5937 = vmatpush2.msra.mxu0 0.0
    %5938 = vmatprep.subr.mxu0 0.0
    %5939 = vmatpush2.msra.mxu0 0.0
    %5940 = vmatprep.subr.mxu0 0.0
    %5941 = vmatpush2.msra.mxu0 0.0
    %5942 = vmatprep.subr.mxu0 0.0
    %5943 = vmatpush2.msra.mxu0 0.0
    %5944 = vmatprep.subr.mxu0 0.0
    %5945 = vmatpush2.msra.mxu0 0.0
    %5946 = vmatprep.subr.mxu0 0.0
    %5947 = vmatpush2.msra.mxu0 0.0
    %5948 = vmatprep.subr.mxu0 0.0
    %5949 = vmatpush2.msra.mxu0 0.0
    %5950 = vmatprep.subr.mxu0 0.0
    %5951 = vmatpush2.msra.mxu0 0.0
    %5952 = vmatprep.subr.mxu0 0.0
    %5953 = vmatpush2.msra.mxu0 0.0
    %5954 = vmatprep.subr.mxu0 0.0
    %5955 = vmatpush2.msra.mxu0 0.0
    %5956 = vmatprep.subr.mxu0 0.0
    %5957 = vmatpush2.msra.mxu0 0.0
    %5958 = vmatprep.subr.mxu0 0.0
    %5959 = vmatpush2.msra.mxu0 0.0
    %5960 = vmatprep.subr.mxu0 0.0
    %5961 = vmatpush2.msra.mxu0 0.0
    %5962 = vmatprep.subr.mxu0 0.0
    %5963 = vmatpush2.msra.mxu0 0.0
    %5964 = vmatprep.subr.mxu0 0.0
    %5965 = vmatpush2.msra.mxu0 0.0
    %5966 = vmatprep.subr.mxu0 0.0
    %5967 = vmatpush2.msra.mxu0 0.0
    %5968 = vmatprep.mubr.f32.mxu0 0.0
    %5969 = vmatmul.mubr.f32.gmra.mxu0 %v5881
    %v5970 = vpop.f32.mrf.mxu0
    %v5971 = vadd.f32 0.0, %v5970
    %v5972 = vpop.f32.mrf.mxu0
    %5973 = vmatprep.mubr.f32.mxu0 0.0
    %5974 = vmatmul.mubr.f32.gmra.mxu0 %v5884
    %v5975 = vpop.f32.mrf.mxu0
    %v5976 = vadd.f32 0.0, %v5975
    %v5977 = vpop.f32.mrf.mxu0
    %5978 = vmatprep.mubr.f32.mxu0 0.0
    %5979 = vmatmul.mubr.f32.gmra.mxu0 %v5887
    %v5980 = vpop.f32.mrf.mxu0
    %v5981 = vadd.f32 0.0, %v5980
    %v5982 = vpop.f32.mrf.mxu0
    %5983 = vmatprep.mubr.f32.mxu0 0.0
    %5984 = vmatmul.mubr.f32.gmra.mxu0 %v5890
    %v5985 = vpop.f32.mrf.mxu0
    %v5986 = vadd.f32 0.0, %v5985
    %v5987 = vpop.f32.mrf.mxu0
    %5988 = vmatprep.mubr.f32.mxu0 0.0
    %5989 = vmatmul.mubr.f32.gmra.mxu0 %v5893
    %v5990 = vpop.f32.mrf.mxu0
    %v5991 = vadd.f32 0.0, %v5990
    %v5992 = vpop.f32.mrf.mxu0
    %5993 = vmatprep.mubr.f32.mxu0 0.0
    %5994 = vmatmul.mubr.f32.gmra.mxu0 %v5896
    %v5995 = vpop.f32.mrf.mxu0
    %v5996 = vadd.f32 0.0, %v5995
    %v5997 = vpop.f32.mrf.mxu0
    %5998 = vmatprep.mubr.f32.mxu0 0.0
    %5999 = vmatmul.mubr.f32.gmra.mxu0 %v5899
    %v6000 = vpop.f32.mrf.mxu0
    %v6001 = vadd.f32 0.0, %v6000
    %v6002 = vpop.f32.mrf.mxu0
    %6003 = vmatprep.mubr.f32.mxu0 0.0
    %6004 = vmatmul.mubr.f32.gmra.mxu0 %v5902
    %v6005 = vpop.f32.mrf.mxu0
    %v6006 = vadd.f32 0.0, %v6005
    %v6007 = vpop.f32.mrf.mxu0
    %6008 = vdwg.mxu0
    %v6009 = vld [vmem:[%s6] sm:$0xff]
    %v6010 = vld [vmem:[%s6 + $0x8] sm:$0xff]
    %v6011 = vld [vmem:[%s8] sm:$0x1]
    %v6013 = vlaneseq
    %v6014 = vshrl.u32 %v6013, 7
    %v6015 = vsub.s32 0, %v6014
    %v6016 = vrot.slane %v6011, %v6015
    %v6019 = vsel %vm85, %v5971, 0
    %v6022 = vsel %vm85, %v5976, 0
    %v6025 = vsel %vm85, %v5981, 0
    %v6028 = vsel %vm85, %v5986, 0
    %v6031 = vsel %vm85, %v5991, 0
    %v6034 = vsel %vm85, %v5996, 0
    %v6037 = vsel %vm85, %v6001, 0
    %v6040 = vsel %vm85, %v6006, 0
    %6042 = vmatprep.subr.mxu0 0.0
    %6043 = vmatpush1.msra.mxu0 0.0
    %6044 = vmatprep.subr.mxu0 0.0
    %6045 = vmatpush1.msra.mxu0 0.0
    %6046 = vmatprep.subr.mxu0 0.0
    %6047 = vmatpush1.msra.mxu0 0.0
    %6048 = vmatprep.subr.mxu0 0.0
    %6049 = vmatpush1.msra.mxu0 0.0
    %6050 = vmatprep.subr.mxu0 0.0
    %6051 = vmatpush1.msra.mxu0 0.0
    %6052 = vmatprep.subr.mxu0 0.0
    %6053 = vmatpush1.msra.mxu0 0.0
    %6054 = vmatprep.subr.mxu0 0.0
    %6055 = vmatpush1.msra.mxu0 0.0
    %6056 = vmatprep.subr.mxu0 0.0
    %6057 = vmatpush1.msra.mxu0 0.0
    %6058 = vmatprep.subr.mxu0 0.0
    %6059 = vmatpush1.msra.mxu0 0.0
    %6060 = vmatprep.subr.mxu0 0.0
    %6061 = vmatpush1.msra.mxu0 0.0
    %6062 = vmatprep.subr.mxu0 0.0
    %6063 = vmatpush1.msra.mxu0 0.0
    %6064 = vmatprep.subr.mxu0 0.0
    %6065 = vmatpush1.msra.mxu0 0.0
    %6066 = vmatprep.subr.mxu0 0.0
    %6067 = vmatpush1.msra.mxu0 0.0
    %6068 = vmatprep.subr.mxu0 0.0
    %6069 = vmatpush1.msra.mxu0 0.0
    %6070 = vmatprep.subr.mxu0 0.0
    %6071 = vmatpush1.msra.mxu0 %v6010
    %6072 = vmatprep.subr.mxu0 0.0
    %6073 = vmatpush1.msra.mxu0 %v6009
    %6074 = vmatprep.subr.mxu0 0.0
    %6075 = vmatpush2.msra.mxu0 0.0
    %6076 = vmatprep.subr.mxu0 0.0
    %6077 = vmatpush2.msra.mxu0 0.0
    %6078 = vmatprep.subr.mxu0 0.0
    %6079 = vmatpush2.msra.mxu0 0.0
    %6080 = vmatprep.subr.mxu0 0.0
    %6081 = vmatpush2.msra.mxu0 0.0
    %6082 = vmatprep.subr.mxu0 0.0
    %6083 = vmatpush2.msra.mxu0 0.0
    %6084 = vmatprep.subr.mxu0 0.0
    %6085 = vmatpush2.msra.mxu0 0.0
    %6086 = vmatprep.subr.mxu0 0.0
    %6087 = vmatpush2.msra.mxu0 0.0
    %6088 = vmatprep.subr.mxu0 0.0
    %6089 = vmatpush2.msra.mxu0 0.0
    %6090 = vmatprep.subr.mxu0 0.0
    %6091 = vmatpush2.msra.mxu0 0.0
    %6092 = vmatprep.subr.mxu0 0.0
    %6093 = vmatpush2.msra.mxu0 0.0
    %6094 = vmatprep.subr.mxu0 0.0
    %6095 = vmatpush2.msra.mxu0 0.0
    %6096 = vmatprep.subr.mxu0 0.0
    %6097 = vmatpush2.msra.mxu0 0.0
    %6098 = vmatprep.subr.mxu0 0.0
    %6099 = vmatpush2.msra.mxu0 0.0
    %6100 = vmatprep.subr.mxu0 0.0
    %6101 = vmatpush2.msra.mxu0 0.0
    %6102 = vmatprep.subr.mxu0 0.0
    %6103 = vmatpush2.msra.mxu0 0.0
    %6104 = vmatprep.subr.mxu0 0.0
    %6105 = vmatpush2.msra.mxu0 0.0
    %6106 = vmatprep.mubr.f32.mxu0 0.0
    %6107 = vmatmul.mubr.f32.gmra.mxu0 %v6019
    %v6108 = vpop.f32.mrf.mxu0
    %v6109 = vadd.f32 %v6016, %v6108
    %v6110 = vpop.f32.mrf.mxu0
    %6111 = vmatprep.mubr.f32.mxu0 0.0
    %6112 = vmatmul.mubr.f32.gmra.mxu0 %v6022
    %v6113 = vpop.f32.mrf.mxu0
    %v6114 = vadd.f32 %v6016, %v6113
    %v6115 = vpop.f32.mrf.mxu0
    %6116 = vmatprep.mubr.f32.mxu0 0.0
    %6117 = vmatmul.mubr.f32.gmra.mxu0 %v6025
    %v6118 = vpop.f32.mrf.mxu0
    %v6119 = vadd.f32 %v6016, %v6118
    %v6120 = vpop.f32.mrf.mxu0
    %6121 = vmatprep.mubr.f32.mxu0 0.0
    %6122 = vmatmul.mubr.f32.gmra.mxu0 %v6028
    %v6123 = vpop.f32.mrf.mxu0
    %v6124 = vadd.f32 %v6016, %v6123
    %v6125 = vpop.f32.mrf.mxu0
    %6126 = vmatprep.mubr.f32.mxu0 0.0
    %6127 = vmatmul.mubr.f32.gmra.mxu0 %v6031
    %v6128 = vpop.f32.mrf.mxu0
    %v6129 = vadd.f32 %v6016, %v6128
    %v6130 = vpop.f32.mrf.mxu0
    %6131 = vmatprep.mubr.f32.mxu0 0.0
    %6132 = vmatmul.mubr.f32.gmra.mxu0 %v6034
    %v6133 = vpop.f32.mrf.mxu0
    %v6134 = vadd.f32 %v6016, %v6133
    %v6135 = vpop.f32.mrf.mxu0
    %6136 = vmatprep.mubr.f32.mxu0 0.0
    %6137 = vmatmul.mubr.f32.gmra.mxu0 %v6037
    %v6138 = vpop.f32.mrf.mxu0
    %v6139 = vadd.f32 %v6016, %v6138
    %v6140 = vpop.f32.mrf.mxu0
    %6141 = vmatprep.mubr.f32.mxu0 0.0
    %6142 = vmatmul.mubr.f32.gmra.mxu0 %v6040
    %v6143 = vpop.f32.mrf.mxu0
    %v6144 = vadd.f32 %v6016, %v6143
    %v6145 = vpop.f32.mrf.mxu0
    %6146 = vdwg.mxu0
    %v6147 = vld [vmem:[#allocation6] sm:$0xff]
    %v6148 = vld [vmem:[#allocation6 + $0x8] sm:$0xff]
    %6149 = vmatprep.subr.mxu0 0.0
    %6150 = vmatpush1.msra.mxu0 0.0
    %6151 = vmatprep.subr.mxu0 0.0
    %6152 = vmatpush1.msra.mxu0 0.0
    %6153 = vmatprep.subr.mxu0 0.0
    %6154 = vmatpush1.msra.mxu0 0.0
    %6155 = vmatprep.subr.mxu0 0.0
    %6156 = vmatpush1.msra.mxu0 0.0
    %6157 = vmatprep.subr.mxu0 0.0
    %6158 = vmatpush1.msra.mxu0 0.0
    %6159 = vmatprep.subr.mxu0 0.0
    %6160 = vmatpush1.msra.mxu0 0.0
    %6161 = vmatprep.subr.mxu0 0.0
    %6162 = vmatpush1.msra.mxu0 0.0
    %6163 = vmatprep.subr.mxu0 0.0
    %6164 = vmatpush1.msra.mxu0 0.0
    %6165 = vmatprep.subr.mxu0 0.0
    %6166 = vmatpush1.msra.mxu0 0.0
    %6167 = vmatprep.subr.mxu0 0.0
    %6168 = vmatpush1.msra.mxu0 0.0
    %6169 = vmatprep.subr.mxu0 0.0
    %6170 = vmatpush1.msra.mxu0 0.0
    %6171 = vmatprep.subr.mxu0 0.0
    %6172 = vmatpush1.msra.mxu0 0.0
    %6173 = vmatprep.subr.mxu0 0.0
    %6174 = vmatpush1.msra.mxu0 0.0
    %6175 = vmatprep.subr.mxu0 0.0
    %6176 = vmatpush1.msra.mxu0 0.0
    %6177 = vmatprep.subr.mxu0 0.0
    %6178 = vmatpush1.msra.mxu0 %v6148
    %6179 = vmatprep.subr.mxu0 0.0
    %6180 = vmatpush1.msra.mxu0 %v6147
    %6181 = vmatprep.subr.mxu0 0.0
    %6182 = vmatpush2.msra.mxu0 0.0
    %6183 = vmatprep.subr.mxu0 0.0
    %6184 = vmatpush2.msra.mxu0 0.0
    %6185 = vmatprep.subr.mxu0 0.0
    %6186 = vmatpush2.msra.mxu0 0.0
    %6187 = vmatprep.subr.mxu0 0.0
    %6188 = vmatpush2.msra.mxu0 0.0
    %6189 = vmatprep.subr.mxu0 0.0
    %6190 = vmatpush2.msra.mxu0 0.0
    %6191 = vmatprep.subr.mxu0 0.0
    %6192 = vmatpush2.msra.mxu0 0.0
    %6193 = vmatprep.subr.mxu0 0.0
    %6194 = vmatpush2.msra.mxu0 0.0
    %6195 = vmatprep.subr.mxu0 0.0
    %6196 = vmatpush2.msra.mxu0 0.0
    %6197 = vmatprep.subr.mxu0 0.0
    %6198 = vmatpush2.msra.mxu0 0.0
    %6199 = vmatprep.subr.mxu0 0.0
    %6200 = vmatpush2.msra.mxu0 0.0
    %6201 = vmatprep.subr.mxu0 0.0
    %6202 = vmatpush2.msra.mxu0 0.0
    %6203 = vmatprep.subr.mxu0 0.0
    %6204 = vmatpush2.msra.mxu0 0.0
    %6205 = vmatprep.subr.mxu0 0.0
    %6206 = vmatpush2.msra.mxu0 0.0
    %6207 = vmatprep.subr.mxu0 0.0
    %6208 = vmatpush2.msra.mxu0 0.0
    %6209 = vmatprep.subr.mxu0 0.0
    %6210 = vmatpush2.msra.mxu0 0.0
    %6211 = vmatprep.subr.mxu0 0.0
    %6212 = vmatpush2.msra.mxu0 0.0
    %6213 = vmatprep.mubr.f32.mxu0 0.0
    %6214 = vmatmul.mubr.f32.gmra.mxu0 %v87
    %v6215 = vpop.f32.mrf.mxu0
    %v6216 = vadd.f32 0.0, %v6215
    %v6217 = vpop.f32.mrf.mxu0
    %6218 = vmatprep.mubr.f32.mxu0 0.0
    %6219 = vmatmul.mubr.f32.gmra.mxu0 %v90
    %v6220 = vpop.f32.mrf.mxu0
    %v6221 = vadd.f32 0.0, %v6220
    %v6222 = vpop.f32.mrf.mxu0
    %6223 = vmatprep.mubr.f32.mxu0 0.0
    %6224 = vmatmul.mubr.f32.gmra.mxu0 %v816
    %v6225 = vpop.f32.mrf.mxu0
    %v6226 = vadd.f32 0.0, %v6225
    %v6227 = vpop.f32.mrf.mxu0
    %6228 = vmatprep.mubr.f32.mxu0 0.0
    %6229 = vmatmul.mubr.f32.gmra.mxu0 %v819
    %v6230 = vpop.f32.mrf.mxu0
    %v6231 = vadd.f32 0.0, %v6230
    %v6232 = vpop.f32.mrf.mxu0
    %6233 = vmatprep.mubr.f32.mxu0 0.0
    %6234 = vmatmul.mubr.f32.gmra.mxu0 %v1501
    %v6235 = vpop.f32.mrf.mxu0
    %v6236 = vadd.f32 0.0, %v6235
    %v6237 = vpop.f32.mrf.mxu0
    %6238 = vmatprep.mubr.f32.mxu0 0.0
    %6239 = vmatmul.mubr.f32.gmra.mxu0 %v1504
    %v6240 = vpop.f32.mrf.mxu0
    %v6241 = vadd.f32 0.0, %v6240
    %v6242 = vpop.f32.mrf.mxu0
    %6243 = vmatprep.mubr.f32.mxu0 0.0
    %6244 = vmatmul.mubr.f32.gmra.mxu0 %v2186
    %v6245 = vpop.f32.mrf.mxu0
    %v6246 = vadd.f32 0.0, %v6245
    %v6247 = vpop.f32.mrf.mxu0
    %6248 = vmatprep.mubr.f32.mxu0 0.0
    %6249 = vmatmul.mubr.f32.gmra.mxu0 %v2189
    %v6250 = vpop.f32.mrf.mxu0
    %v6251 = vadd.f32 0.0, %v6250
    %v6252 = vpop.f32.mrf.mxu0
    %6253 = vdwg.mxu0
    %v6254 = vadd.f32 %v6109, %v6216
    %v6255 = vadd.f32 %v6114, %v6221
    %v6256 = vadd.f32 %v6119, %v6226
    %v6257 = vadd.f32 %v6124, %v6231
    %v6258 = vadd.f32 %v6129, %v6236
    %v6259 = vadd.f32 %v6134, %v6241
    %v6260 = vadd.f32 %v6139, %v6246
    %v6261 = vadd.f32 %v6144, %v6251
    %6262 = vst.msk [vmem:[%s9] sm:$0xff] %vm85, %v6254
    %6263 = vst.msk [vmem:[%s9 + $0x8] sm:$0xff] %vm85, %v6255
    %6264 = vst.msk [vmem:[%s9 + $0x10] sm:$0xff] %vm85, %v6256
    %6265 = vst.msk [vmem:[%s9 + $0x18] sm:$0xff] %vm85, %v6257
    %6266 = vst.msk [vmem:[%s9 + $0x20] sm:$0xff] %vm85, %v6258
    %6267 = vst.msk [vmem:[%s9 + $0x28] sm:$0xff] %vm85, %v6259
    %6268 = vst.msk [vmem:[%s9 + $0x30] sm:$0xff] %vm85, %v6260
    %6269 = vst.msk [vmem:[%s9 + $0x38] sm:$0xff] %vm85, %v6261
    // Predicated region
    $region50: #{tpu_custom_call.1} parent=1 // pred_check
      _
    $region51: #{tpu_custom_call.1} parent=1 // pred_check_branch
      %6271 = sbr.rel (0) target = $region53
    $region52: #{tpu_custom_call.1} parent=1 // pred_region
      _
    $region53: #{tpu_custom_call.1} parent=1 // pred_fallthru
      _
    // Predicated region
    $region54: #{tpu_custom_call.1} parent=1 // pred_check
      _
    $region55: #{tpu_custom_call.1} parent=1 // pred_check_branch
      %6273 = sbr.rel (0) target = $region57
    $region56: #{tpu_custom_call.1} parent=1 // pred_region
      _
    $region57: #{tpu_custom_call.1} parent=1 // pred_fallthru
      _
    %6274 = vsyncpa [#allocation3], 1
    %6275 = vsyncpa [#allocation5], 1

</llo_original>
